<compile_context>
chip_gen: v7x
topology: tpu7x:2x2x1
jax: 0.10.0
libtpu: 0.0.40
codegen_flags: <defaults>
</compile_context>

<pallas_src>
import functools
import numpy as np

import jax
import jax.numpy as jnp
from jax import lax
from jax.experimental import pallas as pl
from jax.experimental.pallas import tpu as pltpu


# ----------------------------------------------------------------------------
# TPS constant tensors (mirrors GridGenerator.build_* — pure numpy, host-side)
# ----------------------------------------------------------------------------
def build_C(num_fiducial):
    f = num_fiducial
    ctrl_pts_x = np.linspace(-1.0, 1.0, f // 2)
    top = np.stack([ctrl_pts_x, -np.ones(f // 2)], axis=1)
    bot = np.stack([ctrl_pts_x, np.ones(f // 2)], axis=1)
    return np.concatenate([top, bot], axis=0)  # (F, 2)


def build_P(H, W):
    gx = (np.arange(-W, W, 2) + 1.0) / W
    gy = (np.arange(-H, H, 2) + 1.0) / H
    P = np.stack(np.meshgrid(gx, gy), axis=2)  # (H, W, 2), [...,0]=x, [...,1]=y
    return P.reshape([-1, 2])                  # (H*W, 2), row-major over (h, w)


def build_inv_delta_C(num_fiducial, C):
    f = num_fiducial
    hat_C = np.zeros((f, f), dtype=float)
    for i in range(f):
        for j in range(i, f):
            r = np.linalg.norm(C[i] - C[j])
            hat_C[i, j] = r
            hat_C[j, i] = r
    np.fill_diagonal(hat_C, 1)
    hat_C = hat_C ** 2 * np.log(hat_C)
    delta_C = np.concatenate(
        [
            np.concatenate([np.ones((f, 1)), C, hat_C], axis=1),
            np.concatenate([np.zeros((2, 3)), np.transpose(C)], axis=1),
            np.concatenate([np.zeros((1, 3)), np.ones((1, f))], axis=1),
        ],
        axis=0,
    )
    return np.linalg.inv(delta_C)  # (F+3, F+3)


def build_P_hat(num_fiducial, C, P, eps=1e-6):
    f = num_fiducial
    n = P.shape[0]
    P_tile = np.tile(np.expand_dims(P, axis=1), (1, f, 1))
    P_diff = P_tile - np.expand_dims(C, axis=0)
    rbf_norm = np.linalg.norm(P_diff, ord=2, axis=2)
    rbf = np.square(rbf_norm) * np.log(rbf_norm + eps)
    return np.concatenate([np.ones((n, 1)), P, rbf], axis=1)  # (n, F+3)


# ----------------------------------------------------------------------------
# Pallas kernel 1: fused Conv3x3(pad=1) + folded-BN + ReLU (per-batch grid).
# im2col happens INSIDE the kernel: 9 shifted views of the padded NHWC tile,
# each contracted (bf16 x bf16 -> f32) against its (Cin, Cout) weight slab.
# ----------------------------------------------------------------------------
def _conv3x3_fused_kernel(x_ref, w_ref, b_ref, o_ref, *, H, W, Cin, Cout):
    acc = jnp.zeros((H * W, Cout), jnp.float32)
    for ky in range(3):
        for kx in range(3):
            patch = x_ref[0, ky:ky + H, kx:kx + W, :]            # (H, W, Cin) f32
            patch = patch.reshape(H * W, Cin).astype(jnp.bfloat16)
            acc = acc + jnp.dot(patch, w_ref[ky * 3 + kx],
                                preferred_element_type=jnp.float32)
    acc = acc + b_ref[...]
    o_ref[0] = jnp.maximum(acc, 0.0).astype(o_ref.dtype)


# ----------------------------------------------------------------------------
# Pallas kernel 2: gridded GEMM + bias (+ReLU).  bf16 operands, f32 accumulate.
# Used as the im2col fallback for tiny late conv layers.
# ----------------------------------------------------------------------------
def _gemm_bias_kernel(a_ref, w_ref, b_ref, o_ref, *, relu):
    acc = jnp.dot(a_ref[...], w_ref[...], preferred_element_type=jnp.float32)
    acc = acc + b_ref[...]
    if relu:
        acc = jnp.maximum(acc, 0.0)
    o_ref[...] = acc.astype(o_ref.dtype)


def matmul_bias(a, w, b, relu=False):
    M, K = a.shape
    N = w.shape[1]
    b = b.reshape(1, N).astype(jnp.float32)
    # tile M so large activations pipeline; tiny M -> single block.
    tm = M
    if M > 256:
        for cand in (512, 256, 128):
            if M % cand == 0:
                tm = cand
                break
    return pl.pallas_call(
        functools.partial(_gemm_bias_kernel, relu=relu),
        out_shape=jax.ShapeDtypeStruct((M, N), jnp.float32),
        grid=(M // tm,),
        in_specs=[
            pl.BlockSpec((tm, K), lambda i: (i, 0)),
            pl.BlockSpec((K, N), lambda i: (0, 0)),
            pl.BlockSpec((1, N), lambda i: (0, 0)),
        ],
        out_specs=pl.BlockSpec((tm, N), lambda i: (i, 0)),
        compiler_params=pltpu.CompilerParams(dimension_semantics=("parallel",)),
    )(a, w, b)


# ----------------------------------------------------------------------------
# Pallas kernel 3: fused fc1(+ReLU) -> fc2 -> grid-generator fc (single call).
# ----------------------------------------------------------------------------
def _loc_head_kernel(x_ref, w1_ref, b1_ref, w2_ref, b2_ref, w3_ref, b3_ref,
                     cp_ref, ex_ref):
    h = jnp.dot(x_ref[...], w1_ref[...], preferred_element_type=jnp.float32) + b1_ref[...]
    h = jnp.maximum(h, 0.0)
    cp = jnp.dot(h, w2_ref[...], preferred_element_type=jnp.float32) + b2_ref[...]
    ex = jnp.dot(cp, w3_ref[...], preferred_element_type=jnp.float32) + b3_ref[...]
    cp_ref[...] = cp
    ex_ref[...] = ex


def loc_head(params, feat):
    B = feat.shape[0]
    F2 = params["fc2_w"].shape[1]
    return pl.pallas_call(
        _loc_head_kernel,
        out_shape=(jax.ShapeDtypeStruct((B, F2), jnp.float32),
                   jax.ShapeDtypeStruct((B, 6), jnp.float32)),
    )(feat.astype(jnp.float32),
      params["fc1_w"], params["fc1_b"].reshape(1, -1),
      params["fc2_w"], params["fc2_b"].reshape(1, -1),
      params["gg_fc_w"], params["gg_fc_b"].reshape(1, -1))


# ----------------------------------------------------------------------------
# Pallas kernel 4: separable TPS grid generation + bilinear grid_sample.
# Per (batch, HW-tile):
#   grid^T = cpz^T @ A^T                                  (2, THW)
#   Mx[w,p] = sum of x-corner one-hots * x-weights        (W, THW)
#   My[h,p] = sum of y-corner one-hots * y-weights        (H, THW)
#   X       = img(C*H, W) @ Mx                            (C*H, THW)   lane-dense MXU
#   out[c]  = sum_h My[h,:] * X[c*H + h, :]               (C, THW)     lane-dense store
# Semantics: bilinear, align_corners=True, padding_mode='zeros'.
# ----------------------------------------------------------------------------
def _tps_sample_kernel(at_ref, cpzT_ref, img_ref, o_ref, *, H, W, C):
    gridT = jnp.dot(cpzT_ref[0], at_ref[...],
                    preferred_element_type=jnp.float32)          # (2, THW)
    thw = o_ref.shape[2]

    ix = (gridT[0:1, :] + 1.0) * (0.5 * (W - 1))                 # align_corners=True
    iy = (gridT[1:2, :] + 1.0) * (0.5 * (H - 1))
    x0f = jnp.floor(ix)
    y0f = jnp.floor(iy)
    x0 = x0f.astype(jnp.int32)
    y0 = y0f.astype(jnp.int32)
    x1 = x0 + 1
    y1 = y0 + 1
    wx1 = ix - x0f
    wx0 = 1.0 - wx1
    wy1 = iy - y0f
    wy0 = 1.0 - wy1

    wi = lax.broadcasted_iota(jnp.int32, (W, thw), 0)
    hi = lax.broadcasted_iota(jnp.int32, (H, thw), 0)

    def onehot(idx, wgt, iota, n):
        valid = ((idx >= 0) & (idx < n)).astype(jnp.float32)     # zeros padding
        return (wgt * valid) * (iota == idx).astype(jnp.float32)

    mx = onehot(x0, wx0, wi, W) + onehot(x1, wx1, wi, W)         # (W, THW)
    my = onehot(y0, wy0, hi, H) + onehot(y1, wy1, hi, H)         # (H, THW)

    xg = jnp.dot(img_ref[0], mx, preferred_element_type=jnp.float32)  # (C*H, THW)

    for c in range(C):
        row = jnp.sum(xg[c * H:(c + 1) * H, :] * my, axis=0, keepdims=True)  # (1, THW)
        o_ref[0, c:c + 1, :] = row.astype(o_ref.dtype)


def _pick_hw_tile(hw):
    if hw <= 512:
        return hw
    for t in (512, 448, 384, 320, 256, 192, 128):
        if hw % t == 0:
            return t
    return hw


def tps_sample(A_T, cpz_T, img_cflat, H, W, C):
    B = cpz_T.shape[0]
    HW = H * W
    Fp3 = A_T.shape[0]
    thw = _pick_hw_tile(HW)
    return pl.pallas_call(
        functools.partial(_tps_sample_kernel, H=H, W=W, C=C),
        out_shape=jax.ShapeDtypeStruct((B, C, HW), jnp.float32),
        grid=(B, HW // thw),
        in_specs=[
            pl.BlockSpec((Fp3, thw), lambda b, t: (0, t)),
            pl.BlockSpec((1, 2, Fp3), lambda b, t: (b, 0, 0)),
            pl.BlockSpec((1, C * H, W), lambda b, t: (b, 0, 0)),
        ],
        out_specs=pl.BlockSpec((1, C, thw), lambda b, t: (b, 0, t)),
        compiler_params=pltpu.CompilerParams(
            dimension_semantics=("parallel", "parallel")),
    )(A_T, cpz_T, img_cflat)


# ----------------------------------------------------------------------------
# Conv glue: BN folding + dispatch (fused kernel / im2col GEMM fallback)
# ----------------------------------------------------------------------------
def im2col_3x3(x_nhwc):
    B, H, W, C = x_nhwc.shape
    xp = jnp.pad(x_nhwc, ((0, 0), (1, 1), (1, 1), (0, 0)))
    patches = []
    for ky in range(3):
        for kx in range(3):
            patches.append(xp[:, ky:ky + H, kx:kx + W, :])
    p = jnp.stack(patches, axis=3)            # (B, H, W, 9, C) — order (ky, kx, cin)
    return p.reshape(B * H * W, 9 * C)


def conv_bn_relu(x_nhwc, p, eps=1e-5):
    B, H, W, Cin = x_nhwc.shape
    w, gamma, beta = p["w"], p["gamma"], p["beta"]
    rmean, rvar = p["rmean"], p["rvar"]
    Cout = w.shape[0]
    scale = gamma / jnp.sqrt(rvar + eps)
    # fold eval-mode BN; reorder (Cout,Cin,3,3) -> (ky,kx,Cin,Cout)
    w_folded = (w * scale[:, None, None, None]).transpose(2, 3, 1, 0)
    bias = (beta - rmean * scale).reshape(1, Cout).astype(jnp.float32)

    if W % 8 == 0:
        # fused path: im2col happens inside the kernel (no 9x HBM blow-up).
        w9 = w_folded.reshape(9, Cin, Cout).astype(jnp.bfloat16)
        xp = jnp.pad(x_nhwc, ((0, 0), (1, 1), (1, 1), (0, 0)))
        y = pl.pallas_call(
            functools.partial(_conv3x3_fused_kernel, H=H, W=W, Cin=Cin, Cout=Cout),
            out_shape=jax.ShapeDtypeStruct((B, H * W, Cout), jnp.float32),
            grid=(B,),
            in_specs=[
                pl.BlockSpec((1, H + 2, W + 2, Cin), lambda b: (b, 0, 0, 0)),
                pl.BlockSpec((9, Cin, Cout), lambda b: (0, 0, 0)),
                pl.BlockSpec((1, Cout), lambda b: (0, 0)),
            ],
            out_specs=pl.BlockSpec((1, H * W, Cout), lambda b: (b, 0, 0)),
            compiler_params=pltpu.CompilerParams(dimension_semantics=("parallel",)),
        )(xp, w9, bias)
        return y.reshape(B, H, W, Cout)

    # tiny-spatial fallback: im2col in the wrapper + gridded bf16 GEMM.
    wmat = w_folded.reshape(9 * Cin, Cout).astype(jnp.bfloat16)
    a = im2col_3x3(x_nhwc).astype(jnp.bfloat16)
    y = matmul_bias(a, wmat, bias, relu=True)
    return y.reshape(B, H, W, Cout)


def maxpool2(x_nhwc):  # MaxPool2d(kernel=2, stride=2)
    B, H, W, C = x_nhwc.shape
    # TODO(synk): could be fused into the conv epilogue to skip one HBM round trip.
    return x_nhwc.reshape(B, H // 2, 2, W // 2, 2, C).max(axis=(2, 4))


# ----------------------------------------------------------------------------
# Model forward (LocalizationNetwork + GridGenerator + grid_sample)
# ----------------------------------------------------------------------------
def loc_net_forward(params, x_nhwc):
    x = x_nhwc
    n_blocks = 4
    for i in range(n_blocks):
        x = conv_bn_relu(x, params["conv%d" % i])
        if i < n_blocks - 1:
            x = maxpool2(x)
        else:
            x = x.mean(axis=(1, 2))           # AdaptiveAvgPool2d(1) + squeeze
    return x                                   # (B, 128)


def tps_forward(params, image_nchw):
    B, C, H, W = image_nchw.shape
    img_f32 = image_nchw.astype(jnp.float32)
    x_nhwc = jnp.transpose(img_f32, (0, 2, 3, 1))

    # localization network + fused fc head (fc1 -> relu -> fc2, grid-gen fc)
    feat = loc_net_forward(params, x_nhwc)                         # (B, 128)
    cp, ex = loc_head(params, feat)                                # (B, 2F), (B, 6)
    Fnum = cp.shape[1] // 2
    batch_C_prime = cp.reshape(B, Fnum, 2)
    cpz = jnp.concatenate([batch_C_prime, ex.reshape(B, 3, 2)], axis=1)  # (B, F+3, 2)
    cpz_T = jnp.transpose(cpz, (0, 2, 1))                          # (B, 2, F+3)

    # fused TPS grid + bilinear sampling; image stays NCHW-flat, output is NCHW-flat.
    img_cflat = img_f32.reshape(B, C * H, W)
    out_flat = tps_sample(params["A_T"], cpz_T, img_cflat, H, W, C)  # (B, C, HW)
    return out_flat.reshape(B, C, H, W)        # no final transpose needed


# ----------------------------------------------------------------------------
# Deterministic parameter init (shapes from TPS.__init__, model_name='small')
# ----------------------------------------------------------------------------
def init_params(key, in_channels, num_fiducial, H, W):
    filters = [16, 32, 64, 128]
    fc_dim = 64
    params = {}
    cin = in_channels
    keys = jax.random.split(key, 8)

    for i, cout in enumerate(filters):
        kw, kg, kb, km = jax.random.split(keys[i], 4)
        params["conv%d" % i] = dict(
            w=jax.random.normal(kw, (cout, cin, 3, 3), jnp.float32) / np.sqrt(cin * 9),
            gamma=1.0 + 0.1 * jax.random.normal(kg, (cout,), jnp.float32),
            beta=0.1 * jax.random.normal(kb, (cout,), jnp.float32),
            rmean=0.1 * jax.random.normal(km, (cout,), jnp.float32),
            rvar=jnp.ones((cout,), jnp.float32),
        )
        cin = cout

    k1, k2, k3 = jax.random.split(keys[4], 3)
    C_np = build_C(num_fiducial)
    params["fc1_w"] = jax.random.normal(k1, (filters[-1], fc_dim), jnp.float32) / np.sqrt(filters[-1])
    params["fc1_b"] = jnp.zeros((fc_dim,), jnp.float32)
    params["fc2_w"] = 0.01 * jax.random.normal(k2, (fc_dim, num_fiducial * 2), jnp.float32)
    params["fc2_b"] = jnp.asarray(C_np.flatten(), jnp.float32)     # near-identity TPS init
    params["gg_fc_w"] = 0.01 * jax.random.normal(k3, (num_fiducial * 2, 6), jnp.float32)
    params["gg_fc_b"] = jnp.zeros((6,), jnp.float32)

    # fold inv_delta_C into P_hat:  grid = (P_hat @ inv_delta_C) @ cpz
    P_np = build_P(H, W)
    inv_dC = build_inv_delta_C(num_fiducial, C_np)                 # (F+3, F+3)
    P_hat = build_P_hat(num_fiducial, C_np, P_np)                  # (HW, F+3)
    A = P_hat @ inv_dC                                             # (HW, F+3)
    params["A_T"] = jnp.asarray(A.T, jnp.float32)                  # (F+3, HW)
    return params


# ----------------------------------------------------------------------------
if __name__ == "__main__":
    B, C, H, W = 2, 4, 16, 16
    num_fiducial = 20

    key = jax.random.PRNGKey(0)
    kp, kx = jax.random.split(key)
    params = init_params(kp, C, num_fiducial, H, W)
    image = jax.random.normal(kx, (B, C, H, W), jnp.float32)       # NCHW, like PyTorch

    fwd = jax.jit(tps_forward)
    out = fwd(params, image)
    out = jax.block_until_ready(out)

    assert out.shape == (B, C, H, W)
    assert jnp.all(jnp.isfinite(out))
    print("KERNEL_OK")
</pallas_src>

<mosaic_0001>
module attributes {stable_mosaic.version = 11 : i64} {
  func.func @_conv3x3_fused_kernel(%arg0: i32, %arg1: memref<1x18x18x4xf32, #tpu.memory_space<vmem>>, %arg2: memref<9x4x16xbf16, #tpu.memory_space<vmem>>, %arg3: memref<1x16xf32, #tpu.memory_space<vmem>>, %arg4: memref<1x256x16xf32, #tpu.memory_space<vmem>>) attributes {dimension_semantics = [#tpu.dimension_semantics<parallel>], iteration_bounds = array<i64: 2>, scalar_prefetch = 0 : i64, scratch_operands = 0 : i64, tpu.core_type = #tpu.core_type<tc>, window_params = [{transform_indices = @transform_0, window_bounds = array<i64: 1, 18, 18, 4>}, {pipeline_mode = #tpu.pipeline_mode<synchronous>, transform_indices = @transform_1, window_bounds = array<i64: 9, 4, 16>}, {pipeline_mode = #tpu.pipeline_mode<synchronous>, transform_indices = @transform_2, window_bounds = array<i64: 1, 16>}, {transform_indices = @transform_3, window_bounds = array<i64: 1, 256, 16>}]} {
    %cst = arith.constant 0.000000e+00 : f32
    %0 = vector.broadcast %cst : f32 to vector<256x16xf32>
    %c0 = arith.constant 0 : index
    %c0_0 = arith.constant 0 : index
    %c0_1 = arith.constant 0 : index
    %c0_2 = arith.constant 0 : index
    %1 = vector.load %arg1[%c0, %c0_0, %c0_1, %c0_2] : memref<1x18x18x4xf32, #tpu.memory_space<vmem>>, vector<1x16x16x4xf32>
    %2 = vector.shape_cast %1 : vector<1x16x16x4xf32> to vector<16x16x4xf32>
    %3 = vector.shape_cast %2 : vector<16x16x4xf32> to vector<256x4xf32>
    %4 = arith.truncf %3 : vector<256x4xf32> to vector<256x4xbf16>
    %c0_3 = arith.constant 0 : index
    %c0_4 = arith.constant 0 : index
    %c0_5 = arith.constant 0 : index
    %5 = vector.load %arg2[%c0_3, %c0_4, %c0_5] : memref<9x4x16xbf16, #tpu.memory_space<vmem>>, vector<1x4x16xbf16>
    %6 = vector.shape_cast %5 : vector<1x4x16xbf16> to vector<4x16xbf16>
    %cst_6 = arith.constant dense<0.000000e+00> : vector<256x16xf32>
    %7 = tpu.matmul %4, %6, %cst_6 {dimension_numbers = #tpu.dot_dimension_numbers<[1], [0], [0], [1], [0, 0, 1, 1], [], []>} : vector<256x4xbf16>, vector<4x16xbf16>, vector<256x16xf32> -> vector<256x16xf32>
    %8 = arith.addf %0, %7 : vector<256x16xf32>
    %c0_7 = arith.constant 0 : index
    %c0_8 = arith.constant 0 : index
    %c1 = arith.constant 1 : index
    %c0_9 = arith.constant 0 : index
    %9 = vector.load %arg1[%c0_7, %c0_8, %c1, %c0_9] : memref<1x18x18x4xf32, #tpu.memory_space<vmem>>, vector<1x16x16x4xf32>
    %10 = vector.shape_cast %9 : vector<1x16x16x4xf32> to vector<16x16x4xf32>
    %11 = vector.shape_cast %10 : vector<16x16x4xf32> to vector<256x4xf32>
    %12 = arith.truncf %11 : vector<256x4xf32> to vector<256x4xbf16>
    %c1_10 = arith.constant 1 : index
    %c0_11 = arith.constant 0 : index
    %c0_12 = arith.constant 0 : index
    %13 = vector.load %arg2[%c1_10, %c0_11, %c0_12] : memref<9x4x16xbf16, #tpu.memory_space<vmem>>, vector<1x4x16xbf16>
    %14 = vector.shape_cast %13 : vector<1x4x16xbf16> to vector<4x16xbf16>
    %cst_13 = arith.constant dense<0.000000e+00> : vector<256x16xf32>
    %15 = tpu.matmul %12, %14, %cst_13 {dimension_numbers = #tpu.dot_dimension_numbers<[1], [0], [0], [1], [0, 0, 1, 1], [], []>} : vector<256x4xbf16>, vector<4x16xbf16>, vector<256x16xf32> -> vector<256x16xf32>
    %16 = arith.addf %8, %15 : vector<256x16xf32>
    %c0_14 = arith.constant 0 : index
    %c0_15 = arith.constant 0 : index
    %c2 = arith.constant 2 : index
    %c0_16 = arith.constant 0 : index
    %17 = vector.load %arg1[%c0_14, %c0_15, %c2, %c0_16] : memref<1x18x18x4xf32, #tpu.memory_space<vmem>>, vector<1x16x16x4xf32>
    %18 = vector.shape_cast %17 : vector<1x16x16x4xf32> to vector<16x16x4xf32>
    %19 = vector.shape_cast %18 : vector<16x16x4xf32> to vector<256x4xf32>
    %20 = arith.truncf %19 : vector<256x4xf32> to vector<256x4xbf16>
    %c2_17 = arith.constant 2 : index
    %c0_18 = arith.constant 0 : index
    %c0_19 = arith.constant 0 : index
    %21 = vector.load %arg2[%c2_17, %c0_18, %c0_19] : memref<9x4x16xbf16, #tpu.memory_space<vmem>>, vector<1x4x16xbf16>
    %22 = vector.shape_cast %21 : vector<1x4x16xbf16> to vector<4x16xbf16>
    %cst_20 = arith.constant dense<0.000000e+00> : vector<256x16xf32>
    %23 = tpu.matmul %20, %22, %cst_20 {dimension_numbers = #tpu.dot_dimension_numbers<[1], [0], [0], [1], [0, 0, 1, 1], [], []>} : vector<256x4xbf16>, vector<4x16xbf16>, vector<256x16xf32> -> vector<256x16xf32>
    %24 = arith.addf %16, %23 : vector<256x16xf32>
    %c0_21 = arith.constant 0 : index
    %c1_22 = arith.constant 1 : index
    %c0_23 = arith.constant 0 : index
    %c0_24 = arith.constant 0 : index
    %25 = vector.load %arg1[%c0_21, %c1_22, %c0_23, %c0_24] : memref<1x18x18x4xf32, #tpu.memory_space<vmem>>, vector<1x16x16x4xf32>
    %26 = vector.shape_cast %25 : vector<1x16x16x4xf32> to vector<16x16x4xf32>
    %27 = vector.shape_cast %26 : vector<16x16x4xf32> to vector<256x4xf32>
    %28 = arith.truncf %27 : vector<256x4xf32> to vector<256x4xbf16>
    %c3 = arith.constant 3 : index
    %c0_25 = arith.constant 0 : index
    %c0_26 = arith.constant 0 : index
    %29 = vector.load %arg2[%c3, %c0_25, %c0_26] : memref<9x4x16xbf16, #tpu.memory_space<vmem>>, vector<1x4x16xbf16>
    %30 = vector.shape_cast %29 : vector<1x4x16xbf16> to vector<4x16xbf16>
    %cst_27 = arith.constant dense<0.000000e+00> : vector<256x16xf32>
    %31 = tpu.matmul %28, %30, %cst_27 {dimension_numbers = #tpu.dot_dimension_numbers<[1], [0], [0], [1], [0, 0, 1, 1], [], []>} : vector<256x4xbf16>, vector<4x16xbf16>, vector<256x16xf32> -> vector<256x16xf32>
    %32 = arith.addf %24, %31 : vector<256x16xf32>
    %c0_28 = arith.constant 0 : index
    %c1_29 = arith.constant 1 : index
    %c1_30 = arith.constant 1 : index
    %c0_31 = arith.constant 0 : index
    %33 = vector.load %arg1[%c0_28, %c1_29, %c1_30, %c0_31] : memref<1x18x18x4xf32, #tpu.memory_space<vmem>>, vector<1x16x16x4xf32>
    %34 = vector.shape_cast %33 : vector<1x16x16x4xf32> to vector<16x16x4xf32>
    %35 = vector.shape_cast %34 : vector<16x16x4xf32> to vector<256x4xf32>
    %36 = arith.truncf %35 : vector<256x4xf32> to vector<256x4xbf16>
    %c4 = arith.constant 4 : index
    %c0_32 = arith.constant 0 : index
    %c0_33 = arith.constant 0 : index
    %37 = vector.load %arg2[%c4, %c0_32, %c0_33] : memref<9x4x16xbf16, #tpu.memory_space<vmem>>, vector<1x4x16xbf16>
    %38 = vector.shape_cast %37 : vector<1x4x16xbf16> to vector<4x16xbf16>
    %cst_34 = arith.constant dense<0.000000e+00> : vector<256x16xf32>
    %39 = tpu.matmul %36, %38, %cst_34 {dimension_numbers = #tpu.dot_dimension_numbers<[1], [0], [0], [1], [0, 0, 1, 1], [], []>} : vector<256x4xbf16>, vector<4x16xbf16>, vector<256x16xf32> -> vector<256x16xf32>
    %40 = arith.addf %32, %39 : vector<256x16xf32>
    %c0_35 = arith.constant 0 : index
    %c1_36 = arith.constant 1 : index
    %c2_37 = arith.constant 2 : index
    %c0_38 = arith.constant 0 : index
    %41 = vector.load %arg1[%c0_35, %c1_36, %c2_37, %c0_38] : memref<1x18x18x4xf32, #tpu.memory_space<vmem>>, vector<1x16x16x4xf32>
    %42 = vector.shape_cast %41 : vector<1x16x16x4xf32> to vector<16x16x4xf32>
    %43 = vector.shape_cast %42 : vector<16x16x4xf32> to vector<256x4xf32>
    %44 = arith.truncf %43 : vector<256x4xf32> to vector<256x4xbf16>
    %c5 = arith.constant 5 : index
    %c0_39 = arith.constant 0 : index
    %c0_40 = arith.constant 0 : index
    %45 = vector.load %arg2[%c5, %c0_39, %c0_40] : memref<9x4x16xbf16, #tpu.memory_space<vmem>>, vector<1x4x16xbf16>
    %46 = vector.shape_cast %45 : vector<1x4x16xbf16> to vector<4x16xbf16>
    %cst_41 = arith.constant dense<0.000000e+00> : vector<256x16xf32>
    %47 = tpu.matmul %44, %46, %cst_41 {dimension_numbers = #tpu.dot_dimension_numbers<[1], [0], [0], [1], [0, 0, 1, 1], [], []>} : vector<256x4xbf16>, vector<4x16xbf16>, vector<256x16xf32> -> vector<256x16xf32>
    %48 = arith.addf %40, %47 : vector<256x16xf32>
    %c0_42 = arith.constant 0 : index
    %c2_43 = arith.constant 2 : index
    %c0_44 = arith.constant 0 : index
    %c0_45 = arith.constant 0 : index
    %49 = vector.load %arg1[%c0_42, %c2_43, %c0_44, %c0_45] : memref<1x18x18x4xf32, #tpu.memory_space<vmem>>, vector<1x16x16x4xf32>
    %50 = vector.shape_cast %49 : vector<1x16x16x4xf32> to vector<16x16x4xf32>
    %51 = vector.shape_cast %50 : vector<16x16x4xf32> to vector<256x4xf32>
    %52 = arith.truncf %51 : vector<256x4xf32> to vector<256x4xbf16>
    %c6 = arith.constant 6 : index
    %c0_46 = arith.constant 0 : index
    %c0_47 = arith.constant 0 : index
    %53 = vector.load %arg2[%c6, %c0_46, %c0_47] : memref<9x4x16xbf16, #tpu.memory_space<vmem>>, vector<1x4x16xbf16>
    %54 = vector.shape_cast %53 : vector<1x4x16xbf16> to vector<4x16xbf16>
    %cst_48 = arith.constant dense<0.000000e+00> : vector<256x16xf32>
    %55 = tpu.matmul %52, %54, %cst_48 {dimension_numbers = #tpu.dot_dimension_numbers<[1], [0], [0], [1], [0, 0, 1, 1], [], []>} : vector<256x4xbf16>, vector<4x16xbf16>, vector<256x16xf32> -> vector<256x16xf32>
    %56 = arith.addf %48, %55 : vector<256x16xf32>
    %c0_49 = arith.constant 0 : index
    %c2_50 = arith.constant 2 : index
    %c1_51 = arith.constant 1 : index
    %c0_52 = arith.constant 0 : index
    %57 = vector.load %arg1[%c0_49, %c2_50, %c1_51, %c0_52] : memref<1x18x18x4xf32, #tpu.memory_space<vmem>>, vector<1x16x16x4xf32>
    %58 = vector.shape_cast %57 : vector<1x16x16x4xf32> to vector<16x16x4xf32>
    %59 = vector.shape_cast %58 : vector<16x16x4xf32> to vector<256x4xf32>
    %60 = arith.truncf %59 : vector<256x4xf32> to vector<256x4xbf16>
    %c7 = arith.constant 7 : index
    %c0_53 = arith.constant 0 : index
    %c0_54 = arith.constant 0 : index
    %61 = vector.load %arg2[%c7, %c0_53, %c0_54] : memref<9x4x16xbf16, #tpu.memory_space<vmem>>, vector<1x4x16xbf16>
    %62 = vector.shape_cast %61 : vector<1x4x16xbf16> to vector<4x16xbf16>
    %cst_55 = arith.constant dense<0.000000e+00> : vector<256x16xf32>
    %63 = tpu.matmul %60, %62, %cst_55 {dimension_numbers = #tpu.dot_dimension_numbers<[1], [0], [0], [1], [0, 0, 1, 1], [], []>} : vector<256x4xbf16>, vector<4x16xbf16>, vector<256x16xf32> -> vector<256x16xf32>
    %64 = arith.addf %56, %63 : vector<256x16xf32>
    %c0_56 = arith.constant 0 : index
    %c2_57 = arith.constant 2 : index
    %c2_58 = arith.constant 2 : index
    %c0_59 = arith.constant 0 : index
    %65 = vector.load %arg1[%c0_56, %c2_57, %c2_58, %c0_59] : memref<1x18x18x4xf32, #tpu.memory_space<vmem>>, vector<1x16x16x4xf32>
    %66 = vector.shape_cast %65 : vector<1x16x16x4xf32> to vector<16x16x4xf32>
    %67 = vector.shape_cast %66 : vector<16x16x4xf32> to vector<256x4xf32>
    %68 = arith.truncf %67 : vector<256x4xf32> to vector<256x4xbf16>
    %c8 = arith.constant 8 : index
    %c0_60 = arith.constant 0 : index
    %c0_61 = arith.constant 0 : index
    %69 = vector.load %arg2[%c8, %c0_60, %c0_61] : memref<9x4x16xbf16, #tpu.memory_space<vmem>>, vector<1x4x16xbf16>
    %70 = vector.shape_cast %69 : vector<1x4x16xbf16> to vector<4x16xbf16>
    %cst_62 = arith.constant dense<0.000000e+00> : vector<256x16xf32>
    %71 = tpu.matmul %68, %70, %cst_62 {dimension_numbers = #tpu.dot_dimension_numbers<[1], [0], [0], [1], [0, 0, 1, 1], [], []>} : vector<256x4xbf16>, vector<4x16xbf16>, vector<256x16xf32> -> vector<256x16xf32>
    %72 = arith.addf %64, %71 : vector<256x16xf32>
    %c0_63 = arith.constant 0 : index
    %c0_64 = arith.constant 0 : index
    %73 = vector.load %arg3[%c0_63, %c0_64] : memref<1x16xf32, #tpu.memory_space<vmem>>, vector<1x16xf32>
    %74 = vector.broadcast %73 : vector<1x16xf32> to vector<256x16xf32>
    %75 = arith.addf %72, %74 : vector<256x16xf32>
    %cst_65 = arith.constant 0.000000e+00 : f32
    %76 = vector.broadcast %cst_65 : f32 to vector<256x16xf32>
    %77 = arith.maximumf %75, %76 : vector<256x16xf32>
    %c0_66 = arith.constant 0 : index
    %c0_67 = arith.constant 0 : index
    %c0_68 = arith.constant 0 : index
    %78 = vector.load %arg4[%c0_66, %c0_67, %c0_68] : memref<1x256x16xf32, #tpu.memory_space<vmem>>, vector<1x256x16xf32>
    %79 = vector.shape_cast %78 : vector<1x256x16xf32> to vector<256x16xf32>
    %80 = vector.shape_cast %77 : vector<256x16xf32> to vector<1x256x16xf32>
    tpu.vector_store %arg4[%c0_66, %c0_67, %c0_68], %80 {strides = array<i32>} : memref<1x256x16xf32, #tpu.memory_space<vmem>>, vector<1x256x16xf32>,
    return
  }
  func.func @transform_0(%arg0: i32) -> (i32, i32, i32, i32) {
    %c0_i32 = arith.constant 0 : i32
    %c0_i32_0 = arith.constant 0 : i32
    %c0_i32_1 = arith.constant 0 : i32
    %c0_i32_2 = arith.constant 0 : i32
    return %arg0, %c0_i32, %c0_i32_0, %c0_i32_1 : i32, i32, i32, i32
  }
  func.func @transform_1(%arg0: i32) -> (i32, i32, i32) {
    %c0_i32 = arith.constant 0 : i32
    %c0_i32_0 = arith.constant 0 : i32
    %c0_i32_1 = arith.constant 0 : i32
    %c0_i32_2 = arith.constant 0 : i32
    return %c0_i32, %c0_i32_0, %c0_i32_1 : i32, i32, i32
  }
  func.func @transform_2(%arg0: i32) -> (i32, i32) {
    %c0_i32 = arith.constant 0 : i32
    %c0_i32_0 = arith.constant 0 : i32
    %c0_i32_1 = arith.constant 0 : i32
    return %c0_i32, %c0_i32_0 : i32, i32
  }
  func.func @transform_3(%arg0: i32) -> (i32, i32, i32) {
    %c0_i32 = arith.constant 0 : i32
    %c0_i32_0 = arith.constant 0 : i32
    %c0_i32_1 = arith.constant 0 : i32
    return %arg0, %c0_i32, %c0_i32_0 : i32, i32, i32
  }
}

module attributes {stable_mosaic.version = 11 : i64} {
  func.func @_conv3x3_fused_kernel(%arg0: i32, %arg1: memref<1x10x10x16xf32, #tpu.memory_space<vmem>>, %arg2: memref<9x16x32xbf16, #tpu.memory_space<vmem>>, %arg3: memref<1x32xf32, #tpu.memory_space<vmem>>, %arg4: memref<1x64x32xf32, #tpu.memory_space<vmem>>) attributes {dimension_semantics = [#tpu.dimension_semantics<parallel>], iteration_bounds = array<i64: 2>, scalar_prefetch = 0 : i64, scratch_operands = 0 : i64, tpu.core_type = #tpu.core_type<tc>, window_params = [{transform_indices = @transform_0, window_bounds = array<i64: 1, 10, 10, 16>}, {pipeline_mode = #tpu.pipeline_mode<synchronous>, transform_indices = @transform_1, window_bounds = array<i64: 9, 16, 32>}, {pipeline_mode = #tpu.pipeline_mode<synchronous>, transform_indices = @transform_2, window_bounds = array<i64: 1, 32>}, {transform_indices = @transform_3, window_bounds = array<i64: 1, 64, 32>}]} {
    %cst = arith.constant 0.000000e+00 : f32
    %0 = vector.broadcast %cst : f32 to vector<64x32xf32>
    %c0 = arith.constant 0 : index
    %c0_0 = arith.constant 0 : index
    %c0_1 = arith.constant 0 : index
    %c0_2 = arith.constant 0 : index
    %1 = vector.load %arg1[%c0, %c0_0, %c0_1, %c0_2] : memref<1x10x10x16xf32, #tpu.memory_space<vmem>>, vector<1x8x8x16xf32>
    %2 = vector.shape_cast %1 : vector<1x8x8x16xf32> to vector<8x8x16xf32>
    %3 = vector.shape_cast %2 : vector<8x8x16xf32> to vector<64x16xf32>
    %4 = arith.truncf %3 : vector<64x16xf32> to vector<64x16xbf16>
    %c0_3 = arith.constant 0 : index
    %c0_4 = arith.constant 0 : index
    %c0_5 = arith.constant 0 : index
    %5 = vector.load %arg2[%c0_3, %c0_4, %c0_5] : memref<9x16x32xbf16, #tpu.memory_space<vmem>>, vector<1x16x32xbf16>
    %6 = vector.shape_cast %5 : vector<1x16x32xbf16> to vector<16x32xbf16>
    %cst_6 = arith.constant dense<0.000000e+00> : vector<64x32xf32>
    %7 = tpu.matmul %4, %6, %cst_6 {dimension_numbers = #tpu.dot_dimension_numbers<[1], [0], [0], [1], [0, 0, 1, 1], [], []>} : vector<64x16xbf16>, vector<16x32xbf16>, vector<64x32xf32> -> vector<64x32xf32>
    %8 = arith.addf %0, %7 : vector<64x32xf32>
    %c0_7 = arith.constant 0 : index
    %c0_8 = arith.constant 0 : index
    %c1 = arith.constant 1 : index
    %c0_9 = arith.constant 0 : index
    %9 = vector.load %arg1[%c0_7, %c0_8, %c1, %c0_9] : memref<1x10x10x16xf32, #tpu.memory_space<vmem>>, vector<1x8x8x16xf32>
    %10 = vector.shape_cast %9 : vector<1x8x8x16xf32> to vector<8x8x16xf32>
    %11 = vector.shape_cast %10 : vector<8x8x16xf32> to vector<64x16xf32>
    %12 = arith.truncf %11 : vector<64x16xf32> to vector<64x16xbf16>
    %c1_10 = arith.constant 1 : index
    %c0_11 = arith.constant 0 : index
    %c0_12 = arith.constant 0 : index
    %13 = vector.load %arg2[%c1_10, %c0_11, %c0_12] : memref<9x16x32xbf16, #tpu.memory_space<vmem>>, vector<1x16x32xbf16>
    %14 = vector.shape_cast %13 : vector<1x16x32xbf16> to vector<16x32xbf16>
    %cst_13 = arith.constant dense<0.000000e+00> : vector<64x32xf32>
    %15 = tpu.matmul %12, %14, %cst_13 {dimension_numbers = #tpu.dot_dimension_numbers<[1], [0], [0], [1], [0, 0, 1, 1], [], []>} : vector<64x16xbf16>, vector<16x32xbf16>, vector<64x32xf32> -> vector<64x32xf32>
    %16 = arith.addf %8, %15 : vector<64x32xf32>
    %c0_14 = arith.constant 0 : index
    %c0_15 = arith.constant 0 : index
    %c2 = arith.constant 2 : index
    %c0_16 = arith.constant 0 : index
    %17 = vector.load %arg1[%c0_14, %c0_15, %c2, %c0_16] : memref<1x10x10x16xf32, #tpu.memory_space<vmem>>, vector<1x8x8x16xf32>
    %18 = vector.shape_cast %17 : vector<1x8x8x16xf32> to vector<8x8x16xf32>
    %19 = vector.shape_cast %18 : vector<8x8x16xf32> to vector<64x16xf32>
    %20 = arith.truncf %19 : vector<64x16xf32> to vector<64x16xbf16>
    %c2_17 = arith.constant 2 : index
    %c0_18 = arith.constant 0 : index
    %c0_19 = arith.constant 0 : index
    %21 = vector.load %arg2[%c2_17, %c0_18, %c0_19] : memref<9x16x32xbf16, #tpu.memory_space<vmem>>, vector<1x16x32xbf16>
    %22 = vector.shape_cast %21 : vector<1x16x32xbf16> to vector<16x32xbf16>
    %cst_20 = arith.constant dense<0.000000e+00> : vector<64x32xf32>
    %23 = tpu.matmul %20, %22, %cst_20 {dimension_numbers = #tpu.dot_dimension_numbers<[1], [0], [0], [1], [0, 0, 1, 1], [], []>} : vector<64x16xbf16>, vector<16x32xbf16>, vector<64x32xf32> -> vector<64x32xf32>
    %24 = arith.addf %16, %23 : vector<64x32xf32>
    %c0_21 = arith.constant 0 : index
    %c1_22 = arith.constant 1 : index
    %c0_23 = arith.constant 0 : index
    %c0_24 = arith.constant 0 : index
    %25 = vector.load %arg1[%c0_21, %c1_22, %c0_23, %c0_24] : memref<1x10x10x16xf32, #tpu.memory_space<vmem>>, vector<1x8x8x16xf32>
    %26 = vector.shape_cast %25 : vector<1x8x8x16xf32> to vector<8x8x16xf32>
    %27 = vector.shape_cast %26 : vector<8x8x16xf32> to vector<64x16xf32>
    %28 = arith.truncf %27 : vector<64x16xf32> to vector<64x16xbf16>
    %c3 = arith.constant 3 : index
    %c0_25 = arith.constant 0 : index
    %c0_26 = arith.constant 0 : index
    %29 = vector.load %arg2[%c3, %c0_25, %c0_26] : memref<9x16x32xbf16, #tpu.memory_space<vmem>>, vector<1x16x32xbf16>
    %30 = vector.shape_cast %29 : vector<1x16x32xbf16> to vector<16x32xbf16>
    %cst_27 = arith.constant dense<0.000000e+00> : vector<64x32xf32>
    %31 = tpu.matmul %28, %30, %cst_27 {dimension_numbers = #tpu.dot_dimension_numbers<[1], [0], [0], [1], [0, 0, 1, 1], [], []>} : vector<64x16xbf16>, vector<16x32xbf16>, vector<64x32xf32> -> vector<64x32xf32>
    %32 = arith.addf %24, %31 : vector<64x32xf32>
    %c0_28 = arith.constant 0 : index
    %c1_29 = arith.constant 1 : index
    %c1_30 = arith.constant 1 : index
    %c0_31 = arith.constant 0 : index
    %33 = vector.load %arg1[%c0_28, %c1_29, %c1_30, %c0_31] : memref<1x10x10x16xf32, #tpu.memory_space<vmem>>, vector<1x8x8x16xf32>
    %34 = vector.shape_cast %33 : vector<1x8x8x16xf32> to vector<8x8x16xf32>
    %35 = vector.shape_cast %34 : vector<8x8x16xf32> to vector<64x16xf32>
    %36 = arith.truncf %35 : vector<64x16xf32> to vector<64x16xbf16>
    %c4 = arith.constant 4 : index
    %c0_32 = arith.constant 0 : index
    %c0_33 = arith.constant 0 : index
    %37 = vector.load %arg2[%c4, %c0_32, %c0_33] : memref<9x16x32xbf16, #tpu.memory_space<vmem>>, vector<1x16x32xbf16>
    %38 = vector.shape_cast %37 : vector<1x16x32xbf16> to vector<16x32xbf16>
    %cst_34 = arith.constant dense<0.000000e+00> : vector<64x32xf32>
    %39 = tpu.matmul %36, %38, %cst_34 {dimension_numbers = #tpu.dot_dimension_numbers<[1], [0], [0], [1], [0, 0, 1, 1], [], []>} : vector<64x16xbf16>, vector<16x32xbf16>, vector<64x32xf32> -> vector<64x32xf32>
    %40 = arith.addf %32, %39 : vector<64x32xf32>
    %c0_35 = arith.constant 0 : index
    %c1_36 = arith.constant 1 : index
    %c2_37 = arith.constant 2 : index
    %c0_38 = arith.constant 0 : index
    %41 = vector.load %arg1[%c0_35, %c1_36, %c2_37, %c0_38] : memref<1x10x10x16xf32, #tpu.memory_space<vmem>>, vector<1x8x8x16xf32>
    %42 = vector.shape_cast %41 : vector<1x8x8x16xf32> to vector<8x8x16xf32>
    %43 = vector.shape_cast %42 : vector<8x8x16xf32> to vector<64x16xf32>
    %44 = arith.truncf %43 : vector<64x16xf32> to vector<64x16xbf16>
    %c5 = arith.constant 5 : index
    %c0_39 = arith.constant 0 : index
    %c0_40 = arith.constant 0 : index
    %45 = vector.load %arg2[%c5, %c0_39, %c0_40] : memref<9x16x32xbf16, #tpu.memory_space<vmem>>, vector<1x16x32xbf16>
    %46 = vector.shape_cast %45 : vector<1x16x32xbf16> to vector<16x32xbf16>
    %cst_41 = arith.constant dense<0.000000e+00> : vector<64x32xf32>
    %47 = tpu.matmul %44, %46, %cst_41 {dimension_numbers = #tpu.dot_dimension_numbers<[1], [0], [0], [1], [0, 0, 1, 1], [], []>} : vector<64x16xbf16>, vector<16x32xbf16>, vector<64x32xf32> -> vector<64x32xf32>
    %48 = arith.addf %40, %47 : vector<64x32xf32>
    %c0_42 = arith.constant 0 : index
    %c2_43 = arith.constant 2 : index
    %c0_44 = arith.constant 0 : index
    %c0_45 = arith.constant 0 : index
    %49 = vector.load %arg1[%c0_42, %c2_43, %c0_44, %c0_45] : memref<1x10x10x16xf32, #tpu.memory_space<vmem>>, vector<1x8x8x16xf32>
    %50 = vector.shape_cast %49 : vector<1x8x8x16xf32> to vector<8x8x16xf32>
    %51 = vector.shape_cast %50 : vector<8x8x16xf32> to vector<64x16xf32>
    %52 = arith.truncf %51 : vector<64x16xf32> to vector<64x16xbf16>
    %c6 = arith.constant 6 : index
    %c0_46 = arith.constant 0 : index
    %c0_47 = arith.constant 0 : index
    %53 = vector.load %arg2[%c6, %c0_46, %c0_47] : memref<9x16x32xbf16, #tpu.memory_space<vmem>>, vector<1x16x32xbf16>
    %54 = vector.shape_cast %53 : vector<1x16x32xbf16> to vector<16x32xbf16>
    %cst_48 = arith.constant dense<0.000000e+00> : vector<64x32xf32>
    %55 = tpu.matmul %52, %54, %cst_48 {dimension_numbers = #tpu.dot_dimension_numbers<[1], [0], [0], [1], [0, 0, 1, 1], [], []>} : vector<64x16xbf16>, vector<16x32xbf16>, vector<64x32xf32> -> vector<64x32xf32>
    %56 = arith.addf %48, %55 : vector<64x32xf32>
    %c0_49 = arith.constant 0 : index
    %c2_50 = arith.constant 2 : index
    %c1_51 = arith.constant 1 : index
    %c0_52 = arith.constant 0 : index
    %57 = vector.load %arg1[%c0_49, %c2_50, %c1_51, %c0_52] : memref<1x10x10x16xf32, #tpu.memory_space<vmem>>, vector<1x8x8x16xf32>
    %58 = vector.shape_cast %57 : vector<1x8x8x16xf32> to vector<8x8x16xf32>
    %59 = vector.shape_cast %58 : vector<8x8x16xf32> to vector<64x16xf32>
    %60 = arith.truncf %59 : vector<64x16xf32> to vector<64x16xbf16>
    %c7 = arith.constant 7 : index
    %c0_53 = arith.constant 0 : index
    %c0_54 = arith.constant 0 : index
    %61 = vector.load %arg2[%c7, %c0_53, %c0_54] : memref<9x16x32xbf16, #tpu.memory_space<vmem>>, vector<1x16x32xbf16>
    %62 = vector.shape_cast %61 : vector<1x16x32xbf16> to vector<16x32xbf16>
    %cst_55 = arith.constant dense<0.000000e+00> : vector<64x32xf32>
    %63 = tpu.matmul %60, %62, %cst_55 {dimension_numbers = #tpu.dot_dimension_numbers<[1], [0], [0], [1], [0, 0, 1, 1], [], []>} : vector<64x16xbf16>, vector<16x32xbf16>, vector<64x32xf32> -> vector<64x32xf32>
    %64 = arith.addf %56, %63 : vector<64x32xf32>
    %c0_56 = arith.constant 0 : index
    %c2_57 = arith.constant 2 : index
    %c2_58 = arith.constant 2 : index
    %c0_59 = arith.constant 0 : index
    %65 = vector.load %arg1[%c0_56, %c2_57, %c2_58, %c0_59] : memref<1x10x10x16xf32, #tpu.memory_space<vmem>>, vector<1x8x8x16xf32>
    %66 = vector.shape_cast %65 : vector<1x8x8x16xf32> to vector<8x8x16xf32>
    %67 = vector.shape_cast %66 : vector<8x8x16xf32> to vector<64x16xf32>
    %68 = arith.truncf %67 : vector<64x16xf32> to vector<64x16xbf16>
    %c8 = arith.constant 8 : index
    %c0_60 = arith.constant 0 : index
    %c0_61 = arith.constant 0 : index
    %69 = vector.load %arg2[%c8, %c0_60, %c0_61] : memref<9x16x32xbf16, #tpu.memory_space<vmem>>, vector<1x16x32xbf16>
    %70 = vector.shape_cast %69 : vector<1x16x32xbf16> to vector<16x32xbf16>
    %cst_62 = arith.constant dense<0.000000e+00> : vector<64x32xf32>
    %71 = tpu.matmul %68, %70, %cst_62 {dimension_numbers = #tpu.dot_dimension_numbers<[1], [0], [0], [1], [0, 0, 1, 1], [], []>} : vector<64x16xbf16>, vector<16x32xbf16>, vector<64x32xf32> -> vector<64x32xf32>
    %72 = arith.addf %64, %71 : vector<64x32xf32>
    %c0_63 = arith.constant 0 : index
    %c0_64 = arith.constant 0 : index
    %73 = vector.load %arg3[%c0_63, %c0_64] : memref<1x32xf32, #tpu.memory_space<vmem>>, vector<1x32xf32>
    %74 = vector.broadcast %73 : vector<1x32xf32> to vector<64x32xf32>
    %75 = arith.addf %72, %74 : vector<64x32xf32>
    %cst_65 = arith.constant 0.000000e+00 : f32
    %76 = vector.broadcast %cst_65 : f32 to vector<64x32xf32>
    %77 = arith.maximumf %75, %76 : vector<64x32xf32>
    %c0_66 = arith.constant 0 : index
    %c0_67 = arith.constant 0 : index
    %c0_68 = arith.constant 0 : index
    %78 = vector.load %arg4[%c0_66, %c0_67, %c0_68] : memref<1x64x32xf32, #tpu.memory_space<vmem>>, vector<1x64x32xf32>
    %79 = vector.shape_cast %78 : vector<1x64x32xf32> to vector<64x32xf32>
    %80 = vector.shape_cast %77 : vector<64x32xf32> to vector<1x64x32xf32>
    tpu.vector_store %arg4[%c0_66, %c0_67, %c0_68], %80 {strides = array<i32>} : memref<1x64x32xf32, #tpu.memory_space<vmem>>, vector<1x64x32xf32>,
    return
  }
  func.func @transform_0(%arg0: i32) -> (i32, i32, i32, i32) {
    %c0_i32 = arith.constant 0 : i32
    %c0_i32_0 = arith.constant 0 : i32
    %c0_i32_1 = arith.constant 0 : i32
    %c0_i32_2 = arith.constant 0 : i32
    return %arg0, %c0_i32, %c0_i32_0, %c0_i32_1 : i32, i32, i32, i32
  }
  func.func @transform_1(%arg0: i32) -> (i32, i32, i32) {
    %c0_i32 = arith.constant 0 : i32
    %c0_i32_0 = arith.constant 0 : i32
    %c0_i32_1 = arith.constant 0 : i32
    %c0_i32_2 = arith.constant 0 : i32
    return %c0_i32, %c0_i32_0, %c0_i32_1 : i32, i32, i32
  }
  func.func @transform_2(%arg0: i32) -> (i32, i32) {
    %c0_i32 = arith.constant 0 : i32
    %c0_i32_0 = arith.constant 0 : i32
    %c0_i32_1 = arith.constant 0 : i32
    return %c0_i32, %c0_i32_0 : i32, i32
  }
  func.func @transform_3(%arg0: i32) -> (i32, i32, i32) {
    %c0_i32 = arith.constant 0 : i32
    %c0_i32_0 = arith.constant 0 : i32
    %c0_i32_1 = arith.constant 0 : i32
    return %arg0, %c0_i32, %c0_i32_0 : i32, i32, i32
  }
}

module attributes {stable_mosaic.version = 11 : i64} {
  func.func @_gemm_bias_kernel(%arg0: i32, %arg1: memref<32x288xbf16, #tpu.memory_space<vmem>>, %arg2: memref<288x64xbf16, #tpu.memory_space<vmem>>, %arg3: memref<1x64xf32, #tpu.memory_space<vmem>>, %arg4: memref<32x64xf32, #tpu.memory_space<vmem>>) attributes {dimension_semantics = [#tpu.dimension_semantics<parallel>], iteration_bounds = array<i64: 1>, scalar_prefetch = 0 : i64, scratch_operands = 0 : i64, tpu.core_type = #tpu.core_type<tc>, window_params = [{transform_indices = @transform_0, window_bounds = array<i64: 32, 288>}, {pipeline_mode = #tpu.pipeline_mode<synchronous>, transform_indices = @transform_1, window_bounds = array<i64: 288, 64>}, {pipeline_mode = #tpu.pipeline_mode<synchronous>, transform_indices = @transform_2, window_bounds = array<i64: 1, 64>}, {transform_indices = @transform_3, window_bounds = array<i64: 32, 64>}]} {
    %c0 = arith.constant 0 : index
    %c0_0 = arith.constant 0 : index
    %0 = vector.load %arg1[%c0, %c0_0] : memref<32x288xbf16, #tpu.memory_space<vmem>>, vector<32x288xbf16>
    %c0_1 = arith.constant 0 : index
    %c0_2 = arith.constant 0 : index
    %1 = vector.load %arg2[%c0_1, %c0_2] : memref<288x64xbf16, #tpu.memory_space<vmem>>, vector<288x64xbf16>
    %cst = arith.constant dense<0.000000e+00> : vector<32x64xf32>
    %2 = tpu.matmul %0, %1, %cst {dimension_numbers = #tpu.dot_dimension_numbers<[1], [0], [0], [1], [0, 0, 1, 1], [], []>} : vector<32x288xbf16>, vector<288x64xbf16>, vector<32x64xf32> -> vector<32x64xf32>
    %c0_3 = arith.constant 0 : index
    %c0_4 = arith.constant 0 : index
    %3 = vector.load %arg3[%c0_3, %c0_4] : memref<1x64xf32, #tpu.memory_space<vmem>>, vector<1x64xf32>
    %4 = vector.broadcast %3 : vector<1x64xf32> to vector<32x64xf32>
    %5 = arith.addf %2, %4 : vector<32x64xf32>
    %cst_5 = arith.constant 0.000000e+00 : f32
    %6 = vector.broadcast %cst_5 : f32 to vector<32x64xf32>
    %7 = arith.maximumf %5, %6 : vector<32x64xf32>
    %c0_6 = arith.constant 0 : index
    %c0_7 = arith.constant 0 : index
    %8 = vector.load %arg4[%c0_6, %c0_7] : memref<32x64xf32, #tpu.memory_space<vmem>>, vector<32x64xf32>
    tpu.vector_store %arg4[%c0_6, %c0_7], %7 {strides = array<i32>} : memref<32x64xf32, #tpu.memory_space<vmem>>, vector<32x64xf32>,
    return
  }
  func.func @transform_0(%arg0: i32) -> (i32, i32) {
    %c0_i32 = arith.constant 0 : i32
    %c0_i32_0 = arith.constant 0 : i32
    return %arg0, %c0_i32 : i32, i32
  }
  func.func @transform_1(%arg0: i32) -> (i32, i32) {
    %c0_i32 = arith.constant 0 : i32
    %c0_i32_0 = arith.constant 0 : i32
    %c0_i32_1 = arith.constant 0 : i32
    return %c0_i32, %c0_i32_0 : i32, i32
  }
  func.func @transform_2(%arg0: i32) -> (i32, i32) {
    %c0_i32 = arith.constant 0 : i32
    %c0_i32_0 = arith.constant 0 : i32
    %c0_i32_1 = arith.constant 0 : i32
    return %c0_i32, %c0_i32_0 : i32, i32
  }
  func.func @transform_3(%arg0: i32) -> (i32, i32) {
    %c0_i32 = arith.constant 0 : i32
    %c0_i32_0 = arith.constant 0 : i32
    return %arg0, %c0_i32 : i32, i32
  }
}

module attributes {stable_mosaic.version = 11 : i64} {
  func.func @_gemm_bias_kernel(%arg0: i32, %arg1: memref<8x576xbf16, #tpu.memory_space<vmem>>, %arg2: memref<576x128xbf16, #tpu.memory_space<vmem>>, %arg3: memref<1x128xf32, #tpu.memory_space<vmem>>, %arg4: memref<8x128xf32, #tpu.memory_space<vmem>>) attributes {dimension_semantics = [#tpu.dimension_semantics<parallel>], iteration_bounds = array<i64: 1>, scalar_prefetch = 0 : i64, scratch_operands = 0 : i64, tpu.core_type = #tpu.core_type<tc>, window_params = [{transform_indices = @transform_0, window_bounds = array<i64: 8, 576>}, {pipeline_mode = #tpu.pipeline_mode<synchronous>, transform_indices = @transform_1, window_bounds = array<i64: 576, 128>}, {pipeline_mode = #tpu.pipeline_mode<synchronous>, transform_indices = @transform_2, window_bounds = array<i64: 1, 128>}, {transform_indices = @transform_3, window_bounds = array<i64: 8, 128>}]} {
    %c0 = arith.constant 0 : index
    %c0_0 = arith.constant 0 : index
    %0 = vector.load %arg1[%c0, %c0_0] : memref<8x576xbf16, #tpu.memory_space<vmem>>, vector<8x576xbf16>
    %c0_1 = arith.constant 0 : index
    %c0_2 = arith.constant 0 : index
    %1 = vector.load %arg2[%c0_1, %c0_2] : memref<576x128xbf16, #tpu.memory_space<vmem>>, vector<576x128xbf16>
    %cst = arith.constant dense<0.000000e+00> : vector<8x128xf32>
    %2 = tpu.matmul %0, %1, %cst {dimension_numbers = #tpu.dot_dimension_numbers<[1], [0], [0], [1], [0, 0, 1, 1], [], []>} : vector<8x576xbf16>, vector<576x128xbf16>, vector<8x128xf32> -> vector<8x128xf32>
    %c0_3 = arith.constant 0 : index
    %c0_4 = arith.constant 0 : index
    %3 = vector.load %arg3[%c0_3, %c0_4] : memref<1x128xf32, #tpu.memory_space<vmem>>, vector<1x128xf32>
    %4 = vector.broadcast %3 : vector<1x128xf32> to vector<8x128xf32>
    %5 = arith.addf %2, %4 : vector<8x128xf32>
    %cst_5 = arith.constant 0.000000e+00 : f32
    %6 = vector.broadcast %cst_5 : f32 to vector<8x128xf32>
    %7 = arith.maximumf %5, %6 : vector<8x128xf32>
    %c0_6 = arith.constant 0 : index
    %c0_7 = arith.constant 0 : index
    %8 = vector.load %arg4[%c0_6, %c0_7] : memref<8x128xf32, #tpu.memory_space<vmem>>, vector<8x128xf32>
    tpu.vector_store %arg4[%c0_6, %c0_7], %7 {strides = array<i32>} : memref<8x128xf32, #tpu.memory_space<vmem>>, vector<8x128xf32>,
    return
  }
  func.func @transform_0(%arg0: i32) -> (i32, i32) {
    %c0_i32 = arith.constant 0 : i32
    %c0_i32_0 = arith.constant 0 : i32
    return %arg0, %c0_i32 : i32, i32
  }
  func.func @transform_1(%arg0: i32) -> (i32, i32) {
    %c0_i32 = arith.constant 0 : i32
    %c0_i32_0 = arith.constant 0 : i32
    %c0_i32_1 = arith.constant 0 : i32
    return %c0_i32, %c0_i32_0 : i32, i32
  }
  func.func @transform_2(%arg0: i32) -> (i32, i32) {
    %c0_i32 = arith.constant 0 : i32
    %c0_i32_0 = arith.constant 0 : i32
    %c0_i32_1 = arith.constant 0 : i32
    return %c0_i32, %c0_i32_0 : i32, i32
  }
  func.func @transform_3(%arg0: i32) -> (i32, i32) {
    %c0_i32 = arith.constant 0 : i32
    %c0_i32_0 = arith.constant 0 : i32
    return %arg0, %c0_i32 : i32, i32
  }
}

module attributes {stable_mosaic.version = 11 : i64} {
  func.func @_loc_head_kernel(%arg0: memref<2x128xf32, #tpu.memory_space<vmem>>, %arg1: memref<128x64xf32, #tpu.memory_space<vmem>>, %arg2: memref<1x64xf32, #tpu.memory_space<vmem>>, %arg3: memref<64x40xf32, #tpu.memory_space<vmem>>, %arg4: memref<1x40xf32, #tpu.memory_space<vmem>>, %arg5: memref<40x6xf32, #tpu.memory_space<vmem>>, %arg6: memref<1x6xf32, #tpu.memory_space<vmem>>, %arg7: memref<2x40xf32, #tpu.memory_space<vmem>>, %arg8: memref<2x6xf32, #tpu.memory_space<vmem>>) attributes {dimension_semantics = [], scalar_prefetch = 0 : i64, scratch_operands = 0 : i64, tpu.core_type = #tpu.core_type<tc>} {
    %c0 = arith.constant 0 : index
    %c0_0 = arith.constant 0 : index
    %0 = vector.load %arg0[%c0, %c0_0] : memref<2x128xf32, #tpu.memory_space<vmem>>, vector<2x128xf32>
    %c0_1 = arith.constant 0 : index
    %c0_2 = arith.constant 0 : index
    %1 = vector.load %arg1[%c0_1, %c0_2] : memref<128x64xf32, #tpu.memory_space<vmem>>, vector<128x64xf32>
    %cst = arith.constant dense<0.000000e+00> : vector<2x64xf32>
    %2 = tpu.matmul %0, %1, %cst {dimension_numbers = #tpu.dot_dimension_numbers<[1], [0], [0], [1], [0, 0, 1, 1], [], []>} : vector<2x128xf32>, vector<128x64xf32>, vector<2x64xf32> -> vector<2x64xf32>
    %c0_3 = arith.constant 0 : index
    %c0_4 = arith.constant 0 : index
    %3 = vector.load %arg2[%c0_3, %c0_4] : memref<1x64xf32, #tpu.memory_space<vmem>>, vector<1x64xf32>
    %4 = vector.broadcast %3 : vector<1x64xf32> to vector<2x64xf32>
    %5 = arith.addf %2, %4 : vector<2x64xf32>
    %cst_5 = arith.constant 0.000000e+00 : f32
    %6 = vector.broadcast %cst_5 : f32 to vector<2x64xf32>
    %7 = arith.maximumf %5, %6 : vector<2x64xf32>
    %c0_6 = arith.constant 0 : index
    %c0_7 = arith.constant 0 : index
    %8 = vector.load %arg3[%c0_6, %c0_7] : memref<64x40xf32, #tpu.memory_space<vmem>>, vector<64x40xf32>
    %cst_8 = arith.constant dense<0.000000e+00> : vector<2x40xf32>
    %9 = tpu.matmul %7, %8, %cst_8 {dimension_numbers = #tpu.dot_dimension_numbers<[1], [0], [0], [1], [0, 0, 1, 1], [], []>} : vector<2x64xf32>, vector<64x40xf32>, vector<2x40xf32> -> vector<2x40xf32>
    %c0_9 = arith.constant 0 : index
    %c0_10 = arith.constant 0 : index
    %10 = vector.load %arg4[%c0_9, %c0_10] : memref<1x40xf32, #tpu.memory_space<vmem>>, vector<1x40xf32>
    %11 = vector.broadcast %10 : vector<1x40xf32> to vector<2x40xf32>
    %12 = arith.addf %9, %11 : vector<2x40xf32>
    %c0_11 = arith.constant 0 : index
    %c0_12 = arith.constant 0 : index
    %13 = vector.load %arg5[%c0_11, %c0_12] : memref<40x6xf32, #tpu.memory_space<vmem>>, vector<40x6xf32>
    %cst_13 = arith.constant dense<0.000000e+00> : vector<2x6xf32>
    %14 = tpu.matmul %12, %13, %cst_13 {dimension_numbers = #tpu.dot_dimension_numbers<[1], [0], [0], [1], [0, 0, 1, 1], [], []>} : vector<2x40xf32>, vector<40x6xf32>, vector<2x6xf32> -> vector<2x6xf32>
    %c0_14 = arith.constant 0 : index
    %c0_15 = arith.constant 0 : index
    %15 = vector.load %arg6[%c0_14, %c0_15] : memref<1x6xf32, #tpu.memory_space<vmem>>, vector<1x6xf32>
    %16 = vector.broadcast %15 : vector<1x6xf32> to vector<2x6xf32>
    %17 = arith.addf %14, %16 : vector<2x6xf32>
    %c0_16 = arith.constant 0 : index
    %c0_17 = arith.constant 0 : index
    %18 = vector.load %arg7[%c0_16, %c0_17] : memref<2x40xf32, #tpu.memory_space<vmem>>, vector<2x40xf32>
    tpu.vector_store %arg7[%c0_16, %c0_17], %12 {strides = array<i32>} : memref<2x40xf32, #tpu.memory_space<vmem>>, vector<2x40xf32>,
    %c0_18 = arith.constant 0 : index
    %c0_19 = arith.constant 0 : index
    %19 = vector.load %arg8[%c0_18, %c0_19] : memref<2x6xf32, #tpu.memory_space<vmem>>, vector<2x6xf32>
    tpu.vector_store %arg8[%c0_18, %c0_19], %17 {strides = array<i32>} : memref<2x6xf32, #tpu.memory_space<vmem>>, vector<2x6xf32>,
    return
  }
}

module attributes {stable_mosaic.version = 11 : i64} {
  func.func @_tps_sample_kernel(%arg0: i32, %arg1: i32, %arg2: memref<23x256xf32, #tpu.memory_space<vmem>>, %arg3: memref<1x2x23xf32, #tpu.memory_space<vmem>>, %arg4: memref<1x64x16xf32, #tpu.memory_space<vmem>>, %arg5: memref<1x4x256xf32, #tpu.memory_space<vmem>>) attributes {dimension_semantics = [#tpu.dimension_semantics<parallel>, #tpu.dimension_semantics<parallel>], iteration_bounds = array<i64: 2, 1>, scalar_prefetch = 0 : i64, scratch_operands = 0 : i64, tpu.core_type = #tpu.core_type<tc>, window_params = [{transform_indices = @transform_0, window_bounds = array<i64: 23, 256>}, {transform_indices = @transform_1, window_bounds = array<i64: 1, 2, 23>}, {transform_indices = @transform_2, window_bounds = array<i64: 1, 64, 16>}, {transform_indices = @transform_3, window_bounds = array<i64: 1, 4, 256>}]} {
    %c0 = arith.constant 0 : index
    %c0_0 = arith.constant 0 : index
    %c0_1 = arith.constant 0 : index
    %0 = vector.load %arg3[%c0, %c0_0, %c0_1] : memref<1x2x23xf32, #tpu.memory_space<vmem>>, vector<1x2x23xf32>
    %1 = vector.shape_cast %0 : vector<1x2x23xf32> to vector<2x23xf32>
    %c0_2 = arith.constant 0 : index
    %c0_3 = arith.constant 0 : index
    %2 = vector.load %arg2[%c0_2, %c0_3] : memref<23x256xf32, #tpu.memory_space<vmem>>, vector<23x256xf32>
    %cst = arith.constant dense<0.000000e+00> : vector<2x256xf32>
    %3 = tpu.matmul %1, %2, %cst {dimension_numbers = #tpu.dot_dimension_numbers<[1], [0], [0], [1], [0, 0, 1, 1], [], []>} : vector<2x23xf32>, vector<23x256xf32>, vector<2x256xf32> -> vector<2x256xf32>
    %4 = vector.extract_strided_slice %3 {offsets = [0, 0], sizes = [1, 256], strides = [1, 1]} : vector<2x256xf32> to vector<1x256xf32>
    %cst_4 = arith.constant 1.000000e+00 : f32
    %5 = vector.broadcast %cst_4 : f32 to vector<1x256xf32>
    %6 = arith.addf %4, %5 : vector<1x256xf32>
    %cst_5 = arith.constant 7.500000e+00 : f32
    %7 = vector.broadcast %cst_5 : f32 to vector<1x256xf32>
    %8 = arith.mulf %6, %7 : vector<1x256xf32>
    %9 = vector.extract_strided_slice %3 {offsets = [1, 0], sizes = [1, 256], strides = [1, 1]} : vector<2x256xf32> to vector<1x256xf32>
    %cst_6 = arith.constant 1.000000e+00 : f32
    %10 = vector.broadcast %cst_6 : f32 to vector<1x256xf32>
    %11 = arith.addf %9, %10 : vector<1x256xf32>
    %cst_7 = arith.constant 7.500000e+00 : f32
    %12 = vector.broadcast %cst_7 : f32 to vector<1x256xf32>
    %13 = arith.mulf %11, %12 : vector<1x256xf32>
    %14 = math.floor %8 : vector<1x256xf32>
    %15 = math.floor %13 : vector<1x256xf32>
    %16 = arith.fptosi %14 : vector<1x256xf32> to vector<1x256xi32>
    %17 = arith.fptosi %15 : vector<1x256xf32> to vector<1x256xi32>
    %c1_i32 = arith.constant 1 : i32
    %18 = vector.broadcast %c1_i32 : i32 to vector<1x256xi32>
    %19 = arith.addi %16, %18 : vector<1x256xi32>
    %c1_i32_8 = arith.constant 1 : i32
    %20 = vector.broadcast %c1_i32_8 : i32 to vector<1x256xi32>
    %21 = arith.addi %17, %20 : vector<1x256xi32>
    %22 = arith.subf %8, %14 : vector<1x256xf32>
    %cst_9 = arith.constant 1.000000e+00 : f32
    %23 = vector.broadcast %cst_9 : f32 to vector<1x256xf32>
    %24 = arith.subf %23, %22 : vector<1x256xf32>
    %25 = arith.subf %13, %15 : vector<1x256xf32>
    %cst_10 = arith.constant 1.000000e+00 : f32
    %26 = vector.broadcast %cst_10 : f32 to vector<1x256xf32>
    %27 = arith.subf %26, %25 : vector<1x256xf32>
    %28 = tpu.iota {dimensions = array<i32: 0>} : vector<16x256xi32>
    %29 = tpu.iota {dimensions = array<i32: 0>} : vector<16x256xi32>
    %c0_i32 = arith.constant 0 : i32
    %30 = vector.broadcast %c0_i32 : i32 to vector<1x256xi32>
    %31 = arith.cmpi sge, %16, %30 : vector<1x256xi32>
    %c16_i32 = arith.constant 16 : i32
    %32 = vector.broadcast %c16_i32 : i32 to vector<1x256xi32>
    %33 = arith.cmpi slt, %16, %32 : vector<1x256xi32>
    %34 = arith.andi %31, %33 : vector<1x256xi1>
    %35 = arith.extui %34 : vector<1x256xi1> to vector<1x256xi32>
    %36 = arith.sitofp %35 : vector<1x256xi32> to vector<1x256xf32>
    %37 = arith.mulf %24, %36 : vector<1x256xf32>
    %38 = vector.broadcast %16 : vector<1x256xi32> to vector<16x256xi32>
    %39 = arith.cmpi eq, %28, %38 : vector<16x256xi32>
    %40 = arith.extui %39 : vector<16x256xi1> to vector<16x256xi32>
    %41 = arith.sitofp %40 : vector<16x256xi32> to vector<16x256xf32>
    %42 = vector.broadcast %37 : vector<1x256xf32> to vector<16x256xf32>
    %43 = arith.mulf %42, %41 : vector<16x256xf32>
    %c0_i32_11 = arith.constant 0 : i32
    %44 = vector.broadcast %c0_i32_11 : i32 to vector<1x256xi32>
    %45 = arith.cmpi sge, %19, %44 : vector<1x256xi32>
    %c16_i32_12 = arith.constant 16 : i32
    %46 = vector.broadcast %c16_i32_12 : i32 to vector<1x256xi32>
    %47 = arith.cmpi slt, %19, %46 : vector<1x256xi32>
    %48 = arith.andi %45, %47 : vector<1x256xi1>
    %49 = arith.extui %48 : vector<1x256xi1> to vector<1x256xi32>
    %50 = arith.sitofp %49 : vector<1x256xi32> to vector<1x256xf32>
    %51 = arith.mulf %22, %50 : vector<1x256xf32>
    %52 = vector.broadcast %19 : vector<1x256xi32> to vector<16x256xi32>
    %53 = arith.cmpi eq, %28, %52 : vector<16x256xi32>
    %54 = arith.extui %53 : vector<16x256xi1> to vector<16x256xi32>
    %55 = arith.sitofp %54 : vector<16x256xi32> to vector<16x256xf32>
    %56 = vector.broadcast %51 : vector<1x256xf32> to vector<16x256xf32>
    %57 = arith.mulf %56, %55 : vector<16x256xf32>
    %58 = arith.addf %43, %57 : vector<16x256xf32>
    %c0_i32_13 = arith.constant 0 : i32
    %59 = vector.broadcast %c0_i32_13 : i32 to vector<1x256xi32>
    %60 = arith.cmpi sge, %17, %59 : vector<1x256xi32>
    %c16_i32_14 = arith.constant 16 : i32
    %61 = vector.broadcast %c16_i32_14 : i32 to vector<1x256xi32>
    %62 = arith.cmpi slt, %17, %61 : vector<1x256xi32>
    %63 = arith.andi %60, %62 : vector<1x256xi1>
    %64 = arith.extui %63 : vector<1x256xi1> to vector<1x256xi32>
    %65 = arith.sitofp %64 : vector<1x256xi32> to vector<1x256xf32>
    %66 = arith.mulf %27, %65 : vector<1x256xf32>
    %67 = vector.broadcast %17 : vector<1x256xi32> to vector<16x256xi32>
    %68 = arith.cmpi eq, %29, %67 : vector<16x256xi32>
    %69 = arith.extui %68 : vector<16x256xi1> to vector<16x256xi32>
    %70 = arith.sitofp %69 : vector<16x256xi32> to vector<16x256xf32>
    %71 = vector.broadcast %66 : vector<1x256xf32> to vector<16x256xf32>
    %72 = arith.mulf %71, %70 : vector<16x256xf32>
    %c0_i32_15 = arith.constant 0 : i32
    %73 = vector.broadcast %c0_i32_15 : i32 to vector<1x256xi32>
    %74 = arith.cmpi sge, %21, %73 : vector<1x256xi32>
    %c16_i32_16 = arith.constant 16 : i32
    %75 = vector.broadcast %c16_i32_16 : i32 to vector<1x256xi32>
    %76 = arith.cmpi slt, %21, %75 : vector<1x256xi32>
    %77 = arith.andi %74, %76 : vector<1x256xi1>
    %78 = arith.extui %77 : vector<1x256xi1> to vector<1x256xi32>
    %79 = arith.sitofp %78 : vector<1x256xi32> to vector<1x256xf32>
    %80 = arith.mulf %25, %79 : vector<1x256xf32>
    %81 = vector.broadcast %21 : vector<1x256xi32> to vector<16x256xi32>
    %82 = arith.cmpi eq, %29, %81 : vector<16x256xi32>
    %83 = arith.extui %82 : vector<16x256xi1> to vector<16x256xi32>
    %84 = arith.sitofp %83 : vector<16x256xi32> to vector<16x256xf32>
    %85 = vector.broadcast %80 : vector<1x256xf32> to vector<16x256xf32>
    %86 = arith.mulf %85, %84 : vector<16x256xf32>
    %87 = arith.addf %72, %86 : vector<16x256xf32>
    %c0_17 = arith.constant 0 : index
    %c0_18 = arith.constant 0 : index
    %c0_19 = arith.constant 0 : index
    %88 = vector.load %arg4[%c0_17, %c0_18, %c0_19] : memref<1x64x16xf32, #tpu.memory_space<vmem>>, vector<1x64x16xf32>
    %89 = vector.shape_cast %88 : vector<1x64x16xf32> to vector<64x16xf32>
    %cst_20 = arith.constant dense<0.000000e+00> : vector<64x256xf32>
    %90 = tpu.matmul %89, %58, %cst_20 {dimension_numbers = #tpu.dot_dimension_numbers<[1], [0], [0], [1], [0, 0, 1, 1], [], []>} : vector<64x16xf32>, vector<16x256xf32>, vector<64x256xf32> -> vector<64x256xf32>
    %91 = vector.extract_strided_slice %90 {offsets = [0, 0], sizes = [16, 256], strides = [1, 1]} : vector<64x256xf32> to vector<16x256xf32>
    %92 = arith.mulf %91, %87 : vector<16x256xf32>
    %cst_21 = arith.constant dense<0.000000e+00> : vector<256xf32>
    %93 = vector.multi_reduction <add>, %92, %cst_21 [0] : vector<16x256xf32> to vector<256xf32>
    %94 = vector.shape_cast %93 : vector<256xf32> to vector<1x256xf32>
    %c0_22 = arith.constant 0 : index
    %c0_23 = arith.constant 0 : index
    %c0_24 = arith.constant 0 : index
    %95 = vector.load %arg5[%c0_22, %c0_23, %c0_24] : memref<1x4x256xf32, #tpu.memory_space<vmem>>, vector<1x1x256xf32>
    %96 = vector.shape_cast %95 : vector<1x1x256xf32> to vector<1x256xf32>
    %97 = vector.shape_cast %94 : vector<1x256xf32> to vector<1x1x256xf32>
    tpu.vector_store %arg5[%c0_22, %c0_23, %c0_24], %97 {strides = array<i32>} : memref<1x4x256xf32, #tpu.memory_space<vmem>>, vector<1x1x256xf32>,
    %98 = vector.extract_strided_slice %90 {offsets = [16, 0], sizes = [16, 256], strides = [1, 1]} : vector<64x256xf32> to vector<16x256xf32>
    %99 = arith.mulf %98, %87 : vector<16x256xf32>
    %cst_25 = arith.constant dense<0.000000e+00> : vector<256xf32>
    %100 = vector.multi_reduction <add>, %99, %cst_25 [0] : vector<16x256xf32> to vector<256xf32>
    %101 = vector.shape_cast %100 : vector<256xf32> to vector<1x256xf32>
    %c0_26 = arith.constant 0 : index
    %c1 = arith.constant 1 : index
    %c0_27 = arith.constant 0 : index
    %102 = vector.load %arg5[%c0_26, %c1, %c0_27] : memref<1x4x256xf32, #tpu.memory_space<vmem>>, vector<1x1x256xf32>
    %103 = vector.shape_cast %102 : vector<1x1x256xf32> to vector<1x256xf32>
    %104 = vector.shape_cast %101 : vector<1x256xf32> to vector<1x1x256xf32>
    tpu.vector_store %arg5[%c0_26, %c1, %c0_27], %104 {strides = array<i32>} : memref<1x4x256xf32, #tpu.memory_space<vmem>>, vector<1x1x256xf32>,
    %105 = vector.extract_strided_slice %90 {offsets = [32, 0], sizes = [16, 256], strides = [1, 1]} : vector<64x256xf32> to vector<16x256xf32>
    %106 = arith.mulf %105, %87 : vector<16x256xf32>
    %cst_28 = arith.constant dense<0.000000e+00> : vector<256xf32>
    %107 = vector.multi_reduction <add>, %106, %cst_28 [0] : vector<16x256xf32> to vector<256xf32>
    %108 = vector.shape_cast %107 : vector<256xf32> to vector<1x256xf32>
    %c0_29 = arith.constant 0 : index
    %c2 = arith.constant 2 : index
    %c0_30 = arith.constant 0 : index
    %109 = vector.load %arg5[%c0_29, %c2, %c0_30] : memref<1x4x256xf32, #tpu.memory_space<vmem>>, vector<1x1x256xf32>
    %110 = vector.shape_cast %109 : vector<1x1x256xf32> to vector<1x256xf32>
    %111 = vector.shape_cast %108 : vector<1x256xf32> to vector<1x1x256xf32>
    tpu.vector_store %arg5[%c0_29, %c2, %c0_30], %111 {strides = array<i32>} : memref<1x4x256xf32, #tpu.memory_space<vmem>>, vector<1x1x256xf32>,
    %112 = vector.extract_strided_slice %90 {offsets = [48, 0], sizes = [16, 256], strides = [1, 1]} : vector<64x256xf32> to vector<16x256xf32>
    %113 = arith.mulf %112, %87 : vector<16x256xf32>
    %cst_31 = arith.constant dense<0.000000e+00> : vector<256xf32>
    %114 = vector.multi_reduction <add>, %113, %cst_31 [0] : vector<16x256xf32> to vector<256xf32>
    %115 = vector.shape_cast %114 : vector<256xf32> to vector<1x256xf32>
    %c0_32 = arith.constant 0 : index
    %c3 = arith.constant 3 : index
    %c0_33 = arith.constant 0 : index
    %116 = vector.load %arg5[%c0_32, %c3, %c0_33] : memref<1x4x256xf32, #tpu.memory_space<vmem>>, vector<1x1x256xf32>
    %117 = vector.shape_cast %116 : vector<1x1x256xf32> to vector<1x256xf32>
    %118 = vector.shape_cast %115 : vector<1x256xf32> to vector<1x1x256xf32>
    tpu.vector_store %arg5[%c0_32, %c3, %c0_33], %118 {strides = array<i32>} : memref<1x4x256xf32, #tpu.memory_space<vmem>>, vector<1x1x256xf32>,
    return
  }
  func.func @transform_0(%arg0: i32, %arg1: i32) -> (i32, i32) {
    %c0_i32 = arith.constant 0 : i32
    %c0_i32_0 = arith.constant 0 : i32
    return %c0_i32, %arg1 : i32, i32
  }
  func.func @transform_1(%arg0: i32, %arg1: i32) -> (i32, i32, i32) {
    %c0_i32 = arith.constant 0 : i32
    %c0_i32_0 = arith.constant 0 : i32
    %c0_i32_1 = arith.constant 0 : i32
    return %arg0, %c0_i32, %c0_i32_0 : i32, i32, i32
  }
  func.func @transform_2(%arg0: i32, %arg1: i32) -> (i32, i32, i32) {
    %c0_i32 = arith.constant 0 : i32
    %c0_i32_0 = arith.constant 0 : i32
    %c0_i32_1 = arith.constant 0 : i32
    return %arg0, %c0_i32, %c0_i32_0 : i32, i32, i32
  }
  func.func @transform_3(%arg0: i32, %arg1: i32) -> (i32, i32, i32) {
    %c0_i32 = arith.constant 0 : i32
    %c0_i32_0 = arith.constant 0 : i32
    return %arg0, %c0_i32, %arg1 : i32, i32, i32
  }
}

</mosaic_0001>

<llo_original>
// kernel: tps_forward.7
$region0: #{tps_forward.7}
  #allocation0 [shape = 'u32[]', space=smem, size = 0x4, offset = 0x4, fixed_abs, tag = 'smem constant byte address 0x4 - core index']
  #allocation1 [shape = 'u32[144,128]{1,0:T(1,128)}', space=vmem, size = 0x12000, scoped, tag = 'internal scratch']
  %s0 = inlined_call_operand.vmem [shape: f32[2,10,10,16], index: 0, kind: input, shape index: {}]
  %s1 = inlined_call_operand.vmem [shape: bf16[9,16,32], index: 1, kind: input, shape index: {}]
  %s2 = inlined_call_operand.vmem [shape: f32[1,32], index: 2, kind: input, shape index: {}]
  %s3 = inlined_call_operand.vmem [shape: f32[2,64,32], index: 3, kind: output, shape index: {}]
  %s4 = sld [smem:[#allocation0]]
  $region45: #{tps_forward.7} parent=0
    _
  %s6 = ssub.s32 1, %s4
  %s7 = scalar_select 0, %s6, %s4
  loop: start=0, step=1, limit=4
  $region2: #{tps_forward.7} parent=0 // loop_pre_header
    _
  $region3: #{tps_forward.7} parent=0 // loop_header
    %s9 = sphi 0, %s13
    %p10 = scmp.ge.s32.totalorder %s9, 4
    %s19 = sphi 0, %s21
    %s22 = sphi 0, %s19
    %s23 = sphi 0, %s22
    %s39 = sphi 0, %s23
    %s43 = sphi 0, %s43
    %s45 = sphi 0, %s43
    %s46 = sphi 0, %s45
    %s60 = sphi 0, %s46
    %s64 = sphi 0, %s64
    %s66 = sphi 0, %s64
    %s67 = sphi 0, %s66
    %s81 = sphi 0, %s67
    %s87 = sphi 0, %s89
    %s90 = sphi 0, %s87
    %s91 = sphi 0, %s90
    %s107 = sphi 0, %s91
  $region4: #{tps_forward.7} parent=0 // loop_header_branch
    %12 = sbr.rel (%p10) target = $region8
  $region5: #{tps_forward.7} parent=0 // loop_body
    %s14 = ssub.s32 %s9, 1
    %s15 = ssub.s32 %s9, 2
    %s16 = sadd.s32 %s9, 1
    %s17 = ssub.s32 %s9, %s16
    %p18 = scmp.eq.s32.totalorder %s17, 0
    %s20 = sadd.s32 %s19, 1
    %s21 = scalar_select %p18, %s19, %s20
    %p24 = pneg %p18
    %p25 = scmp.eq.s32.totalorder %s9, 1
    %p26 = por %p24, %p25
    %p27 = scmp.ne.s32.totalorder %s19, %s22
    %p28 = scmp.eq.s32.totalorder %s9, 0
    %p29 = por %p27, %p28
    %p30 = scmp.ne.s32.totalorder %s19, %s22
    %p31 = scmp.eq.s32.totalorder %s14, 1
    %p32 = por %p30, %p31
    %p33 = scmp.ne.s32.totalorder %s22, %s23
    %p34 = scmp.eq.s32.totalorder %s14, 0
    %p35 = por %p33, %p34
    %p36 = scmp.ne.s32.totalorder %s22, %s23
    %p37 = scmp.eq.s32.totalorder %s15, 1
    %p38 = por %p36, %p37
    %p40 = scmp.ne.s32.totalorder %s23, %s39
    %p41 = scmp.eq.s32.totalorder %s15, 0
    %p42 = por %p40, %p41
    %s44 = sadd.s32 %s43, 1
    %p47 = scmp.eq.s32.totalorder %s9, 1
    %p48 = scmp.ne.s32.totalorder %s43, %s45
    %p49 = scmp.eq.s32.totalorder %s9, 0
    %p50 = por %p48, %p49
    %p51 = scmp.ne.s32.totalorder %s43, %s45
    %p52 = scmp.eq.s32.totalorder %s14, 1
    %p53 = por %p51, %p52
    %p54 = scmp.ne.s32.totalorder %s45, %s46
    %p55 = scmp.eq.s32.totalorder %s14, 0
    %p56 = por %p54, %p55
    %p57 = scmp.ne.s32.totalorder %s45, %s46
    %p58 = scmp.eq.s32.totalorder %s15, 1
    %p59 = por %p57, %p58
    %p61 = scmp.ne.s32.totalorder %s46, %s60
    %p62 = scmp.eq.s32.totalorder %s15, 0
    %p63 = por %p61, %p62
    %s65 = sadd.s32 %s64, 1
    %p68 = scmp.eq.s32.totalorder %s9, 1
    %p69 = scmp.ne.s32.totalorder %s64, %s66
    %p70 = scmp.eq.s32.totalorder %s9, 0
    %p71 = por %p69, %p70
    %p72 = scmp.ne.s32.totalorder %s64, %s66
    %p73 = scmp.eq.s32.totalorder %s14, 1
    %p74 = por %p72, %p73
    %p75 = scmp.ne.s32.totalorder %s66, %s67
    %p76 = scmp.eq.s32.totalorder %s14, 0
    %p77 = por %p75, %p76
    %p78 = scmp.ne.s32.totalorder %s66, %s67
    %p79 = scmp.eq.s32.totalorder %s15, 1
    %p80 = por %p78, %p79
    %p82 = scmp.ne.s32.totalorder %s67, %s81
    %p83 = scmp.eq.s32.totalorder %s15, 0
    %p84 = por %p82, %p83
    %s85 = ssub.s32 %s9, %s16
    %p86 = scmp.eq.s32.totalorder %s85, 0
    %s88 = sadd.s32 %s87, 1
    %s89 = scalar_select %p86, %s87, %s88
    %p92 = pneg %p86
    %p93 = scmp.eq.s32.totalorder %s9, 1
    %p94 = por %p92, %p93
    %p95 = scmp.ne.s32.totalorder %s87, %s90
    %p96 = scmp.eq.s32.totalorder %s9, 0
    %p97 = por %p95, %p96
    %p98 = scmp.ne.s32.totalorder %s87, %s90
    %p99 = scmp.eq.s32.totalorder %s14, 1
    %p100 = por %p98, %p99
    %p101 = scmp.ne.s32.totalorder %s90, %s91
    %p102 = scmp.eq.s32.totalorder %s14, 0
    %p103 = por %p101, %p102
    %p104 = scmp.ne.s32.totalorder %s90, %s91
    %p105 = scmp.eq.s32.totalorder %s15, 1
    %p106 = por %p104, %p105
    %p108 = scmp.ne.s32.totalorder %s91, %s107
    %p109 = scmp.eq.s32.totalorder %s15, 0
    %p110 = por %p108, %p109
    %p111 = scmp.le.s32.totalorder 1, %s9
    %p112 = scmp.lt.s32.totalorder %s9, 3
    %p113 = pnand %p111, %p112
    %p114 = pneg %p113
    // Predicated region
    $region9: #{tps_forward.7} parent=5 // pred_check
      _
    $region10: #{tps_forward.7} parent=5 // pred_check_branch
      %116 = sbr.rel (%p113) target = $region12
    $region11: #{tps_forward.7} parent=5 // pred_region
      %s117 = ssub.s32 %s9, 1
      // Predicated region
      $region13: #{tps_forward.7} parent=11 // pred_check
        %p118 = pneg %p56
      $region14: #{tps_forward.7} parent=11 // pred_check_branch
        %120 = sbr.rel (%p118) target = $region16
      $region15: #{tps_forward.7} parent=11 // pred_region
        _
      $region16: #{tps_forward.7} parent=11 // pred_fallthru
        _
      // Predicated region
      $region17: #{tps_forward.7} parent=11 // pred_check
        %p121 = pneg %p77
      $region18: #{tps_forward.7} parent=11 // pred_check_branch
        %123 = sbr.rel (%p121) target = $region20
      $region19: #{tps_forward.7} parent=11 // pred_region
        _
      $region20: #{tps_forward.7} parent=11 // pred_fallthru
        _
    $region12: #{tps_forward.7} parent=5 // pred_fallthru
      _
    %p124 = scmp.lt.s32.totalorder %s9, 2
    // Predicated region
    $region21: #{tps_forward.7} parent=5 // pred_check
      %p125 = pneg %p124
    $region22: #{tps_forward.7} parent=5 // pred_check_branch
      %127 = sbr.rel (%p125) target = $region24
    $region23: #{tps_forward.7} parent=5 // pred_region
      // Predicated region
      $region25: #{tps_forward.7} parent=23 // pred_check
        %p128 = pneg %p29
      $region26: #{tps_forward.7} parent=23 // pred_check_branch
        %130 = sbr.rel (%p128) target = $region28
      $region27: #{tps_forward.7} parent=23 // pred_region
        %p131 = scmp.lt.s32.totalorder %s9, 1
        %s132 = scalar_select %p131, %s9, 1
        %s133 = smul.addr %s132, 20
        %s134 = smul.addr %s133, 8
        %s135 = scalar_lea.vmem %s0, %s134
      $region28: #{tps_forward.7} parent=23 // pred_fallthru
        _
    $region24: #{tps_forward.7} parent=5 // pred_fallthru
      _
    %p136 = scmp.le.s32.totalorder 1, %s9
    %p137 = scmp.lt.s32.totalorder %s9, 3
    %p138 = pnand %p136, %p137
    %p139 = pneg %p138
    // Predicated region
    $region29: #{tps_forward.7} parent=5 // pred_check
      _
    $region30: #{tps_forward.7} parent=5 // pred_check_branch
      %141 = sbr.rel (%p138) target = $region32
    $region31: #{tps_forward.7} parent=5 // pred_region
      %s142 = ssub.s32 %s9, 1
      %p143 = scmp.lt.s32.totalorder %s14, 1
      %s144 = scalar_select %p143, %s14, 1
      %s145 = smul.addr %s144, 20
      %s146 = smul.addr %s145, 8
      %s147 = scalar_lea.vmem %s0, %s146
      %p148 = pneg %p35
      %p149 = pneg %p32
      %p150 = pneg %p56
      %p151 = pneg %p53
      %p152 = pneg %p77
      %p153 = pneg %p74
      %p154 = pneg %p103
      %p155 = pneg %p100
      %p156 = scmp.lt.s32.totalorder %s14, 1
      %s157 = scalar_select %p156, %s14, 1
      %s158 = smul.addr %s157, 8
      %s159 = smul.addr %s158, 8
      %s160 = scalar_lea.vmem %s3, %s159
      %p161 = scmp.lt.s32.totalorder %s14, 1
      %s162 = scalar_select %p161, %s14, 1
      %s163 = smul.addr %s162, 20
      %s164 = smul.addr %s163, 8
      %s165 = scalar_lea.vmem %s0, %s164
      %p166 = scmp.lt.s32.totalorder %s14, 1
      %s167 = scalar_select %p166, %s14, 1
      %s168 = smul.addr %s167, 8
      %s169 = smul.addr %s168, 8
      %s170 = scalar_lea.vmem %s3, %s169
      %v172 = vld [vmem:[%s165] sm:$0xff]
      %v173 = vld [vmem:[%s165 + $0x10] sm:$0xff]
      %v174 = vld [vmem:[%s165 + $0x20] sm:$0xff]
      %v175 = vld [vmem:[%s165 + $0x30] sm:$0xff]
      %v176 = vld [vmem:[%s165 + $0x40] sm:$0xff]
      %v177 = vld [vmem:[%s165 + $0x50] sm:$0xff]
      %v178 = vld [vmem:[%s165 + $0x60] sm:$0xff]
      %v179 = vld [vmem:[%s165 + $0x70] sm:$0xff]
      %v180 = vpack.c.bf16 %v173, %v172
      %v181 = vpack.c.bf16 %v175, %v174
      %v182 = vpack.c.bf16 %v177, %v176
      %v183 = vpack.c.bf16 %v179, %v178
      %v184 = vld [vmem:[%s1] sm:$0xf]
      %v185 = vld [vmem:[%s1 + $0x4] sm:$0xf]
      %v186 = vld [vmem:[%s165 + $0x1] sm:$0xff]
      %v187 = vld [vmem:[%s165 + $0x11] sm:$0xff]
      %v188 = vld [vmem:[%s165 + $0x21] sm:$0xff]
      %v189 = vld [vmem:[%s165 + $0x31] sm:$0xff]
      %v190 = vld [vmem:[%s165 + $0x41] sm:$0xff]
      %v191 = vld [vmem:[%s165 + $0x51] sm:$0xff]
      %v192 = vld [vmem:[%s165 + $0x61] sm:$0xff]
      %v193 = vld [vmem:[%s165 + $0x71] sm:$0xff]
      %v194 = vpack.c.bf16 %v187, %v186
      %v195 = vpack.c.bf16 %v189, %v188
      %v196 = vpack.c.bf16 %v191, %v190
      %v197 = vpack.c.bf16 %v193, %v192
      %s198 = scalar_lea.vmem %s1, 8
      %v199 = vld [vmem:[%s198] sm:$0xf]
      %v200 = vld [vmem:[%s198 + $0x4] sm:$0xf]
      %v203 = vunpack.c.l.b16 %v199
      %v204 = vunpack.c.l.b16 %v200
      %v205 = vpack.c.b16 %v204, %v203
      %vm207 = vcmask 130048
      %v209 = vsel %vm207, %v194, 0
      %v212 = vsel %vm207, %v195, 0
      %v215 = vsel %vm207, %v196, 0
      %v218 = vsel %vm207, %v197, 0
      %220 = vmatprep.subr.bf16.mxu0 0
      %221 = vmatpush1.bf16.msra.mxu0 %v205
      %222 = vmatprep.subr.bf16.mxu0 0
      %223 = vmatpush1.bf16.msra.mxu0 0
      %224 = vmatprep.subr.bf16.mxu0 0
      %225 = vmatpush1.bf16.msra.mxu0 0
      %226 = vmatprep.subr.bf16.mxu0 0
      %227 = vmatpush1.bf16.msra.mxu0 0
      %228 = vmatprep.subr.bf16.mxu0 0
      %229 = vmatpush1.bf16.msra.mxu0 0
      %230 = vmatprep.subr.bf16.mxu0 0
      %231 = vmatpush1.bf16.msra.mxu0 0
      %232 = vmatprep.subr.bf16.mxu0 0
      %233 = vmatpush1.bf16.msra.mxu0 0
      %234 = vmatprep.subr.bf16.mxu0 0
      %235 = vmatpush1.bf16.msra.mxu0 0
      %236 = vmatprep.subr.bf16.mxu0 0
      %237 = vmatpush1.bf16.msra.mxu0 0
      %238 = vmatprep.subr.bf16.mxu0 0
      %239 = vmatpush1.bf16.msra.mxu0 0
      %240 = vmatprep.subr.bf16.mxu0 0
      %241 = vmatpush1.bf16.msra.mxu0 0
      %242 = vmatprep.subr.bf16.mxu0 0
      %243 = vmatpush1.bf16.msra.mxu0 0
      %244 = vmatprep.subr.bf16.mxu0 0
      %245 = vmatpush1.bf16.msra.mxu0 0
      %246 = vmatprep.subr.bf16.mxu0 0
      %247 = vmatpush1.bf16.msra.mxu0 0
      %248 = vmatprep.subr.bf16.mxu0 0
      %249 = vmatpush1.bf16.msra.mxu0 0
      %250 = vmatprep.subr.bf16.mxu0 0
      %251 = vmatpush1.bf16.msra.mxu0 0
      %252 = vmatprep.mubr.bf16.mxu0 0
      %253 = vmatmul.mubr.bf16.gmra.mrb[0].mxu0 %v209
      %v254 = vpop.f32.mrb[0].mxu0
      %v255 = vadd.f32 0.0, %v254
      %v256 = vpop.f32.mrb[0].mxu0
      %v257 = vpop.f32.mrb[0].mxu0
      %v258 = vadd.f32 0.0, %v257
      %v259 = vpop.f32.mrb[0].mxu0
      %260 = vmatprep.mubr.bf16.mxu0 0
      %261 = vmatmul.mubr.bf16.gmra.mrb[0].mxu0 %v212
      %v262 = vpop.f32.mrb[0].mxu0
      %v263 = vadd.f32 0.0, %v262
      %v264 = vpop.f32.mrb[0].mxu0
      %v265 = vpop.f32.mrb[0].mxu0
      %v266 = vadd.f32 0.0, %v265
      %v267 = vpop.f32.mrb[0].mxu0
      %268 = vmatprep.mubr.bf16.mxu0 0
      %269 = vmatmul.mubr.bf16.gmra.mrb[0].mxu0 %v215
      %v270 = vpop.f32.mrb[0].mxu0
      %v271 = vadd.f32 0.0, %v270
      %v272 = vpop.f32.mrb[0].mxu0
      %v273 = vpop.f32.mrb[0].mxu0
      %v274 = vadd.f32 0.0, %v273
      %v275 = vpop.f32.mrb[0].mxu0
      %276 = vmatprep.mubr.bf16.mxu0 0
      %277 = vmatmul.mubr.bf16.gmra.mrb[0].mxu0 %v218
      %v278 = vpop.f32.mrb[0].mxu0
      %v279 = vadd.f32 0.0, %v278
      %v280 = vpop.f32.mrb[0].mxu0
      %v281 = vpop.f32.mrb[0].mxu0
      %v282 = vadd.f32 0.0, %v281
      %v283 = vpop.f32.mrb[0].mxu0
      %284 = vdwg.mxu0
      %v287 = vunpack.c.l.b16 %v184
      %v288 = vunpack.c.l.b16 %v185
      %v289 = vpack.c.b16 %v288, %v287
      %v292 = vsel %vm207, %v180, 0
      %v295 = vsel %vm207, %v181, 0
      %v298 = vsel %vm207, %v182, 0
      %v301 = vsel %vm207, %v183, 0
      %303 = vmatprep.subr.bf16.mxu0 0
      %304 = vmatpush1.bf16.msra.mxu0 %v289
      %305 = vmatprep.subr.bf16.mxu0 0
      %306 = vmatpush1.bf16.msra.mxu0 0
      %307 = vmatprep.subr.bf16.mxu0 0
      %308 = vmatpush1.bf16.msra.mxu0 0
      %309 = vmatprep.subr.bf16.mxu0 0
      %310 = vmatpush1.bf16.msra.mxu0 0
      %311 = vmatprep.subr.bf16.mxu0 0
      %312 = vmatpush1.bf16.msra.mxu0 0
      %313 = vmatprep.subr.bf16.mxu0 0
      %314 = vmatpush1.bf16.msra.mxu0 0
      %315 = vmatprep.subr.bf16.mxu0 0
      %316 = vmatpush1.bf16.msra.mxu0 0
      %317 = vmatprep.subr.bf16.mxu0 0
      %318 = vmatpush1.bf16.msra.mxu0 0
      %319 = vmatprep.subr.bf16.mxu0 0
      %320 = vmatpush1.bf16.msra.mxu0 0
      %321 = vmatprep.subr.bf16.mxu0 0
      %322 = vmatpush1.bf16.msra.mxu0 0
      %323 = vmatprep.subr.bf16.mxu0 0
      %324 = vmatpush1.bf16.msra.mxu0 0
      %325 = vmatprep.subr.bf16.mxu0 0
      %326 = vmatpush1.bf16.msra.mxu0 0
      %327 = vmatprep.subr.bf16.mxu0 0
      %328 = vmatpush1.bf16.msra.mxu0 0
      %329 = vmatprep.subr.bf16.mxu0 0
      %330 = vmatpush1.bf16.msra.mxu0 0
      %331 = vmatprep.subr.bf16.mxu0 0
      %332 = vmatpush1.bf16.msra.mxu0 0
      %333 = vmatprep.subr.bf16.mxu0 0
      %334 = vmatpush1.bf16.msra.mxu0 0
      %335 = vmatprep.mubr.bf16.mxu0 0
      %336 = vmatmul.mubr.bf16.gmra.mrb[0].mxu0 %v292
      %v337 = vpop.f32.mrb[0].mxu0
      %v338 = vadd.f32 %v255, %v337
      %v339 = vpop.f32.mrb[0].mxu0
      %v340 = vpop.f32.mrb[0].mxu0
      %v341 = vadd.f32 %v258, %v340
      %v342 = vpop.f32.mrb[0].mxu0
      %343 = vmatprep.mubr.bf16.mxu0 0
      %344 = vmatmul.mubr.bf16.gmra.mrb[0].mxu0 %v295
      %v345 = vpop.f32.mrb[0].mxu0
      %v346 = vadd.f32 %v263, %v345
      %v347 = vpop.f32.mrb[0].mxu0
      %v348 = vpop.f32.mrb[0].mxu0
      %v349 = vadd.f32 %v266, %v348
      %v350 = vpop.f32.mrb[0].mxu0
      %351 = vmatprep.mubr.bf16.mxu0 0
      %352 = vmatmul.mubr.bf16.gmra.mrb[0].mxu0 %v298
      %v353 = vpop.f32.mrb[0].mxu0
      %v354 = vadd.f32 %v271, %v353
      %v355 = vpop.f32.mrb[0].mxu0
      %v356 = vpop.f32.mrb[0].mxu0
      %v357 = vadd.f32 %v274, %v356
      %v358 = vpop.f32.mrb[0].mxu0
      %359 = vmatprep.mubr.bf16.mxu0 0
      %360 = vmatmul.mubr.bf16.gmra.mrb[0].mxu0 %v301
      %v361 = vpop.f32.mrb[0].mxu0
      %v362 = vadd.f32 %v279, %v361
      %v363 = vpop.f32.mrb[0].mxu0
      %v364 = vpop.f32.mrb[0].mxu0
      %v365 = vadd.f32 %v282, %v364
      %v366 = vpop.f32.mrb[0].mxu0
      %367 = vdwg.mxu0
      %v368 = vld [vmem:[%s165 + $0x2] sm:$0xff]
      %v369 = vld [vmem:[%s165 + $0x12] sm:$0xff]
      %v370 = vld [vmem:[%s165 + $0x22] sm:$0xff]
      %v371 = vld [vmem:[%s165 + $0x32] sm:$0xff]
      %v372 = vld [vmem:[%s165 + $0x42] sm:$0xff]
      %v373 = vld [vmem:[%s165 + $0x52] sm:$0xff]
      %v374 = vld [vmem:[%s165 + $0x62] sm:$0xff]
      %v375 = vld [vmem:[%s165 + $0x72] sm:$0xff]
      %v376 = vpack.c.bf16 %v369, %v368
      %v377 = vpack.c.bf16 %v371, %v370
      %v378 = vpack.c.bf16 %v373, %v372
      %v379 = vpack.c.bf16 %v375, %v374
      %s380 = scalar_lea.vmem %s1, 16
      %v381 = vld [vmem:[%s380] sm:$0xf]
      %v382 = vld [vmem:[%s380 + $0x4] sm:$0xf]
      %v385 = vunpack.c.l.b16 %v381
      %v386 = vunpack.c.l.b16 %v382
      %v387 = vpack.c.b16 %v386, %v385
      %v390 = vsel %vm207, %v376, 0
      %v393 = vsel %vm207, %v377, 0
      %v396 = vsel %vm207, %v378, 0
      %v399 = vsel %vm207, %v379, 0
      %401 = vmatprep.subr.bf16.mxu0 0
      %402 = vmatpush1.bf16.msra.mxu0 %v387
      %403 = vmatprep.subr.bf16.mxu0 0
      %404 = vmatpush1.bf16.msra.mxu0 0
      %405 = vmatprep.subr.bf16.mxu0 0
      %406 = vmatpush1.bf16.msra.mxu0 0
      %407 = vmatprep.subr.bf16.mxu0 0
      %408 = vmatpush1.bf16.msra.mxu0 0
      %409 = vmatprep.subr.bf16.mxu0 0
      %410 = vmatpush1.bf16.msra.mxu0 0
      %411 = vmatprep.subr.bf16.mxu0 0
      %412 = vmatpush1.bf16.msra.mxu0 0
      %413 = vmatprep.subr.bf16.mxu0 0
      %414 = vmatpush1.bf16.msra.mxu0 0
      %415 = vmatprep.subr.bf16.mxu0 0
      %416 = vmatpush1.bf16.msra.mxu0 0
      %417 = vmatprep.subr.bf16.mxu0 0
      %418 = vmatpush1.bf16.msra.mxu0 0
      %419 = vmatprep.subr.bf16.mxu0 0
      %420 = vmatpush1.bf16.msra.mxu0 0
      %421 = vmatprep.subr.bf16.mxu0 0
      %422 = vmatpush1.bf16.msra.mxu0 0
      %423 = vmatprep.subr.bf16.mxu0 0
      %424 = vmatpush1.bf16.msra.mxu0 0
      %425 = vmatprep.subr.bf16.mxu0 0
      %426 = vmatpush1.bf16.msra.mxu0 0
      %427 = vmatprep.subr.bf16.mxu0 0
      %428 = vmatpush1.bf16.msra.mxu0 0
      %429 = vmatprep.subr.bf16.mxu0 0
      %430 = vmatpush1.bf16.msra.mxu0 0
      %431 = vmatprep.subr.bf16.mxu0 0
      %432 = vmatpush1.bf16.msra.mxu0 0
      %433 = vmatprep.mubr.bf16.mxu0 0
      %434 = vmatmul.mubr.bf16.gmra.mrb[0].mxu0 %v390
      %v435 = vpop.f32.mrb[0].mxu0
      %v436 = vadd.f32 0.0, %v435
      %v437 = vpop.f32.mrb[0].mxu0
      %v438 = vpop.f32.mrb[0].mxu0
      %v439 = vadd.f32 0.0, %v438
      %v440 = vpop.f32.mrb[0].mxu0
      %441 = vmatprep.mubr.bf16.mxu0 0
      %442 = vmatmul.mubr.bf16.gmra.mrb[0].mxu0 %v393
      %v443 = vpop.f32.mrb[0].mxu0
      %v444 = vadd.f32 0.0, %v443
      %v445 = vpop.f32.mrb[0].mxu0
      %v446 = vpop.f32.mrb[0].mxu0
      %v447 = vadd.f32 0.0, %v446
      %v448 = vpop.f32.mrb[0].mxu0
      %449 = vmatprep.mubr.bf16.mxu0 0
      %450 = vmatmul.mubr.bf16.gmra.mrb[0].mxu0 %v396
      %v451 = vpop.f32.mrb[0].mxu0
      %v452 = vadd.f32 0.0, %v451
      %v453 = vpop.f32.mrb[0].mxu0
      %v454 = vpop.f32.mrb[0].mxu0
      %v455 = vadd.f32 0.0, %v454
      %v456 = vpop.f32.mrb[0].mxu0
      %457 = vmatprep.mubr.bf16.mxu0 0
      %458 = vmatmul.mubr.bf16.gmra.mrb[0].mxu0 %v399
      %v459 = vpop.f32.mrb[0].mxu0
      %v460 = vadd.f32 0.0, %v459
      %v461 = vpop.f32.mrb[0].mxu0
      %v462 = vpop.f32.mrb[0].mxu0
      %v463 = vadd.f32 0.0, %v462
      %v464 = vpop.f32.mrb[0].mxu0
      %465 = vdwg.mxu0
      %v466 = vadd.f32 %v338, %v436
      %v467 = vadd.f32 %v341, %v439
      %v468 = vadd.f32 %v346, %v444
      %v469 = vadd.f32 %v349, %v447
      %v470 = vadd.f32 %v354, %v452
      %v471 = vadd.f32 %v357, %v455
      %v472 = vadd.f32 %v362, %v460
      %v473 = vadd.f32 %v365, %v463
      %s474 = scalar_lea.vmem %s165, 16
      %v475 = vld [vmem:[%s474] sm:$0xff]
      %v476 = vld [vmem:[%s474 + $0x10] sm:$0xff]
      %v477 = vld [vmem:[%s474 + $0x20] sm:$0xff]
      %v478 = vld [vmem:[%s474 + $0x30] sm:$0xff]
      %v479 = vld [vmem:[%s474 + $0x40] sm:$0xff]
      %v480 = vld [vmem:[%s474 + $0x50] sm:$0xff]
      %v481 = vld [vmem:[%s474 + $0x60] sm:$0xff]
      %v482 = vld [vmem:[%s474 + $0x70] sm:$0xff]
      %v483 = vpack.c.bf16 %v476, %v475
      %v484 = vpack.c.bf16 %v478, %v477
      %v485 = vpack.c.bf16 %v480, %v479
      %v486 = vpack.c.bf16 %v482, %v481
      %s487 = scalar_lea.vmem %s1, 24
      %v488 = vld [vmem:[%s487] sm:$0xf]
      %v489 = vld [vmem:[%s487 + $0x4] sm:$0xf]
      %v492 = vunpack.c.l.b16 %v488
      %v493 = vunpack.c.l.b16 %v489
      %v494 = vpack.c.b16 %v493, %v492
      %v497 = vsel %vm207, %v483, 0
      %v500 = vsel %vm207, %v484, 0
      %v503 = vsel %vm207, %v485, 0
      %v506 = vsel %vm207, %v486, 0
      %508 = vmatprep.subr.bf16.mxu0 0
      %509 = vmatpush1.bf16.msra.mxu0 %v494
      %510 = vmatprep.subr.bf16.mxu0 0
      %511 = vmatpush1.bf16.msra.mxu0 0
      %512 = vmatprep.subr.bf16.mxu0 0
      %513 = vmatpush1.bf16.msra.mxu0 0
      %514 = vmatprep.subr.bf16.mxu0 0
      %515 = vmatpush1.bf16.msra.mxu0 0
      %516 = vmatprep.subr.bf16.mxu0 0
      %517 = vmatpush1.bf16.msra.mxu0 0
      %518 = vmatprep.subr.bf16.mxu0 0
      %519 = vmatpush1.bf16.msra.mxu0 0
      %520 = vmatprep.subr.bf16.mxu0 0
      %521 = vmatpush1.bf16.msra.mxu0 0
      %522 = vmatprep.subr.bf16.mxu0 0
      %523 = vmatpush1.bf16.msra.mxu0 0
      %524 = vmatprep.subr.bf16.mxu0 0
      %525 = vmatpush1.bf16.msra.mxu0 0
      %526 = vmatprep.subr.bf16.mxu0 0
      %527 = vmatpush1.bf16.msra.mxu0 0
      %528 = vmatprep.subr.bf16.mxu0 0
      %529 = vmatpush1.bf16.msra.mxu0 0
      %530 = vmatprep.subr.bf16.mxu0 0
      %531 = vmatpush1.bf16.msra.mxu0 0
      %532 = vmatprep.subr.bf16.mxu0 0
      %533 = vmatpush1.bf16.msra.mxu0 0
      %534 = vmatprep.subr.bf16.mxu0 0
      %535 = vmatpush1.bf16.msra.mxu0 0
      %536 = vmatprep.subr.bf16.mxu0 0
      %537 = vmatpush1.bf16.msra.mxu0 0
      %538 = vmatprep.subr.bf16.mxu0 0
      %539 = vmatpush1.bf16.msra.mxu0 0
      %540 = vmatprep.mubr.bf16.mxu0 0
      %541 = vmatmul.mubr.bf16.gmra.mrb[0].mxu0 %v497
      %v542 = vpop.f32.mrb[0].mxu0
      %v543 = vadd.f32 0.0, %v542
      %v544 = vpop.f32.mrb[0].mxu0
      %v545 = vpop.f32.mrb[0].mxu0
      %v546 = vadd.f32 0.0, %v545
      %v547 = vpop.f32.mrb[0].mxu0
      %548 = vmatprep.mubr.bf16.mxu0 0
      %549 = vmatmul.mubr.bf16.gmra.mrb[0].mxu0 %v500
      %v550 = vpop.f32.mrb[0].mxu0
      %v551 = vadd.f32 0.0, %v550
      %v552 = vpop.f32.mrb[0].mxu0
      %v553 = vpop.f32.mrb[0].mxu0
      %v554 = vadd.f32 0.0, %v553
      %v555 = vpop.f32.mrb[0].mxu0
      %556 = vmatprep.mubr.bf16.mxu0 0
      %557 = vmatmul.mubr.bf16.gmra.mrb[0].mxu0 %v503
      %v558 = vpop.f32.mrb[0].mxu0
      %v559 = vadd.f32 0.0, %v558
      %v560 = vpop.f32.mrb[0].mxu0
      %v561 = vpop.f32.mrb[0].mxu0
      %v562 = vadd.f32 0.0, %v561
      %v563 = vpop.f32.mrb[0].mxu0
      %564 = vmatprep.mubr.bf16.mxu0 0
      %565 = vmatmul.mubr.bf16.gmra.mrb[0].mxu0 %v506
      %v566 = vpop.f32.mrb[0].mxu0
      %v567 = vadd.f32 0.0, %v566
      %v568 = vpop.f32.mrb[0].mxu0
      %v569 = vpop.f32.mrb[0].mxu0
      %v570 = vadd.f32 0.0, %v569
      %v571 = vpop.f32.mrb[0].mxu0
      %572 = vdwg.mxu0
      %v573 = vadd.f32 %v466, %v543
      %v574 = vadd.f32 %v467, %v546
      %v575 = vadd.f32 %v468, %v551
      %v576 = vadd.f32 %v469, %v554
      %v577 = vadd.f32 %v470, %v559
      %v578 = vadd.f32 %v471, %v562
      %v579 = vadd.f32 %v472, %v567
      %v580 = vadd.f32 %v473, %v570
      %v581 = vld [vmem:[%s474 + $0x1] sm:$0xff]
      %v582 = vld [vmem:[%s474 + $0x11] sm:$0xff]
      %v583 = vld [vmem:[%s474 + $0x21] sm:$0xff]
      %v584 = vld [vmem:[%s474 + $0x31] sm:$0xff]
      %v585 = vld [vmem:[%s474 + $0x41] sm:$0xff]
      %v586 = vld [vmem:[%s474 + $0x51] sm:$0xff]
      %v587 = vld [vmem:[%s474 + $0x61] sm:$0xff]
      %v588 = vld [vmem:[%s474 + $0x71] sm:$0xff]
      %v589 = vpack.c.bf16 %v582, %v581
      %v590 = vpack.c.bf16 %v584, %v583
      %v591 = vpack.c.bf16 %v586, %v585
      %v592 = vpack.c.bf16 %v588, %v587
      %s593 = scalar_lea.vmem %s1, 32
      %v594 = vld [vmem:[%s593] sm:$0xf]
      %v595 = vld [vmem:[%s593 + $0x4] sm:$0xf]
      %v598 = vunpack.c.l.b16 %v594
      %v599 = vunpack.c.l.b16 %v595
      %v600 = vpack.c.b16 %v599, %v598
      %v603 = vsel %vm207, %v589, 0
      %v606 = vsel %vm207, %v590, 0
      %v609 = vsel %vm207, %v591, 0
      %v612 = vsel %vm207, %v592, 0
      %614 = vmatprep.subr.bf16.mxu0 0
      %615 = vmatpush1.bf16.msra.mxu0 %v600
      %616 = vmatprep.subr.bf16.mxu0 0
      %617 = vmatpush1.bf16.msra.mxu0 0
      %618 = vmatprep.subr.bf16.mxu0 0
      %619 = vmatpush1.bf16.msra.mxu0 0
      %620 = vmatprep.subr.bf16.mxu0 0
      %621 = vmatpush1.bf16.msra.mxu0 0
      %622 = vmatprep.subr.bf16.mxu0 0
      %623 = vmatpush1.bf16.msra.mxu0 0
      %624 = vmatprep.subr.bf16.mxu0 0
      %625 = vmatpush1.bf16.msra.mxu0 0
      %626 = vmatprep.subr.bf16.mxu0 0
      %627 = vmatpush1.bf16.msra.mxu0 0
      %628 = vmatprep.subr.bf16.mxu0 0
      %629 = vmatpush1.bf16.msra.mxu0 0
      %630 = vmatprep.subr.bf16.mxu0 0
      %631 = vmatpush1.bf16.msra.mxu0 0
      %632 = vmatprep.subr.bf16.mxu0 0
      %633 = vmatpush1.bf16.msra.mxu0 0
      %634 = vmatprep.subr.bf16.mxu0 0
      %635 = vmatpush1.bf16.msra.mxu0 0
      %636 = vmatprep.subr.bf16.mxu0 0
      %637 = vmatpush1.bf16.msra.mxu0 0
      %638 = vmatprep.subr.bf16.mxu0 0
      %639 = vmatpush1.bf16.msra.mxu0 0
      %640 = vmatprep.subr.bf16.mxu0 0
      %641 = vmatpush1.bf16.msra.mxu0 0
      %642 = vmatprep.subr.bf16.mxu0 0
      %643 = vmatpush1.bf16.msra.mxu0 0
      %644 = vmatprep.subr.bf16.mxu0 0
      %645 = vmatpush1.bf16.msra.mxu0 0
      %646 = vmatprep.mubr.bf16.mxu0 0
      %647 = vmatmul.mubr.bf16.gmra.mrb[0].mxu0 %v603
      %v648 = vpop.f32.mrb[0].mxu0
      %v649 = vadd.f32 0.0, %v648
      %v650 = vpop.f32.mrb[0].mxu0
      %v651 = vpop.f32.mrb[0].mxu0
      %v652 = vadd.f32 0.0, %v651
      %v653 = vpop.f32.mrb[0].mxu0
      %654 = vmatprep.mubr.bf16.mxu0 0
      %655 = vmatmul.mubr.bf16.gmra.mrb[0].mxu0 %v606
      %v656 = vpop.f32.mrb[0].mxu0
      %v657 = vadd.f32 0.0, %v656
      %v658 = vpop.f32.mrb[0].mxu0
      %v659 = vpop.f32.mrb[0].mxu0
      %v660 = vadd.f32 0.0, %v659
      %v661 = vpop.f32.mrb[0].mxu0
      %662 = vmatprep.mubr.bf16.mxu0 0
      %663 = vmatmul.mubr.bf16.gmra.mrb[0].mxu0 %v609
      %v664 = vpop.f32.mrb[0].mxu0
      %v665 = vadd.f32 0.0, %v664
      %v666 = vpop.f32.mrb[0].mxu0
      %v667 = vpop.f32.mrb[0].mxu0
      %v668 = vadd.f32 0.0, %v667
      %v669 = vpop.f32.mrb[0].mxu0
      %670 = vmatprep.mubr.bf16.mxu0 0
      %671 = vmatmul.mubr.bf16.gmra.mrb[0].mxu0 %v612
      %v672 = vpop.f32.mrb[0].mxu0
      %v673 = vadd.f32 0.0, %v672
      %v674 = vpop.f32.mrb[0].mxu0
      %v675 = vpop.f32.mrb[0].mxu0
      %v676 = vadd.f32 0.0, %v675
      %v677 = vpop.f32.mrb[0].mxu0
      %678 = vdwg.mxu0
      %v679 = vadd.f32 %v573, %v649
      %v680 = vadd.f32 %v574, %v652
      %v681 = vadd.f32 %v575, %v657
      %v682 = vadd.f32 %v576, %v660
      %v683 = vadd.f32 %v577, %v665
      %v684 = vadd.f32 %v578, %v668
      %v685 = vadd.f32 %v579, %v673
      %v686 = vadd.f32 %v580, %v676
      %v687 = vld [vmem:[%s474 + $0x2] sm:$0xff]
      %v688 = vld [vmem:[%s474 + $0x12] sm:$0xff]
      %v689 = vld [vmem:[%s474 + $0x22] sm:$0xff]
      %v690 = vld [vmem:[%s474 + $0x32] sm:$0xff]
      %v691 = vld [vmem:[%s474 + $0x42] sm:$0xff]
      %v692 = vld [vmem:[%s474 + $0x52] sm:$0xff]
      %v693 = vld [vmem:[%s474 + $0x62] sm:$0xff]
      %v694 = vld [vmem:[%s474 + $0x72] sm:$0xff]
      %v695 = vpack.c.bf16 %v688, %v687
      %v696 = vpack.c.bf16 %v690, %v689
      %v697 = vpack.c.bf16 %v692, %v691
      %v698 = vpack.c.bf16 %v694, %v693
      %s699 = scalar_lea.vmem %s1, 40
      %v700 = vld [vmem:[%s699] sm:$0xf]
      %v701 = vld [vmem:[%s699 + $0x4] sm:$0xf]
      %v704 = vunpack.c.l.b16 %v700
      %v705 = vunpack.c.l.b16 %v701
      %v706 = vpack.c.b16 %v705, %v704
      %v709 = vsel %vm207, %v695, 0
      %v712 = vsel %vm207, %v696, 0
      %v715 = vsel %vm207, %v697, 0
      %v718 = vsel %vm207, %v698, 0
      %720 = vmatprep.subr.bf16.mxu0 0
      %721 = vmatpush1.bf16.msra.mxu0 %v706
      %722 = vmatprep.subr.bf16.mxu0 0
      %723 = vmatpush1.bf16.msra.mxu0 0
      %724 = vmatprep.subr.bf16.mxu0 0
      %725 = vmatpush1.bf16.msra.mxu0 0
      %726 = vmatprep.subr.bf16.mxu0 0
      %727 = vmatpush1.bf16.msra.mxu0 0
      %728 = vmatprep.subr.bf16.mxu0 0
      %729 = vmatpush1.bf16.msra.mxu0 0
      %730 = vmatprep.subr.bf16.mxu0 0
      %731 = vmatpush1.bf16.msra.mxu0 0
      %732 = vmatprep.subr.bf16.mxu0 0
      %733 = vmatpush1.bf16.msra.mxu0 0
      %734 = vmatprep.subr.bf16.mxu0 0
      %735 = vmatpush1.bf16.msra.mxu0 0
      %736 = vmatprep.subr.bf16.mxu0 0
      %737 = vmatpush1.bf16.msra.mxu0 0
      %738 = vmatprep.subr.bf16.mxu0 0
      %739 = vmatpush1.bf16.msra.mxu0 0
      %740 = vmatprep.subr.bf16.mxu0 0
      %741 = vmatpush1.bf16.msra.mxu0 0
      %742 = vmatprep.subr.bf16.mxu0 0
      %743 = vmatpush1.bf16.msra.mxu0 0
      %744 = vmatprep.subr.bf16.mxu0 0
      %745 = vmatpush1.bf16.msra.mxu0 0
      %746 = vmatprep.subr.bf16.mxu0 0
      %747 = vmatpush1.bf16.msra.mxu0 0
      %748 = vmatprep.subr.bf16.mxu0 0
      %749 = vmatpush1.bf16.msra.mxu0 0
      %750 = vmatprep.subr.bf16.mxu0 0
      %751 = vmatpush1.bf16.msra.mxu0 0
      %752 = vmatprep.mubr.bf16.mxu0 0
      %753 = vmatmul.mubr.bf16.gmra.mrb[0].mxu0 %v709
      %v754 = vpop.f32.mrb[0].mxu0
      %v755 = vadd.f32 0.0, %v754
      %v756 = vpop.f32.mrb[0].mxu0
      %v757 = vpop.f32.mrb[0].mxu0
      %v758 = vadd.f32 0.0, %v757
      %v759 = vpop.f32.mrb[0].mxu0
      %760 = vmatprep.mubr.bf16.mxu0 0
      %761 = vmatmul.mubr.bf16.gmra.mrb[0].mxu0 %v712
      %v762 = vpop.f32.mrb[0].mxu0
      %v763 = vadd.f32 0.0, %v762
      %v764 = vpop.f32.mrb[0].mxu0
      %v765 = vpop.f32.mrb[0].mxu0
      %v766 = vadd.f32 0.0, %v765
      %v767 = vpop.f32.mrb[0].mxu0
      %768 = vmatprep.mubr.bf16.mxu0 0
      %769 = vmatmul.mubr.bf16.gmra.mrb[0].mxu0 %v715
      %v770 = vpop.f32.mrb[0].mxu0
      %v771 = vadd.f32 0.0, %v770
      %v772 = vpop.f32.mrb[0].mxu0
      %v773 = vpop.f32.mrb[0].mxu0
      %v774 = vadd.f32 0.0, %v773
      %v775 = vpop.f32.mrb[0].mxu0
      %776 = vmatprep.mubr.bf16.mxu0 0
      %777 = vmatmul.mubr.bf16.gmra.mrb[0].mxu0 %v718
      %v778 = vpop.f32.mrb[0].mxu0
      %v779 = vadd.f32 0.0, %v778
      %v780 = vpop.f32.mrb[0].mxu0
      %v781 = vpop.f32.mrb[0].mxu0
      %v782 = vadd.f32 0.0, %v781
      %v783 = vpop.f32.mrb[0].mxu0
      %784 = vdwg.mxu0
      %v785 = vadd.f32 %v679, %v755
      %v786 = vadd.f32 %v680, %v758
      %v787 = vadd.f32 %v681, %v763
      %v788 = vadd.f32 %v682, %v766
      %v789 = vadd.f32 %v683, %v771
      %v790 = vadd.f32 %v684, %v774
      %v791 = vadd.f32 %v685, %v779
      %v792 = vadd.f32 %v686, %v782
      %s793 = scalar_lea.vmem %s165, 32
      %v794 = vld [vmem:[%s793] sm:$0xff]
      %v795 = vld [vmem:[%s793 + $0x10] sm:$0xff]
      %v796 = vld [vmem:[%s793 + $0x20] sm:$0xff]
      %v797 = vld [vmem:[%s793 + $0x30] sm:$0xff]
      %v798 = vld [vmem:[%s793 + $0x40] sm:$0xff]
      %v799 = vld [vmem:[%s793 + $0x50] sm:$0xff]
      %v800 = vld [vmem:[%s793 + $0x60] sm:$0xff]
      %v801 = vld [vmem:[%s793 + $0x70] sm:$0xff]
      %v802 = vpack.c.bf16 %v795, %v794
      %v803 = vpack.c.bf16 %v797, %v796
      %v804 = vpack.c.bf16 %v799, %v798
      %v805 = vpack.c.bf16 %v801, %v800
      %s806 = scalar_lea.vmem %s1, 48
      %v807 = vld [vmem:[%s806] sm:$0xf]
      %v808 = vld [vmem:[%s806 + $0x4] sm:$0xf]
      %v811 = vunpack.c.l.b16 %v807
      %v812 = vunpack.c.l.b16 %v808
      %v813 = vpack.c.b16 %v812, %v811
      %v816 = vsel %vm207, %v802, 0
      %v819 = vsel %vm207, %v803, 0
      %v822 = vsel %vm207, %v804, 0
      %v825 = vsel %vm207, %v805, 0
      %827 = vmatprep.subr.bf16.mxu0 0
      %828 = vmatpush1.bf16.msra.mxu0 %v813
      %829 = vmatprep.subr.bf16.mxu0 0
      %830 = vmatpush1.bf16.msra.mxu0 0
      %831 = vmatprep.subr.bf16.mxu0 0
      %832 = vmatpush1.bf16.msra.mxu0 0
      %833 = vmatprep.subr.bf16.mxu0 0
      %834 = vmatpush1.bf16.msra.mxu0 0
      %835 = vmatprep.subr.bf16.mxu0 0
      %836 = vmatpush1.bf16.msra.mxu0 0
      %837 = vmatprep.subr.bf16.mxu0 0
      %838 = vmatpush1.bf16.msra.mxu0 0
      %839 = vmatprep.subr.bf16.mxu0 0
      %840 = vmatpush1.bf16.msra.mxu0 0
      %841 = vmatprep.subr.bf16.mxu0 0
      %842 = vmatpush1.bf16.msra.mxu0 0
      %843 = vmatprep.subr.bf16.mxu0 0
      %844 = vmatpush1.bf16.msra.mxu0 0
      %845 = vmatprep.subr.bf16.mxu0 0
      %846 = vmatpush1.bf16.msra.mxu0 0
      %847 = vmatprep.subr.bf16.mxu0 0
      %848 = vmatpush1.bf16.msra.mxu0 0
      %849 = vmatprep.subr.bf16.mxu0 0
      %850 = vmatpush1.bf16.msra.mxu0 0
      %851 = vmatprep.subr.bf16.mxu0 0
      %852 = vmatpush1.bf16.msra.mxu0 0
      %853 = vmatprep.subr.bf16.mxu0 0
      %854 = vmatpush1.bf16.msra.mxu0 0
      %855 = vmatprep.subr.bf16.mxu0 0
      %856 = vmatpush1.bf16.msra.mxu0 0
      %857 = vmatprep.subr.bf16.mxu0 0
      %858 = vmatpush1.bf16.msra.mxu0 0
      %859 = vmatprep.mubr.bf16.mxu0 0
      %860 = vmatmul.mubr.bf16.gmra.mrb[0].mxu0 %v816
      %v861 = vpop.f32.mrb[0].mxu0
      %v862 = vadd.f32 0.0, %v861
      %v863 = vpop.f32.mrb[0].mxu0
      %v864 = vpop.f32.mrb[0].mxu0
      %v865 = vadd.f32 0.0, %v864
      %v866 = vpop.f32.mrb[0].mxu0
      %867 = vmatprep.mubr.bf16.mxu0 0
      %868 = vmatmul.mubr.bf16.gmra.mrb[0].mxu0 %v819
      %v869 = vpop.f32.mrb[0].mxu0
      %v870 = vadd.f32 0.0, %v869
      %v871 = vpop.f32.mrb[0].mxu0
      %v872 = vpop.f32.mrb[0].mxu0
      %v873 = vadd.f32 0.0, %v872
      %v874 = vpop.f32.mrb[0].mxu0
      %875 = vmatprep.mubr.bf16.mxu0 0
      %876 = vmatmul.mubr.bf16.gmra.mrb[0].mxu0 %v822
      %v877 = vpop.f32.mrb[0].mxu0
      %v878 = vadd.f32 0.0, %v877
      %v879 = vpop.f32.mrb[0].mxu0
      %v880 = vpop.f32.mrb[0].mxu0
      %v881 = vadd.f32 0.0, %v880
      %v882 = vpop.f32.mrb[0].mxu0
      %883 = vmatprep.mubr.bf16.mxu0 0
      %884 = vmatmul.mubr.bf16.gmra.mrb[0].mxu0 %v825
      %v885 = vpop.f32.mrb[0].mxu0
      %v886 = vadd.f32 0.0, %v885
      %v887 = vpop.f32.mrb[0].mxu0
      %v888 = vpop.f32.mrb[0].mxu0
      %v889 = vadd.f32 0.0, %v888
      %v890 = vpop.f32.mrb[0].mxu0
      %891 = vdwg.mxu0
      %v892 = vadd.f32 %v785, %v862
      %v893 = vadd.f32 %v786, %v865
      %v894 = vadd.f32 %v787, %v870
      %v895 = vadd.f32 %v788, %v873
      %v896 = vadd.f32 %v789, %v878
      %v897 = vadd.f32 %v790, %v881
      %v898 = vadd.f32 %v791, %v886
      %v899 = vadd.f32 %v792, %v889
      %v900 = vld [vmem:[%s793 + $0x1] sm:$0xff]
      %v901 = vld [vmem:[%s793 + $0x11] sm:$0xff]
      %v902 = vld [vmem:[%s793 + $0x21] sm:$0xff]
      %v903 = vld [vmem:[%s793 + $0x31] sm:$0xff]
      %v904 = vld [vmem:[%s793 + $0x41] sm:$0xff]
      %v905 = vld [vmem:[%s793 + $0x51] sm:$0xff]
      %v906 = vld [vmem:[%s793 + $0x61] sm:$0xff]
      %v907 = vld [vmem:[%s793 + $0x71] sm:$0xff]
      %v908 = vpack.c.bf16 %v901, %v900
      %v909 = vpack.c.bf16 %v903, %v902
      %v910 = vpack.c.bf16 %v905, %v904
      %v911 = vpack.c.bf16 %v907, %v906
      %s912 = scalar_lea.vmem %s1, 56
      %v913 = vld [vmem:[%s912] sm:$0xf]
      %v914 = vld [vmem:[%s912 + $0x4] sm:$0xf]
      %v917 = vunpack.c.l.b16 %v913
      %v918 = vunpack.c.l.b16 %v914
      %v919 = vpack.c.b16 %v918, %v917
      %v922 = vsel %vm207, %v908, 0
      %v925 = vsel %vm207, %v909, 0
      %v928 = vsel %vm207, %v910, 0
      %v931 = vsel %vm207, %v911, 0
      %933 = vmatprep.subr.bf16.mxu0 0
      %934 = vmatpush1.bf16.msra.mxu0 %v919
      %935 = vmatprep.subr.bf16.mxu0 0
      %936 = vmatpush1.bf16.msra.mxu0 0
      %937 = vmatprep.subr.bf16.mxu0 0
      %938 = vmatpush1.bf16.msra.mxu0 0
      %939 = vmatprep.subr.bf16.mxu0 0
      %940 = vmatpush1.bf16.msra.mxu0 0
      %941 = vmatprep.subr.bf16.mxu0 0
      %942 = vmatpush1.bf16.msra.mxu0 0
      %943 = vmatprep.subr.bf16.mxu0 0
      %944 = vmatpush1.bf16.msra.mxu0 0
      %945 = vmatprep.subr.bf16.mxu0 0
      %946 = vmatpush1.bf16.msra.mxu0 0
      %947 = vmatprep.subr.bf16.mxu0 0
      %948 = vmatpush1.bf16.msra.mxu0 0
      %949 = vmatprep.subr.bf16.mxu0 0
      %950 = vmatpush1.bf16.msra.mxu0 0
      %951 = vmatprep.subr.bf16.mxu0 0
      %952 = vmatpush1.bf16.msra.mxu0 0
      %953 = vmatprep.subr.bf16.mxu0 0
      %954 = vmatpush1.bf16.msra.mxu0 0
      %955 = vmatprep.subr.bf16.mxu0 0
      %956 = vmatpush1.bf16.msra.mxu0 0
      %957 = vmatprep.subr.bf16.mxu0 0
      %958 = vmatpush1.bf16.msra.mxu0 0
      %959 = vmatprep.subr.bf16.mxu0 0
      %960 = vmatpush1.bf16.msra.mxu0 0
      %961 = vmatprep.subr.bf16.mxu0 0
      %962 = vmatpush1.bf16.msra.mxu0 0
      %963 = vmatprep.subr.bf16.mxu0 0
      %964 = vmatpush1.bf16.msra.mxu0 0
      %965 = vmatprep.mubr.bf16.mxu0 0
      %966 = vmatmul.mubr.bf16.gmra.mrb[0].mxu0 %v922
      %v967 = vpop.f32.mrb[0].mxu0
      %v968 = vadd.f32 0.0, %v967
      %v969 = vpop.f32.mrb[0].mxu0
      %v970 = vpop.f32.mrb[0].mxu0
      %v971 = vadd.f32 0.0, %v970
      %v972 = vpop.f32.mrb[0].mxu0
      %973 = vmatprep.mubr.bf16.mxu0 0
      %974 = vmatmul.mubr.bf16.gmra.mrb[0].mxu0 %v925
      %v975 = vpop.f32.mrb[0].mxu0
      %v976 = vadd.f32 0.0, %v975
      %v977 = vpop.f32.mrb[0].mxu0
      %v978 = vpop.f32.mrb[0].mxu0
      %v979 = vadd.f32 0.0, %v978
      %v980 = vpop.f32.mrb[0].mxu0
      %981 = vmatprep.mubr.bf16.mxu0 0
      %982 = vmatmul.mubr.bf16.gmra.mrb[0].mxu0 %v928
      %v983 = vpop.f32.mrb[0].mxu0
      %v984 = vadd.f32 0.0, %v983
      %v985 = vpop.f32.mrb[0].mxu0
      %v986 = vpop.f32.mrb[0].mxu0
      %v987 = vadd.f32 0.0, %v986
      %v988 = vpop.f32.mrb[0].mxu0
      %989 = vmatprep.mubr.bf16.mxu0 0
      %990 = vmatmul.mubr.bf16.gmra.mrb[0].mxu0 %v931
      %v991 = vpop.f32.mrb[0].mxu0
      %v992 = vadd.f32 0.0, %v991
      %v993 = vpop.f32.mrb[0].mxu0
      %v994 = vpop.f32.mrb[0].mxu0
      %v995 = vadd.f32 0.0, %v994
      %v996 = vpop.f32.mrb[0].mxu0
      %997 = vdwg.mxu0
      %v998 = vadd.f32 %v892, %v968
      %v999 = vadd.f32 %v893, %v971
      %v1000 = vadd.f32 %v894, %v976
      %v1001 = vadd.f32 %v895, %v979
      %v1002 = vadd.f32 %v896, %v984
      %v1003 = vadd.f32 %v897, %v987
      %v1004 = vadd.f32 %v898, %v992
      %v1005 = vadd.f32 %v899, %v995
      %v1006 = vld [vmem:[%s793 + $0x2] sm:$0xff]
      %v1007 = vld [vmem:[%s793 + $0x12] sm:$0xff]
      %v1008 = vld [vmem:[%s793 + $0x22] sm:$0xff]
      %v1009 = vld [vmem:[%s793 + $0x32] sm:$0xff]
      %v1010 = vld [vmem:[%s793 + $0x42] sm:$0xff]
      %v1011 = vld [vmem:[%s793 + $0x52] sm:$0xff]
      %v1012 = vld [vmem:[%s793 + $0x62] sm:$0xff]
      %v1013 = vld [vmem:[%s793 + $0x72] sm:$0xff]
      %v1014 = vpack.c.bf16 %v1007, %v1006
      %v1015 = vpack.c.bf16 %v1009, %v1008
      %v1016 = vpack.c.bf16 %v1011, %v1010
      %v1017 = vpack.c.bf16 %v1013, %v1012
      %s1018 = scalar_lea.vmem %s1, 64
      %v1019 = vld [vmem:[%s1018] sm:$0xf]
      %v1020 = vld [vmem:[%s1018 + $0x4] sm:$0xf]
      %v1023 = vunpack.c.l.b16 %v1019
      %v1024 = vunpack.c.l.b16 %v1020
      %v1025 = vpack.c.b16 %v1024, %v1023
      %v1028 = vsel %vm207, %v1014, 0
      %v1031 = vsel %vm207, %v1015, 0
      %v1034 = vsel %vm207, %v1016, 0
      %v1037 = vsel %vm207, %v1017, 0
      %1039 = vmatprep.subr.bf16.mxu0 0
      %1040 = vmatpush1.bf16.msra.mxu0 %v1025
      %1041 = vmatprep.subr.bf16.mxu0 0
      %1042 = vmatpush1.bf16.msra.mxu0 0
      %1043 = vmatprep.subr.bf16.mxu0 0
      %1044 = vmatpush1.bf16.msra.mxu0 0
      %1045 = vmatprep.subr.bf16.mxu0 0
      %1046 = vmatpush1.bf16.msra.mxu0 0
      %1047 = vmatprep.subr.bf16.mxu0 0
      %1048 = vmatpush1.bf16.msra.mxu0 0
      %1049 = vmatprep.subr.bf16.mxu0 0
      %1050 = vmatpush1.bf16.msra.mxu0 0
      %1051 = vmatprep.subr.bf16.mxu0 0
      %1052 = vmatpush1.bf16.msra.mxu0 0
      %1053 = vmatprep.subr.bf16.mxu0 0
      %1054 = vmatpush1.bf16.msra.mxu0 0
      %1055 = vmatprep.subr.bf16.mxu0 0
      %1056 = vmatpush1.bf16.msra.mxu0 0
      %1057 = vmatprep.subr.bf16.mxu0 0
      %1058 = vmatpush1.bf16.msra.mxu0 0
      %1059 = vmatprep.subr.bf16.mxu0 0
      %1060 = vmatpush1.bf16.msra.mxu0 0
      %1061 = vmatprep.subr.bf16.mxu0 0
      %1062 = vmatpush1.bf16.msra.mxu0 0
      %1063 = vmatprep.subr.bf16.mxu0 0
      %1064 = vmatpush1.bf16.msra.mxu0 0
      %1065 = vmatprep.subr.bf16.mxu0 0
      %1066 = vmatpush1.bf16.msra.mxu0 0
      %1067 = vmatprep.subr.bf16.mxu0 0
      %1068 = vmatpush1.bf16.msra.mxu0 0
      %1069 = vmatprep.subr.bf16.mxu0 0
      %1070 = vmatpush1.bf16.msra.mxu0 0
      %1071 = vmatprep.mubr.bf16.mxu0 0
      %1072 = vmatmul.mubr.bf16.gmra.mrb[0].mxu0 %v1028
      %v1073 = vpop.f32.mrb[0].mxu0
      %v1074 = vadd.f32 0.0, %v1073
      %v1075 = vpop.f32.mrb[0].mxu0
      %v1076 = vpop.f32.mrb[0].mxu0
      %v1077 = vadd.f32 0.0, %v1076
      %v1078 = vpop.f32.mrb[0].mxu0
      %1079 = vmatprep.mubr.bf16.mxu0 0
      %1080 = vmatmul.mubr.bf16.gmra.mrb[0].mxu0 %v1031
      %v1081 = vpop.f32.mrb[0].mxu0
      %v1082 = vadd.f32 0.0, %v1081
      %v1083 = vpop.f32.mrb[0].mxu0
      %v1084 = vpop.f32.mrb[0].mxu0
      %v1085 = vadd.f32 0.0, %v1084
      %v1086 = vpop.f32.mrb[0].mxu0
      %1087 = vmatprep.mubr.bf16.mxu0 0
      %1088 = vmatmul.mubr.bf16.gmra.mrb[0].mxu0 %v1034
      %v1089 = vpop.f32.mrb[0].mxu0
      %v1090 = vadd.f32 0.0, %v1089
      %v1091 = vpop.f32.mrb[0].mxu0
      %v1092 = vpop.f32.mrb[0].mxu0
      %v1093 = vadd.f32 0.0, %v1092
      %v1094 = vpop.f32.mrb[0].mxu0
      %1095 = vmatprep.mubr.bf16.mxu0 0
      %1096 = vmatmul.mubr.bf16.gmra.mrb[0].mxu0 %v1037
      %v1097 = vpop.f32.mrb[0].mxu0
      %v1098 = vadd.f32 0.0, %v1097
      %v1099 = vpop.f32.mrb[0].mxu0
      %v1100 = vpop.f32.mrb[0].mxu0
      %v1101 = vadd.f32 0.0, %v1100
      %v1102 = vpop.f32.mrb[0].mxu0
      %1103 = vdwg.mxu0
      %v1104 = vadd.f32 %v998, %v1074
      %v1105 = vadd.f32 %v999, %v1077
      %v1106 = vadd.f32 %v1000, %v1082
      %v1107 = vadd.f32 %v1001, %v1085
      %v1108 = vadd.f32 %v1002, %v1090
      %v1109 = vadd.f32 %v1003, %v1093
      %v1110 = vadd.f32 %v1004, %v1098
      %v1111 = vadd.f32 %v1005, %v1101
      %v1112 = vld [vmem:[%s2] sm:$0x1]
      %v1114 = vlaneseq
      %v1115 = vshrl.u32 %v1114, 7
      %v1116 = vsub.s32 0, %v1115
      %v1117 = vrot.slane %v1112, %v1116
      %v1119 = vadd.f32 %v1104, %v1117
      %v1120 = vadd.f32 %v1105, %v1117
      %v1121 = vadd.f32 %v1106, %v1117
      %v1122 = vadd.f32 %v1107, %v1117
      %v1123 = vadd.f32 %v1108, %v1117
      %v1124 = vadd.f32 %v1109, %v1117
      %v1125 = vadd.f32 %v1110, %v1117
      %v1126 = vadd.f32 %v1111, %v1117
      %v1127 = vmax.f32 %v1119, 0.0
      %v1128 = vmax.f32 %v1120, 0.0
      %v1129 = vmax.f32 %v1121, 0.0
      %v1130 = vmax.f32 %v1122, 0.0
      %v1131 = vmax.f32 %v1123, 0.0
      %v1132 = vmax.f32 %v1124, 0.0
      %v1133 = vmax.f32 %v1125, 0.0
      %v1134 = vmax.f32 %v1126, 0.0
      %vm1135 = vcmask 261120
      %1136 = vst.msk [vmem:[%s170] sm:$0xff] %vm1135, %v1127
      %1137 = vst.msk [vmem:[%s170 + $0x8] sm:$0xff] %vm1135, %v1128
      %1138 = vst.msk [vmem:[%s170 + $0x10] sm:$0xff] %vm1135, %v1129
      %1139 = vst.msk [vmem:[%s170 + $0x18] sm:$0xff] %vm1135, %v1130
      %1140 = vst.msk [vmem:[%s170 + $0x20] sm:$0xff] %vm1135, %v1131
      %1141 = vst.msk [vmem:[%s170 + $0x28] sm:$0xff] %vm1135, %v1132
      %1142 = vst.msk [vmem:[%s170 + $0x30] sm:$0xff] %vm1135, %v1133
      %1143 = vst.msk [vmem:[%s170 + $0x38] sm:$0xff] %vm1135, %v1134
      %p1144 = scmp.lt.s32.totalorder %s14, 1
      %s1145 = scalar_select %p1144, %s14, 1
      %s1146 = smul.addr %s1145, 8
      %s1147 = smul.addr %s1146, 8
      %s1148 = scalar_lea.vmem %s3, %s1147
      // Predicated region
      $region33: #{tps_forward.7} parent=31 // pred_check
        %p1149 = pneg %p100
      $region34: #{tps_forward.7} parent=31 // pred_check_branch
        %1151 = sbr.rel (%p1149) target = $region36
      $region35: #{tps_forward.7} parent=31 // pred_region
        _
      $region36: #{tps_forward.7} parent=31 // pred_fallthru
        _
    $region32: #{tps_forward.7} parent=5 // pred_fallthru
      _
    %p1152 = scmp.le.s32.totalorder 2, %s9
    // Predicated region
    $region37: #{tps_forward.7} parent=5 // pred_check
      %p1153 = pneg %p1152
    $region38: #{tps_forward.7} parent=5 // pred_check_branch
      %1155 = sbr.rel (%p1153) target = $region40
    $region39: #{tps_forward.7} parent=5 // pred_region
      %s1156 = ssub.s32 %s9, 2
      // Predicated region
      $region41: #{tps_forward.7} parent=39 // pred_check
        %p1157 = pneg %p106
      $region42: #{tps_forward.7} parent=39 // pred_check_branch
        %1159 = sbr.rel (%p1157) target = $region44
      $region43: #{tps_forward.7} parent=39 // pred_region
        %p1160 = scmp.lt.s32.totalorder %s15, 1
        %s1161 = scalar_select %p1160, %s15, 1
        %s1162 = smul.addr %s1161, 8
        %s1163 = smul.addr %s1162, 8
        %s1164 = scalar_lea.vmem %s3, %s1163
      $region44: #{tps_forward.7} parent=39 // pred_fallthru
        _
    $region40: #{tps_forward.7} parent=5 // pred_fallthru
      _
  $region6: #{tps_forward.7} parent=0 // loop_footer
    %s13 = sadd.s32 1, %s9
  $region7: #{tps_forward.7} parent=0 // loop_footer_branch
    %8 = sbr.rel target = $region3
  $region8: #{tps_forward.7} parent=0 // loop_exit
    _

// kernel: tps_forward.6
$region0: #{tps_forward.6}
  #allocation0 [shape = 'u32[]', space=smem, size = 0x4, offset = 0x4, fixed_abs, tag = 'smem constant byte address 0x4 - core index']
  #allocation1 [shape = 'u32[144,128]{1,0:T(1,128)}', space=vmem, size = 0x12000, scoped, tag = 'internal scratch']
  %s0 = inlined_call_operand.vmem [shape: f32[2,18,18,4], index: 0, kind: input, shape index: {}]
  %s1 = inlined_call_operand.vmem [shape: bf16[9,4,16], index: 1, kind: input, shape index: {}]
  %s2 = inlined_call_operand.vmem [shape: f32[1,16], index: 2, kind: input, shape index: {}]
  %s3 = inlined_call_operand.vmem [shape: f32[2,256,16], index: 3, kind: output, shape index: {}]
  %s4 = sld [smem:[#allocation0]]
  $region45: #{tps_forward.6} parent=0
    _
  %s6 = ssub.s32 1, %s4
  %s7 = scalar_select 0, %s6, %s4
  loop: start=0, step=1, limit=4
  $region2: #{tps_forward.6} parent=0 // loop_pre_header
    _
  $region3: #{tps_forward.6} parent=0 // loop_header
    %s9 = sphi 0, %s13
    %p10 = scmp.ge.s32.totalorder %s9, 4
    %s19 = sphi 0, %s21
    %s22 = sphi 0, %s19
    %s23 = sphi 0, %s22
    %s39 = sphi 0, %s23
    %s43 = sphi 0, %s43
    %s45 = sphi 0, %s43
    %s46 = sphi 0, %s45
    %s60 = sphi 0, %s46
    %s64 = sphi 0, %s64
    %s66 = sphi 0, %s64
    %s67 = sphi 0, %s66
    %s81 = sphi 0, %s67
    %s87 = sphi 0, %s89
    %s90 = sphi 0, %s87
    %s91 = sphi 0, %s90
    %s107 = sphi 0, %s91
  $region4: #{tps_forward.6} parent=0 // loop_header_branch
    %12 = sbr.rel (%p10) target = $region8
  $region5: #{tps_forward.6} parent=0 // loop_body
    %s14 = ssub.s32 %s9, 1
    %s15 = ssub.s32 %s9, 2
    %s16 = sadd.s32 %s9, 1
    %s17 = ssub.s32 %s9, %s16
    %p18 = scmp.eq.s32.totalorder %s17, 0
    %s20 = sadd.s32 %s19, 1
    %s21 = scalar_select %p18, %s19, %s20
    %p24 = pneg %p18
    %p25 = scmp.eq.s32.totalorder %s9, 1
    %p26 = por %p24, %p25
    %p27 = scmp.ne.s32.totalorder %s19, %s22
    %p28 = scmp.eq.s32.totalorder %s9, 0
    %p29 = por %p27, %p28
    %p30 = scmp.ne.s32.totalorder %s19, %s22
    %p31 = scmp.eq.s32.totalorder %s14, 1
    %p32 = por %p30, %p31
    %p33 = scmp.ne.s32.totalorder %s22, %s23
    %p34 = scmp.eq.s32.totalorder %s14, 0
    %p35 = por %p33, %p34
    %p36 = scmp.ne.s32.totalorder %s22, %s23
    %p37 = scmp.eq.s32.totalorder %s15, 1
    %p38 = por %p36, %p37
    %p40 = scmp.ne.s32.totalorder %s23, %s39
    %p41 = scmp.eq.s32.totalorder %s15, 0
    %p42 = por %p40, %p41
    %s44 = sadd.s32 %s43, 1
    %p47 = scmp.eq.s32.totalorder %s9, 1
    %p48 = scmp.ne.s32.totalorder %s43, %s45
    %p49 = scmp.eq.s32.totalorder %s9, 0
    %p50 = por %p48, %p49
    %p51 = scmp.ne.s32.totalorder %s43, %s45
    %p52 = scmp.eq.s32.totalorder %s14, 1
    %p53 = por %p51, %p52
    %p54 = scmp.ne.s32.totalorder %s45, %s46
    %p55 = scmp.eq.s32.totalorder %s14, 0
    %p56 = por %p54, %p55
    %p57 = scmp.ne.s32.totalorder %s45, %s46
    %p58 = scmp.eq.s32.totalorder %s15, 1
    %p59 = por %p57, %p58
    %p61 = scmp.ne.s32.totalorder %s46, %s60
    %p62 = scmp.eq.s32.totalorder %s15, 0
    %p63 = por %p61, %p62
    %s65 = sadd.s32 %s64, 1
    %p68 = scmp.eq.s32.totalorder %s9, 1
    %p69 = scmp.ne.s32.totalorder %s64, %s66
    %p70 = scmp.eq.s32.totalorder %s9, 0
    %p71 = por %p69, %p70
    %p72 = scmp.ne.s32.totalorder %s64, %s66
    %p73 = scmp.eq.s32.totalorder %s14, 1
    %p74 = por %p72, %p73
    %p75 = scmp.ne.s32.totalorder %s66, %s67
    %p76 = scmp.eq.s32.totalorder %s14, 0
    %p77 = por %p75, %p76
    %p78 = scmp.ne.s32.totalorder %s66, %s67
    %p79 = scmp.eq.s32.totalorder %s15, 1
    %p80 = por %p78, %p79
    %p82 = scmp.ne.s32.totalorder %s67, %s81
    %p83 = scmp.eq.s32.totalorder %s15, 0
    %p84 = por %p82, %p83
    %s85 = ssub.s32 %s9, %s16
    %p86 = scmp.eq.s32.totalorder %s85, 0
    %s88 = sadd.s32 %s87, 1
    %s89 = scalar_select %p86, %s87, %s88
    %p92 = pneg %p86
    %p93 = scmp.eq.s32.totalorder %s9, 1
    %p94 = por %p92, %p93
    %p95 = scmp.ne.s32.totalorder %s87, %s90
    %p96 = scmp.eq.s32.totalorder %s9, 0
    %p97 = por %p95, %p96
    %p98 = scmp.ne.s32.totalorder %s87, %s90
    %p99 = scmp.eq.s32.totalorder %s14, 1
    %p100 = por %p98, %p99
    %p101 = scmp.ne.s32.totalorder %s90, %s91
    %p102 = scmp.eq.s32.totalorder %s14, 0
    %p103 = por %p101, %p102
    %p104 = scmp.ne.s32.totalorder %s90, %s91
    %p105 = scmp.eq.s32.totalorder %s15, 1
    %p106 = por %p104, %p105
    %p108 = scmp.ne.s32.totalorder %s91, %s107
    %p109 = scmp.eq.s32.totalorder %s15, 0
    %p110 = por %p108, %p109
    %p111 = scmp.le.s32.totalorder 1, %s9
    %p112 = scmp.lt.s32.totalorder %s9, 3
    %p113 = pnand %p111, %p112
    %p114 = pneg %p113
    // Predicated region
    $region9: #{tps_forward.6} parent=5 // pred_check
      _
    $region10: #{tps_forward.6} parent=5 // pred_check_branch
      %116 = sbr.rel (%p113) target = $region12
    $region11: #{tps_forward.6} parent=5 // pred_region
      %s117 = ssub.s32 %s9, 1
      // Predicated region
      $region13: #{tps_forward.6} parent=11 // pred_check
        %p118 = pneg %p56
      $region14: #{tps_forward.6} parent=11 // pred_check_branch
        %120 = sbr.rel (%p118) target = $region16
      $region15: #{tps_forward.6} parent=11 // pred_region
        _
      $region16: #{tps_forward.6} parent=11 // pred_fallthru
        _
      // Predicated region
      $region17: #{tps_forward.6} parent=11 // pred_check
        %p121 = pneg %p77
      $region18: #{tps_forward.6} parent=11 // pred_check_branch
        %123 = sbr.rel (%p121) target = $region20
      $region19: #{tps_forward.6} parent=11 // pred_region
        _
      $region20: #{tps_forward.6} parent=11 // pred_fallthru
        _
    $region12: #{tps_forward.6} parent=5 // pred_fallthru
      _
    %p124 = scmp.lt.s32.totalorder %s9, 2
    // Predicated region
    $region21: #{tps_forward.6} parent=5 // pred_check
      %p125 = pneg %p124
    $region22: #{tps_forward.6} parent=5 // pred_check_branch
      %127 = sbr.rel (%p125) target = $region24
    $region23: #{tps_forward.6} parent=5 // pred_region
      // Predicated region
      $region25: #{tps_forward.6} parent=23 // pred_check
        %p128 = pneg %p29
      $region26: #{tps_forward.6} parent=23 // pred_check_branch
        %130 = sbr.rel (%p128) target = $region28
      $region27: #{tps_forward.6} parent=23 // pred_region
        %p131 = scmp.lt.s32.totalorder %s9, 1
        %s132 = scalar_select %p131, %s9, 1
        %s133 = smul.addr %s132, 54
        %s134 = smul.addr %s133, 8
        %s135 = scalar_lea.vmem %s0, %s134
      $region28: #{tps_forward.6} parent=23 // pred_fallthru
        _
    $region24: #{tps_forward.6} parent=5 // pred_fallthru
      _
    %p136 = scmp.le.s32.totalorder 1, %s9
    %p137 = scmp.lt.s32.totalorder %s9, 3
    %p138 = pnand %p136, %p137
    %p139 = pneg %p138
    // Predicated region
    $region29: #{tps_forward.6} parent=5 // pred_check
      _
    $region30: #{tps_forward.6} parent=5 // pred_check_branch
      %141 = sbr.rel (%p138) target = $region32
    $region31: #{tps_forward.6} parent=5 // pred_region
      %s142 = ssub.s32 %s9, 1
      %p143 = scmp.lt.s32.totalorder %s14, 1
      %s144 = scalar_select %p143, %s14, 1
      %s145 = smul.addr %s144, 54
      %s146 = smul.addr %s145, 8
      %s147 = scalar_lea.vmem %s0, %s146
      %p148 = pneg %p35
      %p149 = pneg %p32
      %p150 = pneg %p56
      %p151 = pneg %p53
      %p152 = pneg %p77
      %p153 = pneg %p74
      %p154 = pneg %p103
      %p155 = pneg %p100
      %p156 = scmp.lt.s32.totalorder %s14, 1
      %s157 = scalar_select %p156, %s14, 1
      %s158 = smul.addr %s157, 32
      %s159 = smul.addr %s158, 8
      %s160 = scalar_lea.vmem %s3, %s159
      %p161 = scmp.lt.s32.totalorder %s14, 1
      %s162 = scalar_select %p161, %s14, 1
      %s163 = smul.addr %s162, 54
      %s164 = smul.addr %s163, 8
      %s165 = scalar_lea.vmem %s0, %s164
      %p166 = scmp.lt.s32.totalorder %s14, 1
      %s167 = scalar_select %p166, %s14, 1
      %s168 = smul.addr %s167, 32
      %s169 = smul.addr %s168, 8
      %s170 = scalar_lea.vmem %s3, %s169
      %v172 = vld [vmem:[%s165] sm:$0xff]
      %v173 = vld [vmem:[%s165 + $0x8] sm:$0xff]
      %v174 = vld [vmem:[%s165 + $0x18] sm:$0xff]
      %v175 = vld [vmem:[%s165 + $0x20] sm:$0xff]
      %v176 = vld [vmem:[%s165 + $0x30] sm:$0xff]
      %v177 = vld [vmem:[%s165 + $0x38] sm:$0xff]
      %v178 = vld [vmem:[%s165 + $0x48] sm:$0xff]
      %v179 = vld [vmem:[%s165 + $0x50] sm:$0xff]
      %v180 = vld [vmem:[%s165 + $0x60] sm:$0xff]
      %v181 = vld [vmem:[%s165 + $0x68] sm:$0xff]
      %v182 = vld [vmem:[%s165 + $0x78] sm:$0xff]
      %v183 = vld [vmem:[%s165 + $0x80] sm:$0xff]
      %v184 = vld [vmem:[%s165 + $0x90] sm:$0xff]
      %v185 = vld [vmem:[%s165 + $0x98] sm:$0xff]
      %v186 = vld [vmem:[%s165 + $0xa8] sm:$0xff]
      %v187 = vld [vmem:[%s165 + $0xb0] sm:$0xff]
      %v188 = vld [vmem:[%s165 + $0xc0] sm:$0xff]
      %v189 = vld [vmem:[%s165 + $0xc8] sm:$0xff]
      %v190 = vld [vmem:[%s165 + $0xd8] sm:$0xff]
      %v191 = vld [vmem:[%s165 + $0xe0] sm:$0xff]
      %v192 = vld [vmem:[%s165 + $0xf0] sm:$0xff]
      %v193 = vld [vmem:[%s165 + $0xf8] sm:$0xff]
      %v194 = vld [vmem:[%s165 + $0x108] sm:$0xff]
      %v195 = vld [vmem:[%s165 + $0x110] sm:$0xff]
      %v196 = vld [vmem:[%s165 + $0x120] sm:$0xff]
      %v197 = vld [vmem:[%s165 + $0x128] sm:$0xff]
      %v198 = vld [vmem:[%s165 + $0x138] sm:$0xff]
      %v199 = vld [vmem:[%s165 + $0x140] sm:$0xff]
      %v200 = vld [vmem:[%s165 + $0x150] sm:$0xff]
      %v201 = vld [vmem:[%s165 + $0x158] sm:$0xff]
      %v202 = vld [vmem:[%s165 + $0x168] sm:$0xff]
      %v203 = vld [vmem:[%s165 + $0x170] sm:$0xff]
      %v204 = vpack.c.bf16 %v173, %v172
      %v205 = vpack.c.bf16 %v175, %v174
      %v206 = vpack.c.bf16 %v177, %v176
      %v207 = vpack.c.bf16 %v179, %v178
      %v208 = vpack.c.bf16 %v181, %v180
      %v209 = vpack.c.bf16 %v183, %v182
      %v210 = vpack.c.bf16 %v185, %v184
      %v211 = vpack.c.bf16 %v187, %v186
      %v212 = vpack.c.bf16 %v189, %v188
      %v213 = vpack.c.bf16 %v191, %v190
      %v214 = vpack.c.bf16 %v193, %v192
      %v215 = vpack.c.bf16 %v195, %v194
      %v216 = vpack.c.bf16 %v197, %v196
      %v217 = vpack.c.bf16 %v199, %v198
      %v218 = vpack.c.bf16 %v201, %v200
      %v219 = vpack.c.bf16 %v203, %v202
      %v220 = vld [vmem:[%s1] sm:$0x3]
      %v221 = vld [vmem:[%s165 + $0x1] sm:$0xff]
      %v222 = vld [vmem:[%s165 + $0x9] sm:$0xff]
      %v223 = vld [vmem:[%s165 + $0x19] sm:$0xff]
      %v224 = vld [vmem:[%s165 + $0x21] sm:$0xff]
      %v225 = vld [vmem:[%s165 + $0x31] sm:$0xff]
      %v226 = vld [vmem:[%s165 + $0x39] sm:$0xff]
      %v227 = vld [vmem:[%s165 + $0x49] sm:$0xff]
      %v228 = vld [vmem:[%s165 + $0x51] sm:$0xff]
      %v229 = vld [vmem:[%s165 + $0x61] sm:$0xff]
      %v230 = vld [vmem:[%s165 + $0x69] sm:$0xff]
      %v231 = vld [vmem:[%s165 + $0x79] sm:$0xff]
      %v232 = vld [vmem:[%s165 + $0x81] sm:$0xff]
      %v233 = vld [vmem:[%s165 + $0x91] sm:$0xff]
      %v234 = vld [vmem:[%s165 + $0x99] sm:$0xff]
      %v235 = vld [vmem:[%s165 + $0xa9] sm:$0xff]
      %v236 = vld [vmem:[%s165 + $0xb1] sm:$0xff]
      %v237 = vld [vmem:[%s165 + $0xc1] sm:$0xff]
      %v238 = vld [vmem:[%s165 + $0xc9] sm:$0xff]
      %v239 = vld [vmem:[%s165 + $0xd9] sm:$0xff]
      %v240 = vld [vmem:[%s165 + $0xe1] sm:$0xff]
      %v241 = vld [vmem:[%s165 + $0xf1] sm:$0xff]
      %v242 = vld [vmem:[%s165 + $0xf9] sm:$0xff]
      %v243 = vld [vmem:[%s165 + $0x109] sm:$0xff]
      %v244 = vld [vmem:[%s165 + $0x111] sm:$0xff]
      %v245 = vld [vmem:[%s165 + $0x121] sm:$0xff]
      %v246 = vld [vmem:[%s165 + $0x129] sm:$0xff]
      %v247 = vld [vmem:[%s165 + $0x139] sm:$0xff]
      %v248 = vld [vmem:[%s165 + $0x141] sm:$0xff]
      %v249 = vld [vmem:[%s165 + $0x151] sm:$0xff]
      %v250 = vld [vmem:[%s165 + $0x159] sm:$0xff]
      %v251 = vld [vmem:[%s165 + $0x169] sm:$0xff]
      %v252 = vld [vmem:[%s165 + $0x171] sm:$0xff]
      %v253 = vpack.c.bf16 %v222, %v221
      %v254 = vpack.c.bf16 %v224, %v223
      %v255 = vpack.c.bf16 %v226, %v225
      %v256 = vpack.c.bf16 %v228, %v227
      %v257 = vpack.c.bf16 %v230, %v229
      %v258 = vpack.c.bf16 %v232, %v231
      %v259 = vpack.c.bf16 %v234, %v233
      %v260 = vpack.c.bf16 %v236, %v235
      %v261 = vpack.c.bf16 %v238, %v237
      %v262 = vpack.c.bf16 %v240, %v239
      %v263 = vpack.c.bf16 %v242, %v241
      %v264 = vpack.c.bf16 %v244, %v243
      %v265 = vpack.c.bf16 %v246, %v245
      %v266 = vpack.c.bf16 %v248, %v247
      %v267 = vpack.c.bf16 %v250, %v249
      %v268 = vpack.c.bf16 %v252, %v251
      %s269 = scalar_lea.vmem %s1, 2
      %v270 = vld [vmem:[%s269] sm:$0x3]
      %vm271 = vcmask 31744
      %v273 = vsel %vm271, %v253, 0
      %v276 = vsel %vm271, %v254, 0
      %v279 = vsel %vm271, %v255, 0
      %v282 = vsel %vm271, %v256, 0
      %v285 = vsel %vm271, %v257, 0
      %v288 = vsel %vm271, %v258, 0
      %v291 = vsel %vm271, %v259, 0
      %v294 = vsel %vm271, %v260, 0
      %v297 = vsel %vm271, %v261, 0
      %v300 = vsel %vm271, %v262, 0
      %v303 = vsel %vm271, %v263, 0
      %v306 = vsel %vm271, %v264, 0
      %v309 = vsel %vm271, %v265, 0
      %v312 = vsel %vm271, %v266, 0
      %v315 = vsel %vm271, %v267, 0
      %v318 = vsel %vm271, %v268, 0
      %vm320 = vcmask 1041408
      %v322 = vsel %vm320, %v270, 0
      %324 = vmatprep.subr.bf16.mxu0 0
      %325 = vmatpush1.bf16.msra.mxu0 %v322
      %326 = vmatprep.subr.bf16.mxu0 0
      %327 = vmatpush1.bf16.msra.mxu0 0
      %328 = vmatprep.subr.bf16.mxu0 0
      %329 = vmatpush1.bf16.msra.mxu0 0
      %330 = vmatprep.subr.bf16.mxu0 0
      %331 = vmatpush1.bf16.msra.mxu0 0
      %332 = vmatprep.subr.bf16.mxu0 0
      %333 = vmatpush1.bf16.msra.mxu0 0
      %334 = vmatprep.subr.bf16.mxu0 0
      %335 = vmatpush1.bf16.msra.mxu0 0
      %336 = vmatprep.subr.bf16.mxu0 0
      %337 = vmatpush1.bf16.msra.mxu0 0
      %338 = vmatprep.subr.bf16.mxu0 0
      %339 = vmatpush1.bf16.msra.mxu0 0
      %340 = vmatprep.subr.bf16.mxu0 0
      %341 = vmatpush1.bf16.msra.mxu0 0
      %342 = vmatprep.subr.bf16.mxu0 0
      %343 = vmatpush1.bf16.msra.mxu0 0
      %344 = vmatprep.subr.bf16.mxu0 0
      %345 = vmatpush1.bf16.msra.mxu0 0
      %346 = vmatprep.subr.bf16.mxu0 0
      %347 = vmatpush1.bf16.msra.mxu0 0
      %348 = vmatprep.subr.bf16.mxu0 0
      %349 = vmatpush1.bf16.msra.mxu0 0
      %350 = vmatprep.subr.bf16.mxu0 0
      %351 = vmatpush1.bf16.msra.mxu0 0
      %352 = vmatprep.subr.bf16.mxu0 0
      %353 = vmatpush1.bf16.msra.mxu0 0
      %354 = vmatprep.subr.bf16.mxu0 0
      %355 = vmatpush1.bf16.msra.mxu0 0
      %356 = vmatprep.mubr.bf16.mxu0 0
      %357 = vmatmul.mubr.bf16.gmra.mrb[0].mxu0 %v273
      %v358 = vpop.f32.mrb[0].mxu0
      %v359 = vadd.f32 0.0, %v358
      %v360 = vpop.f32.mrb[0].mxu0
      %v361 = vpop.f32.mrb[0].mxu0
      %v362 = vadd.f32 0.0, %v361
      %v363 = vpop.f32.mrb[0].mxu0
      %364 = vmatprep.mubr.bf16.mxu0 0
      %365 = vmatmul.mubr.bf16.gmra.mrb[0].mxu0 %v276
      %v366 = vpop.f32.mrb[0].mxu0
      %v367 = vadd.f32 0.0, %v366
      %v368 = vpop.f32.mrb[0].mxu0
      %v369 = vpop.f32.mrb[0].mxu0
      %v370 = vadd.f32 0.0, %v369
      %v371 = vpop.f32.mrb[0].mxu0
      %372 = vmatprep.mubr.bf16.mxu0 0
      %373 = vmatmul.mubr.bf16.gmra.mrb[0].mxu0 %v279
      %v374 = vpop.f32.mrb[0].mxu0
      %v375 = vadd.f32 0.0, %v374
      %v376 = vpop.f32.mrb[0].mxu0
      %v377 = vpop.f32.mrb[0].mxu0
      %v378 = vadd.f32 0.0, %v377
      %v379 = vpop.f32.mrb[0].mxu0
      %380 = vmatprep.mubr.bf16.mxu0 0
      %381 = vmatmul.mubr.bf16.gmra.mrb[0].mxu0 %v282
      %v382 = vpop.f32.mrb[0].mxu0
      %v383 = vadd.f32 0.0, %v382
      %v384 = vpop.f32.mrb[0].mxu0
      %v385 = vpop.f32.mrb[0].mxu0
      %v386 = vadd.f32 0.0, %v385
      %v387 = vpop.f32.mrb[0].mxu0
      %388 = vmatprep.mubr.bf16.mxu0 0
      %389 = vmatmul.mubr.bf16.gmra.mrb[0].mxu0 %v285
      %v390 = vpop.f32.mrb[0].mxu0
      %v391 = vadd.f32 0.0, %v390
      %v392 = vpop.f32.mrb[0].mxu0
      %v393 = vpop.f32.mrb[0].mxu0
      %v394 = vadd.f32 0.0, %v393
      %v395 = vpop.f32.mrb[0].mxu0
      %396 = vmatprep.mubr.bf16.mxu0 0
      %397 = vmatmul.mubr.bf16.gmra.mrb[0].mxu0 %v288
      %v398 = vpop.f32.mrb[0].mxu0
      %v399 = vadd.f32 0.0, %v398
      %v400 = vpop.f32.mrb[0].mxu0
      %v401 = vpop.f32.mrb[0].mxu0
      %v402 = vadd.f32 0.0, %v401
      %v403 = vpop.f32.mrb[0].mxu0
      %404 = vmatprep.mubr.bf16.mxu0 0
      %405 = vmatmul.mubr.bf16.gmra.mrb[0].mxu0 %v291
      %v406 = vpop.f32.mrb[0].mxu0
      %v407 = vadd.f32 0.0, %v406
      %v408 = vpop.f32.mrb[0].mxu0
      %v409 = vpop.f32.mrb[0].mxu0
      %v410 = vadd.f32 0.0, %v409
      %v411 = vpop.f32.mrb[0].mxu0
      %412 = vmatprep.mubr.bf16.mxu0 0
      %413 = vmatmul.mubr.bf16.gmra.mrb[0].mxu0 %v294
      %v414 = vpop.f32.mrb[0].mxu0
      %v415 = vadd.f32 0.0, %v414
      %v416 = vpop.f32.mrb[0].mxu0
      %v417 = vpop.f32.mrb[0].mxu0
      %v418 = vadd.f32 0.0, %v417
      %v419 = vpop.f32.mrb[0].mxu0
      %420 = vmatprep.mubr.bf16.mxu0 0
      %421 = vmatmul.mubr.bf16.gmra.mrb[0].mxu0 %v297
      %v422 = vpop.f32.mrb[0].mxu0
      %v423 = vadd.f32 0.0, %v422
      %v424 = vpop.f32.mrb[0].mxu0
      %v425 = vpop.f32.mrb[0].mxu0
      %v426 = vadd.f32 0.0, %v425
      %v427 = vpop.f32.mrb[0].mxu0
      %428 = vmatprep.mubr.bf16.mxu0 0
      %429 = vmatmul.mubr.bf16.gmra.mrb[0].mxu0 %v300
      %v430 = vpop.f32.mrb[0].mxu0
      %v431 = vadd.f32 0.0, %v430
      %v432 = vpop.f32.mrb[0].mxu0
      %v433 = vpop.f32.mrb[0].mxu0
      %v434 = vadd.f32 0.0, %v433
      %v435 = vpop.f32.mrb[0].mxu0
      %436 = vmatprep.mubr.bf16.mxu0 0
      %437 = vmatmul.mubr.bf16.gmra.mrb[0].mxu0 %v303
      %v438 = vpop.f32.mrb[0].mxu0
      %v439 = vadd.f32 0.0, %v438
      %v440 = vpop.f32.mrb[0].mxu0
      %v441 = vpop.f32.mrb[0].mxu0
      %v442 = vadd.f32 0.0, %v441
      %v443 = vpop.f32.mrb[0].mxu0
      %444 = vmatprep.mubr.bf16.mxu0 0
      %445 = vmatmul.mubr.bf16.gmra.mrb[0].mxu0 %v306
      %v446 = vpop.f32.mrb[0].mxu0
      %v447 = vadd.f32 0.0, %v446
      %v448 = vpop.f32.mrb[0].mxu0
      %v449 = vpop.f32.mrb[0].mxu0
      %v450 = vadd.f32 0.0, %v449
      %v451 = vpop.f32.mrb[0].mxu0
      %452 = vmatprep.mubr.bf16.mxu0 0
      %453 = vmatmul.mubr.bf16.gmra.mrb[0].mxu0 %v309
      %v454 = vpop.f32.mrb[0].mxu0
      %v455 = vadd.f32 0.0, %v454
      %v456 = vpop.f32.mrb[0].mxu0
      %v457 = vpop.f32.mrb[0].mxu0
      %v458 = vadd.f32 0.0, %v457
      %v459 = vpop.f32.mrb[0].mxu0
      %460 = vmatprep.mubr.bf16.mxu0 0
      %461 = vmatmul.mubr.bf16.gmra.mrb[0].mxu0 %v312
      %v462 = vpop.f32.mrb[0].mxu0
      %v463 = vadd.f32 0.0, %v462
      %v464 = vpop.f32.mrb[0].mxu0
      %v465 = vpop.f32.mrb[0].mxu0
      %v466 = vadd.f32 0.0, %v465
      %v467 = vpop.f32.mrb[0].mxu0
      %468 = vmatprep.mubr.bf16.mxu0 0
      %469 = vmatmul.mubr.bf16.gmra.mrb[0].mxu0 %v315
      %v470 = vpop.f32.mrb[0].mxu0
      %v471 = vadd.f32 0.0, %v470
      %v472 = vpop.f32.mrb[0].mxu0
      %v473 = vpop.f32.mrb[0].mxu0
      %v474 = vadd.f32 0.0, %v473
      %v475 = vpop.f32.mrb[0].mxu0
      %476 = vmatprep.mubr.bf16.mxu0 0
      %477 = vmatmul.mubr.bf16.gmra.mrb[0].mxu0 %v318
      %v478 = vpop.f32.mrb[0].mxu0
      %v479 = vadd.f32 0.0, %v478
      %v480 = vpop.f32.mrb[0].mxu0
      %v481 = vpop.f32.mrb[0].mxu0
      %v482 = vadd.f32 0.0, %v481
      %v483 = vpop.f32.mrb[0].mxu0
      %484 = vdwg.mxu0
      %v486 = vsel %vm271, %v204, 0
      %v489 = vsel %vm271, %v205, 0
      %v492 = vsel %vm271, %v206, 0
      %v495 = vsel %vm271, %v207, 0
      %v498 = vsel %vm271, %v208, 0
      %v501 = vsel %vm271, %v209, 0
      %v504 = vsel %vm271, %v210, 0
      %v507 = vsel %vm271, %v211, 0
      %v510 = vsel %vm271, %v212, 0
      %v513 = vsel %vm271, %v213, 0
      %v516 = vsel %vm271, %v214, 0
      %v519 = vsel %vm271, %v215, 0
      %v522 = vsel %vm271, %v216, 0
      %v525 = vsel %vm271, %v217, 0
      %v528 = vsel %vm271, %v218, 0
      %v531 = vsel %vm271, %v219, 0
      %v534 = vsel %vm320, %v220, 0
      %536 = vmatprep.subr.bf16.mxu0 0
      %537 = vmatpush1.bf16.msra.mxu0 %v534
      %538 = vmatprep.subr.bf16.mxu0 0
      %539 = vmatpush1.bf16.msra.mxu0 0
      %540 = vmatprep.subr.bf16.mxu0 0
      %541 = vmatpush1.bf16.msra.mxu0 0
      %542 = vmatprep.subr.bf16.mxu0 0
      %543 = vmatpush1.bf16.msra.mxu0 0
      %544 = vmatprep.subr.bf16.mxu0 0
      %545 = vmatpush1.bf16.msra.mxu0 0
      %546 = vmatprep.subr.bf16.mxu0 0
      %547 = vmatpush1.bf16.msra.mxu0 0
      %548 = vmatprep.subr.bf16.mxu0 0
      %549 = vmatpush1.bf16.msra.mxu0 0
      %550 = vmatprep.subr.bf16.mxu0 0
      %551 = vmatpush1.bf16.msra.mxu0 0
      %552 = vmatprep.subr.bf16.mxu0 0
      %553 = vmatpush1.bf16.msra.mxu0 0
      %554 = vmatprep.subr.bf16.mxu0 0
      %555 = vmatpush1.bf16.msra.mxu0 0
      %556 = vmatprep.subr.bf16.mxu0 0
      %557 = vmatpush1.bf16.msra.mxu0 0
      %558 = vmatprep.subr.bf16.mxu0 0
      %559 = vmatpush1.bf16.msra.mxu0 0
      %560 = vmatprep.subr.bf16.mxu0 0
      %561 = vmatpush1.bf16.msra.mxu0 0
      %562 = vmatprep.subr.bf16.mxu0 0
      %563 = vmatpush1.bf16.msra.mxu0 0
      %564 = vmatprep.subr.bf16.mxu0 0
      %565 = vmatpush1.bf16.msra.mxu0 0
      %566 = vmatprep.subr.bf16.mxu0 0
      %567 = vmatpush1.bf16.msra.mxu0 0
      %568 = vmatprep.mubr.bf16.mxu0 0
      %569 = vmatmul.mubr.bf16.gmra.mrb[0].mxu0 %v486
      %v570 = vpop.f32.mrb[0].mxu0
      %v571 = vadd.f32 %v359, %v570
      %v572 = vpop.f32.mrb[0].mxu0
      %v573 = vpop.f32.mrb[0].mxu0
      %v574 = vadd.f32 %v362, %v573
      %v575 = vpop.f32.mrb[0].mxu0
      %576 = vmatprep.mubr.bf16.mxu0 0
      %577 = vmatmul.mubr.bf16.gmra.mrb[0].mxu0 %v489
      %v578 = vpop.f32.mrb[0].mxu0
      %v579 = vadd.f32 %v367, %v578
      %v580 = vpop.f32.mrb[0].mxu0
      %v581 = vpop.f32.mrb[0].mxu0
      %v582 = vadd.f32 %v370, %v581
      %v583 = vpop.f32.mrb[0].mxu0
      %584 = vmatprep.mubr.bf16.mxu0 0
      %585 = vmatmul.mubr.bf16.gmra.mrb[0].mxu0 %v492
      %v586 = vpop.f32.mrb[0].mxu0
      %v587 = vadd.f32 %v375, %v586
      %v588 = vpop.f32.mrb[0].mxu0
      %v589 = vpop.f32.mrb[0].mxu0
      %v590 = vadd.f32 %v378, %v589
      %v591 = vpop.f32.mrb[0].mxu0
      %592 = vmatprep.mubr.bf16.mxu0 0
      %593 = vmatmul.mubr.bf16.gmra.mrb[0].mxu0 %v495
      %v594 = vpop.f32.mrb[0].mxu0
      %v595 = vadd.f32 %v383, %v594
      %v596 = vpop.f32.mrb[0].mxu0
      %v597 = vpop.f32.mrb[0].mxu0
      %v598 = vadd.f32 %v386, %v597
      %v599 = vpop.f32.mrb[0].mxu0
      %600 = vmatprep.mubr.bf16.mxu0 0
      %601 = vmatmul.mubr.bf16.gmra.mrb[0].mxu0 %v498
      %v602 = vpop.f32.mrb[0].mxu0
      %v603 = vadd.f32 %v391, %v602
      %v604 = vpop.f32.mrb[0].mxu0
      %v605 = vpop.f32.mrb[0].mxu0
      %v606 = vadd.f32 %v394, %v605
      %v607 = vpop.f32.mrb[0].mxu0
      %608 = vmatprep.mubr.bf16.mxu0 0
      %609 = vmatmul.mubr.bf16.gmra.mrb[0].mxu0 %v501
      %v610 = vpop.f32.mrb[0].mxu0
      %v611 = vadd.f32 %v399, %v610
      %v612 = vpop.f32.mrb[0].mxu0
      %v613 = vpop.f32.mrb[0].mxu0
      %v614 = vadd.f32 %v402, %v613
      %v615 = vpop.f32.mrb[0].mxu0
      %616 = vmatprep.mubr.bf16.mxu0 0
      %617 = vmatmul.mubr.bf16.gmra.mrb[0].mxu0 %v504
      %v618 = vpop.f32.mrb[0].mxu0
      %v619 = vadd.f32 %v407, %v618
      %v620 = vpop.f32.mrb[0].mxu0
      %v621 = vpop.f32.mrb[0].mxu0
      %v622 = vadd.f32 %v410, %v621
      %v623 = vpop.f32.mrb[0].mxu0
      %624 = vmatprep.mubr.bf16.mxu0 0
      %625 = vmatmul.mubr.bf16.gmra.mrb[0].mxu0 %v507
      %v626 = vpop.f32.mrb[0].mxu0
      %v627 = vadd.f32 %v415, %v626
      %v628 = vpop.f32.mrb[0].mxu0
      %v629 = vpop.f32.mrb[0].mxu0
      %v630 = vadd.f32 %v418, %v629
      %v631 = vpop.f32.mrb[0].mxu0
      %632 = vmatprep.mubr.bf16.mxu0 0
      %633 = vmatmul.mubr.bf16.gmra.mrb[0].mxu0 %v510
      %v634 = vpop.f32.mrb[0].mxu0
      %v635 = vadd.f32 %v423, %v634
      %v636 = vpop.f32.mrb[0].mxu0
      %v637 = vpop.f32.mrb[0].mxu0
      %v638 = vadd.f32 %v426, %v637
      %v639 = vpop.f32.mrb[0].mxu0
      %640 = vmatprep.mubr.bf16.mxu0 0
      %641 = vmatmul.mubr.bf16.gmra.mrb[0].mxu0 %v513
      %v642 = vpop.f32.mrb[0].mxu0
      %v643 = vadd.f32 %v431, %v642
      %v644 = vpop.f32.mrb[0].mxu0
      %v645 = vpop.f32.mrb[0].mxu0
      %v646 = vadd.f32 %v434, %v645
      %v647 = vpop.f32.mrb[0].mxu0
      %648 = vmatprep.mubr.bf16.mxu0 0
      %649 = vmatmul.mubr.bf16.gmra.mrb[0].mxu0 %v516
      %v650 = vpop.f32.mrb[0].mxu0
      %v651 = vadd.f32 %v439, %v650
      %v652 = vpop.f32.mrb[0].mxu0
      %v653 = vpop.f32.mrb[0].mxu0
      %v654 = vadd.f32 %v442, %v653
      %v655 = vpop.f32.mrb[0].mxu0
      %656 = vmatprep.mubr.bf16.mxu0 0
      %657 = vmatmul.mubr.bf16.gmra.mrb[0].mxu0 %v519
      %v658 = vpop.f32.mrb[0].mxu0
      %v659 = vadd.f32 %v447, %v658
      %v660 = vpop.f32.mrb[0].mxu0
      %v661 = vpop.f32.mrb[0].mxu0
      %v662 = vadd.f32 %v450, %v661
      %v663 = vpop.f32.mrb[0].mxu0
      %664 = vmatprep.mubr.bf16.mxu0 0
      %665 = vmatmul.mubr.bf16.gmra.mrb[0].mxu0 %v522
      %v666 = vpop.f32.mrb[0].mxu0
      %v667 = vadd.f32 %v455, %v666
      %v668 = vpop.f32.mrb[0].mxu0
      %v669 = vpop.f32.mrb[0].mxu0
      %v670 = vadd.f32 %v458, %v669
      %v671 = vpop.f32.mrb[0].mxu0
      %672 = vmatprep.mubr.bf16.mxu0 0
      %673 = vmatmul.mubr.bf16.gmra.mrb[0].mxu0 %v525
      %v674 = vpop.f32.mrb[0].mxu0
      %v675 = vadd.f32 %v463, %v674
      %v676 = vpop.f32.mrb[0].mxu0
      %v677 = vpop.f32.mrb[0].mxu0
      %v678 = vadd.f32 %v466, %v677
      %v679 = vpop.f32.mrb[0].mxu0
      %680 = vmatprep.mubr.bf16.mxu0 0
      %681 = vmatmul.mubr.bf16.gmra.mrb[0].mxu0 %v528
      %v682 = vpop.f32.mrb[0].mxu0
      %v683 = vadd.f32 %v471, %v682
      %v684 = vpop.f32.mrb[0].mxu0
      %v685 = vpop.f32.mrb[0].mxu0
      %v686 = vadd.f32 %v474, %v685
      %v687 = vpop.f32.mrb[0].mxu0
      %688 = vmatprep.mubr.bf16.mxu0 0
      %689 = vmatmul.mubr.bf16.gmra.mrb[0].mxu0 %v531
      %v690 = vpop.f32.mrb[0].mxu0
      %v691 = vadd.f32 %v479, %v690
      %v692 = vpop.f32.mrb[0].mxu0
      %v693 = vpop.f32.mrb[0].mxu0
      %v694 = vadd.f32 %v482, %v693
      %v695 = vpop.f32.mrb[0].mxu0
      %696 = vdwg.mxu0
      %v697 = vld [vmem:[%s165 + $0x2] sm:$0xff]
      %v698 = vld [vmem:[%s165 + $0xa] sm:$0xff]
      %v699 = vld [vmem:[%s165 + $0x1a] sm:$0xff]
      %v700 = vld [vmem:[%s165 + $0x22] sm:$0xff]
      %v701 = vld [vmem:[%s165 + $0x32] sm:$0xff]
      %v702 = vld [vmem:[%s165 + $0x3a] sm:$0xff]
      %v703 = vld [vmem:[%s165 + $0x4a] sm:$0xff]
      %v704 = vld [vmem:[%s165 + $0x52] sm:$0xff]
      %v705 = vld [vmem:[%s165 + $0x62] sm:$0xff]
      %v706 = vld [vmem:[%s165 + $0x6a] sm:$0xff]
      %v707 = vld [vmem:[%s165 + $0x7a] sm:$0xff]
      %v708 = vld [vmem:[%s165 + $0x82] sm:$0xff]
      %v709 = vld [vmem:[%s165 + $0x92] sm:$0xff]
      %v710 = vld [vmem:[%s165 + $0x9a] sm:$0xff]
      %v711 = vld [vmem:[%s165 + $0xaa] sm:$0xff]
      %v712 = vld [vmem:[%s165 + $0xb2] sm:$0xff]
      %v713 = vld [vmem:[%s165 + $0xc2] sm:$0xff]
      %v714 = vld [vmem:[%s165 + $0xca] sm:$0xff]
      %v715 = vld [vmem:[%s165 + $0xda] sm:$0xff]
      %v716 = vld [vmem:[%s165 + $0xe2] sm:$0xff]
      %v717 = vld [vmem:[%s165 + $0xf2] sm:$0xff]
      %v718 = vld [vmem:[%s165 + $0xfa] sm:$0xff]
      %v719 = vld [vmem:[%s165 + $0x10a] sm:$0xff]
      %v720 = vld [vmem:[%s165 + $0x112] sm:$0xff]
      %v721 = vld [vmem:[%s165 + $0x122] sm:$0xff]
      %v722 = vld [vmem:[%s165 + $0x12a] sm:$0xff]
      %v723 = vld [vmem:[%s165 + $0x13a] sm:$0xff]
      %v724 = vld [vmem:[%s165 + $0x142] sm:$0xff]
      %v725 = vld [vmem:[%s165 + $0x152] sm:$0xff]
      %v726 = vld [vmem:[%s165 + $0x15a] sm:$0xff]
      %v727 = vld [vmem:[%s165 + $0x16a] sm:$0xff]
      %v728 = vld [vmem:[%s165 + $0x172] sm:$0xff]
      %v729 = vpack.c.bf16 %v698, %v697
      %v730 = vpack.c.bf16 %v700, %v699
      %v731 = vpack.c.bf16 %v702, %v701
      %v732 = vpack.c.bf16 %v704, %v703
      %v733 = vpack.c.bf16 %v706, %v705
      %v734 = vpack.c.bf16 %v708, %v707
      %v735 = vpack.c.bf16 %v710, %v709
      %v736 = vpack.c.bf16 %v712, %v711
      %v737 = vpack.c.bf16 %v714, %v713
      %v738 = vpack.c.bf16 %v716, %v715
      %v739 = vpack.c.bf16 %v718, %v717
      %v740 = vpack.c.bf16 %v720, %v719
      %v741 = vpack.c.bf16 %v722, %v721
      %v742 = vpack.c.bf16 %v724, %v723
      %v743 = vpack.c.bf16 %v726, %v725
      %v744 = vpack.c.bf16 %v728, %v727
      %s745 = scalar_lea.vmem %s1, 4
      %v746 = vld [vmem:[%s745] sm:$0x3]
      %v748 = vsel %vm271, %v729, 0
      %v751 = vsel %vm271, %v730, 0
      %v754 = vsel %vm271, %v731, 0
      %v757 = vsel %vm271, %v732, 0
      %v760 = vsel %vm271, %v733, 0
      %v763 = vsel %vm271, %v734, 0
      %v766 = vsel %vm271, %v735, 0
      %v769 = vsel %vm271, %v736, 0
      %v772 = vsel %vm271, %v737, 0
      %v775 = vsel %vm271, %v738, 0
      %v778 = vsel %vm271, %v739, 0
      %v781 = vsel %vm271, %v740, 0
      %v784 = vsel %vm271, %v741, 0
      %v787 = vsel %vm271, %v742, 0
      %v790 = vsel %vm271, %v743, 0
      %v793 = vsel %vm271, %v744, 0
      %v796 = vsel %vm320, %v746, 0
      %798 = vmatprep.subr.bf16.mxu0 0
      %799 = vmatpush1.bf16.msra.mxu0 %v796
      %800 = vmatprep.subr.bf16.mxu0 0
      %801 = vmatpush1.bf16.msra.mxu0 0
      %802 = vmatprep.subr.bf16.mxu0 0
      %803 = vmatpush1.bf16.msra.mxu0 0
      %804 = vmatprep.subr.bf16.mxu0 0
      %805 = vmatpush1.bf16.msra.mxu0 0
      %806 = vmatprep.subr.bf16.mxu0 0
      %807 = vmatpush1.bf16.msra.mxu0 0
      %808 = vmatprep.subr.bf16.mxu0 0
      %809 = vmatpush1.bf16.msra.mxu0 0
      %810 = vmatprep.subr.bf16.mxu0 0
      %811 = vmatpush1.bf16.msra.mxu0 0
      %812 = vmatprep.subr.bf16.mxu0 0
      %813 = vmatpush1.bf16.msra.mxu0 0
      %814 = vmatprep.subr.bf16.mxu0 0
      %815 = vmatpush1.bf16.msra.mxu0 0
      %816 = vmatprep.subr.bf16.mxu0 0
      %817 = vmatpush1.bf16.msra.mxu0 0
      %818 = vmatprep.subr.bf16.mxu0 0
      %819 = vmatpush1.bf16.msra.mxu0 0
      %820 = vmatprep.subr.bf16.mxu0 0
      %821 = vmatpush1.bf16.msra.mxu0 0
      %822 = vmatprep.subr.bf16.mxu0 0
      %823 = vmatpush1.bf16.msra.mxu0 0
      %824 = vmatprep.subr.bf16.mxu0 0
      %825 = vmatpush1.bf16.msra.mxu0 0
      %826 = vmatprep.subr.bf16.mxu0 0
      %827 = vmatpush1.bf16.msra.mxu0 0
      %828 = vmatprep.subr.bf16.mxu0 0
      %829 = vmatpush1.bf16.msra.mxu0 0
      %830 = vmatprep.mubr.bf16.mxu0 0
      %831 = vmatmul.mubr.bf16.gmra.mrb[0].mxu0 %v748
      %v832 = vpop.f32.mrb[0].mxu0
      %v833 = vadd.f32 0.0, %v832
      %v834 = vpop.f32.mrb[0].mxu0
      %v835 = vpop.f32.mrb[0].mxu0
      %v836 = vadd.f32 0.0, %v835
      %v837 = vpop.f32.mrb[0].mxu0
      %838 = vmatprep.mubr.bf16.mxu0 0
      %839 = vmatmul.mubr.bf16.gmra.mrb[0].mxu0 %v751
      %v840 = vpop.f32.mrb[0].mxu0
      %v841 = vadd.f32 0.0, %v840
      %v842 = vpop.f32.mrb[0].mxu0
      %v843 = vpop.f32.mrb[0].mxu0
      %v844 = vadd.f32 0.0, %v843
      %v845 = vpop.f32.mrb[0].mxu0
      %846 = vmatprep.mubr.bf16.mxu0 0
      %847 = vmatmul.mubr.bf16.gmra.mrb[0].mxu0 %v754
      %v848 = vpop.f32.mrb[0].mxu0
      %v849 = vadd.f32 0.0, %v848
      %v850 = vpop.f32.mrb[0].mxu0
      %v851 = vpop.f32.mrb[0].mxu0
      %v852 = vadd.f32 0.0, %v851
      %v853 = vpop.f32.mrb[0].mxu0
      %854 = vmatprep.mubr.bf16.mxu0 0
      %855 = vmatmul.mubr.bf16.gmra.mrb[0].mxu0 %v757
      %v856 = vpop.f32.mrb[0].mxu0
      %v857 = vadd.f32 0.0, %v856
      %v858 = vpop.f32.mrb[0].mxu0
      %v859 = vpop.f32.mrb[0].mxu0
      %v860 = vadd.f32 0.0, %v859
      %v861 = vpop.f32.mrb[0].mxu0
      %862 = vmatprep.mubr.bf16.mxu0 0
      %863 = vmatmul.mubr.bf16.gmra.mrb[0].mxu0 %v760
      %v864 = vpop.f32.mrb[0].mxu0
      %v865 = vadd.f32 0.0, %v864
      %v866 = vpop.f32.mrb[0].mxu0
      %v867 = vpop.f32.mrb[0].mxu0
      %v868 = vadd.f32 0.0, %v867
      %v869 = vpop.f32.mrb[0].mxu0
      %870 = vmatprep.mubr.bf16.mxu0 0
      %871 = vmatmul.mubr.bf16.gmra.mrb[0].mxu0 %v763
      %v872 = vpop.f32.mrb[0].mxu0
      %v873 = vadd.f32 0.0, %v872
      %v874 = vpop.f32.mrb[0].mxu0
      %v875 = vpop.f32.mrb[0].mxu0
      %v876 = vadd.f32 0.0, %v875
      %v877 = vpop.f32.mrb[0].mxu0
      %878 = vmatprep.mubr.bf16.mxu0 0
      %879 = vmatmul.mubr.bf16.gmra.mrb[0].mxu0 %v766
      %v880 = vpop.f32.mrb[0].mxu0
      %v881 = vadd.f32 0.0, %v880
      %v882 = vpop.f32.mrb[0].mxu0
      %v883 = vpop.f32.mrb[0].mxu0
      %v884 = vadd.f32 0.0, %v883
      %v885 = vpop.f32.mrb[0].mxu0
      %886 = vmatprep.mubr.bf16.mxu0 0
      %887 = vmatmul.mubr.bf16.gmra.mrb[0].mxu0 %v769
      %v888 = vpop.f32.mrb[0].mxu0
      %v889 = vadd.f32 0.0, %v888
      %v890 = vpop.f32.mrb[0].mxu0
      %v891 = vpop.f32.mrb[0].mxu0
      %v892 = vadd.f32 0.0, %v891
      %v893 = vpop.f32.mrb[0].mxu0
      %894 = vmatprep.mubr.bf16.mxu0 0
      %895 = vmatmul.mubr.bf16.gmra.mrb[0].mxu0 %v772
      %v896 = vpop.f32.mrb[0].mxu0
      %v897 = vadd.f32 0.0, %v896
      %v898 = vpop.f32.mrb[0].mxu0
      %v899 = vpop.f32.mrb[0].mxu0
      %v900 = vadd.f32 0.0, %v899
      %v901 = vpop.f32.mrb[0].mxu0
      %902 = vmatprep.mubr.bf16.mxu0 0
      %903 = vmatmul.mubr.bf16.gmra.mrb[0].mxu0 %v775
      %v904 = vpop.f32.mrb[0].mxu0
      %v905 = vadd.f32 0.0, %v904
      %v906 = vpop.f32.mrb[0].mxu0
      %v907 = vpop.f32.mrb[0].mxu0
      %v908 = vadd.f32 0.0, %v907
      %v909 = vpop.f32.mrb[0].mxu0
      %910 = vmatprep.mubr.bf16.mxu0 0
      %911 = vmatmul.mubr.bf16.gmra.mrb[0].mxu0 %v778
      %v912 = vpop.f32.mrb[0].mxu0
      %v913 = vadd.f32 0.0, %v912
      %v914 = vpop.f32.mrb[0].mxu0
      %v915 = vpop.f32.mrb[0].mxu0
      %v916 = vadd.f32 0.0, %v915
      %v917 = vpop.f32.mrb[0].mxu0
      %918 = vmatprep.mubr.bf16.mxu0 0
      %919 = vmatmul.mubr.bf16.gmra.mrb[0].mxu0 %v781
      %v920 = vpop.f32.mrb[0].mxu0
      %v921 = vadd.f32 0.0, %v920
      %v922 = vpop.f32.mrb[0].mxu0
      %v923 = vpop.f32.mrb[0].mxu0
      %v924 = vadd.f32 0.0, %v923
      %v925 = vpop.f32.mrb[0].mxu0
      %926 = vmatprep.mubr.bf16.mxu0 0
      %927 = vmatmul.mubr.bf16.gmra.mrb[0].mxu0 %v784
      %v928 = vpop.f32.mrb[0].mxu0
      %v929 = vadd.f32 0.0, %v928
      %v930 = vpop.f32.mrb[0].mxu0
      %v931 = vpop.f32.mrb[0].mxu0
      %v932 = vadd.f32 0.0, %v931
      %v933 = vpop.f32.mrb[0].mxu0
      %934 = vmatprep.mubr.bf16.mxu0 0
      %935 = vmatmul.mubr.bf16.gmra.mrb[0].mxu0 %v787
      %v936 = vpop.f32.mrb[0].mxu0
      %v937 = vadd.f32 0.0, %v936
      %v938 = vpop.f32.mrb[0].mxu0
      %v939 = vpop.f32.mrb[0].mxu0
      %v940 = vadd.f32 0.0, %v939
      %v941 = vpop.f32.mrb[0].mxu0
      %942 = vmatprep.mubr.bf16.mxu0 0
      %943 = vmatmul.mubr.bf16.gmra.mrb[0].mxu0 %v790
      %v944 = vpop.f32.mrb[0].mxu0
      %v945 = vadd.f32 0.0, %v944
      %v946 = vpop.f32.mrb[0].mxu0
      %v947 = vpop.f32.mrb[0].mxu0
      %v948 = vadd.f32 0.0, %v947
      %v949 = vpop.f32.mrb[0].mxu0
      %950 = vmatprep.mubr.bf16.mxu0 0
      %951 = vmatmul.mubr.bf16.gmra.mrb[0].mxu0 %v793
      %v952 = vpop.f32.mrb[0].mxu0
      %v953 = vadd.f32 0.0, %v952
      %v954 = vpop.f32.mrb[0].mxu0
      %v955 = vpop.f32.mrb[0].mxu0
      %v956 = vadd.f32 0.0, %v955
      %v957 = vpop.f32.mrb[0].mxu0
      %958 = vdwg.mxu0
      %v959 = vadd.f32 %v571, %v833
      %v960 = vadd.f32 %v574, %v836
      %v961 = vadd.f32 %v579, %v841
      %v962 = vadd.f32 %v582, %v844
      %v963 = vadd.f32 %v587, %v849
      %v964 = vadd.f32 %v590, %v852
      %v965 = vadd.f32 %v595, %v857
      %v966 = vadd.f32 %v598, %v860
      %v967 = vadd.f32 %v603, %v865
      %v968 = vadd.f32 %v606, %v868
      %v969 = vadd.f32 %v611, %v873
      %v970 = vadd.f32 %v614, %v876
      %v971 = vadd.f32 %v619, %v881
      %v972 = vadd.f32 %v622, %v884
      %v973 = vadd.f32 %v627, %v889
      %v974 = vadd.f32 %v630, %v892
      %v975 = vadd.f32 %v635, %v897
      %v976 = vadd.f32 %v638, %v900
      %v977 = vadd.f32 %v643, %v905
      %v978 = vadd.f32 %v646, %v908
      %v979 = vadd.f32 %v651, %v913
      %v980 = vadd.f32 %v654, %v916
      %v981 = vadd.f32 %v659, %v921
      %v982 = vadd.f32 %v662, %v924
      %v983 = vadd.f32 %v667, %v929
      %v984 = vadd.f32 %v670, %v932
      %v985 = vadd.f32 %v675, %v937
      %v986 = vadd.f32 %v678, %v940
      %v987 = vadd.f32 %v683, %v945
      %v988 = vadd.f32 %v686, %v948
      %v989 = vadd.f32 %v691, %v953
      %v990 = vadd.f32 %v694, %v956
      %s991 = scalar_lea.vmem %s165, 24
      %v992 = vld [vmem:[%s991] sm:$0xff]
      %v993 = vld [vmem:[%s991 + $0x8] sm:$0xff]
      %v994 = vld [vmem:[%s991 + $0x18] sm:$0xff]
      %v995 = vld [vmem:[%s991 + $0x20] sm:$0xff]
      %v996 = vld [vmem:[%s991 + $0x30] sm:$0xff]
      %v997 = vld [vmem:[%s991 + $0x38] sm:$0xff]
      %v998 = vld [vmem:[%s991 + $0x48] sm:$0xff]
      %v999 = vld [vmem:[%s991 + $0x50] sm:$0xff]
      %v1000 = vld [vmem:[%s991 + $0x60] sm:$0xff]
      %v1001 = vld [vmem:[%s991 + $0x68] sm:$0xff]
      %v1002 = vld [vmem:[%s991 + $0x78] sm:$0xff]
      %v1003 = vld [vmem:[%s991 + $0x80] sm:$0xff]
      %v1004 = vld [vmem:[%s991 + $0x90] sm:$0xff]
      %v1005 = vld [vmem:[%s991 + $0x98] sm:$0xff]
      %v1006 = vld [vmem:[%s991 + $0xa8] sm:$0xff]
      %v1007 = vld [vmem:[%s991 + $0xb0] sm:$0xff]
      %v1008 = vld [vmem:[%s991 + $0xc0] sm:$0xff]
      %v1009 = vld [vmem:[%s991 + $0xc8] sm:$0xff]
      %v1010 = vld [vmem:[%s991 + $0xd8] sm:$0xff]
      %v1011 = vld [vmem:[%s991 + $0xe0] sm:$0xff]
      %v1012 = vld [vmem:[%s991 + $0xf0] sm:$0xff]
      %v1013 = vld [vmem:[%s991 + $0xf8] sm:$0xff]
      %v1014 = vld [vmem:[%s991 + $0x108] sm:$0xff]
      %v1015 = vld [vmem:[%s991 + $0x110] sm:$0xff]
      %v1016 = vld [vmem:[%s991 + $0x120] sm:$0xff]
      %v1017 = vld [vmem:[%s991 + $0x128] sm:$0xff]
      %v1018 = vld [vmem:[%s991 + $0x138] sm:$0xff]
      %v1019 = vld [vmem:[%s991 + $0x140] sm:$0xff]
      %v1020 = vld [vmem:[%s991 + $0x150] sm:$0xff]
      %v1021 = vld [vmem:[%s991 + $0x158] sm:$0xff]
      %v1022 = vld [vmem:[%s991 + $0x168] sm:$0xff]
      %v1023 = vld [vmem:[%s991 + $0x170] sm:$0xff]
      %v1024 = vpack.c.bf16 %v993, %v992
      %v1025 = vpack.c.bf16 %v995, %v994
      %v1026 = vpack.c.bf16 %v997, %v996
      %v1027 = vpack.c.bf16 %v999, %v998
      %v1028 = vpack.c.bf16 %v1001, %v1000
      %v1029 = vpack.c.bf16 %v1003, %v1002
      %v1030 = vpack.c.bf16 %v1005, %v1004
      %v1031 = vpack.c.bf16 %v1007, %v1006
      %v1032 = vpack.c.bf16 %v1009, %v1008
      %v1033 = vpack.c.bf16 %v1011, %v1010
      %v1034 = vpack.c.bf16 %v1013, %v1012
      %v1035 = vpack.c.bf16 %v1015, %v1014
      %v1036 = vpack.c.bf16 %v1017, %v1016
      %v1037 = vpack.c.bf16 %v1019, %v1018
      %v1038 = vpack.c.bf16 %v1021, %v1020
      %v1039 = vpack.c.bf16 %v1023, %v1022
      %s1040 = scalar_lea.vmem %s1, 6
      %v1041 = vld [vmem:[%s1040] sm:$0x3]
      %v1043 = vsel %vm271, %v1024, 0
      %v1046 = vsel %vm271, %v1025, 0
      %v1049 = vsel %vm271, %v1026, 0
      %v1052 = vsel %vm271, %v1027, 0
      %v1055 = vsel %vm271, %v1028, 0
      %v1058 = vsel %vm271, %v1029, 0
      %v1061 = vsel %vm271, %v1030, 0
      %v1064 = vsel %vm271, %v1031, 0
      %v1067 = vsel %vm271, %v1032, 0
      %v1070 = vsel %vm271, %v1033, 0
      %v1073 = vsel %vm271, %v1034, 0
      %v1076 = vsel %vm271, %v1035, 0
      %v1079 = vsel %vm271, %v1036, 0
      %v1082 = vsel %vm271, %v1037, 0
      %v1085 = vsel %vm271, %v1038, 0
      %v1088 = vsel %vm271, %v1039, 0
      %v1091 = vsel %vm320, %v1041, 0
      %1093 = vmatprep.subr.bf16.mxu0 0
      %1094 = vmatpush1.bf16.msra.mxu0 %v1091
      %1095 = vmatprep.subr.bf16.mxu0 0
      %1096 = vmatpush1.bf16.msra.mxu0 0
      %1097 = vmatprep.subr.bf16.mxu0 0
      %1098 = vmatpush1.bf16.msra.mxu0 0
      %1099 = vmatprep.subr.bf16.mxu0 0
      %1100 = vmatpush1.bf16.msra.mxu0 0
      %1101 = vmatprep.subr.bf16.mxu0 0
      %1102 = vmatpush1.bf16.msra.mxu0 0
      %1103 = vmatprep.subr.bf16.mxu0 0
      %1104 = vmatpush1.bf16.msra.mxu0 0
      %1105 = vmatprep.subr.bf16.mxu0 0
      %1106 = vmatpush1.bf16.msra.mxu0 0
      %1107 = vmatprep.subr.bf16.mxu0 0
      %1108 = vmatpush1.bf16.msra.mxu0 0
      %1109 = vmatprep.subr.bf16.mxu0 0
      %1110 = vmatpush1.bf16.msra.mxu0 0
      %1111 = vmatprep.subr.bf16.mxu0 0
      %1112 = vmatpush1.bf16.msra.mxu0 0
      %1113 = vmatprep.subr.bf16.mxu0 0
      %1114 = vmatpush1.bf16.msra.mxu0 0
      %1115 = vmatprep.subr.bf16.mxu0 0
      %1116 = vmatpush1.bf16.msra.mxu0 0
      %1117 = vmatprep.subr.bf16.mxu0 0
      %1118 = vmatpush1.bf16.msra.mxu0 0
      %1119 = vmatprep.subr.bf16.mxu0 0
      %1120 = vmatpush1.bf16.msra.mxu0 0
      %1121 = vmatprep.subr.bf16.mxu0 0
      %1122 = vmatpush1.bf16.msra.mxu0 0
      %1123 = vmatprep.subr.bf16.mxu0 0
      %1124 = vmatpush1.bf16.msra.mxu0 0
      %1125 = vmatprep.mubr.bf16.mxu0 0
      %1126 = vmatmul.mubr.bf16.gmra.mrb[0].mxu0 %v1043
      %v1127 = vpop.f32.mrb[0].mxu0
      %v1128 = vadd.f32 0.0, %v1127
      %v1129 = vpop.f32.mrb[0].mxu0
      %v1130 = vpop.f32.mrb[0].mxu0
      %v1131 = vadd.f32 0.0, %v1130
      %v1132 = vpop.f32.mrb[0].mxu0
      %1133 = vmatprep.mubr.bf16.mxu0 0
      %1134 = vmatmul.mubr.bf16.gmra.mrb[0].mxu0 %v1046
      %v1135 = vpop.f32.mrb[0].mxu0
      %v1136 = vadd.f32 0.0, %v1135
      %v1137 = vpop.f32.mrb[0].mxu0
      %v1138 = vpop.f32.mrb[0].mxu0
      %v1139 = vadd.f32 0.0, %v1138
      %v1140 = vpop.f32.mrb[0].mxu0
      %1141 = vmatprep.mubr.bf16.mxu0 0
      %1142 = vmatmul.mubr.bf16.gmra.mrb[0].mxu0 %v1049
      %v1143 = vpop.f32.mrb[0].mxu0
      %v1144 = vadd.f32 0.0, %v1143
      %v1145 = vpop.f32.mrb[0].mxu0
      %v1146 = vpop.f32.mrb[0].mxu0
      %v1147 = vadd.f32 0.0, %v1146
      %v1148 = vpop.f32.mrb[0].mxu0
      %1149 = vmatprep.mubr.bf16.mxu0 0
      %1150 = vmatmul.mubr.bf16.gmra.mrb[0].mxu0 %v1052
      %v1151 = vpop.f32.mrb[0].mxu0
      %v1152 = vadd.f32 0.0, %v1151
      %v1153 = vpop.f32.mrb[0].mxu0
      %v1154 = vpop.f32.mrb[0].mxu0
      %v1155 = vadd.f32 0.0, %v1154
      %v1156 = vpop.f32.mrb[0].mxu0
      %1157 = vmatprep.mubr.bf16.mxu0 0
      %1158 = vmatmul.mubr.bf16.gmra.mrb[0].mxu0 %v1055
      %v1159 = vpop.f32.mrb[0].mxu0
      %v1160 = vadd.f32 0.0, %v1159
      %v1161 = vpop.f32.mrb[0].mxu0
      %v1162 = vpop.f32.mrb[0].mxu0
      %v1163 = vadd.f32 0.0, %v1162
      %v1164 = vpop.f32.mrb[0].mxu0
      %1165 = vmatprep.mubr.bf16.mxu0 0
      %1166 = vmatmul.mubr.bf16.gmra.mrb[0].mxu0 %v1058
      %v1167 = vpop.f32.mrb[0].mxu0
      %v1168 = vadd.f32 0.0, %v1167
      %v1169 = vpop.f32.mrb[0].mxu0
      %v1170 = vpop.f32.mrb[0].mxu0
      %v1171 = vadd.f32 0.0, %v1170
      %v1172 = vpop.f32.mrb[0].mxu0
      %1173 = vmatprep.mubr.bf16.mxu0 0
      %1174 = vmatmul.mubr.bf16.gmra.mrb[0].mxu0 %v1061
      %v1175 = vpop.f32.mrb[0].mxu0
      %v1176 = vadd.f32 0.0, %v1175
      %v1177 = vpop.f32.mrb[0].mxu0
      %v1178 = vpop.f32.mrb[0].mxu0
      %v1179 = vadd.f32 0.0, %v1178
      %v1180 = vpop.f32.mrb[0].mxu0
      %1181 = vmatprep.mubr.bf16.mxu0 0
      %1182 = vmatmul.mubr.bf16.gmra.mrb[0].mxu0 %v1064
      %v1183 = vpop.f32.mrb[0].mxu0
      %v1184 = vadd.f32 0.0, %v1183
      %v1185 = vpop.f32.mrb[0].mxu0
      %v1186 = vpop.f32.mrb[0].mxu0
      %v1187 = vadd.f32 0.0, %v1186
      %v1188 = vpop.f32.mrb[0].mxu0
      %1189 = vmatprep.mubr.bf16.mxu0 0
      %1190 = vmatmul.mubr.bf16.gmra.mrb[0].mxu0 %v1067
      %v1191 = vpop.f32.mrb[0].mxu0
      %v1192 = vadd.f32 0.0, %v1191
      %v1193 = vpop.f32.mrb[0].mxu0
      %v1194 = vpop.f32.mrb[0].mxu0
      %v1195 = vadd.f32 0.0, %v1194
      %v1196 = vpop.f32.mrb[0].mxu0
      %1197 = vmatprep.mubr.bf16.mxu0 0
      %1198 = vmatmul.mubr.bf16.gmra.mrb[0].mxu0 %v1070
      %v1199 = vpop.f32.mrb[0].mxu0
      %v1200 = vadd.f32 0.0, %v1199
      %v1201 = vpop.f32.mrb[0].mxu0
      %v1202 = vpop.f32.mrb[0].mxu0
      %v1203 = vadd.f32 0.0, %v1202
      %v1204 = vpop.f32.mrb[0].mxu0
      %1205 = vmatprep.mubr.bf16.mxu0 0
      %1206 = vmatmul.mubr.bf16.gmra.mrb[0].mxu0 %v1073
      %v1207 = vpop.f32.mrb[0].mxu0
      %v1208 = vadd.f32 0.0, %v1207
      %v1209 = vpop.f32.mrb[0].mxu0
      %v1210 = vpop.f32.mrb[0].mxu0
      %v1211 = vadd.f32 0.0, %v1210
      %v1212 = vpop.f32.mrb[0].mxu0
      %1213 = vmatprep.mubr.bf16.mxu0 0
      %1214 = vmatmul.mubr.bf16.gmra.mrb[0].mxu0 %v1076
      %v1215 = vpop.f32.mrb[0].mxu0
      %v1216 = vadd.f32 0.0, %v1215
      %v1217 = vpop.f32.mrb[0].mxu0
      %v1218 = vpop.f32.mrb[0].mxu0
      %v1219 = vadd.f32 0.0, %v1218
      %v1220 = vpop.f32.mrb[0].mxu0
      %1221 = vmatprep.mubr.bf16.mxu0 0
      %1222 = vmatmul.mubr.bf16.gmra.mrb[0].mxu0 %v1079
      %v1223 = vpop.f32.mrb[0].mxu0
      %v1224 = vadd.f32 0.0, %v1223
      %v1225 = vpop.f32.mrb[0].mxu0
      %v1226 = vpop.f32.mrb[0].mxu0
      %v1227 = vadd.f32 0.0, %v1226
      %v1228 = vpop.f32.mrb[0].mxu0
      %1229 = vmatprep.mubr.bf16.mxu0 0
      %1230 = vmatmul.mubr.bf16.gmra.mrb[0].mxu0 %v1082
      %v1231 = vpop.f32.mrb[0].mxu0
      %v1232 = vadd.f32 0.0, %v1231
      %v1233 = vpop.f32.mrb[0].mxu0
      %v1234 = vpop.f32.mrb[0].mxu0
      %v1235 = vadd.f32 0.0, %v1234
      %v1236 = vpop.f32.mrb[0].mxu0
      %1237 = vmatprep.mubr.bf16.mxu0 0
      %1238 = vmatmul.mubr.bf16.gmra.mrb[0].mxu0 %v1085
      %v1239 = vpop.f32.mrb[0].mxu0
      %v1240 = vadd.f32 0.0, %v1239
      %v1241 = vpop.f32.mrb[0].mxu0
      %v1242 = vpop.f32.mrb[0].mxu0
      %v1243 = vadd.f32 0.0, %v1242
      %v1244 = vpop.f32.mrb[0].mxu0
      %1245 = vmatprep.mubr.bf16.mxu0 0
      %1246 = vmatmul.mubr.bf16.gmra.mrb[0].mxu0 %v1088
      %v1247 = vpop.f32.mrb[0].mxu0
      %v1248 = vadd.f32 0.0, %v1247
      %v1249 = vpop.f32.mrb[0].mxu0
      %v1250 = vpop.f32.mrb[0].mxu0
      %v1251 = vadd.f32 0.0, %v1250
      %v1252 = vpop.f32.mrb[0].mxu0
      %1253 = vdwg.mxu0
      %v1254 = vadd.f32 %v959, %v1128
      %v1255 = vadd.f32 %v960, %v1131
      %v1256 = vadd.f32 %v961, %v1136
      %v1257 = vadd.f32 %v962, %v1139
      %v1258 = vadd.f32 %v963, %v1144
      %v1259 = vadd.f32 %v964, %v1147
      %v1260 = vadd.f32 %v965, %v1152
      %v1261 = vadd.f32 %v966, %v1155
      %v1262 = vadd.f32 %v967, %v1160
      %v1263 = vadd.f32 %v968, %v1163
      %v1264 = vadd.f32 %v969, %v1168
      %v1265 = vadd.f32 %v970, %v1171
      %v1266 = vadd.f32 %v971, %v1176
      %v1267 = vadd.f32 %v972, %v1179
      %v1268 = vadd.f32 %v973, %v1184
      %v1269 = vadd.f32 %v974, %v1187
      %v1270 = vadd.f32 %v975, %v1192
      %v1271 = vadd.f32 %v976, %v1195
      %v1272 = vadd.f32 %v977, %v1200
      %v1273 = vadd.f32 %v978, %v1203
      %v1274 = vadd.f32 %v979, %v1208
      %v1275 = vadd.f32 %v980, %v1211
      %v1276 = vadd.f32 %v981, %v1216
      %v1277 = vadd.f32 %v982, %v1219
      %v1278 = vadd.f32 %v983, %v1224
      %v1279 = vadd.f32 %v984, %v1227
      %v1280 = vadd.f32 %v985, %v1232
      %v1281 = vadd.f32 %v986, %v1235
      %v1282 = vadd.f32 %v987, %v1240
      %v1283 = vadd.f32 %v988, %v1243
      %v1284 = vadd.f32 %v989, %v1248
      %v1285 = vadd.f32 %v990, %v1251
      %v1286 = vld [vmem:[%s991 + $0x1] sm:$0xff]
      %v1287 = vld [vmem:[%s991 + $0x9] sm:$0xff]
      %v1288 = vld [vmem:[%s991 + $0x19] sm:$0xff]
      %v1289 = vld [vmem:[%s991 + $0x21] sm:$0xff]
      %v1290 = vld [vmem:[%s991 + $0x31] sm:$0xff]
      %v1291 = vld [vmem:[%s991 + $0x39] sm:$0xff]
      %v1292 = vld [vmem:[%s991 + $0x49] sm:$0xff]
      %v1293 = vld [vmem:[%s991 + $0x51] sm:$0xff]
      %v1294 = vld [vmem:[%s991 + $0x61] sm:$0xff]
      %v1295 = vld [vmem:[%s991 + $0x69] sm:$0xff]
      %v1296 = vld [vmem:[%s991 + $0x79] sm:$0xff]
      %v1297 = vld [vmem:[%s991 + $0x81] sm:$0xff]
      %v1298 = vld [vmem:[%s991 + $0x91] sm:$0xff]
      %v1299 = vld [vmem:[%s991 + $0x99] sm:$0xff]
      %v1300 = vld [vmem:[%s991 + $0xa9] sm:$0xff]
      %v1301 = vld [vmem:[%s991 + $0xb1] sm:$0xff]
      %v1302 = vld [vmem:[%s991 + $0xc1] sm:$0xff]
      %v1303 = vld [vmem:[%s991 + $0xc9] sm:$0xff]
      %v1304 = vld [vmem:[%s991 + $0xd9] sm:$0xff]
      %v1305 = vld [vmem:[%s991 + $0xe1] sm:$0xff]
      %v1306 = vld [vmem:[%s991 + $0xf1] sm:$0xff]
      %v1307 = vld [vmem:[%s991 + $0xf9] sm:$0xff]
      %v1308 = vld [vmem:[%s991 + $0x109] sm:$0xff]
      %v1309 = vld [vmem:[%s991 + $0x111] sm:$0xff]
      %v1310 = vld [vmem:[%s991 + $0x121] sm:$0xff]
      %v1311 = vld [vmem:[%s991 + $0x129] sm:$0xff]
      %v1312 = vld [vmem:[%s991 + $0x139] sm:$0xff]
      %v1313 = vld [vmem:[%s991 + $0x141] sm:$0xff]
      %v1314 = vld [vmem:[%s991 + $0x151] sm:$0xff]
      %v1315 = vld [vmem:[%s991 + $0x159] sm:$0xff]
      %v1316 = vld [vmem:[%s991 + $0x169] sm:$0xff]
      %v1317 = vld [vmem:[%s991 + $0x171] sm:$0xff]
      %v1318 = vpack.c.bf16 %v1287, %v1286
      %v1319 = vpack.c.bf16 %v1289, %v1288
      %v1320 = vpack.c.bf16 %v1291, %v1290
      %v1321 = vpack.c.bf16 %v1293, %v1292
      %v1322 = vpack.c.bf16 %v1295, %v1294
      %v1323 = vpack.c.bf16 %v1297, %v1296
      %v1324 = vpack.c.bf16 %v1299, %v1298
      %v1325 = vpack.c.bf16 %v1301, %v1300
      %v1326 = vpack.c.bf16 %v1303, %v1302
      %v1327 = vpack.c.bf16 %v1305, %v1304
      %v1328 = vpack.c.bf16 %v1307, %v1306
      %v1329 = vpack.c.bf16 %v1309, %v1308
      %v1330 = vpack.c.bf16 %v1311, %v1310
      %v1331 = vpack.c.bf16 %v1313, %v1312
      %v1332 = vpack.c.bf16 %v1315, %v1314
      %v1333 = vpack.c.bf16 %v1317, %v1316
      %s1334 = scalar_lea.vmem %s1, 8
      %v1335 = vld [vmem:[%s1334] sm:$0x3]
      %v1337 = vsel %vm271, %v1318, 0
      %v1340 = vsel %vm271, %v1319, 0
      %v1343 = vsel %vm271, %v1320, 0
      %v1346 = vsel %vm271, %v1321, 0
      %v1349 = vsel %vm271, %v1322, 0
      %v1352 = vsel %vm271, %v1323, 0
      %v1355 = vsel %vm271, %v1324, 0
      %v1358 = vsel %vm271, %v1325, 0
      %v1361 = vsel %vm271, %v1326, 0
      %v1364 = vsel %vm271, %v1327, 0
      %v1367 = vsel %vm271, %v1328, 0
      %v1370 = vsel %vm271, %v1329, 0
      %v1373 = vsel %vm271, %v1330, 0
      %v1376 = vsel %vm271, %v1331, 0
      %v1379 = vsel %vm271, %v1332, 0
      %v1382 = vsel %vm271, %v1333, 0
      %v1385 = vsel %vm320, %v1335, 0
      %1387 = vmatprep.subr.bf16.mxu0 0
      %1388 = vmatpush1.bf16.msra.mxu0 %v1385
      %1389 = vmatprep.subr.bf16.mxu0 0
      %1390 = vmatpush1.bf16.msra.mxu0 0
      %1391 = vmatprep.subr.bf16.mxu0 0
      %1392 = vmatpush1.bf16.msra.mxu0 0
      %1393 = vmatprep.subr.bf16.mxu0 0
      %1394 = vmatpush1.bf16.msra.mxu0 0
      %1395 = vmatprep.subr.bf16.mxu0 0
      %1396 = vmatpush1.bf16.msra.mxu0 0
      %1397 = vmatprep.subr.bf16.mxu0 0
      %1398 = vmatpush1.bf16.msra.mxu0 0
      %1399 = vmatprep.subr.bf16.mxu0 0
      %1400 = vmatpush1.bf16.msra.mxu0 0
      %1401 = vmatprep.subr.bf16.mxu0 0
      %1402 = vmatpush1.bf16.msra.mxu0 0
      %1403 = vmatprep.subr.bf16.mxu0 0
      %1404 = vmatpush1.bf16.msra.mxu0 0
      %1405 = vmatprep.subr.bf16.mxu0 0
      %1406 = vmatpush1.bf16.msra.mxu0 0
      %1407 = vmatprep.subr.bf16.mxu0 0
      %1408 = vmatpush1.bf16.msra.mxu0 0
      %1409 = vmatprep.subr.bf16.mxu0 0
      %1410 = vmatpush1.bf16.msra.mxu0 0
      %1411 = vmatprep.subr.bf16.mxu0 0
      %1412 = vmatpush1.bf16.msra.mxu0 0
      %1413 = vmatprep.subr.bf16.mxu0 0
      %1414 = vmatpush1.bf16.msra.mxu0 0
      %1415 = vmatprep.subr.bf16.mxu0 0
      %1416 = vmatpush1.bf16.msra.mxu0 0
      %1417 = vmatprep.subr.bf16.mxu0 0
      %1418 = vmatpush1.bf16.msra.mxu0 0
      %1419 = vmatprep.mubr.bf16.mxu0 0
      %1420 = vmatmul.mubr.bf16.gmra.mrb[0].mxu0 %v1337
      %v1421 = vpop.f32.mrb[0].mxu0
      %v1422 = vadd.f32 0.0, %v1421
      %v1423 = vpop.f32.mrb[0].mxu0
      %v1424 = vpop.f32.mrb[0].mxu0
      %v1425 = vadd.f32 0.0, %v1424
      %v1426 = vpop.f32.mrb[0].mxu0
      %1427 = vmatprep.mubr.bf16.mxu0 0
      %1428 = vmatmul.mubr.bf16.gmra.mrb[0].mxu0 %v1340
      %v1429 = vpop.f32.mrb[0].mxu0
      %v1430 = vadd.f32 0.0, %v1429
      %v1431 = vpop.f32.mrb[0].mxu0
      %v1432 = vpop.f32.mrb[0].mxu0
      %v1433 = vadd.f32 0.0, %v1432
      %v1434 = vpop.f32.mrb[0].mxu0
      %1435 = vmatprep.mubr.bf16.mxu0 0
      %1436 = vmatmul.mubr.bf16.gmra.mrb[0].mxu0 %v1343
      %v1437 = vpop.f32.mrb[0].mxu0
      %v1438 = vadd.f32 0.0, %v1437
      %v1439 = vpop.f32.mrb[0].mxu0
      %v1440 = vpop.f32.mrb[0].mxu0
      %v1441 = vadd.f32 0.0, %v1440
      %v1442 = vpop.f32.mrb[0].mxu0
      %1443 = vmatprep.mubr.bf16.mxu0 0
      %1444 = vmatmul.mubr.bf16.gmra.mrb[0].mxu0 %v1346
      %v1445 = vpop.f32.mrb[0].mxu0
      %v1446 = vadd.f32 0.0, %v1445
      %v1447 = vpop.f32.mrb[0].mxu0
      %v1448 = vpop.f32.mrb[0].mxu0
      %v1449 = vadd.f32 0.0, %v1448
      %v1450 = vpop.f32.mrb[0].mxu0
      %1451 = vmatprep.mubr.bf16.mxu0 0
      %1452 = vmatmul.mubr.bf16.gmra.mrb[0].mxu0 %v1349
      %v1453 = vpop.f32.mrb[0].mxu0
      %v1454 = vadd.f32 0.0, %v1453
      %v1455 = vpop.f32.mrb[0].mxu0
      %v1456 = vpop.f32.mrb[0].mxu0
      %v1457 = vadd.f32 0.0, %v1456
      %v1458 = vpop.f32.mrb[0].mxu0
      %1459 = vmatprep.mubr.bf16.mxu0 0
      %1460 = vmatmul.mubr.bf16.gmra.mrb[0].mxu0 %v1352
      %v1461 = vpop.f32.mrb[0].mxu0
      %v1462 = vadd.f32 0.0, %v1461
      %v1463 = vpop.f32.mrb[0].mxu0
      %v1464 = vpop.f32.mrb[0].mxu0
      %v1465 = vadd.f32 0.0, %v1464
      %v1466 = vpop.f32.mrb[0].mxu0
      %1467 = vmatprep.mubr.bf16.mxu0 0
      %1468 = vmatmul.mubr.bf16.gmra.mrb[0].mxu0 %v1355
      %v1469 = vpop.f32.mrb[0].mxu0
      %v1470 = vadd.f32 0.0, %v1469
      %v1471 = vpop.f32.mrb[0].mxu0
      %v1472 = vpop.f32.mrb[0].mxu0
      %v1473 = vadd.f32 0.0, %v1472
      %v1474 = vpop.f32.mrb[0].mxu0
      %1475 = vmatprep.mubr.bf16.mxu0 0
      %1476 = vmatmul.mubr.bf16.gmra.mrb[0].mxu0 %v1358
      %v1477 = vpop.f32.mrb[0].mxu0
      %v1478 = vadd.f32 0.0, %v1477
      %v1479 = vpop.f32.mrb[0].mxu0
      %v1480 = vpop.f32.mrb[0].mxu0
      %v1481 = vadd.f32 0.0, %v1480
      %v1482 = vpop.f32.mrb[0].mxu0
      %1483 = vmatprep.mubr.bf16.mxu0 0
      %1484 = vmatmul.mubr.bf16.gmra.mrb[0].mxu0 %v1361
      %v1485 = vpop.f32.mrb[0].mxu0
      %v1486 = vadd.f32 0.0, %v1485
      %v1487 = vpop.f32.mrb[0].mxu0
      %v1488 = vpop.f32.mrb[0].mxu0
      %v1489 = vadd.f32 0.0, %v1488
      %v1490 = vpop.f32.mrb[0].mxu0
      %1491 = vmatprep.mubr.bf16.mxu0 0
      %1492 = vmatmul.mubr.bf16.gmra.mrb[0].mxu0 %v1364
      %v1493 = vpop.f32.mrb[0].mxu0
      %v1494 = vadd.f32 0.0, %v1493
      %v1495 = vpop.f32.mrb[0].mxu0
      %v1496 = vpop.f32.mrb[0].mxu0
      %v1497 = vadd.f32 0.0, %v1496
      %v1498 = vpop.f32.mrb[0].mxu0
      %1499 = vmatprep.mubr.bf16.mxu0 0
      %1500 = vmatmul.mubr.bf16.gmra.mrb[0].mxu0 %v1367
      %v1501 = vpop.f32.mrb[0].mxu0
      %v1502 = vadd.f32 0.0, %v1501
      %v1503 = vpop.f32.mrb[0].mxu0
      %v1504 = vpop.f32.mrb[0].mxu0
      %v1505 = vadd.f32 0.0, %v1504
      %v1506 = vpop.f32.mrb[0].mxu0
      %1507 = vmatprep.mubr.bf16.mxu0 0
      %1508 = vmatmul.mubr.bf16.gmra.mrb[0].mxu0 %v1370
      %v1509 = vpop.f32.mrb[0].mxu0
      %v1510 = vadd.f32 0.0, %v1509
      %v1511 = vpop.f32.mrb[0].mxu0
      %v1512 = vpop.f32.mrb[0].mxu0
      %v1513 = vadd.f32 0.0, %v1512
      %v1514 = vpop.f32.mrb[0].mxu0
      %1515 = vmatprep.mubr.bf16.mxu0 0
      %1516 = vmatmul.mubr.bf16.gmra.mrb[0].mxu0 %v1373
      %v1517 = vpop.f32.mrb[0].mxu0
      %v1518 = vadd.f32 0.0, %v1517
      %v1519 = vpop.f32.mrb[0].mxu0
      %v1520 = vpop.f32.mrb[0].mxu0
      %v1521 = vadd.f32 0.0, %v1520
      %v1522 = vpop.f32.mrb[0].mxu0
      %1523 = vmatprep.mubr.bf16.mxu0 0
      %1524 = vmatmul.mubr.bf16.gmra.mrb[0].mxu0 %v1376
      %v1525 = vpop.f32.mrb[0].mxu0
      %v1526 = vadd.f32 0.0, %v1525
      %v1527 = vpop.f32.mrb[0].mxu0
      %v1528 = vpop.f32.mrb[0].mxu0
      %v1529 = vadd.f32 0.0, %v1528
      %v1530 = vpop.f32.mrb[0].mxu0
      %1531 = vmatprep.mubr.bf16.mxu0 0
      %1532 = vmatmul.mubr.bf16.gmra.mrb[0].mxu0 %v1379
      %v1533 = vpop.f32.mrb[0].mxu0
      %v1534 = vadd.f32 0.0, %v1533
      %v1535 = vpop.f32.mrb[0].mxu0
      %v1536 = vpop.f32.mrb[0].mxu0
      %v1537 = vadd.f32 0.0, %v1536
      %v1538 = vpop.f32.mrb[0].mxu0
      %1539 = vmatprep.mubr.bf16.mxu0 0
      %1540 = vmatmul.mubr.bf16.gmra.mrb[0].mxu0 %v1382
      %v1541 = vpop.f32.mrb[0].mxu0
      %v1542 = vadd.f32 0.0, %v1541
      %v1543 = vpop.f32.mrb[0].mxu0
      %v1544 = vpop.f32.mrb[0].mxu0
      %v1545 = vadd.f32 0.0, %v1544
      %v1546 = vpop.f32.mrb[0].mxu0
      %1547 = vdwg.mxu0
      %v1548 = vadd.f32 %v1254, %v1422
      %v1549 = vadd.f32 %v1255, %v1425
      %v1550 = vadd.f32 %v1256, %v1430
      %v1551 = vadd.f32 %v1257, %v1433
      %v1552 = vadd.f32 %v1258, %v1438
      %v1553 = vadd.f32 %v1259, %v1441
      %v1554 = vadd.f32 %v1260, %v1446
      %v1555 = vadd.f32 %v1261, %v1449
      %v1556 = vadd.f32 %v1262, %v1454
      %v1557 = vadd.f32 %v1263, %v1457
      %v1558 = vadd.f32 %v1264, %v1462
      %v1559 = vadd.f32 %v1265, %v1465
      %v1560 = vadd.f32 %v1266, %v1470
      %v1561 = vadd.f32 %v1267, %v1473
      %v1562 = vadd.f32 %v1268, %v1478
      %v1563 = vadd.f32 %v1269, %v1481
      %v1564 = vadd.f32 %v1270, %v1486
      %v1565 = vadd.f32 %v1271, %v1489
      %v1566 = vadd.f32 %v1272, %v1494
      %v1567 = vadd.f32 %v1273, %v1497
      %v1568 = vadd.f32 %v1274, %v1502
      %v1569 = vadd.f32 %v1275, %v1505
      %v1570 = vadd.f32 %v1276, %v1510
      %v1571 = vadd.f32 %v1277, %v1513
      %v1572 = vadd.f32 %v1278, %v1518
      %v1573 = vadd.f32 %v1279, %v1521
      %v1574 = vadd.f32 %v1280, %v1526
      %v1575 = vadd.f32 %v1281, %v1529
      %v1576 = vadd.f32 %v1282, %v1534
      %v1577 = vadd.f32 %v1283, %v1537
      %v1578 = vadd.f32 %v1284, %v1542
      %v1579 = vadd.f32 %v1285, %v1545
      %v1580 = vld [vmem:[%s991 + $0x2] sm:$0xff]
      %v1581 = vld [vmem:[%s991 + $0xa] sm:$0xff]
      %v1582 = vld [vmem:[%s991 + $0x1a] sm:$0xff]
      %v1583 = vld [vmem:[%s991 + $0x22] sm:$0xff]
      %v1584 = vld [vmem:[%s991 + $0x32] sm:$0xff]
      %v1585 = vld [vmem:[%s991 + $0x3a] sm:$0xff]
      %v1586 = vld [vmem:[%s991 + $0x4a] sm:$0xff]
      %v1587 = vld [vmem:[%s991 + $0x52] sm:$0xff]
      %v1588 = vld [vmem:[%s991 + $0x62] sm:$0xff]
      %v1589 = vld [vmem:[%s991 + $0x6a] sm:$0xff]
      %v1590 = vld [vmem:[%s991 + $0x7a] sm:$0xff]
      %v1591 = vld [vmem:[%s991 + $0x82] sm:$0xff]
      %v1592 = vld [vmem:[%s991 + $0x92] sm:$0xff]
      %v1593 = vld [vmem:[%s991 + $0x9a] sm:$0xff]
      %v1594 = vld [vmem:[%s991 + $0xaa] sm:$0xff]
      %v1595 = vld [vmem:[%s991 + $0xb2] sm:$0xff]
      %v1596 = vld [vmem:[%s991 + $0xc2] sm:$0xff]
      %v1597 = vld [vmem:[%s991 + $0xca] sm:$0xff]
      %v1598 = vld [vmem:[%s991 + $0xda] sm:$0xff]
      %v1599 = vld [vmem:[%s991 + $0xe2] sm:$0xff]
      %v1600 = vld [vmem:[%s991 + $0xf2] sm:$0xff]
      %v1601 = vld [vmem:[%s991 + $0xfa] sm:$0xff]
      %v1602 = vld [vmem:[%s991 + $0x10a] sm:$0xff]
      %v1603 = vld [vmem:[%s991 + $0x112] sm:$0xff]
      %v1604 = vld [vmem:[%s991 + $0x122] sm:$0xff]
      %v1605 = vld [vmem:[%s991 + $0x12a] sm:$0xff]
      %v1606 = vld [vmem:[%s991 + $0x13a] sm:$0xff]
      %v1607 = vld [vmem:[%s991 + $0x142] sm:$0xff]
      %v1608 = vld [vmem:[%s991 + $0x152] sm:$0xff]
      %v1609 = vld [vmem:[%s991 + $0x15a] sm:$0xff]
      %v1610 = vld [vmem:[%s991 + $0x16a] sm:$0xff]
      %v1611 = vld [vmem:[%s991 + $0x172] sm:$0xff]
      %v1612 = vpack.c.bf16 %v1581, %v1580
      %v1613 = vpack.c.bf16 %v1583, %v1582
      %v1614 = vpack.c.bf16 %v1585, %v1584
      %v1615 = vpack.c.bf16 %v1587, %v1586
      %v1616 = vpack.c.bf16 %v1589, %v1588
      %v1617 = vpack.c.bf16 %v1591, %v1590
      %v1618 = vpack.c.bf16 %v1593, %v1592
      %v1619 = vpack.c.bf16 %v1595, %v1594
      %v1620 = vpack.c.bf16 %v1597, %v1596
      %v1621 = vpack.c.bf16 %v1599, %v1598
      %v1622 = vpack.c.bf16 %v1601, %v1600
      %v1623 = vpack.c.bf16 %v1603, %v1602
      %v1624 = vpack.c.bf16 %v1605, %v1604
      %v1625 = vpack.c.bf16 %v1607, %v1606
      %v1626 = vpack.c.bf16 %v1609, %v1608
      %v1627 = vpack.c.bf16 %v1611, %v1610
      %s1628 = scalar_lea.vmem %s1, 10
      %v1629 = vld [vmem:[%s1628] sm:$0x3]
      %v1631 = vsel %vm271, %v1612, 0
      %v1634 = vsel %vm271, %v1613, 0
      %v1637 = vsel %vm271, %v1614, 0
      %v1640 = vsel %vm271, %v1615, 0
      %v1643 = vsel %vm271, %v1616, 0
      %v1646 = vsel %vm271, %v1617, 0
      %v1649 = vsel %vm271, %v1618, 0
      %v1652 = vsel %vm271, %v1619, 0
      %v1655 = vsel %vm271, %v1620, 0
      %v1658 = vsel %vm271, %v1621, 0
      %v1661 = vsel %vm271, %v1622, 0
      %v1664 = vsel %vm271, %v1623, 0
      %v1667 = vsel %vm271, %v1624, 0
      %v1670 = vsel %vm271, %v1625, 0
      %v1673 = vsel %vm271, %v1626, 0
      %v1676 = vsel %vm271, %v1627, 0
      %v1679 = vsel %vm320, %v1629, 0
      %1681 = vmatprep.subr.bf16.mxu0 0
      %1682 = vmatpush1.bf16.msra.mxu0 %v1679
      %1683 = vmatprep.subr.bf16.mxu0 0
      %1684 = vmatpush1.bf16.msra.mxu0 0
      %1685 = vmatprep.subr.bf16.mxu0 0
      %1686 = vmatpush1.bf16.msra.mxu0 0
      %1687 = vmatprep.subr.bf16.mxu0 0
      %1688 = vmatpush1.bf16.msra.mxu0 0
      %1689 = vmatprep.subr.bf16.mxu0 0
      %1690 = vmatpush1.bf16.msra.mxu0 0
      %1691 = vmatprep.subr.bf16.mxu0 0
      %1692 = vmatpush1.bf16.msra.mxu0 0
      %1693 = vmatprep.subr.bf16.mxu0 0
      %1694 = vmatpush1.bf16.msra.mxu0 0
      %1695 = vmatprep.subr.bf16.mxu0 0
      %1696 = vmatpush1.bf16.msra.mxu0 0
      %1697 = vmatprep.subr.bf16.mxu0 0
      %1698 = vmatpush1.bf16.msra.mxu0 0
      %1699 = vmatprep.subr.bf16.mxu0 0
      %1700 = vmatpush1.bf16.msra.mxu0 0
      %1701 = vmatprep.subr.bf16.mxu0 0
      %1702 = vmatpush1.bf16.msra.mxu0 0
      %1703 = vmatprep.subr.bf16.mxu0 0
      %1704 = vmatpush1.bf16.msra.mxu0 0
      %1705 = vmatprep.subr.bf16.mxu0 0
      %1706 = vmatpush1.bf16.msra.mxu0 0
      %1707 = vmatprep.subr.bf16.mxu0 0
      %1708 = vmatpush1.bf16.msra.mxu0 0
      %1709 = vmatprep.subr.bf16.mxu0 0
      %1710 = vmatpush1.bf16.msra.mxu0 0
      %1711 = vmatprep.subr.bf16.mxu0 0
      %1712 = vmatpush1.bf16.msra.mxu0 0
      %1713 = vmatprep.mubr.bf16.mxu0 0
      %1714 = vmatmul.mubr.bf16.gmra.mrb[0].mxu0 %v1631
      %v1715 = vpop.f32.mrb[0].mxu0
      %v1716 = vadd.f32 0.0, %v1715
      %v1717 = vpop.f32.mrb[0].mxu0
      %v1718 = vpop.f32.mrb[0].mxu0
      %v1719 = vadd.f32 0.0, %v1718
      %v1720 = vpop.f32.mrb[0].mxu0
      %1721 = vmatprep.mubr.bf16.mxu0 0
      %1722 = vmatmul.mubr.bf16.gmra.mrb[0].mxu0 %v1634
      %v1723 = vpop.f32.mrb[0].mxu0
      %v1724 = vadd.f32 0.0, %v1723
      %v1725 = vpop.f32.mrb[0].mxu0
      %v1726 = vpop.f32.mrb[0].mxu0
      %v1727 = vadd.f32 0.0, %v1726
      %v1728 = vpop.f32.mrb[0].mxu0
      %1729 = vmatprep.mubr.bf16.mxu0 0
      %1730 = vmatmul.mubr.bf16.gmra.mrb[0].mxu0 %v1637
      %v1731 = vpop.f32.mrb[0].mxu0
      %v1732 = vadd.f32 0.0, %v1731
      %v1733 = vpop.f32.mrb[0].mxu0
      %v1734 = vpop.f32.mrb[0].mxu0
      %v1735 = vadd.f32 0.0, %v1734
      %v1736 = vpop.f32.mrb[0].mxu0
      %1737 = vmatprep.mubr.bf16.mxu0 0
      %1738 = vmatmul.mubr.bf16.gmra.mrb[0].mxu0 %v1640
      %v1739 = vpop.f32.mrb[0].mxu0
      %v1740 = vadd.f32 0.0, %v1739
      %v1741 = vpop.f32.mrb[0].mxu0
      %v1742 = vpop.f32.mrb[0].mxu0
      %v1743 = vadd.f32 0.0, %v1742
      %v1744 = vpop.f32.mrb[0].mxu0
      %1745 = vmatprep.mubr.bf16.mxu0 0
      %1746 = vmatmul.mubr.bf16.gmra.mrb[0].mxu0 %v1643
      %v1747 = vpop.f32.mrb[0].mxu0
      %v1748 = vadd.f32 0.0, %v1747
      %v1749 = vpop.f32.mrb[0].mxu0
      %v1750 = vpop.f32.mrb[0].mxu0
      %v1751 = vadd.f32 0.0, %v1750
      %v1752 = vpop.f32.mrb[0].mxu0
      %1753 = vmatprep.mubr.bf16.mxu0 0
      %1754 = vmatmul.mubr.bf16.gmra.mrb[0].mxu0 %v1646
      %v1755 = vpop.f32.mrb[0].mxu0
      %v1756 = vadd.f32 0.0, %v1755
      %v1757 = vpop.f32.mrb[0].mxu0
      %v1758 = vpop.f32.mrb[0].mxu0
      %v1759 = vadd.f32 0.0, %v1758
      %v1760 = vpop.f32.mrb[0].mxu0
      %1761 = vmatprep.mubr.bf16.mxu0 0
      %1762 = vmatmul.mubr.bf16.gmra.mrb[0].mxu0 %v1649
      %v1763 = vpop.f32.mrb[0].mxu0
      %v1764 = vadd.f32 0.0, %v1763
      %v1765 = vpop.f32.mrb[0].mxu0
      %v1766 = vpop.f32.mrb[0].mxu0
      %v1767 = vadd.f32 0.0, %v1766
      %v1768 = vpop.f32.mrb[0].mxu0
      %1769 = vmatprep.mubr.bf16.mxu0 0
      %1770 = vmatmul.mubr.bf16.gmra.mrb[0].mxu0 %v1652
      %v1771 = vpop.f32.mrb[0].mxu0
      %v1772 = vadd.f32 0.0, %v1771
      %v1773 = vpop.f32.mrb[0].mxu0
      %v1774 = vpop.f32.mrb[0].mxu0
      %v1775 = vadd.f32 0.0, %v1774
      %v1776 = vpop.f32.mrb[0].mxu0
      %1777 = vmatprep.mubr.bf16.mxu0 0
      %1778 = vmatmul.mubr.bf16.gmra.mrb[0].mxu0 %v1655
      %v1779 = vpop.f32.mrb[0].mxu0
      %v1780 = vadd.f32 0.0, %v1779
      %v1781 = vpop.f32.mrb[0].mxu0
      %v1782 = vpop.f32.mrb[0].mxu0
      %v1783 = vadd.f32 0.0, %v1782
      %v1784 = vpop.f32.mrb[0].mxu0
      %1785 = vmatprep.mubr.bf16.mxu0 0
      %1786 = vmatmul.mubr.bf16.gmra.mrb[0].mxu0 %v1658
      %v1787 = vpop.f32.mrb[0].mxu0
      %v1788 = vadd.f32 0.0, %v1787
      %v1789 = vpop.f32.mrb[0].mxu0
      %v1790 = vpop.f32.mrb[0].mxu0
      %v1791 = vadd.f32 0.0, %v1790
      %v1792 = vpop.f32.mrb[0].mxu0
      %1793 = vmatprep.mubr.bf16.mxu0 0
      %1794 = vmatmul.mubr.bf16.gmra.mrb[0].mxu0 %v1661
      %v1795 = vpop.f32.mrb[0].mxu0
      %v1796 = vadd.f32 0.0, %v1795
      %v1797 = vpop.f32.mrb[0].mxu0
      %v1798 = vpop.f32.mrb[0].mxu0
      %v1799 = vadd.f32 0.0, %v1798
      %v1800 = vpop.f32.mrb[0].mxu0
      %1801 = vmatprep.mubr.bf16.mxu0 0
      %1802 = vmatmul.mubr.bf16.gmra.mrb[0].mxu0 %v1664
      %v1803 = vpop.f32.mrb[0].mxu0
      %v1804 = vadd.f32 0.0, %v1803
      %v1805 = vpop.f32.mrb[0].mxu0
      %v1806 = vpop.f32.mrb[0].mxu0
      %v1807 = vadd.f32 0.0, %v1806
      %v1808 = vpop.f32.mrb[0].mxu0
      %1809 = vmatprep.mubr.bf16.mxu0 0
      %1810 = vmatmul.mubr.bf16.gmra.mrb[0].mxu0 %v1667
      %v1811 = vpop.f32.mrb[0].mxu0
      %v1812 = vadd.f32 0.0, %v1811
      %v1813 = vpop.f32.mrb[0].mxu0
      %v1814 = vpop.f32.mrb[0].mxu0
      %v1815 = vadd.f32 0.0, %v1814
      %v1816 = vpop.f32.mrb[0].mxu0
      %1817 = vmatprep.mubr.bf16.mxu0 0
      %1818 = vmatmul.mubr.bf16.gmra.mrb[0].mxu0 %v1670
      %v1819 = vpop.f32.mrb[0].mxu0
      %v1820 = vadd.f32 0.0, %v1819
      %v1821 = vpop.f32.mrb[0].mxu0
      %v1822 = vpop.f32.mrb[0].mxu0
      %v1823 = vadd.f32 0.0, %v1822
      %v1824 = vpop.f32.mrb[0].mxu0
      %1825 = vmatprep.mubr.bf16.mxu0 0
      %1826 = vmatmul.mubr.bf16.gmra.mrb[0].mxu0 %v1673
      %v1827 = vpop.f32.mrb[0].mxu0
      %v1828 = vadd.f32 0.0, %v1827
      %v1829 = vpop.f32.mrb[0].mxu0
      %v1830 = vpop.f32.mrb[0].mxu0
      %v1831 = vadd.f32 0.0, %v1830
      %v1832 = vpop.f32.mrb[0].mxu0
      %1833 = vmatprep.mubr.bf16.mxu0 0
      %1834 = vmatmul.mubr.bf16.gmra.mrb[0].mxu0 %v1676
      %v1835 = vpop.f32.mrb[0].mxu0
      %v1836 = vadd.f32 0.0, %v1835
      %v1837 = vpop.f32.mrb[0].mxu0
      %v1838 = vpop.f32.mrb[0].mxu0
      %v1839 = vadd.f32 0.0, %v1838
      %v1840 = vpop.f32.mrb[0].mxu0
      %1841 = vdwg.mxu0
      %v1842 = vadd.f32 %v1548, %v1716
      %v1843 = vadd.f32 %v1549, %v1719
      %v1844 = vadd.f32 %v1550, %v1724
      %v1845 = vadd.f32 %v1551, %v1727
      %v1846 = vadd.f32 %v1552, %v1732
      %v1847 = vadd.f32 %v1553, %v1735
      %v1848 = vadd.f32 %v1554, %v1740
      %v1849 = vadd.f32 %v1555, %v1743
      %v1850 = vadd.f32 %v1556, %v1748
      %v1851 = vadd.f32 %v1557, %v1751
      %v1852 = vadd.f32 %v1558, %v1756
      %v1853 = vadd.f32 %v1559, %v1759
      %v1854 = vadd.f32 %v1560, %v1764
      %v1855 = vadd.f32 %v1561, %v1767
      %v1856 = vadd.f32 %v1562, %v1772
      %v1857 = vadd.f32 %v1563, %v1775
      %v1858 = vadd.f32 %v1564, %v1780
      %v1859 = vadd.f32 %v1565, %v1783
      %v1860 = vadd.f32 %v1566, %v1788
      %v1861 = vadd.f32 %v1567, %v1791
      %v1862 = vadd.f32 %v1568, %v1796
      %v1863 = vadd.f32 %v1569, %v1799
      %v1864 = vadd.f32 %v1570, %v1804
      %v1865 = vadd.f32 %v1571, %v1807
      %v1866 = vadd.f32 %v1572, %v1812
      %v1867 = vadd.f32 %v1573, %v1815
      %v1868 = vadd.f32 %v1574, %v1820
      %v1869 = vadd.f32 %v1575, %v1823
      %v1870 = vadd.f32 %v1576, %v1828
      %v1871 = vadd.f32 %v1577, %v1831
      %v1872 = vadd.f32 %v1578, %v1836
      %v1873 = vadd.f32 %v1579, %v1839
      %s1874 = scalar_lea.vmem %s165, 48
      %v1875 = vld [vmem:[%s1874] sm:$0xff]
      %v1876 = vld [vmem:[%s1874 + $0x8] sm:$0xff]
      %v1877 = vld [vmem:[%s1874 + $0x18] sm:$0xff]
      %v1878 = vld [vmem:[%s1874 + $0x20] sm:$0xff]
      %v1879 = vld [vmem:[%s1874 + $0x30] sm:$0xff]
      %v1880 = vld [vmem:[%s1874 + $0x38] sm:$0xff]
      %v1881 = vld [vmem:[%s1874 + $0x48] sm:$0xff]
      %v1882 = vld [vmem:[%s1874 + $0x50] sm:$0xff]
      %v1883 = vld [vmem:[%s1874 + $0x60] sm:$0xff]
      %v1884 = vld [vmem:[%s1874 + $0x68] sm:$0xff]
      %v1885 = vld [vmem:[%s1874 + $0x78] sm:$0xff]
      %v1886 = vld [vmem:[%s1874 + $0x80] sm:$0xff]
      %v1887 = vld [vmem:[%s1874 + $0x90] sm:$0xff]
      %v1888 = vld [vmem:[%s1874 + $0x98] sm:$0xff]
      %v1889 = vld [vmem:[%s1874 + $0xa8] sm:$0xff]
      %v1890 = vld [vmem:[%s1874 + $0xb0] sm:$0xff]
      %v1891 = vld [vmem:[%s1874 + $0xc0] sm:$0xff]
      %v1892 = vld [vmem:[%s1874 + $0xc8] sm:$0xff]
      %v1893 = vld [vmem:[%s1874 + $0xd8] sm:$0xff]
      %v1894 = vld [vmem:[%s1874 + $0xe0] sm:$0xff]
      %v1895 = vld [vmem:[%s1874 + $0xf0] sm:$0xff]
      %v1896 = vld [vmem:[%s1874 + $0xf8] sm:$0xff]
      %v1897 = vld [vmem:[%s1874 + $0x108] sm:$0xff]
      %v1898 = vld [vmem:[%s1874 + $0x110] sm:$0xff]
      %v1899 = vld [vmem:[%s1874 + $0x120] sm:$0xff]
      %v1900 = vld [vmem:[%s1874 + $0x128] sm:$0xff]
      %v1901 = vld [vmem:[%s1874 + $0x138] sm:$0xff]
      %v1902 = vld [vmem:[%s1874 + $0x140] sm:$0xff]
      %v1903 = vld [vmem:[%s1874 + $0x150] sm:$0xff]
      %v1904 = vld [vmem:[%s1874 + $0x158] sm:$0xff]
      %v1905 = vld [vmem:[%s1874 + $0x168] sm:$0xff]
      %v1906 = vld [vmem:[%s1874 + $0x170] sm:$0xff]
      %v1907 = vpack.c.bf16 %v1876, %v1875
      %v1908 = vpack.c.bf16 %v1878, %v1877
      %v1909 = vpack.c.bf16 %v1880, %v1879
      %v1910 = vpack.c.bf16 %v1882, %v1881
      %v1911 = vpack.c.bf16 %v1884, %v1883
      %v1912 = vpack.c.bf16 %v1886, %v1885
      %v1913 = vpack.c.bf16 %v1888, %v1887
      %v1914 = vpack.c.bf16 %v1890, %v1889
      %v1915 = vpack.c.bf16 %v1892, %v1891
      %v1916 = vpack.c.bf16 %v1894, %v1893
      %v1917 = vpack.c.bf16 %v1896, %v1895
      %v1918 = vpack.c.bf16 %v1898, %v1897
      %v1919 = vpack.c.bf16 %v1900, %v1899
      %v1920 = vpack.c.bf16 %v1902, %v1901
      %v1921 = vpack.c.bf16 %v1904, %v1903
      %v1922 = vpack.c.bf16 %v1906, %v1905
      %s1923 = scalar_lea.vmem %s1, 12
      %v1924 = vld [vmem:[%s1923] sm:$0x3]
      %v1926 = vsel %vm271, %v1907, 0
      %v1929 = vsel %vm271, %v1908, 0
      %v1932 = vsel %vm271, %v1909, 0
      %v1935 = vsel %vm271, %v1910, 0
      %v1938 = vsel %vm271, %v1911, 0
      %v1941 = vsel %vm271, %v1912, 0
      %v1944 = vsel %vm271, %v1913, 0
      %v1947 = vsel %vm271, %v1914, 0
      %v1950 = vsel %vm271, %v1915, 0
      %v1953 = vsel %vm271, %v1916, 0
      %v1956 = vsel %vm271, %v1917, 0
      %v1959 = vsel %vm271, %v1918, 0
      %v1962 = vsel %vm271, %v1919, 0
      %v1965 = vsel %vm271, %v1920, 0
      %v1968 = vsel %vm271, %v1921, 0
      %v1971 = vsel %vm271, %v1922, 0
      %v1974 = vsel %vm320, %v1924, 0
      %1976 = vmatprep.subr.bf16.mxu0 0
      %1977 = vmatpush1.bf16.msra.mxu0 %v1974
      %1978 = vmatprep.subr.bf16.mxu0 0
      %1979 = vmatpush1.bf16.msra.mxu0 0
      %1980 = vmatprep.subr.bf16.mxu0 0
      %1981 = vmatpush1.bf16.msra.mxu0 0
      %1982 = vmatprep.subr.bf16.mxu0 0
      %1983 = vmatpush1.bf16.msra.mxu0 0
      %1984 = vmatprep.subr.bf16.mxu0 0
      %1985 = vmatpush1.bf16.msra.mxu0 0
      %1986 = vmatprep.subr.bf16.mxu0 0
      %1987 = vmatpush1.bf16.msra.mxu0 0
      %1988 = vmatprep.subr.bf16.mxu0 0
      %1989 = vmatpush1.bf16.msra.mxu0 0
      %1990 = vmatprep.subr.bf16.mxu0 0
      %1991 = vmatpush1.bf16.msra.mxu0 0
      %1992 = vmatprep.subr.bf16.mxu0 0
      %1993 = vmatpush1.bf16.msra.mxu0 0
      %1994 = vmatprep.subr.bf16.mxu0 0
      %1995 = vmatpush1.bf16.msra.mxu0 0
      %1996 = vmatprep.subr.bf16.mxu0 0
      %1997 = vmatpush1.bf16.msra.mxu0 0
      %1998 = vmatprep.subr.bf16.mxu0 0
      %1999 = vmatpush1.bf16.msra.mxu0 0
      %2000 = vmatprep.subr.bf16.mxu0 0
      %2001 = vmatpush1.bf16.msra.mxu0 0
      %2002 = vmatprep.subr.bf16.mxu0 0
      %2003 = vmatpush1.bf16.msra.mxu0 0
      %2004 = vmatprep.subr.bf16.mxu0 0
      %2005 = vmatpush1.bf16.msra.mxu0 0
      %2006 = vmatprep.subr.bf16.mxu0 0
      %2007 = vmatpush1.bf16.msra.mxu0 0
      %2008 = vmatprep.mubr.bf16.mxu0 0
      %2009 = vmatmul.mubr.bf16.gmra.mrb[0].mxu0 %v1926
      %v2010 = vpop.f32.mrb[0].mxu0
      %v2011 = vadd.f32 0.0, %v2010
      %v2012 = vpop.f32.mrb[0].mxu0
      %v2013 = vpop.f32.mrb[0].mxu0
      %v2014 = vadd.f32 0.0, %v2013
      %v2015 = vpop.f32.mrb[0].mxu0
      %2016 = vmatprep.mubr.bf16.mxu0 0
      %2017 = vmatmul.mubr.bf16.gmra.mrb[0].mxu0 %v1929
      %v2018 = vpop.f32.mrb[0].mxu0
      %v2019 = vadd.f32 0.0, %v2018
      %v2020 = vpop.f32.mrb[0].mxu0
      %v2021 = vpop.f32.mrb[0].mxu0
      %v2022 = vadd.f32 0.0, %v2021
      %v2023 = vpop.f32.mrb[0].mxu0
      %2024 = vmatprep.mubr.bf16.mxu0 0
      %2025 = vmatmul.mubr.bf16.gmra.mrb[0].mxu0 %v1932
      %v2026 = vpop.f32.mrb[0].mxu0
      %v2027 = vadd.f32 0.0, %v2026
      %v2028 = vpop.f32.mrb[0].mxu0
      %v2029 = vpop.f32.mrb[0].mxu0
      %v2030 = vadd.f32 0.0, %v2029
      %v2031 = vpop.f32.mrb[0].mxu0
      %2032 = vmatprep.mubr.bf16.mxu0 0
      %2033 = vmatmul.mubr.bf16.gmra.mrb[0].mxu0 %v1935
      %v2034 = vpop.f32.mrb[0].mxu0
      %v2035 = vadd.f32 0.0, %v2034
      %v2036 = vpop.f32.mrb[0].mxu0
      %v2037 = vpop.f32.mrb[0].mxu0
      %v2038 = vadd.f32 0.0, %v2037
      %v2039 = vpop.f32.mrb[0].mxu0
      %2040 = vmatprep.mubr.bf16.mxu0 0
      %2041 = vmatmul.mubr.bf16.gmra.mrb[0].mxu0 %v1938
      %v2042 = vpop.f32.mrb[0].mxu0
      %v2043 = vadd.f32 0.0, %v2042
      %v2044 = vpop.f32.mrb[0].mxu0
      %v2045 = vpop.f32.mrb[0].mxu0
      %v2046 = vadd.f32 0.0, %v2045
      %v2047 = vpop.f32.mrb[0].mxu0
      %2048 = vmatprep.mubr.bf16.mxu0 0
      %2049 = vmatmul.mubr.bf16.gmra.mrb[0].mxu0 %v1941
      %v2050 = vpop.f32.mrb[0].mxu0
      %v2051 = vadd.f32 0.0, %v2050
      %v2052 = vpop.f32.mrb[0].mxu0
      %v2053 = vpop.f32.mrb[0].mxu0
      %v2054 = vadd.f32 0.0, %v2053
      %v2055 = vpop.f32.mrb[0].mxu0
      %2056 = vmatprep.mubr.bf16.mxu0 0
      %2057 = vmatmul.mubr.bf16.gmra.mrb[0].mxu0 %v1944
      %v2058 = vpop.f32.mrb[0].mxu0
      %v2059 = vadd.f32 0.0, %v2058
      %v2060 = vpop.f32.mrb[0].mxu0
      %v2061 = vpop.f32.mrb[0].mxu0
      %v2062 = vadd.f32 0.0, %v2061
      %v2063 = vpop.f32.mrb[0].mxu0
      %2064 = vmatprep.mubr.bf16.mxu0 0
      %2065 = vmatmul.mubr.bf16.gmra.mrb[0].mxu0 %v1947
      %v2066 = vpop.f32.mrb[0].mxu0
      %v2067 = vadd.f32 0.0, %v2066
      %v2068 = vpop.f32.mrb[0].mxu0
      %v2069 = vpop.f32.mrb[0].mxu0
      %v2070 = vadd.f32 0.0, %v2069
      %v2071 = vpop.f32.mrb[0].mxu0
      %2072 = vmatprep.mubr.bf16.mxu0 0
      %2073 = vmatmul.mubr.bf16.gmra.mrb[0].mxu0 %v1950
      %v2074 = vpop.f32.mrb[0].mxu0
      %v2075 = vadd.f32 0.0, %v2074
      %v2076 = vpop.f32.mrb[0].mxu0
      %v2077 = vpop.f32.mrb[0].mxu0
      %v2078 = vadd.f32 0.0, %v2077
      %v2079 = vpop.f32.mrb[0].mxu0
      %2080 = vmatprep.mubr.bf16.mxu0 0
      %2081 = vmatmul.mubr.bf16.gmra.mrb[0].mxu0 %v1953
      %v2082 = vpop.f32.mrb[0].mxu0
      %v2083 = vadd.f32 0.0, %v2082
      %v2084 = vpop.f32.mrb[0].mxu0
      %v2085 = vpop.f32.mrb[0].mxu0
      %v2086 = vadd.f32 0.0, %v2085
      %v2087 = vpop.f32.mrb[0].mxu0
      %2088 = vmatprep.mubr.bf16.mxu0 0
      %2089 = vmatmul.mubr.bf16.gmra.mrb[0].mxu0 %v1956
      %v2090 = vpop.f32.mrb[0].mxu0
      %v2091 = vadd.f32 0.0, %v2090
      %v2092 = vpop.f32.mrb[0].mxu0
      %v2093 = vpop.f32.mrb[0].mxu0
      %v2094 = vadd.f32 0.0, %v2093
      %v2095 = vpop.f32.mrb[0].mxu0
      %2096 = vmatprep.mubr.bf16.mxu0 0
      %2097 = vmatmul.mubr.bf16.gmra.mrb[0].mxu0 %v1959
      %v2098 = vpop.f32.mrb[0].mxu0
      %v2099 = vadd.f32 0.0, %v2098
      %v2100 = vpop.f32.mrb[0].mxu0
      %v2101 = vpop.f32.mrb[0].mxu0
      %v2102 = vadd.f32 0.0, %v2101
      %v2103 = vpop.f32.mrb[0].mxu0
      %2104 = vmatprep.mubr.bf16.mxu0 0
      %2105 = vmatmul.mubr.bf16.gmra.mrb[0].mxu0 %v1962
      %v2106 = vpop.f32.mrb[0].mxu0
      %v2107 = vadd.f32 0.0, %v2106
      %v2108 = vpop.f32.mrb[0].mxu0
      %v2109 = vpop.f32.mrb[0].mxu0
      %v2110 = vadd.f32 0.0, %v2109
      %v2111 = vpop.f32.mrb[0].mxu0
      %2112 = vmatprep.mubr.bf16.mxu0 0
      %2113 = vmatmul.mubr.bf16.gmra.mrb[0].mxu0 %v1965
      %v2114 = vpop.f32.mrb[0].mxu0
      %v2115 = vadd.f32 0.0, %v2114
      %v2116 = vpop.f32.mrb[0].mxu0
      %v2117 = vpop.f32.mrb[0].mxu0
      %v2118 = vadd.f32 0.0, %v2117
      %v2119 = vpop.f32.mrb[0].mxu0
      %2120 = vmatprep.mubr.bf16.mxu0 0
      %2121 = vmatmul.mubr.bf16.gmra.mrb[0].mxu0 %v1968
      %v2122 = vpop.f32.mrb[0].mxu0
      %v2123 = vadd.f32 0.0, %v2122
      %v2124 = vpop.f32.mrb[0].mxu0
      %v2125 = vpop.f32.mrb[0].mxu0
      %v2126 = vadd.f32 0.0, %v2125
      %v2127 = vpop.f32.mrb[0].mxu0
      %2128 = vmatprep.mubr.bf16.mxu0 0
      %2129 = vmatmul.mubr.bf16.gmra.mrb[0].mxu0 %v1971
      %v2130 = vpop.f32.mrb[0].mxu0
      %v2131 = vadd.f32 0.0, %v2130
      %v2132 = vpop.f32.mrb[0].mxu0
      %v2133 = vpop.f32.mrb[0].mxu0
      %v2134 = vadd.f32 0.0, %v2133
      %v2135 = vpop.f32.mrb[0].mxu0
      %2136 = vdwg.mxu0
      %v2137 = vadd.f32 %v1842, %v2011
      %v2138 = vadd.f32 %v1843, %v2014
      %v2139 = vadd.f32 %v1844, %v2019
      %v2140 = vadd.f32 %v1845, %v2022
      %v2141 = vadd.f32 %v1846, %v2027
      %v2142 = vadd.f32 %v1847, %v2030
      %v2143 = vadd.f32 %v1848, %v2035
      %v2144 = vadd.f32 %v1849, %v2038
      %v2145 = vadd.f32 %v1850, %v2043
      %v2146 = vadd.f32 %v1851, %v2046
      %v2147 = vadd.f32 %v1852, %v2051
      %v2148 = vadd.f32 %v1853, %v2054
      %v2149 = vadd.f32 %v1854, %v2059
      %v2150 = vadd.f32 %v1855, %v2062
      %v2151 = vadd.f32 %v1856, %v2067
      %v2152 = vadd.f32 %v1857, %v2070
      %v2153 = vadd.f32 %v1858, %v2075
      %v2154 = vadd.f32 %v1859, %v2078
      %v2155 = vadd.f32 %v1860, %v2083
      %v2156 = vadd.f32 %v1861, %v2086
      %v2157 = vadd.f32 %v1862, %v2091
      %v2158 = vadd.f32 %v1863, %v2094
      %v2159 = vadd.f32 %v1864, %v2099
      %v2160 = vadd.f32 %v1865, %v2102
      %v2161 = vadd.f32 %v1866, %v2107
      %v2162 = vadd.f32 %v1867, %v2110
      %v2163 = vadd.f32 %v1868, %v2115
      %v2164 = vadd.f32 %v1869, %v2118
      %v2165 = vadd.f32 %v1870, %v2123
      %v2166 = vadd.f32 %v1871, %v2126
      %v2167 = vadd.f32 %v1872, %v2131
      %v2168 = vadd.f32 %v1873, %v2134
      %v2169 = vld [vmem:[%s1874 + $0x1] sm:$0xff]
      %v2170 = vld [vmem:[%s1874 + $0x9] sm:$0xff]
      %v2171 = vld [vmem:[%s1874 + $0x19] sm:$0xff]
      %v2172 = vld [vmem:[%s1874 + $0x21] sm:$0xff]
      %v2173 = vld [vmem:[%s1874 + $0x31] sm:$0xff]
      %v2174 = vld [vmem:[%s1874 + $0x39] sm:$0xff]
      %v2175 = vld [vmem:[%s1874 + $0x49] sm:$0xff]
      %v2176 = vld [vmem:[%s1874 + $0x51] sm:$0xff]
      %v2177 = vld [vmem:[%s1874 + $0x61] sm:$0xff]
      %v2178 = vld [vmem:[%s1874 + $0x69] sm:$0xff]
      %v2179 = vld [vmem:[%s1874 + $0x79] sm:$0xff]
      %v2180 = vld [vmem:[%s1874 + $0x81] sm:$0xff]
      %v2181 = vld [vmem:[%s1874 + $0x91] sm:$0xff]
      %v2182 = vld [vmem:[%s1874 + $0x99] sm:$0xff]
      %v2183 = vld [vmem:[%s1874 + $0xa9] sm:$0xff]
      %v2184 = vld [vmem:[%s1874 + $0xb1] sm:$0xff]
      %v2185 = vld [vmem:[%s1874 + $0xc1] sm:$0xff]
      %v2186 = vld [vmem:[%s1874 + $0xc9] sm:$0xff]
      %v2187 = vld [vmem:[%s1874 + $0xd9] sm:$0xff]
      %v2188 = vld [vmem:[%s1874 + $0xe1] sm:$0xff]
      %v2189 = vld [vmem:[%s1874 + $0xf1] sm:$0xff]
      %v2190 = vld [vmem:[%s1874 + $0xf9] sm:$0xff]
      %v2191 = vld [vmem:[%s1874 + $0x109] sm:$0xff]
      %v2192 = vld [vmem:[%s1874 + $0x111] sm:$0xff]
      %v2193 = vld [vmem:[%s1874 + $0x121] sm:$0xff]
      %v2194 = vld [vmem:[%s1874 + $0x129] sm:$0xff]
      %v2195 = vld [vmem:[%s1874 + $0x139] sm:$0xff]
      %v2196 = vld [vmem:[%s1874 + $0x141] sm:$0xff]
      %v2197 = vld [vmem:[%s1874 + $0x151] sm:$0xff]
      %v2198 = vld [vmem:[%s1874 + $0x159] sm:$0xff]
      %v2199 = vld [vmem:[%s1874 + $0x169] sm:$0xff]
      %v2200 = vld [vmem:[%s1874 + $0x171] sm:$0xff]
      %v2201 = vpack.c.bf16 %v2170, %v2169
      %v2202 = vpack.c.bf16 %v2172, %v2171
      %v2203 = vpack.c.bf16 %v2174, %v2173
      %v2204 = vpack.c.bf16 %v2176, %v2175
      %v2205 = vpack.c.bf16 %v2178, %v2177
      %v2206 = vpack.c.bf16 %v2180, %v2179
      %v2207 = vpack.c.bf16 %v2182, %v2181
      %v2208 = vpack.c.bf16 %v2184, %v2183
      %v2209 = vpack.c.bf16 %v2186, %v2185
      %v2210 = vpack.c.bf16 %v2188, %v2187
      %v2211 = vpack.c.bf16 %v2190, %v2189
      %v2212 = vpack.c.bf16 %v2192, %v2191
      %v2213 = vpack.c.bf16 %v2194, %v2193
      %v2214 = vpack.c.bf16 %v2196, %v2195
      %v2215 = vpack.c.bf16 %v2198, %v2197
      %v2216 = vpack.c.bf16 %v2200, %v2199
      %s2217 = scalar_lea.vmem %s1, 14
      %v2218 = vld [vmem:[%s2217] sm:$0x3]
      %v2220 = vsel %vm271, %v2201, 0
      %v2223 = vsel %vm271, %v2202, 0
      %v2226 = vsel %vm271, %v2203, 0
      %v2229 = vsel %vm271, %v2204, 0
      %v2232 = vsel %vm271, %v2205, 0
      %v2235 = vsel %vm271, %v2206, 0
      %v2238 = vsel %vm271, %v2207, 0
      %v2241 = vsel %vm271, %v2208, 0
      %v2244 = vsel %vm271, %v2209, 0
      %v2247 = vsel %vm271, %v2210, 0
      %v2250 = vsel %vm271, %v2211, 0
      %v2253 = vsel %vm271, %v2212, 0
      %v2256 = vsel %vm271, %v2213, 0
      %v2259 = vsel %vm271, %v2214, 0
      %v2262 = vsel %vm271, %v2215, 0
      %v2265 = vsel %vm271, %v2216, 0
      %v2268 = vsel %vm320, %v2218, 0
      %2270 = vmatprep.subr.bf16.mxu0 0
      %2271 = vmatpush1.bf16.msra.mxu0 %v2268
      %2272 = vmatprep.subr.bf16.mxu0 0
      %2273 = vmatpush1.bf16.msra.mxu0 0
      %2274 = vmatprep.subr.bf16.mxu0 0
      %2275 = vmatpush1.bf16.msra.mxu0 0
      %2276 = vmatprep.subr.bf16.mxu0 0
      %2277 = vmatpush1.bf16.msra.mxu0 0
      %2278 = vmatprep.subr.bf16.mxu0 0
      %2279 = vmatpush1.bf16.msra.mxu0 0
      %2280 = vmatprep.subr.bf16.mxu0 0
      %2281 = vmatpush1.bf16.msra.mxu0 0
      %2282 = vmatprep.subr.bf16.mxu0 0
      %2283 = vmatpush1.bf16.msra.mxu0 0
      %2284 = vmatprep.subr.bf16.mxu0 0
      %2285 = vmatpush1.bf16.msra.mxu0 0
      %2286 = vmatprep.subr.bf16.mxu0 0
      %2287 = vmatpush1.bf16.msra.mxu0 0
      %2288 = vmatprep.subr.bf16.mxu0 0
      %2289 = vmatpush1.bf16.msra.mxu0 0
      %2290 = vmatprep.subr.bf16.mxu0 0
      %2291 = vmatpush1.bf16.msra.mxu0 0
      %2292 = vmatprep.subr.bf16.mxu0 0
      %2293 = vmatpush1.bf16.msra.mxu0 0
      %2294 = vmatprep.subr.bf16.mxu0 0
      %2295 = vmatpush1.bf16.msra.mxu0 0
      %2296 = vmatprep.subr.bf16.mxu0 0
      %2297 = vmatpush1.bf16.msra.mxu0 0
      %2298 = vmatprep.subr.bf16.mxu0 0
      %2299 = vmatpush1.bf16.msra.mxu0 0
      %2300 = vmatprep.subr.bf16.mxu0 0
      %2301 = vmatpush1.bf16.msra.mxu0 0
      %2302 = vmatprep.mubr.bf16.mxu0 0
      %2303 = vmatmul.mubr.bf16.gmra.mrb[0].mxu0 %v2220
      %v2304 = vpop.f32.mrb[0].mxu0
      %v2305 = vadd.f32 0.0, %v2304
      %v2306 = vpop.f32.mrb[0].mxu0
      %v2307 = vpop.f32.mrb[0].mxu0
      %v2308 = vadd.f32 0.0, %v2307
      %v2309 = vpop.f32.mrb[0].mxu0
      %2310 = vmatprep.mubr.bf16.mxu0 0
      %2311 = vmatmul.mubr.bf16.gmra.mrb[0].mxu0 %v2223
      %v2312 = vpop.f32.mrb[0].mxu0
      %v2313 = vadd.f32 0.0, %v2312
      %v2314 = vpop.f32.mrb[0].mxu0
      %v2315 = vpop.f32.mrb[0].mxu0
      %v2316 = vadd.f32 0.0, %v2315
      %v2317 = vpop.f32.mrb[0].mxu0
      %2318 = vmatprep.mubr.bf16.mxu0 0
      %2319 = vmatmul.mubr.bf16.gmra.mrb[0].mxu0 %v2226
      %v2320 = vpop.f32.mrb[0].mxu0
      %v2321 = vadd.f32 0.0, %v2320
      %v2322 = vpop.f32.mrb[0].mxu0
      %v2323 = vpop.f32.mrb[0].mxu0
      %v2324 = vadd.f32 0.0, %v2323
      %v2325 = vpop.f32.mrb[0].mxu0
      %2326 = vmatprep.mubr.bf16.mxu0 0
      %2327 = vmatmul.mubr.bf16.gmra.mrb[0].mxu0 %v2229
      %v2328 = vpop.f32.mrb[0].mxu0
      %v2329 = vadd.f32 0.0, %v2328
      %v2330 = vpop.f32.mrb[0].mxu0
      %v2331 = vpop.f32.mrb[0].mxu0
      %v2332 = vadd.f32 0.0, %v2331
      %v2333 = vpop.f32.mrb[0].mxu0
      %2334 = vmatprep.mubr.bf16.mxu0 0
      %2335 = vmatmul.mubr.bf16.gmra.mrb[0].mxu0 %v2232
      %v2336 = vpop.f32.mrb[0].mxu0
      %v2337 = vadd.f32 0.0, %v2336
      %v2338 = vpop.f32.mrb[0].mxu0
      %v2339 = vpop.f32.mrb[0].mxu0
      %v2340 = vadd.f32 0.0, %v2339
      %v2341 = vpop.f32.mrb[0].mxu0
      %2342 = vmatprep.mubr.bf16.mxu0 0
      %2343 = vmatmul.mubr.bf16.gmra.mrb[0].mxu0 %v2235
      %v2344 = vpop.f32.mrb[0].mxu0
      %v2345 = vadd.f32 0.0, %v2344
      %v2346 = vpop.f32.mrb[0].mxu0
      %v2347 = vpop.f32.mrb[0].mxu0
      %v2348 = vadd.f32 0.0, %v2347
      %v2349 = vpop.f32.mrb[0].mxu0
      %2350 = vmatprep.mubr.bf16.mxu0 0
      %2351 = vmatmul.mubr.bf16.gmra.mrb[0].mxu0 %v2238
      %v2352 = vpop.f32.mrb[0].mxu0
      %v2353 = vadd.f32 0.0, %v2352
      %v2354 = vpop.f32.mrb[0].mxu0
      %v2355 = vpop.f32.mrb[0].mxu0
      %v2356 = vadd.f32 0.0, %v2355
      %v2357 = vpop.f32.mrb[0].mxu0
      %2358 = vmatprep.mubr.bf16.mxu0 0
      %2359 = vmatmul.mubr.bf16.gmra.mrb[0].mxu0 %v2241
      %v2360 = vpop.f32.mrb[0].mxu0
      %v2361 = vadd.f32 0.0, %v2360
      %v2362 = vpop.f32.mrb[0].mxu0
      %v2363 = vpop.f32.mrb[0].mxu0
      %v2364 = vadd.f32 0.0, %v2363
      %v2365 = vpop.f32.mrb[0].mxu0
      %2366 = vmatprep.mubr.bf16.mxu0 0
      %2367 = vmatmul.mubr.bf16.gmra.mrb[0].mxu0 %v2244
      %v2368 = vpop.f32.mrb[0].mxu0
      %v2369 = vadd.f32 0.0, %v2368
      %v2370 = vpop.f32.mrb[0].mxu0
      %v2371 = vpop.f32.mrb[0].mxu0
      %v2372 = vadd.f32 0.0, %v2371
      %v2373 = vpop.f32.mrb[0].mxu0
      %2374 = vmatprep.mubr.bf16.mxu0 0
      %2375 = vmatmul.mubr.bf16.gmra.mrb[0].mxu0 %v2247
      %v2376 = vpop.f32.mrb[0].mxu0
      %v2377 = vadd.f32 0.0, %v2376
      %v2378 = vpop.f32.mrb[0].mxu0
      %v2379 = vpop.f32.mrb[0].mxu0
      %v2380 = vadd.f32 0.0, %v2379
      %v2381 = vpop.f32.mrb[0].mxu0
      %2382 = vmatprep.mubr.bf16.mxu0 0
      %2383 = vmatmul.mubr.bf16.gmra.mrb[0].mxu0 %v2250
      %v2384 = vpop.f32.mrb[0].mxu0
      %v2385 = vadd.f32 0.0, %v2384
      %v2386 = vpop.f32.mrb[0].mxu0
      %v2387 = vpop.f32.mrb[0].mxu0
      %v2388 = vadd.f32 0.0, %v2387
      %v2389 = vpop.f32.mrb[0].mxu0
      %2390 = vmatprep.mubr.bf16.mxu0 0
      %2391 = vmatmul.mubr.bf16.gmra.mrb[0].mxu0 %v2253
      %v2392 = vpop.f32.mrb[0].mxu0
      %v2393 = vadd.f32 0.0, %v2392
      %v2394 = vpop.f32.mrb[0].mxu0
      %v2395 = vpop.f32.mrb[0].mxu0
      %v2396 = vadd.f32 0.0, %v2395
      %v2397 = vpop.f32.mrb[0].mxu0
      %2398 = vmatprep.mubr.bf16.mxu0 0
      %2399 = vmatmul.mubr.bf16.gmra.mrb[0].mxu0 %v2256
      %v2400 = vpop.f32.mrb[0].mxu0
      %v2401 = vadd.f32 0.0, %v2400
      %v2402 = vpop.f32.mrb[0].mxu0
      %v2403 = vpop.f32.mrb[0].mxu0
      %v2404 = vadd.f32 0.0, %v2403
      %v2405 = vpop.f32.mrb[0].mxu0
      %2406 = vmatprep.mubr.bf16.mxu0 0
      %2407 = vmatmul.mubr.bf16.gmra.mrb[0].mxu0 %v2259
      %v2408 = vpop.f32.mrb[0].mxu0
      %v2409 = vadd.f32 0.0, %v2408
      %v2410 = vpop.f32.mrb[0].mxu0
      %v2411 = vpop.f32.mrb[0].mxu0
      %v2412 = vadd.f32 0.0, %v2411
      %v2413 = vpop.f32.mrb[0].mxu0
      %2414 = vmatprep.mubr.bf16.mxu0 0
      %2415 = vmatmul.mubr.bf16.gmra.mrb[0].mxu0 %v2262
      %v2416 = vpop.f32.mrb[0].mxu0
      %v2417 = vadd.f32 0.0, %v2416
      %v2418 = vpop.f32.mrb[0].mxu0
      %v2419 = vpop.f32.mrb[0].mxu0
      %v2420 = vadd.f32 0.0, %v2419
      %v2421 = vpop.f32.mrb[0].mxu0
      %2422 = vmatprep.mubr.bf16.mxu0 0
      %2423 = vmatmul.mubr.bf16.gmra.mrb[0].mxu0 %v2265
      %v2424 = vpop.f32.mrb[0].mxu0
      %v2425 = vadd.f32 0.0, %v2424
      %v2426 = vpop.f32.mrb[0].mxu0
      %v2427 = vpop.f32.mrb[0].mxu0
      %v2428 = vadd.f32 0.0, %v2427
      %v2429 = vpop.f32.mrb[0].mxu0
      %2430 = vdwg.mxu0
      %v2431 = vadd.f32 %v2137, %v2305
      %v2432 = vadd.f32 %v2138, %v2308
      %v2433 = vadd.f32 %v2139, %v2313
      %v2434 = vadd.f32 %v2140, %v2316
      %v2435 = vadd.f32 %v2141, %v2321
      %v2436 = vadd.f32 %v2142, %v2324
      %v2437 = vadd.f32 %v2143, %v2329
      %v2438 = vadd.f32 %v2144, %v2332
      %v2439 = vadd.f32 %v2145, %v2337
      %v2440 = vadd.f32 %v2146, %v2340
      %v2441 = vadd.f32 %v2147, %v2345
      %v2442 = vadd.f32 %v2148, %v2348
      %v2443 = vadd.f32 %v2149, %v2353
      %v2444 = vadd.f32 %v2150, %v2356
      %v2445 = vadd.f32 %v2151, %v2361
      %v2446 = vadd.f32 %v2152, %v2364
      %v2447 = vadd.f32 %v2153, %v2369
      %v2448 = vadd.f32 %v2154, %v2372
      %v2449 = vadd.f32 %v2155, %v2377
      %v2450 = vadd.f32 %v2156, %v2380
      %v2451 = vadd.f32 %v2157, %v2385
      %v2452 = vadd.f32 %v2158, %v2388
      %v2453 = vadd.f32 %v2159, %v2393
      %v2454 = vadd.f32 %v2160, %v2396
      %v2455 = vadd.f32 %v2161, %v2401
      %v2456 = vadd.f32 %v2162, %v2404
      %v2457 = vadd.f32 %v2163, %v2409
      %v2458 = vadd.f32 %v2164, %v2412
      %v2459 = vadd.f32 %v2165, %v2417
      %v2460 = vadd.f32 %v2166, %v2420
      %v2461 = vadd.f32 %v2167, %v2425
      %v2462 = vadd.f32 %v2168, %v2428
      %v2463 = vld [vmem:[%s1874 + $0x2] sm:$0xff]
      %v2464 = vld [vmem:[%s1874 + $0xa] sm:$0xff]
      %v2465 = vld [vmem:[%s1874 + $0x1a] sm:$0xff]
      %v2466 = vld [vmem:[%s1874 + $0x22] sm:$0xff]
      %v2467 = vld [vmem:[%s1874 + $0x32] sm:$0xff]
      %v2468 = vld [vmem:[%s1874 + $0x3a] sm:$0xff]
      %v2469 = vld [vmem:[%s1874 + $0x4a] sm:$0xff]
      %v2470 = vld [vmem:[%s1874 + $0x52] sm:$0xff]
      %v2471 = vld [vmem:[%s1874 + $0x62] sm:$0xff]
      %v2472 = vld [vmem:[%s1874 + $0x6a] sm:$0xff]
      %v2473 = vld [vmem:[%s1874 + $0x7a] sm:$0xff]
      %v2474 = vld [vmem:[%s1874 + $0x82] sm:$0xff]
      %v2475 = vld [vmem:[%s1874 + $0x92] sm:$0xff]
      %v2476 = vld [vmem:[%s1874 + $0x9a] sm:$0xff]
      %v2477 = vld [vmem:[%s1874 + $0xaa] sm:$0xff]
      %v2478 = vld [vmem:[%s1874 + $0xb2] sm:$0xff]
      %v2479 = vld [vmem:[%s1874 + $0xc2] sm:$0xff]
      %v2480 = vld [vmem:[%s1874 + $0xca] sm:$0xff]
      %v2481 = vld [vmem:[%s1874 + $0xda] sm:$0xff]
      %v2482 = vld [vmem:[%s1874 + $0xe2] sm:$0xff]
      %v2483 = vld [vmem:[%s1874 + $0xf2] sm:$0xff]
      %v2484 = vld [vmem:[%s1874 + $0xfa] sm:$0xff]
      %v2485 = vld [vmem:[%s1874 + $0x10a] sm:$0xff]
      %v2486 = vld [vmem:[%s1874 + $0x112] sm:$0xff]
      %v2487 = vld [vmem:[%s1874 + $0x122] sm:$0xff]
      %v2488 = vld [vmem:[%s1874 + $0x12a] sm:$0xff]
      %v2489 = vld [vmem:[%s1874 + $0x13a] sm:$0xff]
      %v2490 = vld [vmem:[%s1874 + $0x142] sm:$0xff]
      %v2491 = vld [vmem:[%s1874 + $0x152] sm:$0xff]
      %v2492 = vld [vmem:[%s1874 + $0x15a] sm:$0xff]
      %v2493 = vld [vmem:[%s1874 + $0x16a] sm:$0xff]
      %v2494 = vld [vmem:[%s1874 + $0x172] sm:$0xff]
      %v2495 = vpack.c.bf16 %v2464, %v2463
      %v2496 = vpack.c.bf16 %v2466, %v2465
      %v2497 = vpack.c.bf16 %v2468, %v2467
      %v2498 = vpack.c.bf16 %v2470, %v2469
      %v2499 = vpack.c.bf16 %v2472, %v2471
      %v2500 = vpack.c.bf16 %v2474, %v2473
      %v2501 = vpack.c.bf16 %v2476, %v2475
      %v2502 = vpack.c.bf16 %v2478, %v2477
      %v2503 = vpack.c.bf16 %v2480, %v2479
      %v2504 = vpack.c.bf16 %v2482, %v2481
      %v2505 = vpack.c.bf16 %v2484, %v2483
      %v2506 = vpack.c.bf16 %v2486, %v2485
      %v2507 = vpack.c.bf16 %v2488, %v2487
      %v2508 = vpack.c.bf16 %v2490, %v2489
      %v2509 = vpack.c.bf16 %v2492, %v2491
      %v2510 = vpack.c.bf16 %v2494, %v2493
      %s2511 = scalar_lea.vmem %s1, 16
      %v2512 = vld [vmem:[%s2511] sm:$0x3]
      %v2514 = vsel %vm271, %v2495, 0
      %v2517 = vsel %vm271, %v2496, 0
      %v2520 = vsel %vm271, %v2497, 0
      %v2523 = vsel %vm271, %v2498, 0
      %v2526 = vsel %vm271, %v2499, 0
      %v2529 = vsel %vm271, %v2500, 0
      %v2532 = vsel %vm271, %v2501, 0
      %v2535 = vsel %vm271, %v2502, 0
      %v2538 = vsel %vm271, %v2503, 0
      %v2541 = vsel %vm271, %v2504, 0
      %v2544 = vsel %vm271, %v2505, 0
      %v2547 = vsel %vm271, %v2506, 0
      %v2550 = vsel %vm271, %v2507, 0
      %v2553 = vsel %vm271, %v2508, 0
      %v2556 = vsel %vm271, %v2509, 0
      %v2559 = vsel %vm271, %v2510, 0
      %v2562 = vsel %vm320, %v2512, 0
      %2564 = vmatprep.subr.bf16.mxu0 0
      %2565 = vmatpush1.bf16.msra.mxu0 %v2562
      %2566 = vmatprep.subr.bf16.mxu0 0
      %2567 = vmatpush1.bf16.msra.mxu0 0
      %2568 = vmatprep.subr.bf16.mxu0 0
      %2569 = vmatpush1.bf16.msra.mxu0 0
      %2570 = vmatprep.subr.bf16.mxu0 0
      %2571 = vmatpush1.bf16.msra.mxu0 0
      %2572 = vmatprep.subr.bf16.mxu0 0
      %2573 = vmatpush1.bf16.msra.mxu0 0
      %2574 = vmatprep.subr.bf16.mxu0 0
      %2575 = vmatpush1.bf16.msra.mxu0 0
      %2576 = vmatprep.subr.bf16.mxu0 0
      %2577 = vmatpush1.bf16.msra.mxu0 0
      %2578 = vmatprep.subr.bf16.mxu0 0
      %2579 = vmatpush1.bf16.msra.mxu0 0
      %2580 = vmatprep.subr.bf16.mxu0 0
      %2581 = vmatpush1.bf16.msra.mxu0 0
      %2582 = vmatprep.subr.bf16.mxu0 0
      %2583 = vmatpush1.bf16.msra.mxu0 0
      %2584 = vmatprep.subr.bf16.mxu0 0
      %2585 = vmatpush1.bf16.msra.mxu0 0
      %2586 = vmatprep.subr.bf16.mxu0 0
      %2587 = vmatpush1.bf16.msra.mxu0 0
      %2588 = vmatprep.subr.bf16.mxu0 0
      %2589 = vmatpush1.bf16.msra.mxu0 0
      %2590 = vmatprep.subr.bf16.mxu0 0
      %2591 = vmatpush1.bf16.msra.mxu0 0
      %2592 = vmatprep.subr.bf16.mxu0 0
      %2593 = vmatpush1.bf16.msra.mxu0 0
      %2594 = vmatprep.subr.bf16.mxu0 0
      %2595 = vmatpush1.bf16.msra.mxu0 0
      %2596 = vmatprep.mubr.bf16.mxu0 0
      %2597 = vmatmul.mubr.bf16.gmra.mrb[0].mxu0 %v2514
      %v2598 = vpop.f32.mrb[0].mxu0
      %v2599 = vadd.f32 0.0, %v2598
      %v2600 = vpop.f32.mrb[0].mxu0
      %v2601 = vpop.f32.mrb[0].mxu0
      %v2602 = vadd.f32 0.0, %v2601
      %v2603 = vpop.f32.mrb[0].mxu0
      %2604 = vmatprep.mubr.bf16.mxu0 0
      %2605 = vmatmul.mubr.bf16.gmra.mrb[0].mxu0 %v2517
      %v2606 = vpop.f32.mrb[0].mxu0
      %v2607 = vadd.f32 0.0, %v2606
      %v2608 = vpop.f32.mrb[0].mxu0
      %v2609 = vpop.f32.mrb[0].mxu0
      %v2610 = vadd.f32 0.0, %v2609
      %v2611 = vpop.f32.mrb[0].mxu0
      %2612 = vmatprep.mubr.bf16.mxu0 0
      %2613 = vmatmul.mubr.bf16.gmra.mrb[0].mxu0 %v2520
      %v2614 = vpop.f32.mrb[0].mxu0
      %v2615 = vadd.f32 0.0, %v2614
      %v2616 = vpop.f32.mrb[0].mxu0
      %v2617 = vpop.f32.mrb[0].mxu0
      %v2618 = vadd.f32 0.0, %v2617
      %v2619 = vpop.f32.mrb[0].mxu0
      %2620 = vmatprep.mubr.bf16.mxu0 0
      %2621 = vmatmul.mubr.bf16.gmra.mrb[0].mxu0 %v2523
      %v2622 = vpop.f32.mrb[0].mxu0
      %v2623 = vadd.f32 0.0, %v2622
      %v2624 = vpop.f32.mrb[0].mxu0
      %v2625 = vpop.f32.mrb[0].mxu0
      %v2626 = vadd.f32 0.0, %v2625
      %v2627 = vpop.f32.mrb[0].mxu0
      %2628 = vmatprep.mubr.bf16.mxu0 0
      %2629 = vmatmul.mubr.bf16.gmra.mrb[0].mxu0 %v2526
      %v2630 = vpop.f32.mrb[0].mxu0
      %v2631 = vadd.f32 0.0, %v2630
      %v2632 = vpop.f32.mrb[0].mxu0
      %v2633 = vpop.f32.mrb[0].mxu0
      %v2634 = vadd.f32 0.0, %v2633
      %v2635 = vpop.f32.mrb[0].mxu0
      %2636 = vmatprep.mubr.bf16.mxu0 0
      %2637 = vmatmul.mubr.bf16.gmra.mrb[0].mxu0 %v2529
      %v2638 = vpop.f32.mrb[0].mxu0
      %v2639 = vadd.f32 0.0, %v2638
      %v2640 = vpop.f32.mrb[0].mxu0
      %v2641 = vpop.f32.mrb[0].mxu0
      %v2642 = vadd.f32 0.0, %v2641
      %v2643 = vpop.f32.mrb[0].mxu0
      %2644 = vmatprep.mubr.bf16.mxu0 0
      %2645 = vmatmul.mubr.bf16.gmra.mrb[0].mxu0 %v2532
      %v2646 = vpop.f32.mrb[0].mxu0
      %v2647 = vadd.f32 0.0, %v2646
      %v2648 = vpop.f32.mrb[0].mxu0
      %v2649 = vpop.f32.mrb[0].mxu0
      %v2650 = vadd.f32 0.0, %v2649
      %v2651 = vpop.f32.mrb[0].mxu0
      %2652 = vmatprep.mubr.bf16.mxu0 0
      %2653 = vmatmul.mubr.bf16.gmra.mrb[0].mxu0 %v2535
      %v2654 = vpop.f32.mrb[0].mxu0
      %v2655 = vadd.f32 0.0, %v2654
      %v2656 = vpop.f32.mrb[0].mxu0
      %v2657 = vpop.f32.mrb[0].mxu0
      %v2658 = vadd.f32 0.0, %v2657
      %v2659 = vpop.f32.mrb[0].mxu0
      %2660 = vmatprep.mubr.bf16.mxu0 0
      %2661 = vmatmul.mubr.bf16.gmra.mrb[0].mxu0 %v2538
      %v2662 = vpop.f32.mrb[0].mxu0
      %v2663 = vadd.f32 0.0, %v2662
      %v2664 = vpop.f32.mrb[0].mxu0
      %v2665 = vpop.f32.mrb[0].mxu0
      %v2666 = vadd.f32 0.0, %v2665
      %v2667 = vpop.f32.mrb[0].mxu0
      %2668 = vmatprep.mubr.bf16.mxu0 0
      %2669 = vmatmul.mubr.bf16.gmra.mrb[0].mxu0 %v2541
      %v2670 = vpop.f32.mrb[0].mxu0
      %v2671 = vadd.f32 0.0, %v2670
      %v2672 = vpop.f32.mrb[0].mxu0
      %v2673 = vpop.f32.mrb[0].mxu0
      %v2674 = vadd.f32 0.0, %v2673
      %v2675 = vpop.f32.mrb[0].mxu0
      %2676 = vmatprep.mubr.bf16.mxu0 0
      %2677 = vmatmul.mubr.bf16.gmra.mrb[0].mxu0 %v2544
      %v2678 = vpop.f32.mrb[0].mxu0
      %v2679 = vadd.f32 0.0, %v2678
      %v2680 = vpop.f32.mrb[0].mxu0
      %v2681 = vpop.f32.mrb[0].mxu0
      %v2682 = vadd.f32 0.0, %v2681
      %v2683 = vpop.f32.mrb[0].mxu0
      %2684 = vmatprep.mubr.bf16.mxu0 0
      %2685 = vmatmul.mubr.bf16.gmra.mrb[0].mxu0 %v2547
      %v2686 = vpop.f32.mrb[0].mxu0
      %v2687 = vadd.f32 0.0, %v2686
      %v2688 = vpop.f32.mrb[0].mxu0
      %v2689 = vpop.f32.mrb[0].mxu0
      %v2690 = vadd.f32 0.0, %v2689
      %v2691 = vpop.f32.mrb[0].mxu0
      %2692 = vmatprep.mubr.bf16.mxu0 0
      %2693 = vmatmul.mubr.bf16.gmra.mrb[0].mxu0 %v2550
      %v2694 = vpop.f32.mrb[0].mxu0
      %v2695 = vadd.f32 0.0, %v2694
      %v2696 = vpop.f32.mrb[0].mxu0
      %v2697 = vpop.f32.mrb[0].mxu0
      %v2698 = vadd.f32 0.0, %v2697
      %v2699 = vpop.f32.mrb[0].mxu0
      %2700 = vmatprep.mubr.bf16.mxu0 0
      %2701 = vmatmul.mubr.bf16.gmra.mrb[0].mxu0 %v2553
      %v2702 = vpop.f32.mrb[0].mxu0
      %v2703 = vadd.f32 0.0, %v2702
      %v2704 = vpop.f32.mrb[0].mxu0
      %v2705 = vpop.f32.mrb[0].mxu0
      %v2706 = vadd.f32 0.0, %v2705
      %v2707 = vpop.f32.mrb[0].mxu0
      %2708 = vmatprep.mubr.bf16.mxu0 0
      %2709 = vmatmul.mubr.bf16.gmra.mrb[0].mxu0 %v2556
      %v2710 = vpop.f32.mrb[0].mxu0
      %v2711 = vadd.f32 0.0, %v2710
      %v2712 = vpop.f32.mrb[0].mxu0
      %v2713 = vpop.f32.mrb[0].mxu0
      %v2714 = vadd.f32 0.0, %v2713
      %v2715 = vpop.f32.mrb[0].mxu0
      %2716 = vmatprep.mubr.bf16.mxu0 0
      %2717 = vmatmul.mubr.bf16.gmra.mrb[0].mxu0 %v2559
      %v2718 = vpop.f32.mrb[0].mxu0
      %v2719 = vadd.f32 0.0, %v2718
      %v2720 = vpop.f32.mrb[0].mxu0
      %v2721 = vpop.f32.mrb[0].mxu0
      %v2722 = vadd.f32 0.0, %v2721
      %v2723 = vpop.f32.mrb[0].mxu0
      %2724 = vdwg.mxu0
      %v2725 = vadd.f32 %v2431, %v2599
      %v2726 = vadd.f32 %v2432, %v2602
      %v2727 = vadd.f32 %v2433, %v2607
      %v2728 = vadd.f32 %v2434, %v2610
      %v2729 = vadd.f32 %v2435, %v2615
      %v2730 = vadd.f32 %v2436, %v2618
      %v2731 = vadd.f32 %v2437, %v2623
      %v2732 = vadd.f32 %v2438, %v2626
      %v2733 = vadd.f32 %v2439, %v2631
      %v2734 = vadd.f32 %v2440, %v2634
      %v2735 = vadd.f32 %v2441, %v2639
      %v2736 = vadd.f32 %v2442, %v2642
      %v2737 = vadd.f32 %v2443, %v2647
      %v2738 = vadd.f32 %v2444, %v2650
      %v2739 = vadd.f32 %v2445, %v2655
      %v2740 = vadd.f32 %v2446, %v2658
      %v2741 = vadd.f32 %v2447, %v2663
      %v2742 = vadd.f32 %v2448, %v2666
      %v2743 = vadd.f32 %v2449, %v2671
      %v2744 = vadd.f32 %v2450, %v2674
      %v2745 = vadd.f32 %v2451, %v2679
      %v2746 = vadd.f32 %v2452, %v2682
      %v2747 = vadd.f32 %v2453, %v2687
      %v2748 = vadd.f32 %v2454, %v2690
      %v2749 = vadd.f32 %v2455, %v2695
      %v2750 = vadd.f32 %v2456, %v2698
      %v2751 = vadd.f32 %v2457, %v2703
      %v2752 = vadd.f32 %v2458, %v2706
      %v2753 = vadd.f32 %v2459, %v2711
      %v2754 = vadd.f32 %v2460, %v2714
      %v2755 = vadd.f32 %v2461, %v2719
      %v2756 = vadd.f32 %v2462, %v2722
      %v2757 = vld [vmem:[%s2] sm:$0x1]
      %v2759 = vlaneseq
      %v2760 = vshrl.u32 %v2759, 7
      %v2761 = vsub.s32 0, %v2760
      %v2762 = vrot.slane %v2757, %v2761
      %v2764 = vadd.f32 %v2725, %v2762
      %v2765 = vadd.f32 %v2726, %v2762
      %v2766 = vadd.f32 %v2727, %v2762
      %v2767 = vadd.f32 %v2728, %v2762
      %v2768 = vadd.f32 %v2729, %v2762
      %v2769 = vadd.f32 %v2730, %v2762
      %v2770 = vadd.f32 %v2731, %v2762
      %v2771 = vadd.f32 %v2732, %v2762
      %v2772 = vadd.f32 %v2733, %v2762
      %v2773 = vadd.f32 %v2734, %v2762
      %v2774 = vadd.f32 %v2735, %v2762
      %v2775 = vadd.f32 %v2736, %v2762
      %v2776 = vadd.f32 %v2737, %v2762
      %v2777 = vadd.f32 %v2738, %v2762
      %v2778 = vadd.f32 %v2739, %v2762
      %v2779 = vadd.f32 %v2740, %v2762
      %v2780 = vadd.f32 %v2741, %v2762
      %v2781 = vadd.f32 %v2742, %v2762
      %v2782 = vadd.f32 %v2743, %v2762
      %v2783 = vadd.f32 %v2744, %v2762
      %v2784 = vadd.f32 %v2745, %v2762
      %v2785 = vadd.f32 %v2746, %v2762
      %v2786 = vadd.f32 %v2747, %v2762
      %v2787 = vadd.f32 %v2748, %v2762
      %v2788 = vadd.f32 %v2749, %v2762
      %v2789 = vadd.f32 %v2750, %v2762
      %v2790 = vadd.f32 %v2751, %v2762
      %v2791 = vadd.f32 %v2752, %v2762
      %v2792 = vadd.f32 %v2753, %v2762
      %v2793 = vadd.f32 %v2754, %v2762
      %v2794 = vadd.f32 %v2755, %v2762
      %v2795 = vadd.f32 %v2756, %v2762
      %v2796 = vmax.f32 %v2764, 0.0
      %v2797 = vmax.f32 %v2765, 0.0
      %v2798 = vmax.f32 %v2766, 0.0
      %v2799 = vmax.f32 %v2767, 0.0
      %v2800 = vmax.f32 %v2768, 0.0
      %v2801 = vmax.f32 %v2769, 0.0
      %v2802 = vmax.f32 %v2770, 0.0
      %v2803 = vmax.f32 %v2771, 0.0
      %v2804 = vmax.f32 %v2772, 0.0
      %v2805 = vmax.f32 %v2773, 0.0
      %v2806 = vmax.f32 %v2774, 0.0
      %v2807 = vmax.f32 %v2775, 0.0
      %v2808 = vmax.f32 %v2776, 0.0
      %v2809 = vmax.f32 %v2777, 0.0
      %v2810 = vmax.f32 %v2778, 0.0
      %v2811 = vmax.f32 %v2779, 0.0
      %v2812 = vmax.f32 %v2780, 0.0
      %v2813 = vmax.f32 %v2781, 0.0
      %v2814 = vmax.f32 %v2782, 0.0
      %v2815 = vmax.f32 %v2783, 0.0
      %v2816 = vmax.f32 %v2784, 0.0
      %v2817 = vmax.f32 %v2785, 0.0
      %v2818 = vmax.f32 %v2786, 0.0
      %v2819 = vmax.f32 %v2787, 0.0
      %v2820 = vmax.f32 %v2788, 0.0
      %v2821 = vmax.f32 %v2789, 0.0
      %v2822 = vmax.f32 %v2790, 0.0
      %v2823 = vmax.f32 %v2791, 0.0
      %v2824 = vmax.f32 %v2792, 0.0
      %v2825 = vmax.f32 %v2793, 0.0
      %v2826 = vmax.f32 %v2794, 0.0
      %v2827 = vmax.f32 %v2795, 0.0
      %vm2828 = vcmask 130048
      %2829 = vst.msk [vmem:[%s170] sm:$0xff] %vm2828, %v2796
      %2830 = vst.msk [vmem:[%s170 + $0x8] sm:$0xff] %vm2828, %v2797
      %2831 = vst.msk [vmem:[%s170 + $0x10] sm:$0xff] %vm2828, %v2798
      %2832 = vst.msk [vmem:[%s170 + $0x18] sm:$0xff] %vm2828, %v2799
      %2833 = vst.msk [vmem:[%s170 + $0x20] sm:$0xff] %vm2828, %v2800
      %2834 = vst.msk [vmem:[%s170 + $0x28] sm:$0xff] %vm2828, %v2801
      %2835 = vst.msk [vmem:[%s170 + $0x30] sm:$0xff] %vm2828, %v2802
      %2836 = vst.msk [vmem:[%s170 + $0x38] sm:$0xff] %vm2828, %v2803
      %2837 = vst.msk [vmem:[%s170 + $0x40] sm:$0xff] %vm2828, %v2804
      %2838 = vst.msk [vmem:[%s170 + $0x48] sm:$0xff] %vm2828, %v2805
      %2839 = vst.msk [vmem:[%s170 + $0x50] sm:$0xff] %vm2828, %v2806
      %2840 = vst.msk [vmem:[%s170 + $0x58] sm:$0xff] %vm2828, %v2807
      %2841 = vst.msk [vmem:[%s170 + $0x60] sm:$0xff] %vm2828, %v2808
      %2842 = vst.msk [vmem:[%s170 + $0x68] sm:$0xff] %vm2828, %v2809
      %2843 = vst.msk [vmem:[%s170 + $0x70] sm:$0xff] %vm2828, %v2810
      %2844 = vst.msk [vmem:[%s170 + $0x78] sm:$0xff] %vm2828, %v2811
      %2845 = vst.msk [vmem:[%s170 + $0x80] sm:$0xff] %vm2828, %v2812
      %2846 = vst.msk [vmem:[%s170 + $0x88] sm:$0xff] %vm2828, %v2813
      %2847 = vst.msk [vmem:[%s170 + $0x90] sm:$0xff] %vm2828, %v2814
      %2848 = vst.msk [vmem:[%s170 + $0x98] sm:$0xff] %vm2828, %v2815
      %2849 = vst.msk [vmem:[%s170 + $0xa0] sm:$0xff] %vm2828, %v2816
      %2850 = vst.msk [vmem:[%s170 + $0xa8] sm:$0xff] %vm2828, %v2817
      %2851 = vst.msk [vmem:[%s170 + $0xb0] sm:$0xff] %vm2828, %v2818
      %2852 = vst.msk [vmem:[%s170 + $0xb8] sm:$0xff] %vm2828, %v2819
      %2853 = vst.msk [vmem:[%s170 + $0xc0] sm:$0xff] %vm2828, %v2820
      %2854 = vst.msk [vmem:[%s170 + $0xc8] sm:$0xff] %vm2828, %v2821
      %2855 = vst.msk [vmem:[%s170 + $0xd0] sm:$0xff] %vm2828, %v2822
      %2856 = vst.msk [vmem:[%s170 + $0xd8] sm:$0xff] %vm2828, %v2823
      %2857 = vst.msk [vmem:[%s170 + $0xe0] sm:$0xff] %vm2828, %v2824
      %2858 = vst.msk [vmem:[%s170 + $0xe8] sm:$0xff] %vm2828, %v2825
      %2859 = vst.msk [vmem:[%s170 + $0xf0] sm:$0xff] %vm2828, %v2826
      %2860 = vst.msk [vmem:[%s170 + $0xf8] sm:$0xff] %vm2828, %v2827
      %p2861 = scmp.lt.s32.totalorder %s14, 1
      %s2862 = scalar_select %p2861, %s14, 1
      %s2863 = smul.addr %s2862, 32
      %s2864 = smul.addr %s2863, 8
      %s2865 = scalar_lea.vmem %s3, %s2864
      // Predicated region
      $region33: #{tps_forward.6} parent=31 // pred_check
        %p2866 = pneg %p100
      $region34: #{tps_forward.6} parent=31 // pred_check_branch
        %2868 = sbr.rel (%p2866) target = $region36
      $region35: #{tps_forward.6} parent=31 // pred_region
        _
      $region36: #{tps_forward.6} parent=31 // pred_fallthru
        _
    $region32: #{tps_forward.6} parent=5 // pred_fallthru
      _
    %p2869 = scmp.le.s32.totalorder 2, %s9
    // Predicated region
    $region37: #{tps_forward.6} parent=5 // pred_check
      %p2870 = pneg %p2869
    $region38: #{tps_forward.6} parent=5 // pred_check_branch
      %2872 = sbr.rel (%p2870) target = $region40
    $region39: #{tps_forward.6} parent=5 // pred_region
      %s2873 = ssub.s32 %s9, 2
      // Predicated region
      $region41: #{tps_forward.6} parent=39 // pred_check
        %p2874 = pneg %p106
      $region42: #{tps_forward.6} parent=39 // pred_check_branch
        %2876 = sbr.rel (%p2874) target = $region44
      $region43: #{tps_forward.6} parent=39 // pred_region
        %p2877 = scmp.lt.s32.totalorder %s15, 1
        %s2878 = scalar_select %p2877, %s15, 1
        %s2879 = smul.addr %s2878, 32
        %s2880 = smul.addr %s2879, 8
        %s2881 = scalar_lea.vmem %s3, %s2880
      $region44: #{tps_forward.6} parent=39 // pred_fallthru
        _
    $region40: #{tps_forward.6} parent=5 // pred_fallthru
      _
  $region6: #{tps_forward.6} parent=0 // loop_footer
    %s13 = sadd.s32 1, %s9
  $region7: #{tps_forward.6} parent=0 // loop_footer_branch
    %8 = sbr.rel target = $region3
  $region8: #{tps_forward.6} parent=0 // loop_exit
    _

// kernel: tps_forward.8
$region0: #{tps_forward.8}
  #allocation0 [shape = 'u32[]', space=smem, size = 0x4, offset = 0x4, fixed_abs, tag = 'smem constant byte address 0x4 - core index']
  #allocation1 [shape = 'u32[144,128]{1,0:T(1,128)}', space=vmem, size = 0x12000, scoped, tag = 'internal scratch']
  %s0 = inlined_call_operand.vmem [shape: bf16[32,288], index: 0, kind: input, shape index: {}]
  %s1 = inlined_call_operand.vmem [shape: bf16[288,64], index: 1, kind: input, shape index: {}]
  %s2 = inlined_call_operand.vmem [shape: f32[1,64], index: 2, kind: input, shape index: {}]
  %s3 = inlined_call_operand.vmem [shape: f32[32,64], index: 3, kind: output, shape index: {}]
  %s4 = sld [smem:[#allocation0]]
  $region22: #{tps_forward.8} parent=0
    _
  %s6 = ssub.s32 1, %s4
  %s7 = scalar_select 0, %s6, %s4
  // Predicated region
  $region2: #{tps_forward.8} parent=0 // pred_check
    _
  $region3: #{tps_forward.8} parent=0 // pred_check_branch
    %9 = sbr.rel (0) target = $region5
  $region4: #{tps_forward.8} parent=0 // pred_region
    _
  $region5: #{tps_forward.8} parent=0 // pred_fallthru
    _
  // Predicated region
  $region6: #{tps_forward.8} parent=0 // pred_check
    _
  $region7: #{tps_forward.8} parent=0 // pred_check_branch
    %11 = sbr.rel (0) target = $region9
  $region8: #{tps_forward.8} parent=0 // pred_region
    _
  $region9: #{tps_forward.8} parent=0 // pred_fallthru
    _
  // Predicated region
  $region10: #{tps_forward.8} parent=0 // pred_check
    _
  $region11: #{tps_forward.8} parent=0 // pred_check_branch
    %13 = sbr.rel (0) target = $region13
  $region12: #{tps_forward.8} parent=0 // pred_region
    _
  $region13: #{tps_forward.8} parent=0 // pred_fallthru
    _
  %v15 = vld [vmem:[%s0] sm:$0xff]
  %v16 = vld [vmem:[%s0 + $0x8] sm:$0xf]
  %v17 = vld [vmem:[%s0 + $0xc] sm:$0xff]
  %v18 = vld [vmem:[%s0 + $0x14] sm:$0xf]
  %v19 = vld [vmem:[%s0 + $0x18] sm:$0xff]
  %v20 = vld [vmem:[%s0 + $0x20] sm:$0xf]
  %v21 = vld [vmem:[%s0 + $0x24] sm:$0xff]
  %v22 = vld [vmem:[%s0 + $0x2c] sm:$0xf]
  %v23 = vld [vmem:[%s1] sm:$0xf]
  %v24 = vld [vmem:[%s1 + $0x4] sm:$0xf]
  %v25 = vld [vmem:[%s1 + $0x8] sm:$0xf]
  %v26 = vld [vmem:[%s1 + $0xc] sm:$0xf]
  %v27 = vld [vmem:[%s1 + $0x10] sm:$0xf]
  %v28 = vld [vmem:[%s1 + $0x14] sm:$0xf]
  %v29 = vld [vmem:[%s1 + $0x18] sm:$0xf]
  %v30 = vld [vmem:[%s1 + $0x1c] sm:$0xf]
  %v31 = vld [vmem:[%s1 + $0x20] sm:$0xf]
  %v32 = vld [vmem:[%s1 + $0x24] sm:$0xf]
  %v33 = vld [vmem:[%s1 + $0x28] sm:$0xf]
  %v34 = vld [vmem:[%s1 + $0x2c] sm:$0xf]
  %v35 = vld [vmem:[%s1 + $0x30] sm:$0xf]
  %v36 = vld [vmem:[%s1 + $0x34] sm:$0xf]
  %v37 = vld [vmem:[%s1 + $0x38] sm:$0xf]
  %v38 = vld [vmem:[%s1 + $0x3c] sm:$0xf]
  %v39 = vld [vmem:[%s1 + $0x40] sm:$0xf]
  %v40 = vld [vmem:[%s1 + $0x44] sm:$0xf]
  %v41 = vld [vmem:[%s1 + $0x48] sm:$0xf]
  %v42 = vld [vmem:[%s1 + $0x4c] sm:$0xf]
  %v43 = vld [vmem:[%s1 + $0x50] sm:$0xf]
  %v44 = vld [vmem:[%s1 + $0x54] sm:$0xf]
  %v45 = vld [vmem:[%s1 + $0x58] sm:$0xf]
  %v46 = vld [vmem:[%s1 + $0x5c] sm:$0xf]
  %v47 = vld [vmem:[%s1 + $0x60] sm:$0xf]
  %v48 = vld [vmem:[%s1 + $0x64] sm:$0xf]
  %v49 = vld [vmem:[%s1 + $0x68] sm:$0xf]
  %v50 = vld [vmem:[%s1 + $0x6c] sm:$0xf]
  %v51 = vld [vmem:[%s1 + $0x70] sm:$0xf]
  %v52 = vld [vmem:[%s1 + $0x74] sm:$0xf]
  %v53 = vld [vmem:[%s1 + $0x78] sm:$0xf]
  %v54 = vld [vmem:[%s1 + $0x7c] sm:$0xf]
  %v55 = vld [vmem:[%s1 + $0x80] sm:$0xf]
  %v56 = vld [vmem:[%s1 + $0x84] sm:$0xf]
  %v57 = vld [vmem:[%s1 + $0x88] sm:$0xf]
  %v58 = vld [vmem:[%s1 + $0x8c] sm:$0xf]
  %v59 = vld [vmem:[%s2] sm:$0x1]
  %v61 = vlaneseq
  %v62 = vshrl.u32 %v61, 7
  %v63 = vsub.s32 0, %v62
  %v64 = vrot.slane %v59, %v63
  %v74 = vunpack.c.l.b16 %v15
  %v75 = vunpack.c.h.b16 %v15
  %v76 = vunpack.c.l.b16 %v16
  %v77 = vunpack.c.l.b16 %v17
  %v78 = vunpack.c.h.b16 %v17
  %v79 = vunpack.c.l.b16 %v18
  %v80 = vunpack.c.l.b16 %v19
  %v81 = vunpack.c.h.b16 %v19
  %v82 = vunpack.c.l.b16 %v20
  %v83 = vunpack.c.l.b16 %v21
  %v84 = vunpack.c.h.b16 %v21
  %v85 = vunpack.c.l.b16 %v22
  %v86 = vpack.c.b16 %v77, %v74
  %v87 = vpack.c.b16 %v78, %v75
  %v88 = vpack.c.b16 %v79, %v76
  %v89 = vpack.c.b16 %v83, %v80
  %v90 = vpack.c.b16 %v84, %v81
  %v91 = vpack.c.b16 %v85, %v82
  %v132 = vunpack.c.l.b16 %v23
  %v133 = vunpack.c.l.b16 %v24
  %v134 = vunpack.c.l.b16 %v25
  %v135 = vunpack.c.l.b16 %v26
  %v136 = vunpack.c.l.b16 %v27
  %v137 = vunpack.c.l.b16 %v28
  %v138 = vunpack.c.l.b16 %v29
  %v139 = vunpack.c.l.b16 %v30
  %v140 = vunpack.c.l.b16 %v31
  %v141 = vunpack.c.l.b16 %v32
  %v142 = vunpack.c.l.b16 %v33
  %v143 = vunpack.c.l.b16 %v34
  %v144 = vunpack.c.l.b16 %v35
  %v145 = vunpack.c.l.b16 %v36
  %v146 = vunpack.c.l.b16 %v37
  %v147 = vunpack.c.l.b16 %v38
  %v148 = vunpack.c.l.b16 %v39
  %v149 = vunpack.c.l.b16 %v40
  %v150 = vunpack.c.l.b16 %v41
  %v151 = vunpack.c.l.b16 %v42
  %v152 = vunpack.c.l.b16 %v43
  %v153 = vunpack.c.l.b16 %v44
  %v154 = vunpack.c.l.b16 %v45
  %v155 = vunpack.c.l.b16 %v46
  %v156 = vunpack.c.l.b16 %v47
  %v157 = vunpack.c.l.b16 %v48
  %v158 = vunpack.c.l.b16 %v49
  %v159 = vunpack.c.l.b16 %v50
  %v160 = vunpack.c.l.b16 %v51
  %v161 = vunpack.c.l.b16 %v52
  %v162 = vunpack.c.l.b16 %v53
  %v163 = vunpack.c.l.b16 %v54
  %v164 = vunpack.c.l.b16 %v55
  %v165 = vunpack.c.l.b16 %v56
  %v166 = vunpack.c.l.b16 %v57
  %v167 = vunpack.c.l.b16 %v58
  %v168 = vpack.c.b16 %v133, %v132
  %v169 = vpack.c.b16 %v135, %v134
  %v170 = vpack.c.b16 %v137, %v136
  %v171 = vpack.c.b16 %v139, %v138
  %v172 = vpack.c.b16 %v141, %v140
  %v173 = vpack.c.b16 %v143, %v142
  %v174 = vpack.c.b16 %v145, %v144
  %v175 = vpack.c.b16 %v147, %v146
  %v176 = vpack.c.b16 %v149, %v148
  %v177 = vpack.c.b16 %v151, %v150
  %v178 = vpack.c.b16 %v153, %v152
  %v179 = vpack.c.b16 %v155, %v154
  %v180 = vpack.c.b16 %v157, %v156
  %v181 = vpack.c.b16 %v159, %v158
  %v182 = vpack.c.b16 %v161, %v160
  %v183 = vpack.c.b16 %v163, %v162
  %v184 = vpack.c.b16 %v165, %v164
  %v185 = vpack.c.b16 %v167, %v166
  %vm204 = vcmask 261120
  %v206 = vsel %vm204, %v88, 0
  %v209 = vsel %vm204, %v91, 0
  %211 = vmatprep.subr.bf16.mxu0 0
  %212 = vmatpush1.bf16.msra.mxu0 %v168
  %213 = vmatprep.subr.bf16.mxu0 0
  %214 = vmatpush1.bf16.msra.mxu0 %v169
  %215 = vmatprep.subr.bf16.mxu0 0
  %216 = vmatpush1.bf16.msra.mxu0 %v170
  %217 = vmatprep.subr.bf16.mxu0 0
  %218 = vmatpush1.bf16.msra.mxu0 %v171
  %219 = vmatprep.subr.bf16.mxu0 0
  %220 = vmatpush1.bf16.msra.mxu0 %v172
  %221 = vmatprep.subr.bf16.mxu0 0
  %222 = vmatpush1.bf16.msra.mxu0 %v173
  %223 = vmatprep.subr.bf16.mxu0 0
  %224 = vmatpush1.bf16.msra.mxu0 %v174
  %225 = vmatprep.subr.bf16.mxu0 0
  %226 = vmatpush1.bf16.msra.mxu0 %v175
  %227 = vmatprep.subr.bf16.mxu0 0
  %228 = vmatpush1.bf16.msra.mxu0 %v176
  %229 = vmatprep.subr.bf16.mxu0 0
  %230 = vmatpush1.bf16.msra.mxu0 %v177
  %231 = vmatprep.subr.bf16.mxu0 0
  %232 = vmatpush1.bf16.msra.mxu0 %v178
  %233 = vmatprep.subr.bf16.mxu0 0
  %234 = vmatpush1.bf16.msra.mxu0 %v179
  %235 = vmatprep.subr.bf16.mxu0 0
  %236 = vmatpush1.bf16.msra.mxu0 %v180
  %237 = vmatprep.subr.bf16.mxu0 0
  %238 = vmatpush1.bf16.msra.mxu0 %v181
  %239 = vmatprep.subr.bf16.mxu0 0
  %240 = vmatpush1.bf16.msra.mxu0 %v182
  %241 = vmatprep.subr.bf16.mxu0 0
  %242 = vmatpush1.bf16.msra.mxu0 %v183
  %243 = vmatprep.mubr.bf16.mxu0 %v87
  %244 = vmatmul.mubr.bf16.gmra.mrb[0].mxu0 %v86
  %v245 = vpop.f32.mrb[0].mxu0
  %v246 = vadd.f32 %v64, %v245
  %v247 = vpop.f32.mrb[0].mxu0
  %v248 = vpop.f32.mrb[0].mxu0
  %v249 = vadd.f32 %v64, %v248
  %v250 = vpop.f32.mrb[0].mxu0
  %251 = vmatprep.mubr.bf16.mxu0 %v90
  %252 = vmatmul.mubr.bf16.gmra.mrb[0].mxu0 %v89
  %v253 = vpop.f32.mrb[0].mxu0
  %v254 = vadd.f32 %v64, %v253
  %v255 = vpop.f32.mrb[0].mxu0
  %v256 = vpop.f32.mrb[0].mxu0
  %v257 = vadd.f32 %v64, %v256
  %v258 = vpop.f32.mrb[0].mxu0
  %259 = vdwg.mxu0
  %260 = vmatprep.subr.bf16.mxu0 0
  %261 = vmatpush1.bf16.msra.mxu0 %v184
  %262 = vmatprep.subr.bf16.mxu0 0
  %263 = vmatpush1.bf16.msra.mxu0 %v185
  %264 = vmatprep.subr.bf16.mxu0 0
  %265 = vmatpush1.bf16.msra.mxu0 0
  %266 = vmatprep.subr.bf16.mxu0 0
  %267 = vmatpush1.bf16.msra.mxu0 0
  %268 = vmatprep.subr.bf16.mxu0 0
  %269 = vmatpush1.bf16.msra.mxu0 0
  %270 = vmatprep.subr.bf16.mxu0 0
  %271 = vmatpush1.bf16.msra.mxu0 0
  %272 = vmatprep.subr.bf16.mxu0 0
  %273 = vmatpush1.bf16.msra.mxu0 0
  %274 = vmatprep.subr.bf16.mxu0 0
  %275 = vmatpush1.bf16.msra.mxu0 0
  %276 = vmatprep.subr.bf16.mxu0 0
  %277 = vmatpush1.bf16.msra.mxu0 0
  %278 = vmatprep.subr.bf16.mxu0 0
  %279 = vmatpush1.bf16.msra.mxu0 0
  %280 = vmatprep.subr.bf16.mxu0 0
  %281 = vmatpush1.bf16.msra.mxu0 0
  %282 = vmatprep.subr.bf16.mxu0 0
  %283 = vmatpush1.bf16.msra.mxu0 0
  %284 = vmatprep.subr.bf16.mxu0 0
  %285 = vmatpush1.bf16.msra.mxu0 0
  %286 = vmatprep.subr.bf16.mxu0 0
  %287 = vmatpush1.bf16.msra.mxu0 0
  %288 = vmatprep.subr.bf16.mxu0 0
  %289 = vmatpush1.bf16.msra.mxu0 0
  %290 = vmatprep.subr.bf16.mxu0 0
  %291 = vmatpush1.bf16.msra.mxu0 0
  %292 = vmatprep.mubr.bf16.mxu0 0
  %293 = vmatmul.mubr.bf16.gmra.mrb[0].mxu0 %v206
  %v294 = vpop.f32.mrb[0].mxu0
  %v295 = vadd.f32 %v246, %v294
  %v296 = vpop.f32.mrb[0].mxu0
  %v297 = vpop.f32.mrb[0].mxu0
  %v298 = vadd.f32 %v249, %v297
  %v299 = vpop.f32.mrb[0].mxu0
  %300 = vmatprep.mubr.bf16.mxu0 0
  %301 = vmatmul.mubr.bf16.gmra.mrb[0].mxu0 %v209
  %v302 = vpop.f32.mrb[0].mxu0
  %v303 = vadd.f32 %v254, %v302
  %v304 = vpop.f32.mrb[0].mxu0
  %v305 = vpop.f32.mrb[0].mxu0
  %v306 = vadd.f32 %v257, %v305
  %v307 = vpop.f32.mrb[0].mxu0
  %308 = vdwg.mxu0
  %v309 = vmax.f32 %v295, 0.0
  %v310 = vmax.f32 %v298, 0.0
  %v311 = vmax.f32 %v303, 0.0
  %v312 = vmax.f32 %v306, 0.0
  %vm313 = vcmask 523264
  %314 = vst.msk [vmem:[%s3] sm:$0xff] %vm313, %v309
  %315 = vst.msk [vmem:[%s3 + $0x8] sm:$0xff] %vm313, %v310
  %316 = vst.msk [vmem:[%s3 + $0x10] sm:$0xff] %vm313, %v311
  %317 = vst.msk [vmem:[%s3 + $0x18] sm:$0xff] %vm313, %v312
  // Predicated region
  $region14: #{tps_forward.8} parent=0 // pred_check
    _
  $region15: #{tps_forward.8} parent=0 // pred_check_branch
    %319 = sbr.rel (0) target = $region17
  $region16: #{tps_forward.8} parent=0 // pred_region
    _
  $region17: #{tps_forward.8} parent=0 // pred_fallthru
    _
  // Predicated region
  $region18: #{tps_forward.8} parent=0 // pred_check
    _
  $region19: #{tps_forward.8} parent=0 // pred_check_branch
    %321 = sbr.rel (0) target = $region21
  $region20: #{tps_forward.8} parent=0 // pred_region
    _
  $region21: #{tps_forward.8} parent=0 // pred_fallthru
    _

// kernel: tps_forward.9
$region0: #{tps_forward.9}
  #allocation0 [shape = 'u32[]', space=smem, size = 0x4, offset = 0x4, fixed_abs, tag = 'smem constant byte address 0x4 - core index']
  #allocation1 [shape = 'u32[144,128]{1,0:T(1,128)}', space=vmem, size = 0x12000, scoped, tag = 'internal scratch']
  %s0 = inlined_call_operand.vmem [shape: bf16[8,576], index: 0, kind: input, shape index: {}]
  %s1 = inlined_call_operand.vmem [shape: bf16[576,128], index: 1, kind: input, shape index: {}]
  %s2 = inlined_call_operand.vmem [shape: f32[1,128], index: 2, kind: input, shape index: {}]
  %s3 = inlined_call_operand.vmem [shape: f32[8,128], index: 3, kind: output, shape index: {}]
  %s4 = sld [smem:[#allocation0]]
  $region22: #{tps_forward.9} parent=0
    _
  %s6 = ssub.s32 1, %s4
  %s7 = scalar_select 0, %s6, %s4
  // Predicated region
  $region2: #{tps_forward.9} parent=0 // pred_check
    _
  $region3: #{tps_forward.9} parent=0 // pred_check_branch
    %9 = sbr.rel (0) target = $region5
  $region4: #{tps_forward.9} parent=0 // pred_region
    _
  $region5: #{tps_forward.9} parent=0 // pred_fallthru
    _
  // Predicated region
  $region6: #{tps_forward.9} parent=0 // pred_check
    _
  $region7: #{tps_forward.9} parent=0 // pred_check_branch
    %11 = sbr.rel (0) target = $region9
  $region8: #{tps_forward.9} parent=0 // pred_region
    _
  $region9: #{tps_forward.9} parent=0 // pred_fallthru
    _
  // Predicated region
  $region10: #{tps_forward.9} parent=0 // pred_check
    _
  $region11: #{tps_forward.9} parent=0 // pred_check_branch
    %13 = sbr.rel (0) target = $region13
  $region12: #{tps_forward.9} parent=0 // pred_region
    _
  $region13: #{tps_forward.9} parent=0 // pred_fallthru
    _
  %v15 = vld [vmem:[%s0] sm:$0xff]
  %v16 = vld [vmem:[%s0 + $0x8] sm:$0xff]
  %v17 = vld [vmem:[%s0 + $0x10] sm:$0xf]
  %v18 = vld [vmem:[%s1] sm:$0xf]
  %v19 = vld [vmem:[%s1 + $0x4] sm:$0xf]
  %v20 = vld [vmem:[%s1 + $0x8] sm:$0xf]
  %v21 = vld [vmem:[%s1 + $0xc] sm:$0xf]
  %v22 = vld [vmem:[%s1 + $0x10] sm:$0xf]
  %v23 = vld [vmem:[%s1 + $0x14] sm:$0xf]
  %v24 = vld [vmem:[%s1 + $0x18] sm:$0xf]
  %v25 = vld [vmem:[%s1 + $0x1c] sm:$0xf]
  %v26 = vld [vmem:[%s1 + $0x20] sm:$0xf]
  %v27 = vld [vmem:[%s1 + $0x24] sm:$0xf]
  %v28 = vld [vmem:[%s1 + $0x28] sm:$0xf]
  %v29 = vld [vmem:[%s1 + $0x2c] sm:$0xf]
  %v30 = vld [vmem:[%s1 + $0x30] sm:$0xf]
  %v31 = vld [vmem:[%s1 + $0x34] sm:$0xf]
  %v32 = vld [vmem:[%s1 + $0x38] sm:$0xf]
  %v33 = vld [vmem:[%s1 + $0x3c] sm:$0xf]
  %v34 = vld [vmem:[%s1 + $0x40] sm:$0xf]
  %v35 = vld [vmem:[%s1 + $0x44] sm:$0xf]
  %v36 = vld [vmem:[%s1 + $0x48] sm:$0xf]
  %v37 = vld [vmem:[%s1 + $0x4c] sm:$0xf]
  %v38 = vld [vmem:[%s1 + $0x50] sm:$0xf]
  %v39 = vld [vmem:[%s1 + $0x54] sm:$0xf]
  %v40 = vld [vmem:[%s1 + $0x58] sm:$0xf]
  %v41 = vld [vmem:[%s1 + $0x5c] sm:$0xf]
  %v42 = vld [vmem:[%s1 + $0x60] sm:$0xf]
  %v43 = vld [vmem:[%s1 + $0x64] sm:$0xf]
  %v44 = vld [vmem:[%s1 + $0x68] sm:$0xf]
  %v45 = vld [vmem:[%s1 + $0x6c] sm:$0xf]
  %v46 = vld [vmem:[%s1 + $0x70] sm:$0xf]
  %v47 = vld [vmem:[%s1 + $0x74] sm:$0xf]
  %v48 = vld [vmem:[%s1 + $0x78] sm:$0xf]
  %v49 = vld [vmem:[%s1 + $0x7c] sm:$0xf]
  %v50 = vld [vmem:[%s1 + $0x80] sm:$0xf]
  %v51 = vld [vmem:[%s1 + $0x84] sm:$0xf]
  %v52 = vld [vmem:[%s1 + $0x88] sm:$0xf]
  %v53 = vld [vmem:[%s1 + $0x8c] sm:$0xf]
  %v54 = vld [vmem:[%s1 + $0x90] sm:$0xf]
  %v55 = vld [vmem:[%s1 + $0x94] sm:$0xf]
  %v56 = vld [vmem:[%s1 + $0x98] sm:$0xf]
  %v57 = vld [vmem:[%s1 + $0x9c] sm:$0xf]
  %v58 = vld [vmem:[%s1 + $0xa0] sm:$0xf]
  %v59 = vld [vmem:[%s1 + $0xa4] sm:$0xf]
  %v60 = vld [vmem:[%s1 + $0xa8] sm:$0xf]
  %v61 = vld [vmem:[%s1 + $0xac] sm:$0xf]
  %v62 = vld [vmem:[%s1 + $0xb0] sm:$0xf]
  %v63 = vld [vmem:[%s1 + $0xb4] sm:$0xf]
  %v64 = vld [vmem:[%s1 + $0xb8] sm:$0xf]
  %v65 = vld [vmem:[%s1 + $0xbc] sm:$0xf]
  %v66 = vld [vmem:[%s1 + $0xc0] sm:$0xf]
  %v67 = vld [vmem:[%s1 + $0xc4] sm:$0xf]
  %v68 = vld [vmem:[%s1 + $0xc8] sm:$0xf]
  %v69 = vld [vmem:[%s1 + $0xcc] sm:$0xf]
  %v70 = vld [vmem:[%s1 + $0xd0] sm:$0xf]
  %v71 = vld [vmem:[%s1 + $0xd4] sm:$0xf]
  %v72 = vld [vmem:[%s1 + $0xd8] sm:$0xf]
  %v73 = vld [vmem:[%s1 + $0xdc] sm:$0xf]
  %v74 = vld [vmem:[%s1 + $0xe0] sm:$0xf]
  %v75 = vld [vmem:[%s1 + $0xe4] sm:$0xf]
  %v76 = vld [vmem:[%s1 + $0xe8] sm:$0xf]
  %v77 = vld [vmem:[%s1 + $0xec] sm:$0xf]
  %v78 = vld [vmem:[%s1 + $0xf0] sm:$0xf]
  %v79 = vld [vmem:[%s1 + $0xf4] sm:$0xf]
  %v80 = vld [vmem:[%s1 + $0xf8] sm:$0xf]
  %v81 = vld [vmem:[%s1 + $0xfc] sm:$0xf]
  %v82 = vld [vmem:[%s1 + $0x100] sm:$0xf]
  %v83 = vld [vmem:[%s1 + $0x104] sm:$0xf]
  %v84 = vld [vmem:[%s1 + $0x108] sm:$0xf]
  %v85 = vld [vmem:[%s1 + $0x10c] sm:$0xf]
  %v86 = vld [vmem:[%s1 + $0x110] sm:$0xf]
  %v87 = vld [vmem:[%s1 + $0x114] sm:$0xf]
  %v88 = vld [vmem:[%s1 + $0x118] sm:$0xf]
  %v89 = vld [vmem:[%s1 + $0x11c] sm:$0xf]
  %v90 = vld [vmem:[%s2] sm:$0x1]
  %v92 = vlaneseq
  %v93 = vshrl.u32 %v92, 7
  %v94 = vsub.s32 0, %v93
  %v95 = vrot.slane %v90, %v94
  %v100 = vunpack.c.l.b16 %v15
  %v101 = vunpack.c.h.b16 %v15
  %v102 = vunpack.c.l.b16 %v16
  %v103 = vunpack.c.h.b16 %v16
  %v104 = vunpack.c.l.b16 %v17
  %v105 = vpack.c.b16 %v100, %v100
  %v106 = vpack.c.b16 %v101, %v101
  %v107 = vpack.c.b16 %v102, %v102
  %v108 = vpack.c.b16 %v103, %v103
  %v109 = vpack.c.b16 %v104, %v104
  %v186 = vunpack.c.l.b16 %v18
  %v187 = vunpack.c.l.b16 %v19
  %v188 = vunpack.c.l.b16 %v20
  %v189 = vunpack.c.l.b16 %v21
  %v190 = vunpack.c.l.b16 %v22
  %v191 = vunpack.c.l.b16 %v23
  %v192 = vunpack.c.l.b16 %v24
  %v193 = vunpack.c.l.b16 %v25
  %v194 = vunpack.c.l.b16 %v26
  %v195 = vunpack.c.l.b16 %v27
  %v196 = vunpack.c.l.b16 %v28
  %v197 = vunpack.c.l.b16 %v29
  %v198 = vunpack.c.l.b16 %v30
  %v199 = vunpack.c.l.b16 %v31
  %v200 = vunpack.c.l.b16 %v32
  %v201 = vunpack.c.l.b16 %v33
  %v202 = vunpack.c.l.b16 %v34
  %v203 = vunpack.c.l.b16 %v35
  %v204 = vunpack.c.l.b16 %v36
  %v205 = vunpack.c.l.b16 %v37
  %v206 = vunpack.c.l.b16 %v38
  %v207 = vunpack.c.l.b16 %v39
  %v208 = vunpack.c.l.b16 %v40
  %v209 = vunpack.c.l.b16 %v41
  %v210 = vunpack.c.l.b16 %v42
  %v211 = vunpack.c.l.b16 %v43
  %v212 = vunpack.c.l.b16 %v44
  %v213 = vunpack.c.l.b16 %v45
  %v214 = vunpack.c.l.b16 %v46
  %v215 = vunpack.c.l.b16 %v47
  %v216 = vunpack.c.l.b16 %v48
  %v217 = vunpack.c.l.b16 %v49
  %v218 = vunpack.c.l.b16 %v50
  %v219 = vunpack.c.l.b16 %v51
  %v220 = vunpack.c.l.b16 %v52
  %v221 = vunpack.c.l.b16 %v53
  %v222 = vunpack.c.l.b16 %v54
  %v223 = vunpack.c.l.b16 %v55
  %v224 = vunpack.c.l.b16 %v56
  %v225 = vunpack.c.l.b16 %v57
  %v226 = vunpack.c.l.b16 %v58
  %v227 = vunpack.c.l.b16 %v59
  %v228 = vunpack.c.l.b16 %v60
  %v229 = vunpack.c.l.b16 %v61
  %v230 = vunpack.c.l.b16 %v62
  %v231 = vunpack.c.l.b16 %v63
  %v232 = vunpack.c.l.b16 %v64
  %v233 = vunpack.c.l.b16 %v65
  %v234 = vunpack.c.l.b16 %v66
  %v235 = vunpack.c.l.b16 %v67
  %v236 = vunpack.c.l.b16 %v68
  %v237 = vunpack.c.l.b16 %v69
  %v238 = vunpack.c.l.b16 %v70
  %v239 = vunpack.c.l.b16 %v71
  %v240 = vunpack.c.l.b16 %v72
  %v241 = vunpack.c.l.b16 %v73
  %v242 = vunpack.c.l.b16 %v74
  %v243 = vunpack.c.l.b16 %v75
  %v244 = vunpack.c.l.b16 %v76
  %v245 = vunpack.c.l.b16 %v77
  %v246 = vunpack.c.l.b16 %v78
  %v247 = vunpack.c.l.b16 %v79
  %v248 = vunpack.c.l.b16 %v80
  %v249 = vunpack.c.l.b16 %v81
  %v250 = vunpack.c.l.b16 %v82
  %v251 = vunpack.c.l.b16 %v83
  %v252 = vunpack.c.l.b16 %v84
  %v253 = vunpack.c.l.b16 %v85
  %v254 = vunpack.c.l.b16 %v86
  %v255 = vunpack.c.l.b16 %v87
  %v256 = vunpack.c.l.b16 %v88
  %v257 = vunpack.c.l.b16 %v89
  %v258 = vpack.c.b16 %v187, %v186
  %v259 = vpack.c.b16 %v189, %v188
  %v260 = vpack.c.b16 %v191, %v190
  %v261 = vpack.c.b16 %v193, %v192
  %v262 = vpack.c.b16 %v195, %v194
  %v263 = vpack.c.b16 %v197, %v196
  %v264 = vpack.c.b16 %v199, %v198
  %v265 = vpack.c.b16 %v201, %v200
  %v266 = vpack.c.b16 %v203, %v202
  %v267 = vpack.c.b16 %v205, %v204
  %v268 = vpack.c.b16 %v207, %v206
  %v269 = vpack.c.b16 %v209, %v208
  %v270 = vpack.c.b16 %v211, %v210
  %v271 = vpack.c.b16 %v213, %v212
  %v272 = vpack.c.b16 %v215, %v214
  %v273 = vpack.c.b16 %v217, %v216
  %v274 = vpack.c.b16 %v219, %v218
  %v275 = vpack.c.b16 %v221, %v220
  %v276 = vpack.c.b16 %v223, %v222
  %v277 = vpack.c.b16 %v225, %v224
  %v278 = vpack.c.b16 %v227, %v226
  %v279 = vpack.c.b16 %v229, %v228
  %v280 = vpack.c.b16 %v231, %v230
  %v281 = vpack.c.b16 %v233, %v232
  %v282 = vpack.c.b16 %v235, %v234
  %v283 = vpack.c.b16 %v237, %v236
  %v284 = vpack.c.b16 %v239, %v238
  %v285 = vpack.c.b16 %v241, %v240
  %v286 = vpack.c.b16 %v243, %v242
  %v287 = vpack.c.b16 %v245, %v244
  %v288 = vpack.c.b16 %v247, %v246
  %v289 = vpack.c.b16 %v249, %v248
  %v290 = vpack.c.b16 %v251, %v250
  %v291 = vpack.c.b16 %v253, %v252
  %v292 = vpack.c.b16 %v255, %v254
  %v293 = vpack.c.b16 %v257, %v256
  %vm330 = vcmask 523264
  %v332 = vsel %vm330, %v109, 0
  %334 = vmatprep.subr.bf16.mxu0 0
  %335 = vmatpush1.bf16.msra.mxu0 %v258
  %336 = vmatprep.subr.bf16.mxu0 0
  %337 = vmatpush1.bf16.msra.mxu0 %v259
  %338 = vmatprep.subr.bf16.mxu0 0
  %339 = vmatpush1.bf16.msra.mxu0 %v260
  %340 = vmatprep.subr.bf16.mxu0 0
  %341 = vmatpush1.bf16.msra.mxu0 %v261
  %342 = vmatprep.subr.bf16.mxu0 0
  %343 = vmatpush1.bf16.msra.mxu0 %v262
  %344 = vmatprep.subr.bf16.mxu0 0
  %345 = vmatpush1.bf16.msra.mxu0 %v263
  %346 = vmatprep.subr.bf16.mxu0 0
  %347 = vmatpush1.bf16.msra.mxu0 %v264
  %348 = vmatprep.subr.bf16.mxu0 0
  %349 = vmatpush1.bf16.msra.mxu0 %v265
  %350 = vmatprep.subr.bf16.mxu0 0
  %351 = vmatpush1.bf16.msra.mxu0 %v266
  %352 = vmatprep.subr.bf16.mxu0 0
  %353 = vmatpush1.bf16.msra.mxu0 %v267
  %354 = vmatprep.subr.bf16.mxu0 0
  %355 = vmatpush1.bf16.msra.mxu0 %v268
  %356 = vmatprep.subr.bf16.mxu0 0
  %357 = vmatpush1.bf16.msra.mxu0 %v269
  %358 = vmatprep.subr.bf16.mxu0 0
  %359 = vmatpush1.bf16.msra.mxu0 %v270
  %360 = vmatprep.subr.bf16.mxu0 0
  %361 = vmatpush1.bf16.msra.mxu0 %v271
  %362 = vmatprep.subr.bf16.mxu0 0
  %363 = vmatpush1.bf16.msra.mxu0 %v272
  %364 = vmatprep.subr.bf16.mxu0 0
  %365 = vmatpush1.bf16.msra.mxu0 %v273
  %366 = vmatprep.mubr.bf16.mxu0 %v106
  %367 = vmatmul.mubr.bf16.gmra.mrb[0].mxu0 %v105
  %v368 = vpop.f32.mrb[0].mxu0
  %v369 = vadd.f32 %v95, %v368
  %v370 = vpop.f32.mrb[0].mxu0
  %v371 = vpop.f32.mrb[0].mxu0
  %v372 = vpop.f32.mrb[0].mxu0
  %373 = vdwg.mxu0
  %374 = vmatprep.subr.bf16.mxu0 0
  %375 = vmatpush1.bf16.msra.mxu0 %v274
  %376 = vmatprep.subr.bf16.mxu0 0
  %377 = vmatpush1.bf16.msra.mxu0 %v275
  %378 = vmatprep.subr.bf16.mxu0 0
  %379 = vmatpush1.bf16.msra.mxu0 %v276
  %380 = vmatprep.subr.bf16.mxu0 0
  %381 = vmatpush1.bf16.msra.mxu0 %v277
  %382 = vmatprep.subr.bf16.mxu0 0
  %383 = vmatpush1.bf16.msra.mxu0 %v278
  %384 = vmatprep.subr.bf16.mxu0 0
  %385 = vmatpush1.bf16.msra.mxu0 %v279
  %386 = vmatprep.subr.bf16.mxu0 0
  %387 = vmatpush1.bf16.msra.mxu0 %v280
  %388 = vmatprep.subr.bf16.mxu0 0
  %389 = vmatpush1.bf16.msra.mxu0 %v281
  %390 = vmatprep.subr.bf16.mxu0 0
  %391 = vmatpush1.bf16.msra.mxu0 %v282
  %392 = vmatprep.subr.bf16.mxu0 0
  %393 = vmatpush1.bf16.msra.mxu0 %v283
  %394 = vmatprep.subr.bf16.mxu0 0
  %395 = vmatpush1.bf16.msra.mxu0 %v284
  %396 = vmatprep.subr.bf16.mxu0 0
  %397 = vmatpush1.bf16.msra.mxu0 %v285
  %398 = vmatprep.subr.bf16.mxu0 0
  %399 = vmatpush1.bf16.msra.mxu0 %v286
  %400 = vmatprep.subr.bf16.mxu0 0
  %401 = vmatpush1.bf16.msra.mxu0 %v287
  %402 = vmatprep.subr.bf16.mxu0 0
  %403 = vmatpush1.bf16.msra.mxu0 %v288
  %404 = vmatprep.subr.bf16.mxu0 0
  %405 = vmatpush1.bf16.msra.mxu0 %v289
  %406 = vmatprep.mubr.bf16.mxu0 %v108
  %407 = vmatmul.mubr.bf16.gmra.mrb[0].mxu0 %v107
  %v408 = vpop.f32.mrb[0].mxu0
  %v409 = vadd.f32 %v369, %v408
  %v410 = vpop.f32.mrb[0].mxu0
  %v411 = vpop.f32.mrb[0].mxu0
  %v412 = vpop.f32.mrb[0].mxu0
  %413 = vdwg.mxu0
  %414 = vmatprep.subr.bf16.mxu0 0
  %415 = vmatpush1.bf16.msra.mxu0 %v290
  %416 = vmatprep.subr.bf16.mxu0 0
  %417 = vmatpush1.bf16.msra.mxu0 %v291
  %418 = vmatprep.subr.bf16.mxu0 0
  %419 = vmatpush1.bf16.msra.mxu0 %v292
  %420 = vmatprep.subr.bf16.mxu0 0
  %421 = vmatpush1.bf16.msra.mxu0 %v293
  %422 = vmatprep.subr.bf16.mxu0 0
  %423 = vmatpush1.bf16.msra.mxu0 0
  %424 = vmatprep.subr.bf16.mxu0 0
  %425 = vmatpush1.bf16.msra.mxu0 0
  %426 = vmatprep.subr.bf16.mxu0 0
  %427 = vmatpush1.bf16.msra.mxu0 0
  %428 = vmatprep.subr.bf16.mxu0 0
  %429 = vmatpush1.bf16.msra.mxu0 0
  %430 = vmatprep.subr.bf16.mxu0 0
  %431 = vmatpush1.bf16.msra.mxu0 0
  %432 = vmatprep.subr.bf16.mxu0 0
  %433 = vmatpush1.bf16.msra.mxu0 0
  %434 = vmatprep.subr.bf16.mxu0 0
  %435 = vmatpush1.bf16.msra.mxu0 0
  %436 = vmatprep.subr.bf16.mxu0 0
  %437 = vmatpush1.bf16.msra.mxu0 0
  %438 = vmatprep.subr.bf16.mxu0 0
  %439 = vmatpush1.bf16.msra.mxu0 0
  %440 = vmatprep.subr.bf16.mxu0 0
  %441 = vmatpush1.bf16.msra.mxu0 0
  %442 = vmatprep.subr.bf16.mxu0 0
  %443 = vmatpush1.bf16.msra.mxu0 0
  %444 = vmatprep.subr.bf16.mxu0 0
  %445 = vmatpush1.bf16.msra.mxu0 0
  %446 = vmatprep.mubr.bf16.mxu0 0
  %447 = vmatmul.mubr.bf16.gmra.mrb[0].mxu0 %v332
  %v448 = vpop.f32.mrb[0].mxu0
  %v449 = vadd.f32 %v409, %v448
  %v450 = vpop.f32.mrb[0].mxu0
  %v451 = vpop.f32.mrb[0].mxu0
  %v452 = vpop.f32.mrb[0].mxu0
  %453 = vdwg.mxu0
  %v454 = vmax.f32 %v449, 0.0
  %455 = vst [vmem:[%s3] sm:$0xff] %v454
  // Predicated region
  $region14: #{tps_forward.9} parent=0 // pred_check
    _
  $region15: #{tps_forward.9} parent=0 // pred_check_branch
    %457 = sbr.rel (0) target = $region17
  $region16: #{tps_forward.9} parent=0 // pred_region
    _
  $region17: #{tps_forward.9} parent=0 // pred_fallthru
    _
  // Predicated region
  $region18: #{tps_forward.9} parent=0 // pred_check
    _
  $region19: #{tps_forward.9} parent=0 // pred_check_branch
    %459 = sbr.rel (0) target = $region21
  $region20: #{tps_forward.9} parent=0 // pred_region
    _
  $region21: #{tps_forward.9} parent=0 // pred_fallthru
    _

// kernel: tps_forward.10
$region0: #{tps_forward.10}
  #allocation0 [shape = 'u32[]', space=smem, size = 0x4, offset = 0x4, fixed_abs, tag = 'smem constant byte address 0x4 - core index']
  #allocation1 [shape = 'u32[144,128]{1,0:T(1,128)}', space=vmem, size = 0x12000, scoped, tag = 'internal scratch']
  %s0 = inlined_call_operand.vmem [shape: f32[2,128], index: 0, kind: input, shape index: {}]
  %s1 = inlined_call_operand.vmem [shape: f32[128,64], index: 1, kind: input, shape index: {}]
  %s2 = inlined_call_operand.vmem [shape: f32[1,64], index: 2, kind: input, shape index: {}]
  %s3 = inlined_call_operand.vmem [shape: f32[64,40], index: 3, kind: input, shape index: {}]
  %s4 = inlined_call_operand.vmem [shape: f32[1,40], index: 4, kind: input, shape index: {}]
  %s5 = inlined_call_operand.vmem [shape: f32[40,6], index: 5, kind: input, shape index: {}]
  %s6 = inlined_call_operand.vmem [shape: f32[1,6], index: 6, kind: input, shape index: {}]
  %s7 = inlined_call_operand.vmem [shape: f32[2,40], index: 7, kind: output, shape index: {0}]
  %s8 = inlined_call_operand.vmem [shape: f32[2,6], index: 8, kind: output, shape index: {1}]
  %9 = xla_tuple %s7, %s8
  %s10 = sld [smem:[#allocation0]]
  $region46: #{tps_forward.10} parent=0
    _
  %s12 = ssub.s32 1, %s10
  %s13 = scalar_select 0, %s12, %s10
  // Predicated region
  $region2: #{tps_forward.10} parent=0 // pred_check
    _
  $region3: #{tps_forward.10} parent=0 // pred_check_branch
    %15 = sbr.rel (0) target = $region5
  $region4: #{tps_forward.10} parent=0 // pred_region
    _
  $region5: #{tps_forward.10} parent=0 // pred_fallthru
    _
  // Predicated region
  $region6: #{tps_forward.10} parent=0 // pred_check
    _
  $region7: #{tps_forward.10} parent=0 // pred_check_branch
    %17 = sbr.rel (0) target = $region9
  $region8: #{tps_forward.10} parent=0 // pred_region
    _
  $region9: #{tps_forward.10} parent=0 // pred_fallthru
    _
  // Predicated region
  $region10: #{tps_forward.10} parent=0 // pred_check
    _
  $region11: #{tps_forward.10} parent=0 // pred_check_branch
    %19 = sbr.rel (0) target = $region13
  $region12: #{tps_forward.10} parent=0 // pred_region
    _
  $region13: #{tps_forward.10} parent=0 // pred_fallthru
    _
  // Predicated region
  $region14: #{tps_forward.10} parent=0 // pred_check
    _
  $region15: #{tps_forward.10} parent=0 // pred_check_branch
    %21 = sbr.rel (0) target = $region17
  $region16: #{tps_forward.10} parent=0 // pred_region
    _
  $region17: #{tps_forward.10} parent=0 // pred_fallthru
    _
  // Predicated region
  $region18: #{tps_forward.10} parent=0 // pred_check
    _
  $region19: #{tps_forward.10} parent=0 // pred_check_branch
    %23 = sbr.rel (0) target = $region21
  $region20: #{tps_forward.10} parent=0 // pred_region
    _
  $region21: #{tps_forward.10} parent=0 // pred_fallthru
    _
  // Predicated region
  $region22: #{tps_forward.10} parent=0 // pred_check
    _
  $region23: #{tps_forward.10} parent=0 // pred_check_branch
    %25 = sbr.rel (0) target = $region25
  $region24: #{tps_forward.10} parent=0 // pred_region
    _
  $region25: #{tps_forward.10} parent=0 // pred_fallthru
    _
  // Predicated region
  $region26: #{tps_forward.10} parent=0 // pred_check
    _
  $region27: #{tps_forward.10} parent=0 // pred_check_branch
    %27 = sbr.rel (0) target = $region29
  $region28: #{tps_forward.10} parent=0 // pred_region
    _
  $region29: #{tps_forward.10} parent=0 // pred_fallthru
    _
  %v28 = vld [vmem:[%s0] sm:$0x3]
  %v29 = vld [vmem:[%s1] sm:$0xff]
  %v30 = vld [vmem:[%s1 + $0x8] sm:$0xff]
  %v31 = vld [vmem:[%s1 + $0x10] sm:$0xff]
  %v32 = vld [vmem:[%s1 + $0x18] sm:$0xff]
  %v33 = vld [vmem:[%s1 + $0x20] sm:$0xff]
  %v34 = vld [vmem:[%s1 + $0x28] sm:$0xff]
  %v35 = vld [vmem:[%s1 + $0x30] sm:$0xff]
  %v36 = vld [vmem:[%s1 + $0x38] sm:$0xff]
  %v37 = vld [vmem:[%s1 + $0x40] sm:$0xff]
  %v38 = vld [vmem:[%s1 + $0x48] sm:$0xff]
  %v39 = vld [vmem:[%s1 + $0x50] sm:$0xff]
  %v40 = vld [vmem:[%s1 + $0x58] sm:$0xff]
  %v41 = vld [vmem:[%s1 + $0x60] sm:$0xff]
  %v42 = vld [vmem:[%s1 + $0x68] sm:$0xff]
  %v43 = vld [vmem:[%s1 + $0x70] sm:$0xff]
  %v44 = vld [vmem:[%s1 + $0x78] sm:$0xff]
  %v45 = vld [vmem:[%s2] sm:$0x1]
  %v47 = vlaneseq
  %v48 = vshrl.u32 %v47, 7
  %v49 = vsub.s32 0, %v48
  %v50 = vrot.slane %v45, %v49
  %52 = vmatprep.subr.mxu0 0.0
  %53 = vmatpush1.msra.mxu0 %v29
  %54 = vmatprep.subr.mxu0 0.0
  %55 = vmatpush1.msra.mxu0 %v30
  %56 = vmatprep.subr.mxu0 0.0
  %57 = vmatpush1.msra.mxu0 %v31
  %58 = vmatprep.subr.mxu0 0.0
  %59 = vmatpush1.msra.mxu0 %v32
  %60 = vmatprep.subr.mxu0 0.0
  %61 = vmatpush1.msra.mxu0 %v33
  %62 = vmatprep.subr.mxu0 0.0
  %63 = vmatpush1.msra.mxu0 %v34
  %64 = vmatprep.subr.mxu0 0.0
  %65 = vmatpush1.msra.mxu0 %v35
  %66 = vmatprep.subr.mxu0 0.0
  %67 = vmatpush1.msra.mxu0 %v36
  %68 = vmatprep.subr.mxu0 0.0
  %69 = vmatpush1.msra.mxu0 %v37
  %70 = vmatprep.subr.mxu0 0.0
  %71 = vmatpush1.msra.mxu0 %v38
  %72 = vmatprep.subr.mxu0 0.0
  %73 = vmatpush1.msra.mxu0 %v39
  %74 = vmatprep.subr.mxu0 0.0
  %75 = vmatpush1.msra.mxu0 %v40
  %76 = vmatprep.subr.mxu0 0.0
  %77 = vmatpush1.msra.mxu0 %v41
  %78 = vmatprep.subr.mxu0 0.0
  %79 = vmatpush1.msra.mxu0 %v42
  %80 = vmatprep.subr.mxu0 0.0
  %81 = vmatpush1.msra.mxu0 %v43
  %82 = vmatprep.subr.mxu0 0.0
  %83 = vmatpush1.msra.mxu0 %v44
  %84 = vmatprep.subr.mxu0 0.0
  %85 = vmatpush1.msra.mxu0 0.0
  %86 = vmatprep.subr.mxu0 0.0
  %87 = vmatpush1.msra.mxu0 0.0
  %88 = vmatprep.subr.mxu0 0.0
  %89 = vmatpush1.msra.mxu0 0.0
  %90 = vmatprep.subr.mxu0 0.0
  %91 = vmatpush1.msra.mxu0 0.0
  %92 = vmatprep.subr.mxu0 0.0
  %93 = vmatpush1.msra.mxu0 0.0
  %94 = vmatprep.subr.mxu0 0.0
  %95 = vmatpush1.msra.mxu0 0.0
  %96 = vmatprep.subr.mxu0 0.0
  %97 = vmatpush1.msra.mxu0 0.0
  %98 = vmatprep.subr.mxu0 0.0
  %99 = vmatpush1.msra.mxu0 0.0
  %100 = vmatprep.subr.mxu0 0.0
  %101 = vmatpush1.msra.mxu0 0.0
  %102 = vmatprep.subr.mxu0 0.0
  %103 = vmatpush1.msra.mxu0 0.0
  %104 = vmatprep.subr.mxu0 0.0
  %105 = vmatpush1.msra.mxu0 0.0
  %106 = vmatprep.subr.mxu0 0.0
  %107 = vmatpush1.msra.mxu0 0.0
  %108 = vmatprep.subr.mxu0 0.0
  %109 = vmatpush1.msra.mxu0 0.0
  %110 = vmatprep.subr.mxu0 0.0
  %111 = vmatpush1.msra.mxu0 0.0
  %112 = vmatprep.subr.mxu0 0.0
  %113 = vmatpush1.msra.mxu0 0.0
  %114 = vmatprep.subr.mxu0 0.0
  %115 = vmatpush1.msra.mxu0 0.0
  %116 = vmatprep.mubr.f32.mxu0 0.0
  %117 = vmatmul.mubr.f32.gmra.mrb[0].mxu0 %v28
  %v118 = vpop.f32.mrb[0].mxu0
  %v119 = vadd.f32 %v50, %v118
  %v120 = vpop.f32.mrb[0].mxu0
  %121 = vdwg.mxu0
  %v122 = vmax.f32 %v119, 0.0
  %v123 = vld [vmem:[%s3] sm:$0xff]
  %v124 = vld [vmem:[%s3 + $0x8] sm:$0xff]
  %v125 = vld [vmem:[%s3 + $0x10] sm:$0xff]
  %v126 = vld [vmem:[%s3 + $0x18] sm:$0xff]
  %v127 = vld [vmem:[%s3 + $0x20] sm:$0xff]
  %v128 = vld [vmem:[%s3 + $0x28] sm:$0xff]
  %v129 = vld [vmem:[%s3 + $0x30] sm:$0xff]
  %v130 = vld [vmem:[%s3 + $0x38] sm:$0xff]
  %v131 = vld [vmem:[%s4] sm:$0x1]
  %v133 = vlaneseq
  %v134 = vshrl.u32 %v133, 7
  %v135 = vsub.s32 0, %v134
  %v136 = vrot.slane %v131, %v135
  %vm138 = vcmask 523264
  %v140 = vsel %vm138, %v122, 0
  %142 = vmatprep.subr.mxu0 0.0
  %143 = vmatpush1.msra.mxu0 %v123
  %144 = vmatprep.subr.mxu0 0.0
  %145 = vmatpush1.msra.mxu0 %v124
  %146 = vmatprep.subr.mxu0 0.0
  %147 = vmatpush1.msra.mxu0 %v125
  %148 = vmatprep.subr.mxu0 0.0
  %149 = vmatpush1.msra.mxu0 %v126
  %150 = vmatprep.subr.mxu0 0.0
  %151 = vmatpush1.msra.mxu0 %v127
  %152 = vmatprep.subr.mxu0 0.0
  %153 = vmatpush1.msra.mxu0 %v128
  %154 = vmatprep.subr.mxu0 0.0
  %155 = vmatpush1.msra.mxu0 %v129
  %156 = vmatprep.subr.mxu0 0.0
  %157 = vmatpush1.msra.mxu0 %v130
  %158 = vmatprep.subr.mxu0 0.0
  %159 = vmatpush1.msra.mxu0 0.0
  %160 = vmatprep.subr.mxu0 0.0
  %161 = vmatpush1.msra.mxu0 0.0
  %162 = vmatprep.subr.mxu0 0.0
  %163 = vmatpush1.msra.mxu0 0.0
  %164 = vmatprep.subr.mxu0 0.0
  %165 = vmatpush1.msra.mxu0 0.0
  %166 = vmatprep.subr.mxu0 0.0
  %167 = vmatpush1.msra.mxu0 0.0
  %168 = vmatprep.subr.mxu0 0.0
  %169 = vmatpush1.msra.mxu0 0.0
  %170 = vmatprep.subr.mxu0 0.0
  %171 = vmatpush1.msra.mxu0 0.0
  %172 = vmatprep.subr.mxu0 0.0
  %173 = vmatpush1.msra.mxu0 0.0
  %174 = vmatprep.subr.mxu0 0.0
  %175 = vmatpush1.msra.mxu0 0.0
  %176 = vmatprep.subr.mxu0 0.0
  %177 = vmatpush1.msra.mxu0 0.0
  %178 = vmatprep.subr.mxu0 0.0
  %179 = vmatpush1.msra.mxu0 0.0
  %180 = vmatprep.subr.mxu0 0.0
  %181 = vmatpush1.msra.mxu0 0.0
  %182 = vmatprep.subr.mxu0 0.0
  %183 = vmatpush1.msra.mxu0 0.0
  %184 = vmatprep.subr.mxu0 0.0
  %185 = vmatpush1.msra.mxu0 0.0
  %186 = vmatprep.subr.mxu0 0.0
  %187 = vmatpush1.msra.mxu0 0.0
  %188 = vmatprep.subr.mxu0 0.0
  %189 = vmatpush1.msra.mxu0 0.0
  %190 = vmatprep.subr.mxu0 0.0
  %191 = vmatpush1.msra.mxu0 0.0
  %192 = vmatprep.subr.mxu0 0.0
  %193 = vmatpush1.msra.mxu0 0.0
  %194 = vmatprep.subr.mxu0 0.0
  %195 = vmatpush1.msra.mxu0 0.0
  %196 = vmatprep.subr.mxu0 0.0
  %197 = vmatpush1.msra.mxu0 0.0
  %198 = vmatprep.subr.mxu0 0.0
  %199 = vmatpush1.msra.mxu0 0.0
  %200 = vmatprep.subr.mxu0 0.0
  %201 = vmatpush1.msra.mxu0 0.0
  %202 = vmatprep.subr.mxu0 0.0
  %203 = vmatpush1.msra.mxu0 0.0
  %204 = vmatprep.subr.mxu0 0.0
  %205 = vmatpush1.msra.mxu0 0.0
  %206 = vmatprep.mubr.f32.mxu0 0.0
  %207 = vmatmul.mubr.f32.gmra.mrb[0].mxu0 %v140
  %v208 = vpop.f32.mrb[0].mxu0
  %v209 = vadd.f32 %v136, %v208
  %v210 = vpop.f32.mrb[0].mxu0
  %211 = vdwg.mxu0
  %v212 = vld [vmem:[%s5] sm:$0xff]
  %v213 = vld [vmem:[%s5 + $0x8] sm:$0xff]
  %v214 = vld [vmem:[%s5 + $0x10] sm:$0xff]
  %v215 = vld [vmem:[%s5 + $0x18] sm:$0xff]
  %v216 = vld [vmem:[%s5 + $0x20] sm:$0xff]
  %v217 = vld [vmem:[%s6] sm:$0x1]
  %v219 = vlaneseq
  %v220 = vshrl.u32 %v219, 7
  %v221 = vsub.s32 0, %v220
  %v222 = vrot.slane %v217, %v221
  %vm224 = vcmask 326656
  %v226 = vsel %vm224, %v209, 0
  %228 = vmatprep.subr.mxu0 0.0
  %229 = vmatpush1.msra.mxu0 %v212
  %230 = vmatprep.subr.mxu0 0.0
  %231 = vmatpush1.msra.mxu0 %v213
  %232 = vmatprep.subr.mxu0 0.0
  %233 = vmatpush1.msra.mxu0 %v214
  %234 = vmatprep.subr.mxu0 0.0
  %235 = vmatpush1.msra.mxu0 %v215
  %236 = vmatprep.subr.mxu0 0.0
  %237 = vmatpush1.msra.mxu0 %v216
  %238 = vmatprep.subr.mxu0 0.0
  %239 = vmatpush1.msra.mxu0 0.0
  %240 = vmatprep.subr.mxu0 0.0
  %241 = vmatpush1.msra.mxu0 0.0
  %242 = vmatprep.subr.mxu0 0.0
  %243 = vmatpush1.msra.mxu0 0.0
  %244 = vmatprep.subr.mxu0 0.0
  %245 = vmatpush1.msra.mxu0 0.0
  %246 = vmatprep.subr.mxu0 0.0
  %247 = vmatpush1.msra.mxu0 0.0
  %248 = vmatprep.subr.mxu0 0.0
  %249 = vmatpush1.msra.mxu0 0.0
  %250 = vmatprep.subr.mxu0 0.0
  %251 = vmatpush1.msra.mxu0 0.0
  %252 = vmatprep.subr.mxu0 0.0
  %253 = vmatpush1.msra.mxu0 0.0
  %254 = vmatprep.subr.mxu0 0.0
  %255 = vmatpush1.msra.mxu0 0.0
  %256 = vmatprep.subr.mxu0 0.0
  %257 = vmatpush1.msra.mxu0 0.0
  %258 = vmatprep.subr.mxu0 0.0
  %259 = vmatpush1.msra.mxu0 0.0
  %260 = vmatprep.subr.mxu0 0.0
  %261 = vmatpush1.msra.mxu0 0.0
  %262 = vmatprep.subr.mxu0 0.0
  %263 = vmatpush1.msra.mxu0 0.0
  %264 = vmatprep.subr.mxu0 0.0
  %265 = vmatpush1.msra.mxu0 0.0
  %266 = vmatprep.subr.mxu0 0.0
  %267 = vmatpush1.msra.mxu0 0.0
  %268 = vmatprep.subr.mxu0 0.0
  %269 = vmatpush1.msra.mxu0 0.0
  %270 = vmatprep.subr.mxu0 0.0
  %271 = vmatpush1.msra.mxu0 0.0
  %272 = vmatprep.subr.mxu0 0.0
  %273 = vmatpush1.msra.mxu0 0.0
  %274 = vmatprep.subr.mxu0 0.0
  %275 = vmatpush1.msra.mxu0 0.0
  %276 = vmatprep.subr.mxu0 0.0
  %277 = vmatpush1.msra.mxu0 0.0
  %278 = vmatprep.subr.mxu0 0.0
  %279 = vmatpush1.msra.mxu0 0.0
  %280 = vmatprep.subr.mxu0 0.0
  %281 = vmatpush1.msra.mxu0 0.0
  %282 = vmatprep.subr.mxu0 0.0
  %283 = vmatpush1.msra.mxu0 0.0
  %284 = vmatprep.subr.mxu0 0.0
  %285 = vmatpush1.msra.mxu0 0.0
  %286 = vmatprep.subr.mxu0 0.0
  %287 = vmatpush1.msra.mxu0 0.0
  %288 = vmatprep.subr.mxu0 0.0
  %289 = vmatpush1.msra.mxu0 0.0
  %290 = vmatprep.subr.mxu0 0.0
  %291 = vmatpush1.msra.mxu0 0.0
  %292 = vmatprep.mubr.f32.mxu0 0.0
  %293 = vmatmul.mubr.f32.gmra.mrb[0].mxu0 %v226
  %v294 = vpop.f32.mrb[0].mxu0
  %v295 = vadd.f32 %v222, %v294
  %v296 = vpop.f32.mrb[0].mxu0
  %297 = vdwg.mxu0
  %vm298 = vcmask 320512
  %299 = vst.msk [vmem:[%s7] sm:$0x3] %vm298, %v209
  %vm300 = vcmask 41984
  %301 = vst.msk [vmem:[%s8] sm:$0x3] %vm300, %v295
  // Predicated region
  $region30: #{tps_forward.10} parent=0 // pred_check
    _
  $region31: #{tps_forward.10} parent=0 // pred_check_branch
    %303 = sbr.rel (0) target = $region33
  $region32: #{tps_forward.10} parent=0 // pred_region
    _
  $region33: #{tps_forward.10} parent=0 // pred_fallthru
    _
  // Predicated region
  $region34: #{tps_forward.10} parent=0 // pred_check
    _
  $region35: #{tps_forward.10} parent=0 // pred_check_branch
    %305 = sbr.rel (0) target = $region37
  $region36: #{tps_forward.10} parent=0 // pred_region
    _
  $region37: #{tps_forward.10} parent=0 // pred_fallthru
    _
  // Predicated region
  $region38: #{tps_forward.10} parent=0 // pred_check
    _
  $region39: #{tps_forward.10} parent=0 // pred_check_branch
    %307 = sbr.rel (0) target = $region41
  $region40: #{tps_forward.10} parent=0 // pred_region
    _
  $region41: #{tps_forward.10} parent=0 // pred_fallthru
    _
  // Predicated region
  $region42: #{tps_forward.10} parent=0 // pred_check
    _
  $region43: #{tps_forward.10} parent=0 // pred_check_branch
    %309 = sbr.rel (0) target = $region45
  $region44: #{tps_forward.10} parent=0 // pred_region
    _
  $region45: #{tps_forward.10} parent=0 // pred_fallthru
    _

// kernel: tps_forward.11
$region0: #{tps_forward.11}
  #allocation0 [shape = 'u32[]', space=smem, size = 0x4, offset = 0x4, fixed_abs, tag = 'smem constant byte address 0x4 - core index']
  #allocation1 [shape = 'u32[144,128]{1,0:T(1,128)}', space=vmem, size = 0x12000, scoped, tag = 'internal scratch']
  %s0 = inlined_call_operand.vmem [shape: f32[23,256], index: 0, kind: input, shape index: {}]
  %s1 = inlined_call_operand.vmem [shape: f32[2,2,23], index: 1, kind: input, shape index: {}]
  %s2 = inlined_call_operand.vmem [shape: f32[2,64,16], index: 2, kind: input, shape index: {}]
  %s3 = inlined_call_operand.vmem [shape: f32[2,4,256], index: 3, kind: output, shape index: {}]
  %s4 = sld [smem:[#allocation0]]
  $region45: #{tps_forward.11} parent=0
    _
  %s6 = ssub.s32 1, %s4
  %s7 = scalar_select 0, %s6, %s4
  loop: start=0, step=1, limit=4
  $region2: #{tps_forward.11} parent=0 // loop_pre_header
    _
  $region3: #{tps_forward.11} parent=0 // loop_header
    %s9 = sphi 0, %s13
    %p10 = scmp.ge.s32.totalorder %s9, 4
    %s16 = sphi 0, %s28
    %s17 = sphi 0, %s24
    %s18 = sphi 0, %s16
    %s19 = sphi 0, %s17
    %s20 = sphi 0, %s18
    %s21 = sphi 0, %s19
    %s31 = sphi 0, %s33
    %s34 = sphi 0, %s31
    %s35 = sphi 0, %s34
    %s51 = sphi 0, %s35
    %s57 = sphi 0, %s59
    %s60 = sphi 0, %s57
    %s61 = sphi 0, %s60
    %s77 = sphi 0, %s61
    %s83 = sphi 0, %s85
    %s86 = sphi 0, %s83
    %s87 = sphi 0, %s86
    %s103 = sphi 0, %s87
    %s111 = sphi 0, %s113
    %s114 = sphi 0, %s111
    %s115 = sphi 0, %s114
    %s131 = sphi 0, %s115
  $region4: #{tps_forward.11} parent=0 // loop_header_branch
    %12 = sbr.rel (%p10) target = $region8
  $region5: #{tps_forward.11} parent=0 // loop_body
    %s14 = ssub.s32 %s9, 1
    %s15 = ssub.s32 %s9, 2
    %s22 = sadd.s32 1, %s17
    %p23 = scmp.ge.s32.totalorder %s22, 1
    %s24 = scalar_select %p23, 0, %s22
    %s25 = sadd.s32 1, %s16
    %s26 = scalar_select %p23, %s25, %s16
    %p27 = scmp.ge.s32.totalorder %s26, 2
    %s28 = scalar_select %p27, 0, %s26
    %s29 = ssub.s32 %s17, %s24
    %p30 = scmp.eq.s32.totalorder %s29, 0
    %s32 = sadd.s32 %s31, 1
    %s33 = scalar_select %p30, %s31, %s32
    %p36 = pneg %p30
    %p37 = scmp.eq.s32.totalorder %s9, 1
    %p38 = por %p36, %p37
    %p39 = scmp.ne.s32.totalorder %s31, %s34
    %p40 = scmp.eq.s32.totalorder %s9, 0
    %p41 = por %p39, %p40
    %p42 = scmp.ne.s32.totalorder %s31, %s34
    %p43 = scmp.eq.s32.totalorder %s14, 1
    %p44 = por %p42, %p43
    %p45 = scmp.ne.s32.totalorder %s34, %s35
    %p46 = scmp.eq.s32.totalorder %s14, 0
    %p47 = por %p45, %p46
    %p48 = scmp.ne.s32.totalorder %s34, %s35
    %p49 = scmp.eq.s32.totalorder %s15, 1
    %p50 = por %p48, %p49
    %p52 = scmp.ne.s32.totalorder %s35, %s51
    %p53 = scmp.eq.s32.totalorder %s15, 0
    %p54 = por %p52, %p53
    %s55 = ssub.s32 %s16, %s28
    %p56 = scmp.eq.s32.totalorder %s55, 0
    %s58 = sadd.s32 %s57, 1
    %s59 = scalar_select %p56, %s57, %s58
    %p62 = pneg %p56
    %p63 = scmp.eq.s32.totalorder %s9, 1
    %p64 = por %p62, %p63
    %p65 = scmp.ne.s32.totalorder %s57, %s60
    %p66 = scmp.eq.s32.totalorder %s9, 0
    %p67 = por %p65, %p66
    %p68 = scmp.ne.s32.totalorder %s57, %s60
    %p69 = scmp.eq.s32.totalorder %s14, 1
    %p70 = por %p68, %p69
    %p71 = scmp.ne.s32.totalorder %s60, %s61
    %p72 = scmp.eq.s32.totalorder %s14, 0
    %p73 = por %p71, %p72
    %p74 = scmp.ne.s32.totalorder %s60, %s61
    %p75 = scmp.eq.s32.totalorder %s15, 1
    %p76 = por %p74, %p75
    %p78 = scmp.ne.s32.totalorder %s61, %s77
    %p79 = scmp.eq.s32.totalorder %s15, 0
    %p80 = por %p78, %p79
    %s81 = ssub.s32 %s16, %s28
    %p82 = scmp.eq.s32.totalorder %s81, 0
    %s84 = sadd.s32 %s83, 1
    %s85 = scalar_select %p82, %s83, %s84
    %p88 = pneg %p82
    %p89 = scmp.eq.s32.totalorder %s9, 1
    %p90 = por %p88, %p89
    %p91 = scmp.ne.s32.totalorder %s83, %s86
    %p92 = scmp.eq.s32.totalorder %s9, 0
    %p93 = por %p91, %p92
    %p94 = scmp.ne.s32.totalorder %s83, %s86
    %p95 = scmp.eq.s32.totalorder %s14, 1
    %p96 = por %p94, %p95
    %p97 = scmp.ne.s32.totalorder %s86, %s87
    %p98 = scmp.eq.s32.totalorder %s14, 0
    %p99 = por %p97, %p98
    %p100 = scmp.ne.s32.totalorder %s86, %s87
    %p101 = scmp.eq.s32.totalorder %s15, 1
    %p102 = por %p100, %p101
    %p104 = scmp.ne.s32.totalorder %s87, %s103
    %p105 = scmp.eq.s32.totalorder %s15, 0
    %p106 = por %p104, %p105
    %s107 = ssub.s32 %s16, %s28
    %s108 = ssub.s32 %s17, %s24
    %s109 = sor.u32 %s107, %s108
    %p110 = scmp.eq.s32.totalorder %s109, 0
    %s112 = sadd.s32 %s111, 1
    %s113 = scalar_select %p110, %s111, %s112
    %p116 = pneg %p110
    %p117 = scmp.eq.s32.totalorder %s9, 1
    %p118 = por %p116, %p117
    %p119 = scmp.ne.s32.totalorder %s111, %s114
    %p120 = scmp.eq.s32.totalorder %s9, 0
    %p121 = por %p119, %p120
    %p122 = scmp.ne.s32.totalorder %s111, %s114
    %p123 = scmp.eq.s32.totalorder %s14, 1
    %p124 = por %p122, %p123
    %p125 = scmp.ne.s32.totalorder %s114, %s115
    %p126 = scmp.eq.s32.totalorder %s14, 0
    %p127 = por %p125, %p126
    %p128 = scmp.ne.s32.totalorder %s114, %s115
    %p129 = scmp.eq.s32.totalorder %s15, 1
    %p130 = por %p128, %p129
    %p132 = scmp.ne.s32.totalorder %s115, %s131
    %p133 = scmp.eq.s32.totalorder %s15, 0
    %p134 = por %p132, %p133
    %p135 = scmp.le.s32.totalorder 1, %s9
    %p136 = scmp.lt.s32.totalorder %s9, 3
    %p137 = pnand %p135, %p136
    %p138 = pneg %p137
    // Predicated region
    $region9: #{tps_forward.11} parent=5 // pred_check
      _
    $region10: #{tps_forward.11} parent=5 // pred_check_branch
      %140 = sbr.rel (%p137) target = $region12
    $region11: #{tps_forward.11} parent=5 // pred_region
      %s141 = ssub.s32 %s9, 1
      // Predicated region
      $region13: #{tps_forward.11} parent=11 // pred_check
        %p142 = pneg %p47
      $region14: #{tps_forward.11} parent=11 // pred_check_branch
        %144 = sbr.rel (%p142) target = $region16
      $region15: #{tps_forward.11} parent=11 // pred_region
        %s145 = smul.u32 2, %s19
        %p146 = scmp.lt.s32.totalorder %s145, 1
        %s147 = scalar_select %p146, %s145, 1
        %s148 = smul.addr %s147, 8
        %s149 = scalar_lea.vmem %s0, %s148
        %s150 = smul.u32 2, %s19
      $region16: #{tps_forward.11} parent=11 // pred_fallthru
        _
    $region12: #{tps_forward.11} parent=5 // pred_fallthru
      _
    %p151 = scmp.lt.s32.totalorder %s9, 2
    // Predicated region
    $region17: #{tps_forward.11} parent=5 // pred_check
      %p152 = pneg %p151
    $region18: #{tps_forward.11} parent=5 // pred_check_branch
      %154 = sbr.rel (%p152) target = $region20
    $region19: #{tps_forward.11} parent=5 // pred_region
      // Predicated region
      $region21: #{tps_forward.11} parent=19 // pred_check
        %p155 = pneg %p67
      $region22: #{tps_forward.11} parent=19 // pred_check_branch
        %157 = sbr.rel (%p155) target = $region24
      $region23: #{tps_forward.11} parent=19 // pred_region
        %p158 = scmp.lt.s32.totalorder %s16, 1
        %s159 = scalar_select %p158, %s16, 1
        %s160 = smul.addr %s159, 2
        %s161 = scalar_lea.vmem %s1, %s160
      $region24: #{tps_forward.11} parent=19 // pred_fallthru
        _
      // Predicated region
      $region25: #{tps_forward.11} parent=19 // pred_check
        %p162 = pneg %p93
      $region26: #{tps_forward.11} parent=19 // pred_check_branch
        %164 = sbr.rel (%p162) target = $region28
      $region27: #{tps_forward.11} parent=19 // pred_region
        %p165 = scmp.lt.s32.totalorder %s16, 1
        %s166 = scalar_select %p165, %s16, 1
        %s167 = smul.addr %s166, 8
        %s168 = smul.addr %s167, 8
        %s169 = scalar_lea.vmem %s2, %s168
      $region28: #{tps_forward.11} parent=19 // pred_fallthru
        _
    $region20: #{tps_forward.11} parent=5 // pred_fallthru
      _
    %p170 = scmp.le.s32.totalorder 1, %s9
    %p171 = scmp.lt.s32.totalorder %s9, 3
    %p172 = pnand %p170, %p171
    %p173 = pneg %p172
    // Predicated region
    $region29: #{tps_forward.11} parent=5 // pred_check
      _
    $region30: #{tps_forward.11} parent=5 // pred_check_branch
      %175 = sbr.rel (%p172) target = $region32
    $region31: #{tps_forward.11} parent=5 // pred_region
      %s176 = ssub.s32 %s9, 1
      %s177 = smul.u32 2, %s19
      %p178 = scmp.lt.s32.totalorder %s177, 1
      %s179 = scalar_select %p178, %s177, 1
      %s180 = smul.addr %s179, 8
      %s181 = scalar_lea.vmem %s0, %s180
      %p182 = pneg %p47
      %p183 = pneg %p44
      %p184 = scmp.lt.s32.totalorder %s18, 1
      %s185 = scalar_select %p184, %s18, 1
      %s186 = smul.addr %s185, 2
      %s187 = scalar_lea.vmem %s1, %s186
      %p188 = pneg %p73
      %p189 = pneg %p70
      %p190 = scmp.lt.s32.totalorder %s18, 1
      %s191 = scalar_select %p190, %s18, 1
      %s192 = smul.addr %s191, 8
      %s193 = smul.addr %s192, 8
      %s194 = scalar_lea.vmem %s2, %s193
      %p195 = pneg %p99
      %p196 = pneg %p96
      %p197 = pneg %p127
      %p198 = pneg %p124
      %s199 = smul.u32 2, %s19
      %p200 = scmp.lt.s32.totalorder %s18, 1
      %s201 = scalar_select %p200, %s18, 1
      %p202 = scmp.lt.s32.totalorder %s199, 1
      %s203 = scalar_select %p202, %s199, 1
      %s204 = smul.addr %s201, 2
      %s205 = sadd.s32 %s203, %s204
      %s206 = smul.addr %s205, 4
      %s207 = scalar_lea.vmem %s3, %s206
      %s208 = smul.u32 2, %s19
      %p209 = scmp.lt.s32.totalorder %s208, 1
      %s210 = scalar_select %p209, %s208, 1
      %s211 = smul.addr %s210, 8
      %s212 = scalar_lea.vmem %s0, %s211
      %s213 = smul.u32 2, %s19
      %p214 = scmp.lt.s32.totalorder %s18, 1
      %s215 = scalar_select %p214, %s18, 1
      %s216 = smul.addr %s215, 2
      %s217 = scalar_lea.vmem %s1, %s216
      %p218 = scmp.lt.s32.totalorder %s18, 1
      %s219 = scalar_select %p218, %s18, 1
      %s220 = smul.addr %s219, 8
      %s221 = smul.addr %s220, 8
      %s222 = scalar_lea.vmem %s2, %s221
      %s223 = smul.u32 2, %s19
      %p224 = scmp.lt.s32.totalorder %s18, 1
      %s225 = scalar_select %p224, %s18, 1
      %p226 = scmp.lt.s32.totalorder %s223, 1
      %s227 = scalar_select %p226, %s223, 1
      %s228 = smul.addr %s225, 2
      %s229 = sadd.s32 %s227, %s228
      %s230 = smul.addr %s229, 4
      %s231 = scalar_lea.vmem %s3, %s230
      %s232 = smul.u32 2, %s19
      %v233 = vld [vmem:[%s217] sm:$0x3]
      %v234 = vld [vmem:[%s212] sm:$0xff]
      %v235 = vld [vmem:[%s212 + $0x8] sm:$0xff]
      %v236 = vld [vmem:[%s212 + $0x10] sm:$0xff]
      %v237 = vld [vmem:[%s212 + $0x18] sm:$0xff]
      %v238 = vld [vmem:[%s212 + $0x20] sm:$0x7f]
      %v239 = vld [vmem:[%s212 + $0x28] sm:$0x7f]
      %vm240 = vcmask 187392
      %v242 = vsel %vm240, %v233, 0
      %vm244 = vcmask 1046528
      %v246 = vsel %vm244, %v238, 0
      %v249 = vsel %vm244, %v239, 0
      %251 = vmatprep.subr.mxu0 %v235
      %252 = vmatpush1.msra.mxu0 %v234
      %253 = vmatprep.subr.mxu0 %v237
      %254 = vmatpush1.msra.mxu0 %v236
      %255 = vmatprep.subr.mxu0 %v249
      %256 = vmatpush1.msra.mxu0 %v246
      %257 = vmatprep.subr.mxu0 0.0
      %258 = vmatpush1.msra.mxu0 0.0
      %259 = vmatprep.subr.mxu0 0.0
      %260 = vmatpush1.msra.mxu0 0.0
      %261 = vmatprep.subr.mxu0 0.0
      %262 = vmatpush1.msra.mxu0 0.0
      %263 = vmatprep.subr.mxu0 0.0
      %264 = vmatpush1.msra.mxu0 0.0
      %265 = vmatprep.subr.mxu0 0.0
      %266 = vmatpush1.msra.mxu0 0.0
      %267 = vmatprep.subr.mxu0 0.0
      %268 = vmatpush1.msra.mxu0 0.0
      %269 = vmatprep.subr.mxu0 0.0
      %270 = vmatpush1.msra.mxu0 0.0
      %271 = vmatprep.subr.mxu0 0.0
      %272 = vmatpush1.msra.mxu0 0.0
      %273 = vmatprep.subr.mxu0 0.0
      %274 = vmatpush1.msra.mxu0 0.0
      %275 = vmatprep.subr.mxu0 0.0
      %276 = vmatpush1.msra.mxu0 0.0
      %277 = vmatprep.subr.mxu0 0.0
      %278 = vmatpush1.msra.mxu0 0.0
      %279 = vmatprep.subr.mxu0 0.0
      %280 = vmatpush1.msra.mxu0 0.0
      %281 = vmatprep.subr.mxu0 0.0
      %282 = vmatpush1.msra.mxu0 0.0
      %283 = vmatprep.subr.mxu0 0.0
      %284 = vmatpush1.msra.mxu0 0.0
      %285 = vmatprep.subr.mxu0 0.0
      %286 = vmatpush1.msra.mxu0 0.0
      %287 = vmatprep.subr.mxu0 0.0
      %288 = vmatpush1.msra.mxu0 0.0
      %289 = vmatprep.subr.mxu0 0.0
      %290 = vmatpush1.msra.mxu0 0.0
      %291 = vmatprep.subr.mxu0 0.0
      %292 = vmatpush1.msra.mxu0 0.0
      %293 = vmatprep.subr.mxu0 0.0
      %294 = vmatpush1.msra.mxu0 0.0
      %295 = vmatprep.subr.mxu0 0.0
      %296 = vmatpush1.msra.mxu0 0.0
      %297 = vmatprep.subr.mxu0 0.0
      %298 = vmatpush1.msra.mxu0 0.0
      %299 = vmatprep.subr.mxu0 0.0
      %300 = vmatpush1.msra.mxu0 0.0
      %301 = vmatprep.subr.mxu0 0.0
      %302 = vmatpush1.msra.mxu0 0.0
      %303 = vmatprep.subr.mxu0 0.0
      %304 = vmatpush1.msra.mxu0 0.0
      %305 = vmatprep.subr.mxu0 0.0
      %306 = vmatpush1.msra.mxu0 0.0
      %307 = vmatprep.subr.mxu0 0.0
      %308 = vmatpush1.msra.mxu0 0.0
      %309 = vmatprep.subr.mxu0 0.0
      %310 = vmatpush1.msra.mxu0 0.0
      %311 = vmatprep.subr.mxu0 0.0
      %312 = vmatpush1.msra.mxu0 0.0
      %313 = vmatprep.subr.mxu0 0.0
      %314 = vmatpush1.msra.mxu0 0.0
      %315 = vmatprep.mubr.f32.mxu0 0.0
      %316 = vmatmul.mubr.f32.gmra.mrb[0].mxu0 %v242
      %v317 = vpop.f32.mrb[0].mxu0
      %v318 = vadd.f32 0.0, %v317
      %v319 = vpop.f32.mrb[0].mxu0
      %v320 = vadd.f32 0.0, %v319
      %321 = vdwg.mxu0
      %v322 = vadd.f32 %v318, 1.0
      %v323 = vadd.f32 %v320, 1.0
      %v324 = vmul.f32 %v322, 7.5
      %v325 = vmul.f32 %v323, 7.5
      %v326 = vfloor.f32 %v324
      %v327 = vfloor.f32 %v325
      %v328 = vcvt.f32.s32.to.zero.pseudo %v326
      %v329 = vcvt.f32.s32.to.zero.pseudo %v327
      %v330 = vadd.s32 %v328, 1
      %v331 = vadd.s32 %v329, 1
      %v332 = vsub.f32 %v324, %v326
      %v333 = vsub.f32 %v325, %v327
      %v334 = vsub.f32 1.0, %v332
      %v335 = vsub.f32 1.0, %v333
      %v336 = vlaneseq
      %v337 = vshrl.u32 %v336, 7
      %v338 = vadd.s32 %v337, 8
      %vm339 = vcmp.ge.s32.totalorder %v328, 0
      %vm340 = vcmp.ge.s32.totalorder %v329, 0
      %vm341 = vcmp.lt.s32.totalorder %v328, 16
      %vm342 = vcmp.lt.s32.totalorder %v329, 16
      %vm343 = vmand %vm339, %vm341
      %vm344 = vmand %vm340, %vm342
      %v345 = vsel %vm343, 1, 0
      %v346 = vsel %vm344, 1, 0
      %v347 = vcvt.s32.f32 %v345
      %v348 = vcvt.s32.f32 %v346
      %v349 = vmul.f32 %v334, %v347
      %v350 = vmul.f32 %v335, %v348
      %v351 = vlaneseq
      %v352 = vshrl.u32 %v351, 7
      %v353 = vsub.s32 0, %v352
      %v354 = vrot.slane %v328, %v353
      %v355 = vlaneseq
      %v356 = vshrl.u32 %v355, 7
      %v357 = vsub.s32 0, %v356
      %v358 = vrot.slane %v329, %v357
      %vm359 = vcmp.eq.s32.totalorder %v337, %v354
      %vm360 = vcmp.eq.s32.totalorder %v337, %v358
      %vm361 = vcmp.eq.s32.totalorder %v338, %v354
      %vm362 = vcmp.eq.s32.totalorder %v338, %v358
      %v363 = vsel %vm359, 1, 0
      %v364 = vsel %vm360, 1, 0
      %v365 = vsel %vm361, 1, 0
      %v366 = vsel %vm362, 1, 0
      %v367 = vcvt.s32.f32 %v363
      %v368 = vcvt.s32.f32 %v364
      %v369 = vcvt.s32.f32 %v365
      %v370 = vcvt.s32.f32 %v366
      %v371 = vlaneseq
      %v372 = vshrl.u32 %v371, 7
      %v373 = vsub.s32 0, %v372
      %v374 = vrot.slane %v349, %v373
      %v375 = vlaneseq
      %v376 = vshrl.u32 %v375, 7
      %v377 = vsub.s32 0, %v376
      %v378 = vrot.slane %v350, %v377
      %v379 = vmul.f32 %v374, %v367
      %v380 = vmul.f32 %v378, %v368
      %v381 = vmul.f32 %v374, %v369
      %v382 = vmul.f32 %v378, %v370
      %vm383 = vcmp.ge.s32.totalorder %v330, 0
      %vm384 = vcmp.ge.s32.totalorder %v331, 0
      %vm385 = vcmp.lt.s32.totalorder %v330, 16
      %vm386 = vcmp.lt.s32.totalorder %v331, 16
      %vm387 = vmand %vm383, %vm385
      %vm388 = vmand %vm384, %vm386
      %v389 = vsel %vm387, 1, 0
      %v390 = vsel %vm388, 1, 0
      %v391 = vcvt.s32.f32 %v389
      %v392 = vcvt.s32.f32 %v390
      %v393 = vmul.f32 %v332, %v391
      %v394 = vmul.f32 %v333, %v392
      %v395 = vlaneseq
      %v396 = vshrl.u32 %v395, 7
      %v397 = vsub.s32 0, %v396
      %v398 = vrot.slane %v330, %v397
      %v399 = vlaneseq
      %v400 = vshrl.u32 %v399, 7
      %v401 = vsub.s32 0, %v400
      %v402 = vrot.slane %v331, %v401
      %vm403 = vcmp.eq.s32.totalorder %v337, %v398
      %vm404 = vcmp.eq.s32.totalorder %v337, %v402
      %vm405 = vcmp.eq.s32.totalorder %v338, %v398
      %vm406 = vcmp.eq.s32.totalorder %v338, %v402
      %v407 = vsel %vm403, 1, 0
      %v408 = vsel %vm404, 1, 0
      %v409 = vsel %vm405, 1, 0
      %v410 = vsel %vm406, 1, 0
      %v411 = vcvt.s32.f32 %v407
      %v412 = vcvt.s32.f32 %v408
      %v413 = vcvt.s32.f32 %v409
      %v414 = vcvt.s32.f32 %v410
      %v415 = vlaneseq
      %v416 = vshrl.u32 %v415, 7
      %v417 = vsub.s32 0, %v416
      %v418 = vrot.slane %v393, %v417
      %v419 = vlaneseq
      %v420 = vshrl.u32 %v419, 7
      %v421 = vsub.s32 0, %v420
      %v422 = vrot.slane %v394, %v421
      %v423 = vmul.f32 %v418, %v411
      %v424 = vmul.f32 %v422, %v412
      %v425 = vmul.f32 %v418, %v413
      %v426 = vmul.f32 %v422, %v414
      %v427 = vadd.f32 %v379, %v423
      %v428 = vadd.f32 %v380, %v424
      %v429 = vadd.f32 %v381, %v425
      %v430 = vadd.f32 %v382, %v426
      %v431 = vlaneseq
      %v432 = vshrl.u32 %v431, 7
      %v433 = vsub.s32 1, %v432
      %v434 = vrot.slane %v328, %v433
      %v435 = vlaneseq
      %v436 = vshrl.u32 %v435, 7
      %v437 = vsub.s32 1, %v436
      %v438 = vrot.slane %v329, %v437
      %vm439 = vcmp.eq.s32.totalorder %v337, %v434
      %vm440 = vcmp.eq.s32.totalorder %v337, %v438
      %vm441 = vcmp.eq.s32.totalorder %v338, %v434
      %vm442 = vcmp.eq.s32.totalorder %v338, %v438
      %v443 = vsel %vm439, 1, 0
      %v444 = vsel %vm440, 1, 0
      %v445 = vsel %vm441, 1, 0
      %v446 = vsel %vm442, 1, 0
      %v447 = vcvt.s32.f32 %v443
      %v448 = vcvt.s32.f32 %v444
      %v449 = vcvt.s32.f32 %v445
      %v450 = vcvt.s32.f32 %v446
      %v451 = vlaneseq
      %v452 = vshrl.u32 %v451, 7
      %v453 = vsub.s32 1, %v452
      %v454 = vrot.slane %v349, %v453
      %v455 = vlaneseq
      %v456 = vshrl.u32 %v455, 7
      %v457 = vsub.s32 1, %v456
      %v458 = vrot.slane %v350, %v457
      %v459 = vmul.f32 %v454, %v447
      %v460 = vmul.f32 %v458, %v448
      %v461 = vmul.f32 %v454, %v449
      %v462 = vmul.f32 %v458, %v450
      %v463 = vlaneseq
      %v464 = vshrl.u32 %v463, 7
      %v465 = vsub.s32 1, %v464
      %v466 = vrot.slane %v330, %v465
      %v467 = vlaneseq
      %v468 = vshrl.u32 %v467, 7
      %v469 = vsub.s32 1, %v468
      %v470 = vrot.slane %v331, %v469
      %vm471 = vcmp.eq.s32.totalorder %v337, %v466
      %vm472 = vcmp.eq.s32.totalorder %v337, %v470
      %vm473 = vcmp.eq.s32.totalorder %v338, %v466
      %vm474 = vcmp.eq.s32.totalorder %v338, %v470
      %v475 = vsel %vm471, 1, 0
      %v476 = vsel %vm472, 1, 0
      %v477 = vsel %vm473, 1, 0
      %v478 = vsel %vm474, 1, 0
      %v479 = vcvt.s32.f32 %v475
      %v480 = vcvt.s32.f32 %v476
      %v481 = vcvt.s32.f32 %v477
      %v482 = vcvt.s32.f32 %v478
      %v483 = vlaneseq
      %v484 = vshrl.u32 %v483, 7
      %v485 = vsub.s32 1, %v484
      %v486 = vrot.slane %v393, %v485
      %v487 = vlaneseq
      %v488 = vshrl.u32 %v487, 7
      %v489 = vsub.s32 1, %v488
      %v490 = vrot.slane %v394, %v489
      %v491 = vmul.f32 %v486, %v479
      %v492 = vmul.f32 %v490, %v480
      %v493 = vmul.f32 %v486, %v481
      %v494 = vmul.f32 %v490, %v482
      %v495 = vadd.f32 %v459, %v491
      %v496 = vadd.f32 %v460, %v492
      %v497 = vadd.f32 %v461, %v493
      %v498 = vadd.f32 %v462, %v494
      %v499 = vld [vmem:[%s222] sm:$0xff]
      %v500 = vld [vmem:[%s222 + $0x8] sm:$0xff]
      %v501 = vld [vmem:[%s222 + $0x10] sm:$0xff]
      %v502 = vld [vmem:[%s222 + $0x18] sm:$0xff]
      %v503 = vld [vmem:[%s222 + $0x20] sm:$0xff]
      %v504 = vld [vmem:[%s222 + $0x28] sm:$0xff]
      %v505 = vld [vmem:[%s222 + $0x30] sm:$0xff]
      %v506 = vld [vmem:[%s222 + $0x38] sm:$0xff]
      %vm507 = vcmask 130048
      %v509 = vsel %vm507, %v499, 0
      %v512 = vsel %vm507, %v500, 0
      %v515 = vsel %vm507, %v501, 0
      %v518 = vsel %vm507, %v502, 0
      %v521 = vsel %vm507, %v503, 0
      %v524 = vsel %vm507, %v504, 0
      %v527 = vsel %vm507, %v505, 0
      %v530 = vsel %vm507, %v506, 0
      %532 = vmatprep.subr.mxu0 %v428
      %533 = vmatpush1.msra.mxu0 %v427
      %534 = vmatprep.subr.mxu0 %v430
      %535 = vmatpush1.msra.mxu0 %v429
      %536 = vmatprep.subr.mxu0 0.0
      %537 = vmatpush1.msra.mxu0 0.0
      %538 = vmatprep.subr.mxu0 0.0
      %539 = vmatpush1.msra.mxu0 0.0
      %540 = vmatprep.subr.mxu0 0.0
      %541 = vmatpush1.msra.mxu0 0.0
      %542 = vmatprep.subr.mxu0 0.0
      %543 = vmatpush1.msra.mxu0 0.0
      %544 = vmatprep.subr.mxu0 0.0
      %545 = vmatpush1.msra.mxu0 0.0
      %546 = vmatprep.subr.mxu0 0.0
      %547 = vmatpush1.msra.mxu0 0.0
      %548 = vmatprep.subr.mxu0 0.0
      %549 = vmatpush1.msra.mxu0 0.0
      %550 = vmatprep.subr.mxu0 0.0
      %551 = vmatpush1.msra.mxu0 0.0
      %552 = vmatprep.subr.mxu0 0.0
      %553 = vmatpush1.msra.mxu0 0.0
      %554 = vmatprep.subr.mxu0 0.0
      %555 = vmatpush1.msra.mxu0 0.0
      %556 = vmatprep.subr.mxu0 0.0
      %557 = vmatpush1.msra.mxu0 0.0
      %558 = vmatprep.subr.mxu0 0.0
      %559 = vmatpush1.msra.mxu0 0.0
      %560 = vmatprep.subr.mxu0 0.0
      %561 = vmatpush1.msra.mxu0 0.0
      %562 = vmatprep.subr.mxu0 0.0
      %563 = vmatpush1.msra.mxu0 0.0
      %564 = vmatprep.subr.mxu0 0.0
      %565 = vmatpush1.msra.mxu0 0.0
      %566 = vmatprep.subr.mxu0 0.0
      %567 = vmatpush1.msra.mxu0 0.0
      %568 = vmatprep.subr.mxu0 0.0
      %569 = vmatpush1.msra.mxu0 0.0
      %570 = vmatprep.subr.mxu0 0.0
      %571 = vmatpush1.msra.mxu0 0.0
      %572 = vmatprep.subr.mxu0 0.0
      %573 = vmatpush1.msra.mxu0 0.0
      %574 = vmatprep.subr.mxu0 0.0
      %575 = vmatpush1.msra.mxu0 0.0
      %576 = vmatprep.subr.mxu0 0.0
      %577 = vmatpush1.msra.mxu0 0.0
      %578 = vmatprep.subr.mxu0 0.0
      %579 = vmatpush1.msra.mxu0 0.0
      %580 = vmatprep.subr.mxu0 0.0
      %581 = vmatpush1.msra.mxu0 0.0
      %582 = vmatprep.subr.mxu0 0.0
      %583 = vmatpush1.msra.mxu0 0.0
      %584 = vmatprep.subr.mxu0 0.0
      %585 = vmatpush1.msra.mxu0 0.0
      %586 = vmatprep.subr.mxu0 0.0
      %587 = vmatpush1.msra.mxu0 0.0
      %588 = vmatprep.subr.mxu0 0.0
      %589 = vmatpush1.msra.mxu0 0.0
      %590 = vmatprep.subr.mxu0 0.0
      %591 = vmatpush1.msra.mxu0 0.0
      %592 = vmatprep.subr.mxu0 0.0
      %593 = vmatpush1.msra.mxu0 0.0
      %594 = vmatprep.subr.mxu0 0.0
      %595 = vmatpush1.msra.mxu0 0.0
      %596 = vmatprep.mubr.f32.mxu0 0.0
      %597 = vmatmul.mubr.f32.gmra.mrb[0].mxu0 %v509
      %v598 = vpop.f32.mrb[0].mxu0
      %v599 = vadd.f32 0.0, %v598
      %v600 = vpop.f32.mrb[0].mxu0
      %v601 = vadd.f32 0.0, %v600
      %602 = vmatprep.mubr.f32.mxu0 0.0
      %603 = vmatmul.mubr.f32.gmra.mrb[0].mxu0 %v512
      %v604 = vpop.f32.mrb[0].mxu0
      %v605 = vadd.f32 0.0, %v604
      %v606 = vpop.f32.mrb[0].mxu0
      %v607 = vadd.f32 0.0, %v606
      %608 = vmatprep.mubr.f32.mxu0 0.0
      %609 = vmatmul.mubr.f32.gmra.mrb[0].mxu0 %v515
      %v610 = vpop.f32.mrb[0].mxu0
      %v611 = vadd.f32 0.0, %v610
      %v612 = vpop.f32.mrb[0].mxu0
      %v613 = vadd.f32 0.0, %v612
      %614 = vmatprep.mubr.f32.mxu0 0.0
      %615 = vmatmul.mubr.f32.gmra.mrb[0].mxu0 %v518
      %v616 = vpop.f32.mrb[0].mxu0
      %v617 = vadd.f32 0.0, %v616
      %v618 = vpop.f32.mrb[0].mxu0
      %v619 = vadd.f32 0.0, %v618
      %620 = vmatprep.mubr.f32.mxu0 0.0
      %621 = vmatmul.mubr.f32.gmra.mrb[0].mxu0 %v521
      %v622 = vpop.f32.mrb[0].mxu0
      %v623 = vadd.f32 0.0, %v622
      %v624 = vpop.f32.mrb[0].mxu0
      %v625 = vadd.f32 0.0, %v624
      %626 = vmatprep.mubr.f32.mxu0 0.0
      %627 = vmatmul.mubr.f32.gmra.mrb[0].mxu0 %v524
      %v628 = vpop.f32.mrb[0].mxu0
      %v629 = vadd.f32 0.0, %v628
      %v630 = vpop.f32.mrb[0].mxu0
      %v631 = vadd.f32 0.0, %v630
      %632 = vmatprep.mubr.f32.mxu0 0.0
      %633 = vmatmul.mubr.f32.gmra.mrb[0].mxu0 %v527
      %v634 = vpop.f32.mrb[0].mxu0
      %v635 = vadd.f32 0.0, %v634
      %v636 = vpop.f32.mrb[0].mxu0
      %v637 = vadd.f32 0.0, %v636
      %638 = vmatprep.mubr.f32.mxu0 0.0
      %639 = vmatmul.mubr.f32.gmra.mrb[0].mxu0 %v530
      %v640 = vpop.f32.mrb[0].mxu0
      %v641 = vadd.f32 0.0, %v640
      %v642 = vpop.f32.mrb[0].mxu0
      %v643 = vadd.f32 0.0, %v642
      %644 = vdwg.mxu0
      %v645 = vmul.f32 %v599, %v495
      %v646 = vmul.f32 %v601, %v496
      %v647 = vmul.f32 %v605, %v497
      %v648 = vmul.f32 %v607, %v498
      %v649 = vadd.f32 %v645, %v647
      %v650 = vrot.slane %v649, 4
      %v651 = vadd.f32 %v649, %v650
      %v652 = vrot.slane %v651, 2
      %v653 = vadd.f32 %v651, %v652
      %v654 = vrot.slane %v653, 1
      %v655 = vadd.f32 %v653, %v654
      %v656 = vadd.f32 %v646, %v648
      %v657 = vrot.slane %v656, 4
      %v658 = vadd.f32 %v656, %v657
      %v659 = vrot.slane %v658, 2
      %v660 = vadd.f32 %v658, %v659
      %v661 = vrot.slane %v660, 1
      %v662 = vadd.f32 %v660, %v661
      %v665 = vcombine.low %v655, %v662
      %v667 = vunpack.c.l.s4 1966171168
      %v668 = vunpack.c.0.s8 %v667
      %v669 = vlaneseq
      %v670 = vshrl.u32 %v669, 7
      %v671 = vsub.s32 %v668, %v670
      %v672 = vrot.slane %v665, %v671
      %v674 = vunpack.c.l.s4 1966171168
      %v675 = vunpack.c.0.s8 %v674
      %v676 = vlaneseq
      %v677 = vshrl.u32 %v676, 7
      %v678 = vsub.s32 %v675, %v677
      %v679 = vrot.slane %v672, %v678
      %v681 = vlaneseq
      %vm682 = vcmp.ge.s32.totalorder %v681, 0
      %vm683 = vcmp.lt.s32.totalorder %v681, 256
      %vm684 = vmand %vm682, %vm683
      %685 = vst.msk [vmem:[%s231] ss:$4 sm:$0x3] %vm684, %v679
      %v686 = vmul.f32 %v611, %v495
      %v687 = vmul.f32 %v613, %v496
      %v688 = vmul.f32 %v617, %v497
      %v689 = vmul.f32 %v619, %v498
      %v690 = vadd.f32 %v686, %v688
      %v691 = vrot.slane %v690, 4
      %v692 = vadd.f32 %v690, %v691
      %v693 = vrot.slane %v692, 2
      %v694 = vadd.f32 %v692, %v693
      %v695 = vrot.slane %v694, 1
      %v696 = vadd.f32 %v694, %v695
      %v697 = vadd.f32 %v687, %v689
      %v698 = vrot.slane %v697, 4
      %v699 = vadd.f32 %v697, %v698
      %v700 = vrot.slane %v699, 2
      %v701 = vadd.f32 %v699, %v700
      %v702 = vrot.slane %v701, 1
      %v703 = vadd.f32 %v701, %v702
      %v706 = vcombine.low %v696, %v703
      %v708 = vunpack.c.l.s4 1966171168
      %v709 = vunpack.c.0.s8 %v708
      %v710 = vlaneseq
      %v711 = vshrl.u32 %v710, 7
      %v712 = vsub.s32 %v709, %v711
      %v713 = vrot.slane %v706, %v712
      %v715 = vunpack.c.l.s4 1966171168
      %v716 = vunpack.c.0.s8 %v715
      %v717 = vlaneseq
      %v718 = vshrl.u32 %v717, 7
      %v719 = vsub.s32 %v716, %v718
      %v720 = vrot.slane %v713, %v719
      %s722 = scalar_lea.vmem %s231, 1
      %723 = vst.msk [vmem:[%s722] ss:$4 sm:$0x3] %vm684, %v720
      %v724 = vmul.f32 %v623, %v495
      %v725 = vmul.f32 %v625, %v496
      %v726 = vmul.f32 %v629, %v497
      %v727 = vmul.f32 %v631, %v498
      %v728 = vadd.f32 %v724, %v726
      %v729 = vrot.slane %v728, 4
      %v730 = vadd.f32 %v728, %v729
      %v731 = vrot.slane %v730, 2
      %v732 = vadd.f32 %v730, %v731
      %v733 = vrot.slane %v732, 1
      %v734 = vadd.f32 %v732, %v733
      %v735 = vadd.f32 %v725, %v727
      %v736 = vrot.slane %v735, 4
      %v737 = vadd.f32 %v735, %v736
      %v738 = vrot.slane %v737, 2
      %v739 = vadd.f32 %v737, %v738
      %v740 = vrot.slane %v739, 1
      %v741 = vadd.f32 %v739, %v740
      %v744 = vcombine.low %v734, %v741
      %v746 = vunpack.c.l.s4 1966171168
      %v747 = vunpack.c.0.s8 %v746
      %v748 = vlaneseq
      %v749 = vshrl.u32 %v748, 7
      %v750 = vsub.s32 %v747, %v749
      %v751 = vrot.slane %v744, %v750
      %v753 = vunpack.c.l.s4 1966171168
      %v754 = vunpack.c.0.s8 %v753
      %v755 = vlaneseq
      %v756 = vshrl.u32 %v755, 7
      %v757 = vsub.s32 %v754, %v756
      %v758 = vrot.slane %v751, %v757
      %s760 = scalar_lea.vmem %s231, 2
      %761 = vst.msk [vmem:[%s760] ss:$4 sm:$0x3] %vm684, %v758
      %v762 = vmul.f32 %v635, %v495
      %v763 = vmul.f32 %v637, %v496
      %v764 = vmul.f32 %v641, %v497
      %v765 = vmul.f32 %v643, %v498
      %v766 = vadd.f32 %v762, %v764
      %v767 = vrot.slane %v766, 4
      %v768 = vadd.f32 %v766, %v767
      %v769 = vrot.slane %v768, 2
      %v770 = vadd.f32 %v768, %v769
      %v771 = vrot.slane %v770, 1
      %v772 = vadd.f32 %v770, %v771
      %v773 = vadd.f32 %v763, %v765
      %v774 = vrot.slane %v773, 4
      %v775 = vadd.f32 %v773, %v774
      %v776 = vrot.slane %v775, 2
      %v777 = vadd.f32 %v775, %v776
      %v778 = vrot.slane %v777, 1
      %v779 = vadd.f32 %v777, %v778
      %v782 = vcombine.low %v772, %v779
      %v784 = vunpack.c.l.s4 1966171168
      %v785 = vunpack.c.0.s8 %v784
      %v786 = vlaneseq
      %v787 = vshrl.u32 %v786, 7
      %v788 = vsub.s32 %v785, %v787
      %v789 = vrot.slane %v782, %v788
      %v791 = vunpack.c.l.s4 1966171168
      %v792 = vunpack.c.0.s8 %v791
      %v793 = vlaneseq
      %v794 = vshrl.u32 %v793, 7
      %v795 = vsub.s32 %v792, %v794
      %v796 = vrot.slane %v789, %v795
      %s798 = scalar_lea.vmem %s231, 3
      %799 = vst.msk [vmem:[%s798] ss:$4 sm:$0x3] %vm684, %v796
      %s800 = smul.u32 2, %s19
      %p801 = scmp.lt.s32.totalorder %s18, 1
      %s802 = scalar_select %p801, %s18, 1
      %p803 = scmp.lt.s32.totalorder %s800, 1
      %s804 = scalar_select %p803, %s800, 1
      %s805 = smul.addr %s802, 2
      %s806 = sadd.s32 %s804, %s805
      %s807 = smul.addr %s806, 4
      %s808 = scalar_lea.vmem %s3, %s807
      // Predicated region
      $region33: #{tps_forward.11} parent=31 // pred_check
        %p809 = pneg %p124
      $region34: #{tps_forward.11} parent=31 // pred_check_branch
        %811 = sbr.rel (%p809) target = $region36
      $region35: #{tps_forward.11} parent=31 // pred_region
        %s812 = smul.u32 2, %s19
      $region36: #{tps_forward.11} parent=31 // pred_fallthru
        _
    $region32: #{tps_forward.11} parent=5 // pred_fallthru
      _
    %p813 = scmp.le.s32.totalorder 2, %s9
    // Predicated region
    $region37: #{tps_forward.11} parent=5 // pred_check
      %p814 = pneg %p813
    $region38: #{tps_forward.11} parent=5 // pred_check_branch
      %816 = sbr.rel (%p814) target = $region40
    $region39: #{tps_forward.11} parent=5 // pred_region
      %s817 = ssub.s32 %s9, 2
      // Predicated region
      $region41: #{tps_forward.11} parent=39 // pred_check
        %p818 = pneg %p130
      $region42: #{tps_forward.11} parent=39 // pred_check_branch
        %820 = sbr.rel (%p818) target = $region44
      $region43: #{tps_forward.11} parent=39 // pred_region
        %s821 = smul.u32 2, %s21
        %p822 = scmp.lt.s32.totalorder %s20, 1
        %s823 = scalar_select %p822, %s20, 1
        %p824 = scmp.lt.s32.totalorder %s821, 1
        %s825 = scalar_select %p824, %s821, 1
        %s826 = smul.addr %s823, 2
        %s827 = sadd.s32 %s825, %s826
        %s828 = smul.addr %s827, 4
        %s829 = scalar_lea.vmem %s3, %s828
      $region44: #{tps_forward.11} parent=39 // pred_fallthru
        _
    $region40: #{tps_forward.11} parent=5 // pred_fallthru
      _
  $region6: #{tps_forward.11} parent=0 // loop_footer
    %s13 = sadd.s32 1, %s9
  $region7: #{tps_forward.11} parent=0 // loop_footer_branch
    %8 = sbr.rel target = $region3
  $region8: #{tps_forward.11} parent=0 // loop_exit
    _

</llo_original>
